<compile_context>
chip_gen: v6e
topology: v6e:2x2x1
jax: 0.10.0
libtpu: 0.0.40
codegen_flags: <defaults>
</compile_context>

<pallas_src>
import functools

import jax
import jax.numpy as jnp
import numpy as np
from jax.experimental import pallas as pl
from jax.experimental.pallas import tpu as pltpu


# ----------------------------------------------------------------------------
# Fused kernel: one grid step == the full recurrence of ONE batch element.
# ----------------------------------------------------------------------------
def _prenet_kernel(inp_ref, w0_ref, b0_ref, wg_ref, bg_ref,
                   wra_ref, bra_ref, wrb_ref, brb_ref, wo_ref, bo_ref,
                   out_ref, im_ref, *, H, W, iteration):
    lanes = im_ref.shape[-1]

    # Zero the two halo rows once per batch element.  fill() never writes
    # them, so they permanently provide the 3x3 conv's dy = +-1 zero padding.
    zrow = jnp.zeros((1, W, lanes), im_ref.dtype)
    im_ref[0:1] = zrow
    im_ref[H + 1:H + 2] = zrow

    def fill(pieces):
        """Write the dx-folded im2col slab for one 3x3 conv into im_ref.

        Builds concat([col x-1, col x, col x+1], lane axis) in registers
        (single f32->bf16 cast; zero border columns written explicitly) and
        issues ONE dense store covering rows 1..H, lanes 0..3*Cin.
        Returns K = 3*Cin.
        """
        p = pieces[0] if len(pieces) == 1 else jnp.concatenate(pieces, axis=-1)
        p = p.astype(im_ref.dtype)                          # one f32->bf16 cast
        cin = p.shape[-1]
        zcol = jnp.zeros((H, 1, cin), im_ref.dtype)
        left = jnp.concatenate([zcol, p[:, :W - 1, :]], axis=1)   # value at x-1
        right = jnp.concatenate([p[:, 1:, :], zcol], axis=1)      # value at x+1
        slab = jnp.concatenate([left, p, right], axis=-1)         # (H, W, 3*Cin)
        im_ref[1:H + 1, :, 0:3 * cin] = slab
        return 3 * cin

    def conv(k, w, b):
        """3x3 conv from the slab: 3 bf16 MXU matmuls, K = 3*Cin, f32 acc."""
        acc = jnp.dot(im_ref[0:H, :, 0:k].reshape(H * W, k), w[0],
                      preferred_element_type=jnp.float32)
        acc = acc + jnp.dot(im_ref[1:H + 1, :, 0:k].reshape(H * W, k), w[1],
                            preferred_element_type=jnp.float32)
        acc = acc + jnp.dot(im_ref[2:H + 2, :, 0:k].reshape(H * W, k), w[2],
                            preferred_element_type=jnp.float32)
        return acc + b                                      # (H*W, Cout) f32

    def relu(v):
        return jnp.maximum(v, 0.0)

    def sigmoid(v):
        # exp on the EUP + exact EUP reciprocal (approx dropped: it compounds
        # through c/h over the 6 recurrent iterations).
        return pl.reciprocal(1.0 + jnp.exp(-v))

    inp = inp_ref[0]                                        # (H, W, 3) f32

    def one_iteration(it, carry):
        x, h, c = carry                                     # (H,W,3),(H,W,32),(H,W,32)

        # x = relu(conv0(cat(input, x)))
        k = fill([inp, x])
        x = relu(conv(k, w0_ref[...], b0_ref[...])).reshape(H, W, 32)

        # Fused 4-gate conv (lanes packed [i|f|o|g]) + LSTM state update.
        k = fill([x, h])
        gates = conv(k, wg_ref[...], bg_ref[...]).reshape(H, W, 128)
        ifo = sigmoid(gates[..., 0:96])                     # one contiguous sigmoid
        i_g = ifo[..., 0:32]
        f_g = ifo[..., 32:64]
        o_g = ifo[..., 64:96]
        g_g = jnp.tanh(gates[..., 96:128])                  # one contiguous tanh
        c = f_g * c + i_g * g_g
        h = o_g * jnp.tanh(c)

        # Five residual blocks: x = relu(relu(conv_b(relu(conv_a(x)))) + x)
        def res_block(r, xr):
            kk = fill([xr])
            y = relu(conv(kk, wra_ref[r], bra_ref[r])).reshape(H, W, 32)
            kk = fill([y])
            y = relu(conv(kk, wrb_ref[r], brb_ref[r])).reshape(H, W, 32)
            return relu(y + xr)

        x = jax.lax.fori_loop(0, 5, res_block, h)

        # Final 32 -> 3 conv (no activation); also feeds the next iteration.
        k = fill([x])
        out = conv(k, wo_ref[...], bo_ref[...])             # (H*W, 3) f32
        out_ref[it] = out.reshape(1, H, W, 3)
        return out.reshape(H, W, 3), h, c

    h0 = jnp.zeros((H, W, 32), jnp.float32)
    c0 = jnp.zeros((H, W, 32), jnp.float32)
    jax.lax.fori_loop(0, iteration, one_iteration, (inp, h0, c0))


# ----------------------------------------------------------------------------
# Parameter packing (HWIO -> (3, 3*Cin, Cout) bf16 for MXU operands)
# ----------------------------------------------------------------------------
def _pack_w(w_hwio):
    kh, kw, ci, co = w_hwio.shape
    return w_hwio.reshape(kh, kw * ci, co).astype(jnp.bfloat16)


def _pack_b(b):
    return b.reshape(1, -1).astype(jnp.float32)


# ----------------------------------------------------------------------------
# Forward pass (NCHW in / NCHW out, mirrors PReNet_LSTM.forward)
# ----------------------------------------------------------------------------
def prenet_lstm_forward(params, input_nchw, iteration=6):
    B, C, H, W = input_nchw.shape
    assert C == 3
    # W should be a multiple of 8 (16 preferred for the bf16 scratch) so the
    # in-kernel (H, W, C) <-> (H*W, C) reshapes stay layout-preserving views.
    x_nhwc = jnp.transpose(input_nchw, (0, 2, 3, 1)).astype(jnp.float32)

    w0, b0 = params["conv0"]
    wi, bi = params["conv_i"]
    wf, bff = params["conv_f"]
    wg, bg = params["conv_g"]
    wo, bo = params["conv_o"]
    # Gate packing [i | f | o | g]: contiguous sigmoid (96 lanes) + tanh (32).
    w_gates = jnp.concatenate([wi, wf, wo, wg], axis=-1)    # (3,3,64,128)
    b_gates = jnp.concatenate([bi, bff, bo, bg], axis=-1)   # (128,)
    wra = jnp.stack([_pack_w(params[f"res{r}a"][0]) for r in range(1, 6)])
    bra = jnp.stack([_pack_b(params[f"res{r}a"][1]) for r in range(1, 6)])
    wrb = jnp.stack([_pack_w(params[f"res{r}b"][0]) for r in range(1, 6)])
    brb = jnp.stack([_pack_b(params[f"res{r}b"][1]) for r in range(1, 6)])
    w_out, b_out = params["conv_out"]

    weight_args = (_pack_w(w0), _pack_b(b0),
                   _pack_w(w_gates), _pack_b(b_gates),
                   wra, bra, wrb, brb,
                   _pack_w(w_out), _pack_b(b_out))

    def wspec(shape):
        nd = len(shape)
        return pl.BlockSpec(shape, lambda b, _nd=nd: (0,) * _nd)

    in_specs = [pl.BlockSpec((1, H, W, 3), lambda b: (b, 0, 0, 0))]
    in_specs += [wspec(tuple(a.shape)) for a in weight_args]

    # Scoped-VMEM budget: im2col scratch + weights + I/O blocks + headroom
    # (default scoped limit is only 16 MiB on v5e / 32 MiB on v6e and v7x).
    scratch_bytes = (H + 2) * W * 192 * 2
    weight_bytes = sum(int(np.prod(a.shape)) * a.dtype.itemsize
                       for a in weight_args)
    io_bytes = 2 * H * W * 3 * 4 * (1 + iteration)
    vmem_limit = int(min(127 << 20,
                         max(32 << 20,
                             scratch_bytes + weight_bytes + io_bytes + (8 << 20))))

    kernel = functools.partial(_prenet_kernel, H=H, W=W, iteration=iteration)

    xlist_nhwc = pl.pallas_call(
        kernel,
        out_shape=jax.ShapeDtypeStruct((iteration, B, H, W, 3), jnp.float32),
        grid=(B,),
        in_specs=in_specs,
        out_specs=pl.BlockSpec((iteration, 1, H, W, 3),
                               lambda b: (0, b, 0, 0, 0)),
        scratch_shapes=[
            # Shared dx-folded im2col scratch (bf16), aliased by every conv:
            # lanes 0:3*Cin in use; rows 0 and H+1 are the zero halo.
            pltpu.VMEM((H + 2, W, 192), jnp.bfloat16),
        ],
        compiler_params=pltpu.CompilerParams(
            dimension_semantics=("parallel",),
            vmem_limit_bytes=vmem_limit),
    )(x_nhwc, *weight_args)

    xlist_nchw = jnp.transpose(xlist_nhwc, (0, 1, 4, 2, 3))  # (ITER,B,3,H,W)
    x_list = [xlist_nchw[i] for i in range(iteration)]
    return x_list[-1], x_list


# ----------------------------------------------------------------------------
# Deterministic parameter init (shapes from PReNet_LSTM.__init__)
# ----------------------------------------------------------------------------
def init_params(key):
    def conv_init(k, cin, cout):
        k1, k2 = jax.random.split(k)
        bound = 1.0 / np.sqrt(cin * 9)  # PyTorch-style fan_in bound
        w = jax.random.uniform(k1, (3, 3, cin, cout), jnp.float32, -bound, bound)
        b = jax.random.uniform(k2, (cout,), jnp.float32, -bound, bound)
        return (w, b)

    layer_defs = [("conv0", 6, 32)]
    for r in range(1, 6):
        layer_defs += [(f"res{r}a", 32, 32), (f"res{r}b", 32, 32)]
    layer_defs += [("conv_i", 64, 32), ("conv_f", 64, 32),
                   ("conv_g", 64, 32), ("conv_o", 64, 32),
                   ("conv_out", 32, 3)]

    keys = jax.random.split(key, len(layer_defs))
    return {name: conv_init(k, cin, cout)
            for k, (name, cin, cout) in zip(keys, layer_defs)}


# ----------------------------------------------------------------------------
# Main
# ----------------------------------------------------------------------------
if __name__ == "__main__":
    key = jax.random.PRNGKey(0)
    pkey, xkey = jax.random.split(key)

    params = init_params(pkey)

    B, C, H, W = 2, 3, 16, 16                     # NCHW, matching PyTorch input
    x_nchw = jax.random.normal(xkey, (B, C, H, W), jnp.float32)

    fwd = jax.jit(prenet_lstm_forward, static_argnums=(2,))
    out, out_list = fwd(params, x_nchw, 6)

    jax.block_until_ready(out)
    jax.block_until_ready(out_list)

    assert out.shape == (B, 3, H, W)
    assert len(out_list) == 6
    assert all(o.shape == (B, 3, H, W) for o in out_list)
    assert bool(jnp.all(jnp.isfinite(out)))

    print("KERNEL_OK")
</pallas_src>

<mosaic_0001>
module attributes {stable_mosaic.version = 11 : i64} {
  func.func @_prenet_kernel(%arg0: i32, %arg1: memref<1x16x16x3xf32, #tpu.memory_space<vmem>>, %arg2: memref<3x18x32xbf16, #tpu.memory_space<vmem>>, %arg3: memref<1x32xf32, #tpu.memory_space<vmem>>, %arg4: memref<3x192x128xbf16, #tpu.memory_space<vmem>>, %arg5: memref<1x128xf32, #tpu.memory_space<vmem>>, %arg6: memref<5x3x96x32xbf16, #tpu.memory_space<vmem>>, %arg7: memref<5x1x32xf32, #tpu.memory_space<vmem>>, %arg8: memref<5x3x96x32xbf16, #tpu.memory_space<vmem>>, %arg9: memref<5x1x32xf32, #tpu.memory_space<vmem>>, %arg10: memref<3x96x3xbf16, #tpu.memory_space<vmem>>, %arg11: memref<1x3xf32, #tpu.memory_space<vmem>>, %arg12: memref<6x1x16x16x3xf32, #tpu.memory_space<vmem>>, %arg13: memref<18x16x192xbf16, #tpu.memory_space<vmem>>) attributes {dimension_semantics = [#tpu.dimension_semantics<parallel>], iteration_bounds = array<i64: 2>, scalar_prefetch = 0 : i64, scratch_operands = 1 : i64, tpu.core_type = #tpu.core_type<tc>, window_params = [{transform_indices = @transform_0, window_bounds = array<i64: 1, 16, 16, 3>}, {pipeline_mode = #tpu.pipeline_mode<synchronous>, transform_indices = @transform_1, window_bounds = array<i64: 3, 18, 32>}, {pipeline_mode = #tpu.pipeline_mode<synchronous>, transform_indices = @transform_2, window_bounds = array<i64: 1, 32>}, {pipeline_mode = #tpu.pipeline_mode<synchronous>, transform_indices = @transform_3, window_bounds = array<i64: 3, 192, 128>}, {pipeline_mode = #tpu.pipeline_mode<synchronous>, transform_indices = @transform_4, window_bounds = array<i64: 1, 128>}, {pipeline_mode = #tpu.pipeline_mode<synchronous>, transform_indices = @transform_5, window_bounds = array<i64: 5, 3, 96, 32>}, {pipeline_mode = #tpu.pipeline_mode<synchronous>, transform_indices = @transform_6, window_bounds = array<i64: 5, 1, 32>}, {pipeline_mode = #tpu.pipeline_mode<synchronous>, transform_indices = @transform_7, window_bounds = array<i64: 5, 3, 96, 32>}, {pipeline_mode = #tpu.pipeline_mode<synchronous>, transform_indices = @transform_8, window_bounds = array<i64: 5, 1, 32>}, {pipeline_mode = #tpu.pipeline_mode<synchronous>, transform_indices = @transform_9, window_bounds = array<i64: 3, 96, 3>}, {pipeline_mode = #tpu.pipeline_mode<synchronous>, transform_indices = @transform_10, window_bounds = array<i64: 1, 3>}, {transform_indices = @transform_11, window_bounds = array<i64: 6, 1, 16, 16, 3>}]} {
    %cst = arith.constant 0.000000e+00 : bf16
    %0 = vector.broadcast %cst : bf16 to vector<1x16x192xbf16>
    %c0 = arith.constant 0 : index
    %c0_0 = arith.constant 0 : index
    %c0_1 = arith.constant 0 : index
    %1 = vector.load %arg13[%c0, %c0_0, %c0_1] : memref<18x16x192xbf16, #tpu.memory_space<vmem>>, vector<1x16x192xbf16>
    tpu.vector_store %arg13[%c0, %c0_0, %c0_1], %0 {strides = array<i32>} : memref<18x16x192xbf16, #tpu.memory_space<vmem>>, vector<1x16x192xbf16>,
    %c17 = arith.constant 17 : index
    %c0_2 = arith.constant 0 : index
    %c0_3 = arith.constant 0 : index
    %2 = vector.load %arg13[%c17, %c0_2, %c0_3] : memref<18x16x192xbf16, #tpu.memory_space<vmem>>, vector<1x16x192xbf16>
    tpu.vector_store %arg13[%c17, %c0_2, %c0_3], %0 {strides = array<i32>} : memref<18x16x192xbf16, #tpu.memory_space<vmem>>, vector<1x16x192xbf16>,
    %c0_4 = arith.constant 0 : index
    %c0_5 = arith.constant 0 : index
    %c0_6 = arith.constant 0 : index
    %c0_7 = arith.constant 0 : index
    %3 = vector.load %arg1[%c0_4, %c0_5, %c0_6, %c0_7] : memref<1x16x16x3xf32, #tpu.memory_space<vmem>>, vector<1x16x16x3xf32>
    %4 = vector.shape_cast %3 : vector<1x16x16x3xf32> to vector<16x16x3xf32>
    %cst_8 = arith.constant 0.000000e+00 : f32
    %5 = vector.broadcast %cst_8 : f32 to vector<16x16x32xf32>
    %cst_9 = arith.constant 0.000000e+00 : f32
    %6 = vector.broadcast %cst_9 : f32 to vector<16x16x32xf32>
    %c0_i32 = arith.constant 0 : i32
    %c6_i32 = arith.constant 6 : i32
    %7 = arith.addi %c0_i32, %c6_i32 : i32
    %c1_i32 = arith.constant 1 : i32
    %8:3 = scf.for %arg14 = %c0_i32 to %7 step %c1_i32 iter_args(%arg15 = %4, %arg16 = %5, %arg17 = %6) -> (vector<16x16x3xf32>, vector<16x16x32xf32>, vector<16x16x32xf32>)  : i32 {
      %9 = tpu.concatenate %4, %arg15 in 2 : vector<16x16x3xf32>, vector<16x16x3xf32> -> vector<16x16x6xf32>
      %10 = arith.truncf %9 : vector<16x16x6xf32> to vector<16x16x6xbf16>
      %cst_11 = arith.constant 0.000000e+00 : bf16
      %11 = vector.broadcast %cst_11 : bf16 to vector<16x1x6xbf16>
      %12 = vector.extract_strided_slice %10 {offsets = [0, 0, 0], sizes = [16, 15, 6], strides = [1, 1, 1]} : vector<16x16x6xbf16> to vector<16x15x6xbf16>
      %13 = tpu.concatenate %11, %12 in 1 : vector<16x1x6xbf16>, vector<16x15x6xbf16> -> vector<16x16x6xbf16>
      %14 = vector.extract_strided_slice %10 {offsets = [0, 1, 0], sizes = [16, 15, 6], strides = [1, 1, 1]} : vector<16x16x6xbf16> to vector<16x15x6xbf16>
      %15 = tpu.concatenate %14, %11 in 1 : vector<16x15x6xbf16>, vector<16x1x6xbf16> -> vector<16x16x6xbf16>
      %16 = tpu.concatenate %13, %10, %15 in 2 : vector<16x16x6xbf16>, vector<16x16x6xbf16>, vector<16x16x6xbf16> -> vector<16x16x18xbf16>
      %c1 = arith.constant 1 : index
      %c0_12 = arith.constant 0 : index
      %c0_13 = arith.constant 0 : index
      %17 = vector.load %arg13[%c1, %c0_12, %c0_13] : memref<18x16x192xbf16, #tpu.memory_space<vmem>>, vector<16x16x18xbf16>
      tpu.vector_store %arg13[%c1, %c0_12, %c0_13], %16 {strides = array<i32>} : memref<18x16x192xbf16, #tpu.memory_space<vmem>>, vector<16x16x18xbf16>,
      %c0_14 = arith.constant 0 : index
      %c0_15 = arith.constant 0 : index
      %c0_16 = arith.constant 0 : index
      %18 = vector.load %arg2[%c0_14, %c0_15, %c0_16] : memref<3x18x32xbf16, #tpu.memory_space<vmem>>, vector<3x18x32xbf16>
      %c0_17 = arith.constant 0 : index
      %c0_18 = arith.constant 0 : index
      %19 = vector.load %arg3[%c0_17, %c0_18] : memref<1x32xf32, #tpu.memory_space<vmem>>, vector<1x32xf32>
      %c0_19 = arith.constant 0 : index
      %c0_20 = arith.constant 0 : index
      %c0_21 = arith.constant 0 : index
      %20 = vector.load %arg13[%c0_19, %c0_20, %c0_21] : memref<18x16x192xbf16, #tpu.memory_space<vmem>>, vector<16x16x18xbf16>
      %21 = vector.shape_cast %20 : vector<16x16x18xbf16> to vector<256x18xbf16>
      %22 = vector.extract_strided_slice %18 {offsets = [0, 0, 0], sizes = [1, 18, 32], strides = [1, 1, 1]} : vector<3x18x32xbf16> to vector<1x18x32xbf16>
      %23 = vector.shape_cast %22 : vector<1x18x32xbf16> to vector<18x32xbf16>
      %cst_22 = arith.constant dense<0.000000e+00> : vector<256x32xf32>
      %24 = tpu.matmul %21, %23, %cst_22 {dimension_numbers = #tpu.dot_dimension_numbers<[1], [0], [0], [1], [0, 0, 1, 1], [], []>} : vector<256x18xbf16>, vector<18x32xbf16>, vector<256x32xf32> -> vector<256x32xf32>
      %c1_23 = arith.constant 1 : index
      %c0_24 = arith.constant 0 : index
      %c0_25 = arith.constant 0 : index
      %25 = vector.load %arg13[%c1_23, %c0_24, %c0_25] : memref<18x16x192xbf16, #tpu.memory_space<vmem>>, vector<16x16x18xbf16>
      %26 = vector.shape_cast %25 : vector<16x16x18xbf16> to vector<256x18xbf16>
      %27 = vector.extract_strided_slice %18 {offsets = [1, 0, 0], sizes = [1, 18, 32], strides = [1, 1, 1]} : vector<3x18x32xbf16> to vector<1x18x32xbf16>
      %28 = vector.shape_cast %27 : vector<1x18x32xbf16> to vector<18x32xbf16>
      %cst_26 = arith.constant dense<0.000000e+00> : vector<256x32xf32>
      %29 = tpu.matmul %26, %28, %cst_26 {dimension_numbers = #tpu.dot_dimension_numbers<[1], [0], [0], [1], [0, 0, 1, 1], [], []>} : vector<256x18xbf16>, vector<18x32xbf16>, vector<256x32xf32> -> vector<256x32xf32>
      %30 = arith.addf %24, %29 : vector<256x32xf32>
      %c2 = arith.constant 2 : index
      %c0_27 = arith.constant 0 : index
      %c0_28 = arith.constant 0 : index
      %31 = vector.load %arg13[%c2, %c0_27, %c0_28] : memref<18x16x192xbf16, #tpu.memory_space<vmem>>, vector<16x16x18xbf16>
      %32 = vector.shape_cast %31 : vector<16x16x18xbf16> to vector<256x18xbf16>
      %33 = vector.extract_strided_slice %18 {offsets = [2, 0, 0], sizes = [1, 18, 32], strides = [1, 1, 1]} : vector<3x18x32xbf16> to vector<1x18x32xbf16>
      %34 = vector.shape_cast %33 : vector<1x18x32xbf16> to vector<18x32xbf16>
      %cst_29 = arith.constant dense<0.000000e+00> : vector<256x32xf32>
      %35 = tpu.matmul %32, %34, %cst_29 {dimension_numbers = #tpu.dot_dimension_numbers<[1], [0], [0], [1], [0, 0, 1, 1], [], []>} : vector<256x18xbf16>, vector<18x32xbf16>, vector<256x32xf32> -> vector<256x32xf32>
      %36 = arith.addf %30, %35 : vector<256x32xf32>
      %37 = vector.broadcast %19 : vector<1x32xf32> to vector<256x32xf32>
      %38 = arith.addf %36, %37 : vector<256x32xf32>
      %cst_30 = arith.constant 0.000000e+00 : f32
      %39 = vector.broadcast %cst_30 : f32 to vector<256x32xf32>
      %40 = arith.maximumf %38, %39 : vector<256x32xf32>
      %41 = vector.shape_cast %40 : vector<256x32xf32> to vector<16x16x32xf32>
      %42 = tpu.concatenate %41, %arg16 in 2 : vector<16x16x32xf32>, vector<16x16x32xf32> -> vector<16x16x64xf32>
      %43 = arith.truncf %42 : vector<16x16x64xf32> to vector<16x16x64xbf16>
      %cst_31 = arith.constant 0.000000e+00 : bf16
      %44 = vector.broadcast %cst_31 : bf16 to vector<16x1x64xbf16>
      %45 = vector.extract_strided_slice %43 {offsets = [0, 0, 0], sizes = [16, 15, 64], strides = [1, 1, 1]} : vector<16x16x64xbf16> to vector<16x15x64xbf16>
      %46 = tpu.concatenate %44, %45 in 1 : vector<16x1x64xbf16>, vector<16x15x64xbf16> -> vector<16x16x64xbf16>
      %47 = vector.extract_strided_slice %43 {offsets = [0, 1, 0], sizes = [16, 15, 64], strides = [1, 1, 1]} : vector<16x16x64xbf16> to vector<16x15x64xbf16>
      %48 = tpu.concatenate %47, %44 in 1 : vector<16x15x64xbf16>, vector<16x1x64xbf16> -> vector<16x16x64xbf16>
      %49 = tpu.concatenate %46, %43, %48 in 2 : vector<16x16x64xbf16>, vector<16x16x64xbf16>, vector<16x16x64xbf16> -> vector<16x16x192xbf16>
      %c1_32 = arith.constant 1 : index
      %c0_33 = arith.constant 0 : index
      %c0_34 = arith.constant 0 : index
      %50 = vector.load %arg13[%c1_32, %c0_33, %c0_34] : memref<18x16x192xbf16, #tpu.memory_space<vmem>>, vector<16x16x192xbf16>
      tpu.vector_store %arg13[%c1_32, %c0_33, %c0_34], %49 {strides = array<i32>} : memref<18x16x192xbf16, #tpu.memory_space<vmem>>, vector<16x16x192xbf16>,
      %c0_35 = arith.constant 0 : index
      %c0_36 = arith.constant 0 : index
      %c0_37 = arith.constant 0 : index
      %51 = vector.load %arg4[%c0_35, %c0_36, %c0_37] : memref<3x192x128xbf16, #tpu.memory_space<vmem>>, vector<3x192x128xbf16>
      %c0_38 = arith.constant 0 : index
      %c0_39 = arith.constant 0 : index
      %52 = vector.load %arg5[%c0_38, %c0_39] : memref<1x128xf32, #tpu.memory_space<vmem>>, vector<1x128xf32>
      %c0_40 = arith.constant 0 : index
      %c0_41 = arith.constant 0 : index
      %c0_42 = arith.constant 0 : index
      %53 = vector.load %arg13[%c0_40, %c0_41, %c0_42] : memref<18x16x192xbf16, #tpu.memory_space<vmem>>, vector<16x16x192xbf16>
      %54 = vector.shape_cast %53 : vector<16x16x192xbf16> to vector<256x192xbf16>
      %55 = vector.extract_strided_slice %51 {offsets = [0, 0, 0], sizes = [1, 192, 128], strides = [1, 1, 1]} : vector<3x192x128xbf16> to vector<1x192x128xbf16>
      %56 = vector.shape_cast %55 : vector<1x192x128xbf16> to vector<192x128xbf16>
      %cst_43 = arith.constant dense<0.000000e+00> : vector<256x128xf32>
      %57 = tpu.matmul %54, %56, %cst_43 {dimension_numbers = #tpu.dot_dimension_numbers<[1], [0], [0], [1], [0, 0, 1, 1], [], []>} : vector<256x192xbf16>, vector<192x128xbf16>, vector<256x128xf32> -> vector<256x128xf32>
      %c1_44 = arith.constant 1 : index
      %c0_45 = arith.constant 0 : index
      %c0_46 = arith.constant 0 : index
      %58 = vector.load %arg13[%c1_44, %c0_45, %c0_46] : memref<18x16x192xbf16, #tpu.memory_space<vmem>>, vector<16x16x192xbf16>
      %59 = vector.shape_cast %58 : vector<16x16x192xbf16> to vector<256x192xbf16>
      %60 = vector.extract_strided_slice %51 {offsets = [1, 0, 0], sizes = [1, 192, 128], strides = [1, 1, 1]} : vector<3x192x128xbf16> to vector<1x192x128xbf16>
      %61 = vector.shape_cast %60 : vector<1x192x128xbf16> to vector<192x128xbf16>
      %cst_47 = arith.constant dense<0.000000e+00> : vector<256x128xf32>
      %62 = tpu.matmul %59, %61, %cst_47 {dimension_numbers = #tpu.dot_dimension_numbers<[1], [0], [0], [1], [0, 0, 1, 1], [], []>} : vector<256x192xbf16>, vector<192x128xbf16>, vector<256x128xf32> -> vector<256x128xf32>
      %63 = arith.addf %57, %62 : vector<256x128xf32>
      %c2_48 = arith.constant 2 : index
      %c0_49 = arith.constant 0 : index
      %c0_50 = arith.constant 0 : index
      %64 = vector.load %arg13[%c2_48, %c0_49, %c0_50] : memref<18x16x192xbf16, #tpu.memory_space<vmem>>, vector<16x16x192xbf16>
      %65 = vector.shape_cast %64 : vector<16x16x192xbf16> to vector<256x192xbf16>
      %66 = vector.extract_strided_slice %51 {offsets = [2, 0, 0], sizes = [1, 192, 128], strides = [1, 1, 1]} : vector<3x192x128xbf16> to vector<1x192x128xbf16>
      %67 = vector.shape_cast %66 : vector<1x192x128xbf16> to vector<192x128xbf16>
      %cst_51 = arith.constant dense<0.000000e+00> : vector<256x128xf32>
      %68 = tpu.matmul %65, %67, %cst_51 {dimension_numbers = #tpu.dot_dimension_numbers<[1], [0], [0], [1], [0, 0, 1, 1], [], []>} : vector<256x192xbf16>, vector<192x128xbf16>, vector<256x128xf32> -> vector<256x128xf32>
      %69 = arith.addf %63, %68 : vector<256x128xf32>
      %70 = vector.broadcast %52 : vector<1x128xf32> to vector<256x128xf32>
      %71 = arith.addf %69, %70 : vector<256x128xf32>
      %72 = vector.shape_cast %71 : vector<256x128xf32> to vector<16x16x128xf32>
      %73 = vector.extract_strided_slice %72 {offsets = [0, 0, 0], sizes = [16, 16, 96], strides = [1, 1, 1]} : vector<16x16x128xf32> to vector<16x16x96xf32>
      %cst_52 = arith.constant 0.000000e+00 : f32
      %74 = vector.broadcast %cst_52 : f32 to vector<16x16x96xf32>
      %75 = arith.subf %74, %73 : vector<16x16x96xf32>
      %76 = math.exp %75 : vector<16x16x96xf32>
      %cst_53 = arith.constant 1.000000e+00 : f32
      %77 = vector.broadcast %cst_53 : f32 to vector<16x16x96xf32>
      %78 = arith.addf %77, %76 : vector<16x16x96xf32>
      %79 = tpu.reciprocal %78 : vector<16x16x96xf32> -> vector<16x16x96xf32>
      %80 = vector.extract_strided_slice %79 {offsets = [0, 0, 0], sizes = [16, 16, 32], strides = [1, 1, 1]} : vector<16x16x96xf32> to vector<16x16x32xf32>
      %81 = vector.extract_strided_slice %79 {offsets = [0, 0, 32], sizes = [16, 16, 32], strides = [1, 1, 1]} : vector<16x16x96xf32> to vector<16x16x32xf32>
      %82 = vector.extract_strided_slice %79 {offsets = [0, 0, 64], sizes = [16, 16, 32], strides = [1, 1, 1]} : vector<16x16x96xf32> to vector<16x16x32xf32>
      %83 = vector.extract_strided_slice %72 {offsets = [0, 0, 96], sizes = [16, 16, 32], strides = [1, 1, 1]} : vector<16x16x128xf32> to vector<16x16x32xf32>
      %84 = math.tanh %83 : vector<16x16x32xf32>
      %85 = arith.mulf %81, %arg17 : vector<16x16x32xf32>
      %86 = arith.mulf %80, %84 : vector<16x16x32xf32>
      %87 = arith.addf %85, %86 : vector<16x16x32xf32>
      %88 = math.tanh %87 : vector<16x16x32xf32>
      %89 = arith.mulf %82, %88 : vector<16x16x32xf32>
      %c0_i32_54 = arith.constant 0 : i32
      %c5_i32 = arith.constant 5 : i32
      %90 = arith.addi %c0_i32_54, %c5_i32 : i32
      %c1_i32_55 = arith.constant 1 : i32
      %91 = scf.for %arg18 = %c0_i32_54 to %90 step %c1_i32_55 iter_args(%arg19 = %89) -> (vector<16x16x32xf32>)  : i32 {
        %127 = arith.truncf %arg19 : vector<16x16x32xf32> to vector<16x16x32xbf16>
        %cst_82 = arith.constant 0.000000e+00 : bf16
        %128 = vector.broadcast %cst_82 : bf16 to vector<16x1x32xbf16>
        %129 = vector.extract_strided_slice %127 {offsets = [0, 0, 0], sizes = [16, 15, 32], strides = [1, 1, 1]} : vector<16x16x32xbf16> to vector<16x15x32xbf16>
        %130 = tpu.concatenate %128, %129 in 1 : vector<16x1x32xbf16>, vector<16x15x32xbf16> -> vector<16x16x32xbf16>
        %131 = vector.extract_strided_slice %127 {offsets = [0, 1, 0], sizes = [16, 15, 32], strides = [1, 1, 1]} : vector<16x16x32xbf16> to vector<16x15x32xbf16>
        %132 = tpu.concatenate %131, %128 in 1 : vector<16x15x32xbf16>, vector<16x1x32xbf16> -> vector<16x16x32xbf16>
        %133 = tpu.concatenate %130, %127, %132 in 2 : vector<16x16x32xbf16>, vector<16x16x32xbf16>, vector<16x16x32xbf16> -> vector<16x16x96xbf16>
        %c1_83 = arith.constant 1 : index
        %c0_84 = arith.constant 0 : index
        %c0_85 = arith.constant 0 : index
        %134 = vector.load %arg13[%c1_83, %c0_84, %c0_85] : memref<18x16x192xbf16, #tpu.memory_space<vmem>>, vector<16x16x96xbf16>
        tpu.vector_store %arg13[%c1_83, %c0_84, %c0_85], %133 {strides = array<i32>} : memref<18x16x192xbf16, #tpu.memory_space<vmem>>, vector<16x16x96xbf16>,
        %135 = arith.index_cast %arg18 : i32 to index
        %c0_86 = arith.constant 0 : index
        %c0_87 = arith.constant 0 : index
        %c0_88 = arith.constant 0 : index
        %136 = vector.load %arg6[%135, %c0_86, %c0_87, %c0_88] : memref<5x3x96x32xbf16, #tpu.memory_space<vmem>>, vector<1x3x96x32xbf16>
        %137 = vector.shape_cast %136 : vector<1x3x96x32xbf16> to vector<3x96x32xbf16>
        %138 = arith.index_cast %arg18 : i32 to index
        %c0_89 = arith.constant 0 : index
        %c0_90 = arith.constant 0 : index
        %139 = vector.load %arg7[%138, %c0_89, %c0_90] : memref<5x1x32xf32, #tpu.memory_space<vmem>>, vector<1x1x32xf32>
        %140 = vector.shape_cast %139 : vector<1x1x32xf32> to vector<1x32xf32>
        %c0_91 = arith.constant 0 : index
        %c0_92 = arith.constant 0 : index
        %c0_93 = arith.constant 0 : index
        %141 = vector.load %arg13[%c0_91, %c0_92, %c0_93] : memref<18x16x192xbf16, #tpu.memory_space<vmem>>, vector<16x16x96xbf16>
        %142 = vector.shape_cast %141 : vector<16x16x96xbf16> to vector<256x96xbf16>
        %143 = vector.extract_strided_slice %137 {offsets = [0, 0, 0], sizes = [1, 96, 32], strides = [1, 1, 1]} : vector<3x96x32xbf16> to vector<1x96x32xbf16>
        %144 = vector.shape_cast %143 : vector<1x96x32xbf16> to vector<96x32xbf16>
        %cst_94 = arith.constant dense<0.000000e+00> : vector<256x32xf32>
        %145 = tpu.matmul %142, %144, %cst_94 {dimension_numbers = #tpu.dot_dimension_numbers<[1], [0], [0], [1], [0, 0, 1, 1], [], []>} : vector<256x96xbf16>, vector<96x32xbf16>, vector<256x32xf32> -> vector<256x32xf32>
        %c1_95 = arith.constant 1 : index
        %c0_96 = arith.constant 0 : index
        %c0_97 = arith.constant 0 : index
        %146 = vector.load %arg13[%c1_95, %c0_96, %c0_97] : memref<18x16x192xbf16, #tpu.memory_space<vmem>>, vector<16x16x96xbf16>
        %147 = vector.shape_cast %146 : vector<16x16x96xbf16> to vector<256x96xbf16>
        %148 = vector.extract_strided_slice %137 {offsets = [1, 0, 0], sizes = [1, 96, 32], strides = [1, 1, 1]} : vector<3x96x32xbf16> to vector<1x96x32xbf16>
        %149 = vector.shape_cast %148 : vector<1x96x32xbf16> to vector<96x32xbf16>
        %cst_98 = arith.constant dense<0.000000e+00> : vector<256x32xf32>
        %150 = tpu.matmul %147, %149, %cst_98 {dimension_numbers = #tpu.dot_dimension_numbers<[1], [0], [0], [1], [0, 0, 1, 1], [], []>} : vector<256x96xbf16>, vector<96x32xbf16>, vector<256x32xf32> -> vector<256x32xf32>
        %151 = arith.addf %145, %150 : vector<256x32xf32>
        %c2_99 = arith.constant 2 : index
        %c0_100 = arith.constant 0 : index
        %c0_101 = arith.constant 0 : index
        %152 = vector.load %arg13[%c2_99, %c0_100, %c0_101] : memref<18x16x192xbf16, #tpu.memory_space<vmem>>, vector<16x16x96xbf16>
        %153 = vector.shape_cast %152 : vector<16x16x96xbf16> to vector<256x96xbf16>
        %154 = vector.extract_strided_slice %137 {offsets = [2, 0, 0], sizes = [1, 96, 32], strides = [1, 1, 1]} : vector<3x96x32xbf16> to vector<1x96x32xbf16>
        %155 = vector.shape_cast %154 : vector<1x96x32xbf16> to vector<96x32xbf16>
        %cst_102 = arith.constant dense<0.000000e+00> : vector<256x32xf32>
        %156 = tpu.matmul %153, %155, %cst_102 {dimension_numbers = #tpu.dot_dimension_numbers<[1], [0], [0], [1], [0, 0, 1, 1], [], []>} : vector<256x96xbf16>, vector<96x32xbf16>, vector<256x32xf32> -> vector<256x32xf32>
        %157 = arith.addf %151, %156 : vector<256x32xf32>
        %158 = vector.broadcast %140 : vector<1x32xf32> to vector<256x32xf32>
        %159 = arith.addf %157, %158 : vector<256x32xf32>
        %cst_103 = arith.constant 0.000000e+00 : f32
        %160 = vector.broadcast %cst_103 : f32 to vector<256x32xf32>
        %161 = arith.maximumf %159, %160 : vector<256x32xf32>
        %162 = vector.shape_cast %161 : vector<256x32xf32> to vector<16x16x32xf32>
        %163 = arith.truncf %162 : vector<16x16x32xf32> to vector<16x16x32xbf16>
        %cst_104 = arith.constant 0.000000e+00 : bf16
        %164 = vector.broadcast %cst_104 : bf16 to vector<16x1x32xbf16>
        %165 = vector.extract_strided_slice %163 {offsets = [0, 0, 0], sizes = [16, 15, 32], strides = [1, 1, 1]} : vector<16x16x32xbf16> to vector<16x15x32xbf16>
        %166 = tpu.concatenate %164, %165 in 1 : vector<16x1x32xbf16>, vector<16x15x32xbf16> -> vector<16x16x32xbf16>
        %167 = vector.extract_strided_slice %163 {offsets = [0, 1, 0], sizes = [16, 15, 32], strides = [1, 1, 1]} : vector<16x16x32xbf16> to vector<16x15x32xbf16>
        %168 = tpu.concatenate %167, %164 in 1 : vector<16x15x32xbf16>, vector<16x1x32xbf16> -> vector<16x16x32xbf16>
        %169 = tpu.concatenate %166, %163, %168 in 2 : vector<16x16x32xbf16>, vector<16x16x32xbf16>, vector<16x16x32xbf16> -> vector<16x16x96xbf16>
        %c1_105 = arith.constant 1 : index
        %c0_106 = arith.constant 0 : index
        %c0_107 = arith.constant 0 : index
        %170 = vector.load %arg13[%c1_105, %c0_106, %c0_107] : memref<18x16x192xbf16, #tpu.memory_space<vmem>>, vector<16x16x96xbf16>
        tpu.vector_store %arg13[%c1_105, %c0_106, %c0_107], %169 {strides = array<i32>} : memref<18x16x192xbf16, #tpu.memory_space<vmem>>, vector<16x16x96xbf16>,
        %171 = arith.index_cast %arg18 : i32 to index
        %c0_108 = arith.constant 0 : index
        %c0_109 = arith.constant 0 : index
        %c0_110 = arith.constant 0 : index
        %172 = vector.load %arg8[%171, %c0_108, %c0_109, %c0_110] : memref<5x3x96x32xbf16, #tpu.memory_space<vmem>>, vector<1x3x96x32xbf16>
        %173 = vector.shape_cast %172 : vector<1x3x96x32xbf16> to vector<3x96x32xbf16>
        %174 = arith.index_cast %arg18 : i32 to index
        %c0_111 = arith.constant 0 : index
        %c0_112 = arith.constant 0 : index
        %175 = vector.load %arg9[%174, %c0_111, %c0_112] : memref<5x1x32xf32, #tpu.memory_space<vmem>>, vector<1x1x32xf32>
        %176 = vector.shape_cast %175 : vector<1x1x32xf32> to vector<1x32xf32>
        %c0_113 = arith.constant 0 : index
        %c0_114 = arith.constant 0 : index
        %c0_115 = arith.constant 0 : index
        %177 = vector.load %arg13[%c0_113, %c0_114, %c0_115] : memref<18x16x192xbf16, #tpu.memory_space<vmem>>, vector<16x16x96xbf16>
        %178 = vector.shape_cast %177 : vector<16x16x96xbf16> to vector<256x96xbf16>
        %179 = vector.extract_strided_slice %173 {offsets = [0, 0, 0], sizes = [1, 96, 32], strides = [1, 1, 1]} : vector<3x96x32xbf16> to vector<1x96x32xbf16>
        %180 = vector.shape_cast %179 : vector<1x96x32xbf16> to vector<96x32xbf16>
        %cst_116 = arith.constant dense<0.000000e+00> : vector<256x32xf32>
        %181 = tpu.matmul %178, %180, %cst_116 {dimension_numbers = #tpu.dot_dimension_numbers<[1], [0], [0], [1], [0, 0, 1, 1], [], []>} : vector<256x96xbf16>, vector<96x32xbf16>, vector<256x32xf32> -> vector<256x32xf32>
        %c1_117 = arith.constant 1 : index
        %c0_118 = arith.constant 0 : index
        %c0_119 = arith.constant 0 : index
        %182 = vector.load %arg13[%c1_117, %c0_118, %c0_119] : memref<18x16x192xbf16, #tpu.memory_space<vmem>>, vector<16x16x96xbf16>
        %183 = vector.shape_cast %182 : vector<16x16x96xbf16> to vector<256x96xbf16>
        %184 = vector.extract_strided_slice %173 {offsets = [1, 0, 0], sizes = [1, 96, 32], strides = [1, 1, 1]} : vector<3x96x32xbf16> to vector<1x96x32xbf16>
        %185 = vector.shape_cast %184 : vector<1x96x32xbf16> to vector<96x32xbf16>
        %cst_120 = arith.constant dense<0.000000e+00> : vector<256x32xf32>
        %186 = tpu.matmul %183, %185, %cst_120 {dimension_numbers = #tpu.dot_dimension_numbers<[1], [0], [0], [1], [0, 0, 1, 1], [], []>} : vector<256x96xbf16>, vector<96x32xbf16>, vector<256x32xf32> -> vector<256x32xf32>
        %187 = arith.addf %181, %186 : vector<256x32xf32>
        %c2_121 = arith.constant 2 : index
        %c0_122 = arith.constant 0 : index
        %c0_123 = arith.constant 0 : index
        %188 = vector.load %arg13[%c2_121, %c0_122, %c0_123] : memref<18x16x192xbf16, #tpu.memory_space<vmem>>, vector<16x16x96xbf16>
        %189 = vector.shape_cast %188 : vector<16x16x96xbf16> to vector<256x96xbf16>
        %190 = vector.extract_strided_slice %173 {offsets = [2, 0, 0], sizes = [1, 96, 32], strides = [1, 1, 1]} : vector<3x96x32xbf16> to vector<1x96x32xbf16>
        %191 = vector.shape_cast %190 : vector<1x96x32xbf16> to vector<96x32xbf16>
        %cst_124 = arith.constant dense<0.000000e+00> : vector<256x32xf32>
        %192 = tpu.matmul %189, %191, %cst_124 {dimension_numbers = #tpu.dot_dimension_numbers<[1], [0], [0], [1], [0, 0, 1, 1], [], []>} : vector<256x96xbf16>, vector<96x32xbf16>, vector<256x32xf32> -> vector<256x32xf32>
        %193 = arith.addf %187, %192 : vector<256x32xf32>
        %194 = vector.broadcast %176 : vector<1x32xf32> to vector<256x32xf32>
        %195 = arith.addf %193, %194 : vector<256x32xf32>
        %cst_125 = arith.constant 0.000000e+00 : f32
        %196 = vector.broadcast %cst_125 : f32 to vector<256x32xf32>
        %197 = arith.maximumf %195, %196 : vector<256x32xf32>
        %198 = vector.shape_cast %197 : vector<256x32xf32> to vector<16x16x32xf32>
        %199 = arith.addf %198, %arg19 : vector<16x16x32xf32>
        %cst_126 = arith.constant 0.000000e+00 : f32
        %200 = vector.broadcast %cst_126 : f32 to vector<16x16x32xf32>
        %201 = arith.maximumf %199, %200 : vector<16x16x32xf32>
        scf.yield %201 : vector<16x16x32xf32>
      }
      %c5_i32_56 = arith.constant 5 : i32
      %92 = arith.truncf %91 : vector<16x16x32xf32> to vector<16x16x32xbf16>
      %cst_57 = arith.constant 0.000000e+00 : bf16
      %93 = vector.broadcast %cst_57 : bf16 to vector<16x1x32xbf16>
      %94 = vector.extract_strided_slice %92 {offsets = [0, 0, 0], sizes = [16, 15, 32], strides = [1, 1, 1]} : vector<16x16x32xbf16> to vector<16x15x32xbf16>
      %95 = tpu.concatenate %93, %94 in 1 : vector<16x1x32xbf16>, vector<16x15x32xbf16> -> vector<16x16x32xbf16>
      %96 = vector.extract_strided_slice %92 {offsets = [0, 1, 0], sizes = [16, 15, 32], strides = [1, 1, 1]} : vector<16x16x32xbf16> to vector<16x15x32xbf16>
      %97 = tpu.concatenate %96, %93 in 1 : vector<16x15x32xbf16>, vector<16x1x32xbf16> -> vector<16x16x32xbf16>
      %98 = tpu.concatenate %95, %92, %97 in 2 : vector<16x16x32xbf16>, vector<16x16x32xbf16>, vector<16x16x32xbf16> -> vector<16x16x96xbf16>
      %c1_58 = arith.constant 1 : index
      %c0_59 = arith.constant 0 : index
      %c0_60 = arith.constant 0 : index
      %99 = vector.load %arg13[%c1_58, %c0_59, %c0_60] : memref<18x16x192xbf16, #tpu.memory_space<vmem>>, vector<16x16x96xbf16>
      tpu.vector_store %arg13[%c1_58, %c0_59, %c0_60], %98 {strides = array<i32>} : memref<18x16x192xbf16, #tpu.memory_space<vmem>>, vector<16x16x96xbf16>,
      %c0_61 = arith.constant 0 : index
      %c0_62 = arith.constant 0 : index
      %c0_63 = arith.constant 0 : index
      %100 = vector.load %arg10[%c0_61, %c0_62, %c0_63] : memref<3x96x3xbf16, #tpu.memory_space<vmem>>, vector<3x96x3xbf16>
      %c0_64 = arith.constant 0 : index
      %c0_65 = arith.constant 0 : index
      %101 = vector.load %arg11[%c0_64, %c0_65] : memref<1x3xf32, #tpu.memory_space<vmem>>, vector<1x3xf32>
      %c0_66 = arith.constant 0 : index
      %c0_67 = arith.constant 0 : index
      %c0_68 = arith.constant 0 : index
      %102 = vector.load %arg13[%c0_66, %c0_67, %c0_68] : memref<18x16x192xbf16, #tpu.memory_space<vmem>>, vector<16x16x96xbf16>
      %103 = vector.shape_cast %102 : vector<16x16x96xbf16> to vector<256x96xbf16>
      %104 = vector.extract_strided_slice %100 {offsets = [0, 0, 0], sizes = [1, 96, 3], strides = [1, 1, 1]} : vector<3x96x3xbf16> to vector<1x96x3xbf16>
      %105 = vector.shape_cast %104 : vector<1x96x3xbf16> to vector<96x3xbf16>
      %cst_69 = arith.constant dense<0.000000e+00> : vector<256x3xf32>
      %106 = tpu.matmul %103, %105, %cst_69 {dimension_numbers = #tpu.dot_dimension_numbers<[1], [0], [0], [1], [0, 0, 1, 1], [], []>} : vector<256x96xbf16>, vector<96x3xbf16>, vector<256x3xf32> -> vector<256x3xf32>
      %c1_70 = arith.constant 1 : index
      %c0_71 = arith.constant 0 : index
      %c0_72 = arith.constant 0 : index
      %107 = vector.load %arg13[%c1_70, %c0_71, %c0_72] : memref<18x16x192xbf16, #tpu.memory_space<vmem>>, vector<16x16x96xbf16>
      %108 = vector.shape_cast %107 : vector<16x16x96xbf16> to vector<256x96xbf16>
      %109 = vector.extract_strided_slice %100 {offsets = [1, 0, 0], sizes = [1, 96, 3], strides = [1, 1, 1]} : vector<3x96x3xbf16> to vector<1x96x3xbf16>
      %110 = vector.shape_cast %109 : vector<1x96x3xbf16> to vector<96x3xbf16>
      %cst_73 = arith.constant dense<0.000000e+00> : vector<256x3xf32>
      %111 = tpu.matmul %108, %110, %cst_73 {dimension_numbers = #tpu.dot_dimension_numbers<[1], [0], [0], [1], [0, 0, 1, 1], [], []>} : vector<256x96xbf16>, vector<96x3xbf16>, vector<256x3xf32> -> vector<256x3xf32>
      %112 = arith.addf %106, %111 : vector<256x3xf32>
      %c2_74 = arith.constant 2 : index
      %c0_75 = arith.constant 0 : index
      %c0_76 = arith.constant 0 : index
      %113 = vector.load %arg13[%c2_74, %c0_75, %c0_76] : memref<18x16x192xbf16, #tpu.memory_space<vmem>>, vector<16x16x96xbf16>
      %114 = vector.shape_cast %113 : vector<16x16x96xbf16> to vector<256x96xbf16>
      %115 = vector.extract_strided_slice %100 {offsets = [2, 0, 0], sizes = [1, 96, 3], strides = [1, 1, 1]} : vector<3x96x3xbf16> to vector<1x96x3xbf16>
      %116 = vector.shape_cast %115 : vector<1x96x3xbf16> to vector<96x3xbf16>
      %cst_77 = arith.constant dense<0.000000e+00> : vector<256x3xf32>
      %117 = tpu.matmul %114, %116, %cst_77 {dimension_numbers = #tpu.dot_dimension_numbers<[1], [0], [0], [1], [0, 0, 1, 1], [], []>} : vector<256x96xbf16>, vector<96x3xbf16>, vector<256x3xf32> -> vector<256x3xf32>
      %118 = arith.addf %112, %117 : vector<256x3xf32>
      %119 = vector.broadcast %101 : vector<1x3xf32> to vector<256x3xf32>
      %120 = arith.addf %118, %119 : vector<256x3xf32>
      %121 = vector.shape_cast %120 : vector<256x3xf32> to vector<1x16x16x3xf32>
      %122 = arith.index_cast %arg14 : i32 to index
      %c0_78 = arith.constant 0 : index
      %c0_79 = arith.constant 0 : index
      %c0_80 = arith.constant 0 : index
      %c0_81 = arith.constant 0 : index
      %123 = vector.load %arg12[%122, %c0_78, %c0_79, %c0_80, %c0_81] : memref<6x1x16x16x3xf32, #tpu.memory_space<vmem>>, vector<1x1x16x16x3xf32>
      %124 = vector.shape_cast %123 : vector<1x1x16x16x3xf32> to vector<1x16x16x3xf32>
      %125 = vector.shape_cast %121 : vector<1x16x16x3xf32> to vector<1x1x16x16x3xf32>
      tpu.vector_store %arg12[%122, %c0_78, %c0_79, %c0_80, %c0_81], %125 {strides = array<i32>} : memref<6x1x16x16x3xf32, #tpu.memory_space<vmem>>, vector<1x1x16x16x3xf32>,
      %126 = vector.shape_cast %120 : vector<256x3xf32> to vector<16x16x3xf32>
      scf.yield %126, %89, %87 : vector<16x16x3xf32>, vector<16x16x32xf32>, vector<16x16x32xf32>
    }
    %c6_i32_10 = arith.constant 6 : i32
    return
  }
  func.func @transform_0(%arg0: i32) -> (i32, i32, i32, i32) {
    %c0_i32 = arith.constant 0 : i32
    %c0_i32_0 = arith.constant 0 : i32
    %c0_i32_1 = arith.constant 0 : i32
    %c0_i32_2 = arith.constant 0 : i32
    return %arg0, %c0_i32, %c0_i32_0, %c0_i32_1 : i32, i32, i32, i32
  }
  func.func @transform_1(%arg0: i32) -> (i32, i32, i32) {
    %c0_i32 = arith.constant 0 : i32
    %c0_i32_0 = arith.constant 0 : i32
    %c0_i32_1 = arith.constant 0 : i32
    %c0_i32_2 = arith.constant 0 : i32
    return %c0_i32, %c0_i32_0, %c0_i32_1 : i32, i32, i32
  }
  func.func @transform_2(%arg0: i32) -> (i32, i32) {
    %c0_i32 = arith.constant 0 : i32
    %c0_i32_0 = arith.constant 0 : i32
    %c0_i32_1 = arith.constant 0 : i32
    return %c0_i32, %c0_i32_0 : i32, i32
  }
  func.func @transform_3(%arg0: i32) -> (i32, i32, i32) {
    %c0_i32 = arith.constant 0 : i32
    %c0_i32_0 = arith.constant 0 : i32
    %c0_i32_1 = arith.constant 0 : i32
    %c0_i32_2 = arith.constant 0 : i32
    return %c0_i32, %c0_i32_0, %c0_i32_1 : i32, i32, i32
  }
  func.func @transform_4(%arg0: i32) -> (i32, i32) {
    %c0_i32 = arith.constant 0 : i32
    %c0_i32_0 = arith.constant 0 : i32
    %c0_i32_1 = arith.constant 0 : i32
    return %c0_i32, %c0_i32_0 : i32, i32
  }
  func.func @transform_5(%arg0: i32) -> (i32, i32, i32, i32) {
    %c0_i32 = arith.constant 0 : i32
    %c0_i32_0 = arith.constant 0 : i32
    %c0_i32_1 = arith.constant 0 : i32
    %c0_i32_2 = arith.constant 0 : i32
    %c0_i32_3 = arith.constant 0 : i32
    return %c0_i32, %c0_i32_0, %c0_i32_1, %c0_i32_2 : i32, i32, i32, i32
  }
  func.func @transform_6(%arg0: i32) -> (i32, i32, i32) {
    %c0_i32 = arith.constant 0 : i32
    %c0_i32_0 = arith.constant 0 : i32
    %c0_i32_1 = arith.constant 0 : i32
    %c0_i32_2 = arith.constant 0 : i32
    return %c0_i32, %c0_i32_0, %c0_i32_1 : i32, i32, i32
  }
  func.func @transform_7(%arg0: i32) -> (i32, i32, i32, i32) {
    %c0_i32 = arith.constant 0 : i32
    %c0_i32_0 = arith.constant 0 : i32
    %c0_i32_1 = arith.constant 0 : i32
    %c0_i32_2 = arith.constant 0 : i32
    %c0_i32_3 = arith.constant 0 : i32
    return %c0_i32, %c0_i32_0, %c0_i32_1, %c0_i32_2 : i32, i32, i32, i32
  }
  func.func @transform_8(%arg0: i32) -> (i32, i32, i32) {
    %c0_i32 = arith.constant 0 : i32
    %c0_i32_0 = arith.constant 0 : i32
    %c0_i32_1 = arith.constant 0 : i32
    %c0_i32_2 = arith.constant 0 : i32
    return %c0_i32, %c0_i32_0, %c0_i32_1 : i32, i32, i32
  }
  func.func @transform_9(%arg0: i32) -> (i32, i32, i32) {
    %c0_i32 = arith.constant 0 : i32
    %c0_i32_0 = arith.constant 0 : i32
    %c0_i32_1 = arith.constant 0 : i32
    %c0_i32_2 = arith.constant 0 : i32
    return %c0_i32, %c0_i32_0, %c0_i32_1 : i32, i32, i32
  }
  func.func @transform_10(%arg0: i32) -> (i32, i32) {
    %c0_i32 = arith.constant 0 : i32
    %c0_i32_0 = arith.constant 0 : i32
    %c0_i32_1 = arith.constant 0 : i32
    return %c0_i32, %c0_i32_0 : i32, i32
  }
  func.func @transform_11(%arg0: i32) -> (i32, i32, i32, i32, i32) {
    %c0_i32 = arith.constant 0 : i32
    %c0_i32_0 = arith.constant 0 : i32
    %c0_i32_1 = arith.constant 0 : i32
    %c0_i32_2 = arith.constant 0 : i32
    %c0_i32_3 = arith.constant 0 : i32
    return %c0_i32, %arg0, %c0_i32_0, %c0_i32_1, %c0_i32_2 : i32, i32, i32, i32, i32
  }
}

</mosaic_0001>

<llo_original>
// kernel: prenet_lstm_forward.1
$region0: #{prenet_lstm_forward.1}
  #allocation0 [shape = 'u32[]', space=smem, size = 0x4, offset = 0x4, fixed_abs, tag = 'smem constant byte address 0x4 - core index']
  #allocation1 [shape = 'u32[144,128]{1,0:T(1,128)}', space=vmem, size = 0x12000, scoped, tag = 'internal scratch']
  #allocation2 [shape = 'bf16[18,16,192]{2,1,0:T(8,128)(2,1)}', space=vmem, size = 0x24000, scoped, tag = 'scratch operand']
  %s0 = inlined_call_operand.vmem [shape: f32[2,16,16,3], index: 0, kind: input, shape index: {}]
  %s1 = inlined_call_operand.vmem [shape: bf16[3,18,32], index: 1, kind: input, shape index: {}]
  %s2 = inlined_call_operand.vmem [shape: f32[1,32], index: 2, kind: input, shape index: {}]
  %s3 = inlined_call_operand.vmem [shape: bf16[3,192,128], index: 3, kind: input, shape index: {}]
  %s4 = inlined_call_operand.vmem [shape: f32[1,128], index: 4, kind: input, shape index: {}]
  %s5 = inlined_call_operand.vmem [shape: bf16[5,3,96,32], index: 5, kind: input, shape index: {}]
  %s6 = inlined_call_operand.vmem [shape: f32[5,1,32], index: 6, kind: input, shape index: {}]
  %s7 = inlined_call_operand.vmem [shape: bf16[5,3,96,32], index: 7, kind: input, shape index: {}]
  %s8 = inlined_call_operand.vmem [shape: f32[5,1,32], index: 8, kind: input, shape index: {}]
  %s9 = inlined_call_operand.vmem [shape: bf16[3,96,3], index: 9, kind: input, shape index: {}]
  %s10 = inlined_call_operand.vmem [shape: f32[1,3], index: 10, kind: input, shape index: {}]
  %s11 = inlined_call_operand.vmem [shape: f32[6,2,16,16,3], index: 11, kind: output, shape index: {}]
  %s12 = sld [smem:[#allocation0]]
  $region125: #{prenet_lstm_forward.1} parent=0
    _
  %s14 = ssub.s32 1, %s12
  %s15 = scalar_select 0, %s14, %s12
  $region1: #{prenet_lstm_forward.1} parent=0
    #allocation3 [shape = 'u8[1572864]{0}', space=vmem, size = 0x180000, scoped, tag = 'output window, operand 0']
    loop: start=0, step=1, limit=4
    $region2: #{prenet_lstm_forward.1} parent=1 // loop_pre_header
      _
    $region3: #{prenet_lstm_forward.1} parent=1 // loop_header
      %s17 = sphi 0, %s21
      %p18 = scmp.ge.s32.totalorder %s17, 4
      %s27 = sphi 0, %s29
      %s30 = sphi 0, %s27
      %s31 = sphi 0, %s30
      %s47 = sphi 0, %s31
      %s51 = sphi 0, %s51
      %s53 = sphi 0, %s51
      %s54 = sphi 0, %s53
      %s68 = sphi 0, %s54
      %s72 = sphi 0, %s72
      %s74 = sphi 0, %s72
      %s75 = sphi 0, %s74
      %s89 = sphi 0, %s75
      %s93 = sphi 0, %s93
      %s95 = sphi 0, %s93
      %s96 = sphi 0, %s95
      %s110 = sphi 0, %s96
      %s114 = sphi 0, %s114
      %s116 = sphi 0, %s114
      %s117 = sphi 0, %s116
      %s131 = sphi 0, %s117
      %s135 = sphi 0, %s135
      %s137 = sphi 0, %s135
      %s138 = sphi 0, %s137
      %s152 = sphi 0, %s138
      %s156 = sphi 0, %s156
      %s158 = sphi 0, %s156
      %s159 = sphi 0, %s158
      %s173 = sphi 0, %s159
      %s177 = sphi 0, %s177
      %s179 = sphi 0, %s177
      %s180 = sphi 0, %s179
      %s194 = sphi 0, %s180
      %s198 = sphi 0, %s198
      %s200 = sphi 0, %s198
      %s201 = sphi 0, %s200
      %s215 = sphi 0, %s201
      %s219 = sphi 0, %s219
      %s221 = sphi 0, %s219
      %s222 = sphi 0, %s221
      %s236 = sphi 0, %s222
      %s240 = sphi 0, %s240
      %s242 = sphi 0, %s240
      %s243 = sphi 0, %s242
      %s257 = sphi 0, %s243
      %s263 = sphi 0, %s265
      %s266 = sphi 0, %s263
      %s267 = sphi 0, %s266
      %s283 = sphi 0, %s267
    $region4: #{prenet_lstm_forward.1} parent=1 // loop_header_branch
      %20 = sbr.rel (%p18) target = $region8
    $region5: #{prenet_lstm_forward.1} parent=1 // loop_body
      %s22 = ssub.s32 %s17, 1
      %s23 = ssub.s32 %s17, 2
      %s24 = sadd.s32 %s17, 1
      %s25 = ssub.s32 %s17, %s24
      %p26 = scmp.eq.s32.totalorder %s25, 0
      %s28 = sadd.s32 %s27, 1
      %s29 = scalar_select %p26, %s27, %s28
      %p32 = pneg %p26
      %p33 = scmp.eq.s32.totalorder %s17, 1
      %p34 = por %p32, %p33
      %p35 = scmp.ne.s32.totalorder %s27, %s30
      %p36 = scmp.eq.s32.totalorder %s17, 0
      %p37 = por %p35, %p36
      %p38 = scmp.ne.s32.totalorder %s27, %s30
      %p39 = scmp.eq.s32.totalorder %s22, 1
      %p40 = por %p38, %p39
      %p41 = scmp.ne.s32.totalorder %s30, %s31
      %p42 = scmp.eq.s32.totalorder %s22, 0
      %p43 = por %p41, %p42
      %p44 = scmp.ne.s32.totalorder %s30, %s31
      %p45 = scmp.eq.s32.totalorder %s23, 1
      %p46 = por %p44, %p45
      %p48 = scmp.ne.s32.totalorder %s31, %s47
      %p49 = scmp.eq.s32.totalorder %s23, 0
      %p50 = por %p48, %p49
      %s52 = sadd.s32 %s51, 1
      %p55 = scmp.eq.s32.totalorder %s17, 1
      %p56 = scmp.ne.s32.totalorder %s51, %s53
      %p57 = scmp.eq.s32.totalorder %s17, 0
      %p58 = por %p56, %p57
      %p59 = scmp.ne.s32.totalorder %s51, %s53
      %p60 = scmp.eq.s32.totalorder %s22, 1
      %p61 = por %p59, %p60
      %p62 = scmp.ne.s32.totalorder %s53, %s54
      %p63 = scmp.eq.s32.totalorder %s22, 0
      %p64 = por %p62, %p63
      %p65 = scmp.ne.s32.totalorder %s53, %s54
      %p66 = scmp.eq.s32.totalorder %s23, 1
      %p67 = por %p65, %p66
      %p69 = scmp.ne.s32.totalorder %s54, %s68
      %p70 = scmp.eq.s32.totalorder %s23, 0
      %p71 = por %p69, %p70
      %s73 = sadd.s32 %s72, 1
      %p76 = scmp.eq.s32.totalorder %s17, 1
      %p77 = scmp.ne.s32.totalorder %s72, %s74
      %p78 = scmp.eq.s32.totalorder %s17, 0
      %p79 = por %p77, %p78
      %p80 = scmp.ne.s32.totalorder %s72, %s74
      %p81 = scmp.eq.s32.totalorder %s22, 1
      %p82 = por %p80, %p81
      %p83 = scmp.ne.s32.totalorder %s74, %s75
      %p84 = scmp.eq.s32.totalorder %s22, 0
      %p85 = por %p83, %p84
      %p86 = scmp.ne.s32.totalorder %s74, %s75
      %p87 = scmp.eq.s32.totalorder %s23, 1
      %p88 = por %p86, %p87
      %p90 = scmp.ne.s32.totalorder %s75, %s89
      %p91 = scmp.eq.s32.totalorder %s23, 0
      %p92 = por %p90, %p91
      %s94 = sadd.s32 %s93, 1
      %p97 = scmp.eq.s32.totalorder %s17, 1
      %p98 = scmp.ne.s32.totalorder %s93, %s95
      %p99 = scmp.eq.s32.totalorder %s17, 0
      %p100 = por %p98, %p99
      %p101 = scmp.ne.s32.totalorder %s93, %s95
      %p102 = scmp.eq.s32.totalorder %s22, 1
      %p103 = por %p101, %p102
      %p104 = scmp.ne.s32.totalorder %s95, %s96
      %p105 = scmp.eq.s32.totalorder %s22, 0
      %p106 = por %p104, %p105
      %p107 = scmp.ne.s32.totalorder %s95, %s96
      %p108 = scmp.eq.s32.totalorder %s23, 1
      %p109 = por %p107, %p108
      %p111 = scmp.ne.s32.totalorder %s96, %s110
      %p112 = scmp.eq.s32.totalorder %s23, 0
      %p113 = por %p111, %p112
      %s115 = sadd.s32 %s114, 1
      %p118 = scmp.eq.s32.totalorder %s17, 1
      %p119 = scmp.ne.s32.totalorder %s114, %s116
      %p120 = scmp.eq.s32.totalorder %s17, 0
      %p121 = por %p119, %p120
      %p122 = scmp.ne.s32.totalorder %s114, %s116
      %p123 = scmp.eq.s32.totalorder %s22, 1
      %p124 = por %p122, %p123
      %p125 = scmp.ne.s32.totalorder %s116, %s117
      %p126 = scmp.eq.s32.totalorder %s22, 0
      %p127 = por %p125, %p126
      %p128 = scmp.ne.s32.totalorder %s116, %s117
      %p129 = scmp.eq.s32.totalorder %s23, 1
      %p130 = por %p128, %p129
      %p132 = scmp.ne.s32.totalorder %s117, %s131
      %p133 = scmp.eq.s32.totalorder %s23, 0
      %p134 = por %p132, %p133
      %s136 = sadd.s32 %s135, 1
      %p139 = scmp.eq.s32.totalorder %s17, 1
      %p140 = scmp.ne.s32.totalorder %s135, %s137
      %p141 = scmp.eq.s32.totalorder %s17, 0
      %p142 = por %p140, %p141
      %p143 = scmp.ne.s32.totalorder %s135, %s137
      %p144 = scmp.eq.s32.totalorder %s22, 1
      %p145 = por %p143, %p144
      %p146 = scmp.ne.s32.totalorder %s137, %s138
      %p147 = scmp.eq.s32.totalorder %s22, 0
      %p148 = por %p146, %p147
      %p149 = scmp.ne.s32.totalorder %s137, %s138
      %p150 = scmp.eq.s32.totalorder %s23, 1
      %p151 = por %p149, %p150
      %p153 = scmp.ne.s32.totalorder %s138, %s152
      %p154 = scmp.eq.s32.totalorder %s23, 0
      %p155 = por %p153, %p154
      %s157 = sadd.s32 %s156, 1
      %p160 = scmp.eq.s32.totalorder %s17, 1
      %p161 = scmp.ne.s32.totalorder %s156, %s158
      %p162 = scmp.eq.s32.totalorder %s17, 0
      %p163 = por %p161, %p162
      %p164 = scmp.ne.s32.totalorder %s156, %s158
      %p165 = scmp.eq.s32.totalorder %s22, 1
      %p166 = por %p164, %p165
      %p167 = scmp.ne.s32.totalorder %s158, %s159
      %p168 = scmp.eq.s32.totalorder %s22, 0
      %p169 = por %p167, %p168
      %p170 = scmp.ne.s32.totalorder %s158, %s159
      %p171 = scmp.eq.s32.totalorder %s23, 1
      %p172 = por %p170, %p171
      %p174 = scmp.ne.s32.totalorder %s159, %s173
      %p175 = scmp.eq.s32.totalorder %s23, 0
      %p176 = por %p174, %p175
      %s178 = sadd.s32 %s177, 1
      %p181 = scmp.eq.s32.totalorder %s17, 1
      %p182 = scmp.ne.s32.totalorder %s177, %s179
      %p183 = scmp.eq.s32.totalorder %s17, 0
      %p184 = por %p182, %p183
      %p185 = scmp.ne.s32.totalorder %s177, %s179
      %p186 = scmp.eq.s32.totalorder %s22, 1
      %p187 = por %p185, %p186
      %p188 = scmp.ne.s32.totalorder %s179, %s180
      %p189 = scmp.eq.s32.totalorder %s22, 0
      %p190 = por %p188, %p189
      %p191 = scmp.ne.s32.totalorder %s179, %s180
      %p192 = scmp.eq.s32.totalorder %s23, 1
      %p193 = por %p191, %p192
      %p195 = scmp.ne.s32.totalorder %s180, %s194
      %p196 = scmp.eq.s32.totalorder %s23, 0
      %p197 = por %p195, %p196
      %s199 = sadd.s32 %s198, 1
      %p202 = scmp.eq.s32.totalorder %s17, 1
      %p203 = scmp.ne.s32.totalorder %s198, %s200
      %p204 = scmp.eq.s32.totalorder %s17, 0
      %p205 = por %p203, %p204
      %p206 = scmp.ne.s32.totalorder %s198, %s200
      %p207 = scmp.eq.s32.totalorder %s22, 1
      %p208 = por %p206, %p207
      %p209 = scmp.ne.s32.totalorder %s200, %s201
      %p210 = scmp.eq.s32.totalorder %s22, 0
      %p211 = por %p209, %p210
      %p212 = scmp.ne.s32.totalorder %s200, %s201
      %p213 = scmp.eq.s32.totalorder %s23, 1
      %p214 = por %p212, %p213
      %p216 = scmp.ne.s32.totalorder %s201, %s215
      %p217 = scmp.eq.s32.totalorder %s23, 0
      %p218 = por %p216, %p217
      %s220 = sadd.s32 %s219, 1
      %p223 = scmp.eq.s32.totalorder %s17, 1
      %p224 = scmp.ne.s32.totalorder %s219, %s221
      %p225 = scmp.eq.s32.totalorder %s17, 0
      %p226 = por %p224, %p225
      %p227 = scmp.ne.s32.totalorder %s219, %s221
      %p228 = scmp.eq.s32.totalorder %s22, 1
      %p229 = por %p227, %p228
      %p230 = scmp.ne.s32.totalorder %s221, %s222
      %p231 = scmp.eq.s32.totalorder %s22, 0
      %p232 = por %p230, %p231
      %p233 = scmp.ne.s32.totalorder %s221, %s222
      %p234 = scmp.eq.s32.totalorder %s23, 1
      %p235 = por %p233, %p234
      %p237 = scmp.ne.s32.totalorder %s222, %s236
      %p238 = scmp.eq.s32.totalorder %s23, 0
      %p239 = por %p237, %p238
      %s241 = sadd.s32 %s240, 1
      %p244 = scmp.eq.s32.totalorder %s17, 1
      %p245 = scmp.ne.s32.totalorder %s240, %s242
      %p246 = scmp.eq.s32.totalorder %s17, 0
      %p247 = por %p245, %p246
      %p248 = scmp.ne.s32.totalorder %s240, %s242
      %p249 = scmp.eq.s32.totalorder %s22, 1
      %p250 = por %p248, %p249
      %p251 = scmp.ne.s32.totalorder %s242, %s243
      %p252 = scmp.eq.s32.totalorder %s22, 0
      %p253 = por %p251, %p252
      %p254 = scmp.ne.s32.totalorder %s242, %s243
      %p255 = scmp.eq.s32.totalorder %s23, 1
      %p256 = por %p254, %p255
      %p258 = scmp.ne.s32.totalorder %s243, %s257
      %p259 = scmp.eq.s32.totalorder %s23, 0
      %p260 = por %p258, %p259
      %s261 = ssub.s32 %s17, %s24
      %p262 = scmp.eq.s32.totalorder %s261, 0
      %s264 = sadd.s32 %s263, 1
      %s265 = scalar_select %p262, %s263, %s264
      %p268 = pneg %p262
      %p269 = scmp.eq.s32.totalorder %s17, 1
      %p270 = por %p268, %p269
      %p271 = scmp.ne.s32.totalorder %s263, %s266
      %p272 = scmp.eq.s32.totalorder %s17, 0
      %p273 = por %p271, %p272
      %p274 = scmp.ne.s32.totalorder %s263, %s266
      %p275 = scmp.eq.s32.totalorder %s22, 1
      %p276 = por %p274, %p275
      %p277 = scmp.ne.s32.totalorder %s266, %s267
      %p278 = scmp.eq.s32.totalorder %s22, 0
      %p279 = por %p277, %p278
      %p280 = scmp.ne.s32.totalorder %s266, %s267
      %p281 = scmp.eq.s32.totalorder %s23, 1
      %p282 = por %p280, %p281
      %p284 = scmp.ne.s32.totalorder %s267, %s283
      %p285 = scmp.eq.s32.totalorder %s23, 0
      %p286 = por %p284, %p285
      %p287 = scmp.le.s32.totalorder 1, %s17
      %p288 = scmp.lt.s32.totalorder %s17, 3
      %p289 = pnand %p287, %p288
      %p290 = pneg %p289
      // Predicated region
      $region9: #{prenet_lstm_forward.1} parent=5 // pred_check
        _
      $region10: #{prenet_lstm_forward.1} parent=5 // pred_check_branch
        %292 = sbr.rel (%p289) target = $region12
      $region11: #{prenet_lstm_forward.1} parent=5 // pred_region
        %s293 = ssub.s32 %s17, 1
        // Predicated region
        $region13: #{prenet_lstm_forward.1} parent=11 // pred_check
          %p294 = pneg %p64
        $region14: #{prenet_lstm_forward.1} parent=11 // pred_check_branch
          %296 = sbr.rel (%p294) target = $region16
        $region15: #{prenet_lstm_forward.1} parent=11 // pred_region
          _
        $region16: #{prenet_lstm_forward.1} parent=11 // pred_fallthru
          _
        // Predicated region
        $region17: #{prenet_lstm_forward.1} parent=11 // pred_check
          %p297 = pneg %p85
        $region18: #{prenet_lstm_forward.1} parent=11 // pred_check_branch
          %299 = sbr.rel (%p297) target = $region20
        $region19: #{prenet_lstm_forward.1} parent=11 // pred_region
          _
        $region20: #{prenet_lstm_forward.1} parent=11 // pred_fallthru
          _
        // Predicated region
        $region21: #{prenet_lstm_forward.1} parent=11 // pred_check
          %p300 = pneg %p106
        $region22: #{prenet_lstm_forward.1} parent=11 // pred_check_branch
          %302 = sbr.rel (%p300) target = $region24
        $region23: #{prenet_lstm_forward.1} parent=11 // pred_region
          _
        $region24: #{prenet_lstm_forward.1} parent=11 // pred_fallthru
          _
        // Predicated region
        $region25: #{prenet_lstm_forward.1} parent=11 // pred_check
          %p303 = pneg %p127
        $region26: #{prenet_lstm_forward.1} parent=11 // pred_check_branch
          %305 = sbr.rel (%p303) target = $region28
        $region27: #{prenet_lstm_forward.1} parent=11 // pred_region
          _
        $region28: #{prenet_lstm_forward.1} parent=11 // pred_fallthru
          _
        // Predicated region
        $region29: #{prenet_lstm_forward.1} parent=11 // pred_check
          %p306 = pneg %p148
        $region30: #{prenet_lstm_forward.1} parent=11 // pred_check_branch
          %308 = sbr.rel (%p306) target = $region32
        $region31: #{prenet_lstm_forward.1} parent=11 // pred_region
          _
        $region32: #{prenet_lstm_forward.1} parent=11 // pred_fallthru
          _
        // Predicated region
        $region33: #{prenet_lstm_forward.1} parent=11 // pred_check
          %p309 = pneg %p169
        $region34: #{prenet_lstm_forward.1} parent=11 // pred_check_branch
          %311 = sbr.rel (%p309) target = $region36
        $region35: #{prenet_lstm_forward.1} parent=11 // pred_region
          _
        $region36: #{prenet_lstm_forward.1} parent=11 // pred_fallthru
          _
        // Predicated region
        $region37: #{prenet_lstm_forward.1} parent=11 // pred_check
          %p312 = pneg %p190
        $region38: #{prenet_lstm_forward.1} parent=11 // pred_check_branch
          %314 = sbr.rel (%p312) target = $region40
        $region39: #{prenet_lstm_forward.1} parent=11 // pred_region
          _
        $region40: #{prenet_lstm_forward.1} parent=11 // pred_fallthru
          _
        // Predicated region
        $region41: #{prenet_lstm_forward.1} parent=11 // pred_check
          %p315 = pneg %p211
        $region42: #{prenet_lstm_forward.1} parent=11 // pred_check_branch
          %317 = sbr.rel (%p315) target = $region44
        $region43: #{prenet_lstm_forward.1} parent=11 // pred_region
          _
        $region44: #{prenet_lstm_forward.1} parent=11 // pred_fallthru
          _
        // Predicated region
        $region45: #{prenet_lstm_forward.1} parent=11 // pred_check
          %p318 = pneg %p232
        $region46: #{prenet_lstm_forward.1} parent=11 // pred_check_branch
          %320 = sbr.rel (%p318) target = $region48
        $region47: #{prenet_lstm_forward.1} parent=11 // pred_region
          _
        $region48: #{prenet_lstm_forward.1} parent=11 // pred_fallthru
          _
        // Predicated region
        $region49: #{prenet_lstm_forward.1} parent=11 // pred_check
          %p321 = pneg %p253
        $region50: #{prenet_lstm_forward.1} parent=11 // pred_check_branch
          %323 = sbr.rel (%p321) target = $region52
        $region51: #{prenet_lstm_forward.1} parent=11 // pred_region
          _
        $region52: #{prenet_lstm_forward.1} parent=11 // pred_fallthru
          _
      $region12: #{prenet_lstm_forward.1} parent=5 // pred_fallthru
        _
      %p324 = scmp.lt.s32.totalorder %s17, 2
      // Predicated region
      $region53: #{prenet_lstm_forward.1} parent=5 // pred_check
        %p325 = pneg %p324
      $region54: #{prenet_lstm_forward.1} parent=5 // pred_check_branch
        %327 = sbr.rel (%p325) target = $region56
      $region55: #{prenet_lstm_forward.1} parent=5 // pred_region
        // Predicated region
        $region57: #{prenet_lstm_forward.1} parent=55 // pred_check
          %p328 = pneg %p37
        $region58: #{prenet_lstm_forward.1} parent=55 // pred_check_branch
          %330 = sbr.rel (%p328) target = $region60
        $region59: #{prenet_lstm_forward.1} parent=55 // pred_region
          %p331 = scmp.lt.s32.totalorder %s17, 1
          %s332 = scalar_select %p331, %s17, 1
          %s333 = smul.addr %s332, 32
          %s334 = smul.addr %s333, 8
          %s335 = scalar_lea.vmem %s0, %s334
        $region60: #{prenet_lstm_forward.1} parent=55 // pred_fallthru
          _
      $region56: #{prenet_lstm_forward.1} parent=5 // pred_fallthru
        _
      %p336 = scmp.le.s32.totalorder 1, %s17
      %p337 = scmp.lt.s32.totalorder %s17, 3
      %p338 = pnand %p336, %p337
      %p339 = pneg %p338
      // Predicated region
      $region61: #{prenet_lstm_forward.1} parent=5 // pred_check
        _
      $region62: #{prenet_lstm_forward.1} parent=5 // pred_check_branch
        %341 = sbr.rel (%p338) target = $region64
      $region63: #{prenet_lstm_forward.1} parent=5 // pred_region
        %s342 = ssub.s32 %s17, 1
        %p343 = scmp.lt.s32.totalorder %s22, 1
        %s344 = scalar_select %p343, %s22, 1
        %s345 = smul.addr %s344, 32
        %s346 = smul.addr %s345, 8
        %s347 = scalar_lea.vmem %s0, %s346
        %p348 = pneg %p43
        %p349 = pneg %p40
        %p350 = pneg %p64
        %p351 = pneg %p61
        %p352 = pneg %p85
        %p353 = pneg %p82
        %p354 = pneg %p106
        %p355 = pneg %p103
        %p356 = pneg %p127
        %p357 = pneg %p124
        %p358 = pneg %p148
        %p359 = pneg %p145
        %p360 = pneg %p169
        %p361 = pneg %p166
        %p362 = pneg %p190
        %p363 = pneg %p187
        %p364 = pneg %p211
        %p365 = pneg %p208
        %p366 = pneg %p232
        %p367 = pneg %p229
        %p368 = pneg %p253
        %p369 = pneg %p250
        %p370 = pneg %p279
        %p371 = pneg %p276
        %s372 = sand.u32 %s266, 1
        %s373 = sand.u32 %s266, 1
        %s374 = smul.addr %s373, 1536
        %s375 = scalar_lea.vmem [#allocation3], %s374
        %p376 = scmp.lt.s32.totalorder %s22, 1
        %s377 = scalar_select %p376, %s22, 1
        %s378 = smul.addr %s377, 32
        %s379 = smul.addr %s378, 8
        %s380 = scalar_lea.vmem %s0, %s379
        %vm382 = vcmask 1043456
        %vm383 = vcmask 523268
        %vm384 = vmor %vm383, %vm382
        %385 = vst.msk [vmem:[#allocation2] sm:$0xff] %vm384, 0
        %386 = vst.msk [vmem:[#allocation2 + $0x8] sm:$0xff] %vm384, 0
        %s387 = scalar_lea.vmem [#allocation2], 272
        %388 = vst.msk [vmem:[%s387] sm:$0xff] %vm384, 0
        %389 = vst.msk [vmem:[%s387 + $0x8] sm:$0xff] %vm384, 0
        %v390 = vld [vmem:[%s380] sm:$0xff]
        %v391 = vld [vmem:[%s380 + $0x8] sm:$0xff]
        %v392 = vld [vmem:[%s380 + $0x10] sm:$0xff]
        %v393 = vld [vmem:[%s380 + $0x18] sm:$0xff]
        %v394 = vld [vmem:[%s380 + $0x20] sm:$0xff]
        %v395 = vld [vmem:[%s380 + $0x28] sm:$0xff]
        %v396 = vld [vmem:[%s380 + $0x30] sm:$0xff]
        %v397 = vld [vmem:[%s380 + $0x38] sm:$0xff]
        %v398 = vld [vmem:[%s380 + $0x40] sm:$0xff]
        %v399 = vld [vmem:[%s380 + $0x48] sm:$0xff]
        %v400 = vld [vmem:[%s380 + $0x50] sm:$0xff]
        %v401 = vld [vmem:[%s380 + $0x58] sm:$0xff]
        %v402 = vld [vmem:[%s380 + $0x60] sm:$0xff]
        %v403 = vld [vmem:[%s380 + $0x68] sm:$0xff]
        %v404 = vld [vmem:[%s380 + $0x70] sm:$0xff]
        %v405 = vld [vmem:[%s380 + $0x78] sm:$0xff]
        %v406 = vld [vmem:[%s380 + $0x80] sm:$0xff]
        %v407 = vld [vmem:[%s380 + $0x88] sm:$0xff]
        %v408 = vld [vmem:[%s380 + $0x90] sm:$0xff]
        %v409 = vld [vmem:[%s380 + $0x98] sm:$0xff]
        %v410 = vld [vmem:[%s380 + $0xa0] sm:$0xff]
        %v411 = vld [vmem:[%s380 + $0xa8] sm:$0xff]
        %v412 = vld [vmem:[%s380 + $0xb0] sm:$0xff]
        %v413 = vld [vmem:[%s380 + $0xb8] sm:$0xff]
        %v414 = vld [vmem:[%s380 + $0xc0] sm:$0xff]
        %v415 = vld [vmem:[%s380 + $0xc8] sm:$0xff]
        %v416 = vld [vmem:[%s380 + $0xd0] sm:$0xff]
        %v417 = vld [vmem:[%s380 + $0xd8] sm:$0xff]
        %v418 = vld [vmem:[%s380 + $0xe0] sm:$0xff]
        %v419 = vld [vmem:[%s380 + $0xe8] sm:$0xff]
        %v420 = vld [vmem:[%s380 + $0xf0] sm:$0xff]
        %v421 = vld [vmem:[%s380 + $0xf8] sm:$0xff]
        loop: start=0, step=1, limit=6
        $region65: #{prenet_lstm_forward.1} parent=63 // loop_pre_header
          _
        $region66: #{prenet_lstm_forward.1} parent=63 // loop_header
          %s423 = sphi 0, %s427
          %p424 = scmp.ge.s32.totalorder %s423, 6
          %v428 = vphi %v390, %v10716
          %v429 = vphi %v391, %v10717
          %v430 = vphi %v392, %v10718
          %v431 = vphi %v393, %v10719
          %v432 = vphi %v394, %v10720
          %v433 = vphi %v395, %v10721
          %v434 = vphi %v396, %v10722
          %v435 = vphi %v397, %v10723
          %v436 = vphi %v398, %v10724
          %v437 = vphi %v399, %v10725
          %v438 = vphi %v400, %v10726
          %v439 = vphi %v401, %v10727
          %v440 = vphi %v402, %v10728
          %v441 = vphi %v403, %v10729
          %v442 = vphi %v404, %v10730
          %v443 = vphi %v405, %v10731
          %v444 = vphi %v406, %v10732
          %v445 = vphi %v407, %v10733
          %v446 = vphi %v408, %v10734
          %v447 = vphi %v409, %v10735
          %v448 = vphi %v410, %v10736
          %v449 = vphi %v411, %v10737
          %v450 = vphi %v412, %v10738
          %v451 = vphi %v413, %v10739
          %v452 = vphi %v414, %v10740
          %v453 = vphi %v415, %v10741
          %v454 = vphi %v416, %v10742
          %v455 = vphi %v417, %v10743
          %v456 = vphi %v418, %v10744
          %v457 = vphi %v419, %v10745
          %v458 = vphi %v420, %v10746
          %v459 = vphi %v421, %v10747
          %v460 = vphi 0.0, %v5245
          %v461 = vphi 0.0, %v5246
          %v462 = vphi 0.0, %v5247
          %v463 = vphi 0.0, %v5248
          %v464 = vphi 0.0, %v5249
          %v465 = vphi 0.0, %v5250
          %v466 = vphi 0.0, %v5251
          %v467 = vphi 0.0, %v5252
          %v468 = vphi 0.0, %v5253
          %v469 = vphi 0.0, %v5254
          %v470 = vphi 0.0, %v5255
          %v471 = vphi 0.0, %v5256
          %v472 = vphi 0.0, %v5257
          %v473 = vphi 0.0, %v5258
          %v474 = vphi 0.0, %v5259
          %v475 = vphi 0.0, %v5260
          %v476 = vphi 0.0, %v5261
          %v477 = vphi 0.0, %v5262
          %v478 = vphi 0.0, %v5263
          %v479 = vphi 0.0, %v5264
          %v480 = vphi 0.0, %v5265
          %v481 = vphi 0.0, %v5266
          %v482 = vphi 0.0, %v5267
          %v483 = vphi 0.0, %v5268
          %v484 = vphi 0.0, %v5269
          %v485 = vphi 0.0, %v5270
          %v486 = vphi 0.0, %v5271
          %v487 = vphi 0.0, %v5272
          %v488 = vphi 0.0, %v5273
          %v489 = vphi 0.0, %v5274
          %v490 = vphi 0.0, %v5275
          %v491 = vphi 0.0, %v5276
          %v492 = vphi 0.0, %v5053
          %v493 = vphi 0.0, %v5054
          %v494 = vphi 0.0, %v5055
          %v495 = vphi 0.0, %v5056
          %v496 = vphi 0.0, %v5057
          %v497 = vphi 0.0, %v5058
          %v498 = vphi 0.0, %v5059
          %v499 = vphi 0.0, %v5060
          %v500 = vphi 0.0, %v5061
          %v501 = vphi 0.0, %v5062
          %v502 = vphi 0.0, %v5063
          %v503 = vphi 0.0, %v5064
          %v504 = vphi 0.0, %v5065
          %v505 = vphi 0.0, %v5066
          %v506 = vphi 0.0, %v5067
          %v507 = vphi 0.0, %v5068
          %v508 = vphi 0.0, %v5069
          %v509 = vphi 0.0, %v5070
          %v510 = vphi 0.0, %v5071
          %v511 = vphi 0.0, %v5072
          %v512 = vphi 0.0, %v5073
          %v513 = vphi 0.0, %v5074
          %v514 = vphi 0.0, %v5075
          %v515 = vphi 0.0, %v5076
          %v516 = vphi 0.0, %v5077
          %v517 = vphi 0.0, %v5078
          %v518 = vphi 0.0, %v5079
          %v519 = vphi 0.0, %v5080
          %v520 = vphi 0.0, %v5081
          %v521 = vphi 0.0, %v5082
          %v522 = vphi 0.0, %v5083
          %v523 = vphi 0.0, %v5084
        $region67: #{prenet_lstm_forward.1} parent=63 // loop_header_branch
          %426 = sbr.rel (%p424) target = $region71
        $region68: #{prenet_lstm_forward.1} parent=63 // loop_body
          %556 = vrot.lane.b32.xlu0 %v428, 3
          %v557 = vpop.permute.xlu0 %556
          %558 = vrot.lane.b32.xlu0 %v429, 3
          %v559 = vpop.permute.xlu0 %558
          %560 = vrot.lane.b32.xlu0 %v430, 3
          %v561 = vpop.permute.xlu0 %560
          %562 = vrot.lane.b32.xlu0 %v431, 3
          %v563 = vpop.permute.xlu0 %562
          %564 = vrot.lane.b32.xlu0 %v432, 3
          %v565 = vpop.permute.xlu0 %564
          %566 = vrot.lane.b32.xlu0 %v433, 3
          %v567 = vpop.permute.xlu0 %566
          %568 = vrot.lane.b32.xlu0 %v434, 3
          %v569 = vpop.permute.xlu0 %568
          %570 = vrot.lane.b32.xlu0 %v435, 3
          %v571 = vpop.permute.xlu0 %570
          %572 = vrot.lane.b32.xlu0 %v436, 3
          %v573 = vpop.permute.xlu0 %572
          %574 = vrot.lane.b32.xlu0 %v437, 3
          %v575 = vpop.permute.xlu0 %574
          %576 = vrot.lane.b32.xlu0 %v438, 3
          %v577 = vpop.permute.xlu0 %576
          %578 = vrot.lane.b32.xlu0 %v439, 3
          %v579 = vpop.permute.xlu0 %578
          %580 = vrot.lane.b32.xlu0 %v440, 3
          %v581 = vpop.permute.xlu0 %580
          %582 = vrot.lane.b32.xlu0 %v441, 3
          %v583 = vpop.permute.xlu0 %582
          %584 = vrot.lane.b32.xlu0 %v442, 3
          %v585 = vpop.permute.xlu0 %584
          %586 = vrot.lane.b32.xlu0 %v443, 3
          %v587 = vpop.permute.xlu0 %586
          %588 = vrot.lane.b32.xlu0 %v444, 3
          %v589 = vpop.permute.xlu0 %588
          %590 = vrot.lane.b32.xlu0 %v445, 3
          %v591 = vpop.permute.xlu0 %590
          %592 = vrot.lane.b32.xlu0 %v446, 3
          %v593 = vpop.permute.xlu0 %592
          %594 = vrot.lane.b32.xlu0 %v447, 3
          %v595 = vpop.permute.xlu0 %594
          %596 = vrot.lane.b32.xlu0 %v448, 3
          %v597 = vpop.permute.xlu0 %596
          %598 = vrot.lane.b32.xlu0 %v449, 3
          %v599 = vpop.permute.xlu0 %598
          %600 = vrot.lane.b32.xlu0 %v450, 3
          %v601 = vpop.permute.xlu0 %600
          %602 = vrot.lane.b32.xlu0 %v451, 3
          %v603 = vpop.permute.xlu0 %602
          %604 = vrot.lane.b32.xlu0 %v452, 3
          %v605 = vpop.permute.xlu0 %604
          %606 = vrot.lane.b32.xlu0 %v453, 3
          %v607 = vpop.permute.xlu0 %606
          %608 = vrot.lane.b32.xlu0 %v454, 3
          %v609 = vpop.permute.xlu0 %608
          %610 = vrot.lane.b32.xlu0 %v455, 3
          %v611 = vpop.permute.xlu0 %610
          %612 = vrot.lane.b32.xlu0 %v456, 3
          %v613 = vpop.permute.xlu0 %612
          %614 = vrot.lane.b32.xlu0 %v457, 3
          %v615 = vpop.permute.xlu0 %614
          %616 = vrot.lane.b32.xlu0 %v458, 3
          %v617 = vpop.permute.xlu0 %616
          %618 = vrot.lane.b32.xlu0 %v459, 3
          %v619 = vpop.permute.xlu0 %618
          %vm652 = vcmask 23552
          %v653 = vsel %vm652, %v390, %v557
          %v654 = vsel %vm652, %v391, %v559
          %v655 = vsel %vm652, %v392, %v561
          %v656 = vsel %vm652, %v393, %v563
          %v657 = vsel %vm652, %v394, %v565
          %v658 = vsel %vm652, %v395, %v567
          %v659 = vsel %vm652, %v396, %v569
          %v660 = vsel %vm652, %v397, %v571
          %v661 = vsel %vm652, %v398, %v573
          %v662 = vsel %vm652, %v399, %v575
          %v663 = vsel %vm652, %v400, %v577
          %v664 = vsel %vm652, %v401, %v579
          %v665 = vsel %vm652, %v402, %v581
          %v666 = vsel %vm652, %v403, %v583
          %v667 = vsel %vm652, %v404, %v585
          %v668 = vsel %vm652, %v405, %v587
          %v669 = vsel %vm652, %v406, %v589
          %v670 = vsel %vm652, %v407, %v591
          %v671 = vsel %vm652, %v408, %v593
          %v672 = vsel %vm652, %v409, %v595
          %v673 = vsel %vm652, %v410, %v597
          %v674 = vsel %vm652, %v411, %v599
          %v675 = vsel %vm652, %v412, %v601
          %v676 = vsel %vm652, %v413, %v603
          %v677 = vsel %vm652, %v414, %v605
          %v678 = vsel %vm652, %v415, %v607
          %v679 = vsel %vm652, %v416, %v609
          %v680 = vsel %vm652, %v417, %v611
          %v681 = vsel %vm652, %v418, %v613
          %v682 = vsel %vm652, %v419, %v615
          %v683 = vsel %vm652, %v420, %v617
          %v684 = vsel %vm652, %v421, %v619
          %v685 = vpack.c.bf16 %v654, %v653
          %v686 = vpack.c.bf16 %v656, %v655
          %v687 = vpack.c.bf16 %v658, %v657
          %v688 = vpack.c.bf16 %v660, %v659
          %v689 = vpack.c.bf16 %v662, %v661
          %v690 = vpack.c.bf16 %v664, %v663
          %v691 = vpack.c.bf16 %v666, %v665
          %v692 = vpack.c.bf16 %v668, %v667
          %v693 = vpack.c.bf16 %v670, %v669
          %v694 = vpack.c.bf16 %v672, %v671
          %v695 = vpack.c.bf16 %v674, %v673
          %v696 = vpack.c.bf16 %v676, %v675
          %v697 = vpack.c.bf16 %v678, %v677
          %v698 = vpack.c.bf16 %v680, %v679
          %v699 = vpack.c.bf16 %v682, %v681
          %v700 = vpack.c.bf16 %v684, %v683
          %v702 = vshrl.u32 %v685, 16
          %v704 = vrot.slane %v702, 7
          %v705 = vshll.u32 %v685, 16
          %v707 = vor.u32 %v704, %v705
          %v709 = vshrl.u32 %v686, 16
          %v711 = vrot.slane %v709, 7
          %v712 = vshll.u32 %v686, 16
          %v714 = vor.u32 %v711, %v712
          %v716 = vshrl.u32 %v687, 16
          %v718 = vrot.slane %v716, 7
          %v719 = vshll.u32 %v687, 16
          %v721 = vor.u32 %v718, %v719
          %v723 = vshrl.u32 %v688, 16
          %v725 = vrot.slane %v723, 7
          %v726 = vshll.u32 %v688, 16
          %v728 = vor.u32 %v725, %v726
          %v730 = vshrl.u32 %v689, 16
          %v732 = vrot.slane %v730, 7
          %v733 = vshll.u32 %v689, 16
          %v735 = vor.u32 %v732, %v733
          %v737 = vshrl.u32 %v690, 16
          %v739 = vrot.slane %v737, 7
          %v740 = vshll.u32 %v690, 16
          %v742 = vor.u32 %v739, %v740
          %v744 = vshrl.u32 %v691, 16
          %v746 = vrot.slane %v744, 7
          %v747 = vshll.u32 %v691, 16
          %v749 = vor.u32 %v746, %v747
          %v751 = vshrl.u32 %v692, 16
          %v753 = vrot.slane %v751, 7
          %v754 = vshll.u32 %v692, 16
          %v756 = vor.u32 %v753, %v754
          %v758 = vshrl.u32 %v693, 16
          %v760 = vrot.slane %v758, 7
          %v761 = vshll.u32 %v693, 16
          %v763 = vor.u32 %v760, %v761
          %v765 = vshrl.u32 %v694, 16
          %v767 = vrot.slane %v765, 7
          %v768 = vshll.u32 %v694, 16
          %v770 = vor.u32 %v767, %v768
          %v772 = vshrl.u32 %v695, 16
          %v774 = vrot.slane %v772, 7
          %v775 = vshll.u32 %v695, 16
          %v777 = vor.u32 %v774, %v775
          %v779 = vshrl.u32 %v696, 16
          %v781 = vrot.slane %v779, 7
          %v782 = vshll.u32 %v696, 16
          %v784 = vor.u32 %v781, %v782
          %v786 = vshrl.u32 %v697, 16
          %v788 = vrot.slane %v786, 7
          %v789 = vshll.u32 %v697, 16
          %v791 = vor.u32 %v788, %v789
          %v793 = vshrl.u32 %v698, 16
          %v795 = vrot.slane %v793, 7
          %v796 = vshll.u32 %v698, 16
          %v798 = vor.u32 %v795, %v796
          %v800 = vshrl.u32 %v699, 16
          %v802 = vrot.slane %v800, 7
          %v803 = vshll.u32 %v699, 16
          %v805 = vor.u32 %v802, %v803
          %v807 = vshrl.u32 %v700, 16
          %v809 = vrot.slane %v807, 7
          %v810 = vshll.u32 %v700, 16
          %v812 = vor.u32 %v809, %v810
          %vm829 = vcmask 1040384
          %vm830 = vsmask.f32 256
          %vm831 = vmand %vm829, %vm830
          %v832 = vsel %vm831, 0, %v707
          %v833 = vsel %vm831, 0, %v714
          %v834 = vsel %vm831, 0, %v721
          %v835 = vsel %vm831, 0, %v728
          %v836 = vsel %vm831, 0, %v735
          %v837 = vsel %vm831, 0, %v742
          %v838 = vsel %vm831, 0, %v749
          %v839 = vsel %vm831, 0, %v756
          %v840 = vsel %vm831, 0, %v763
          %v841 = vsel %vm831, 0, %v770
          %v842 = vsel %vm831, 0, %v777
          %v843 = vsel %vm831, 0, %v784
          %v844 = vsel %vm831, 0, %v791
          %v845 = vsel %vm831, 0, %v798
          %v846 = vsel %vm831, 0, %v805
          %v847 = vsel %vm831, 0, %v812
          %v848 = vrot.slane %v705, 1
          %v849 = vor.u32 %v702, %v848
          %v850 = vrot.slane %v712, 1
          %v851 = vor.u32 %v709, %v850
          %v852 = vrot.slane %v719, 1
          %v853 = vor.u32 %v716, %v852
          %v854 = vrot.slane %v726, 1
          %v855 = vor.u32 %v723, %v854
          %v856 = vrot.slane %v733, 1
          %v857 = vor.u32 %v730, %v856
          %v858 = vrot.slane %v740, 1
          %v859 = vor.u32 %v737, %v858
          %v860 = vrot.slane %v747, 1
          %v861 = vor.u32 %v744, %v860
          %v862 = vrot.slane %v754, 1
          %v863 = vor.u32 %v751, %v862
          %v864 = vrot.slane %v761, 1
          %v865 = vor.u32 %v758, %v864
          %v866 = vrot.slane %v768, 1
          %v867 = vor.u32 %v765, %v866
          %v868 = vrot.slane %v775, 1
          %v869 = vor.u32 %v772, %v868
          %v870 = vrot.slane %v782, 1
          %v871 = vor.u32 %v779, %v870
          %v872 = vrot.slane %v789, 1
          %v873 = vor.u32 %v786, %v872
          %v874 = vrot.slane %v796, 1
          %v875 = vor.u32 %v793, %v874
          %v876 = vrot.slane %v803, 1
          %v877 = vor.u32 %v800, %v876
          %v878 = vrot.slane %v810, 1
          %v879 = vor.u32 %v807, %v878
          %vm896 = vcmask 1047552
          %vm897 = vsmask.f32 7424
          %vm898 = vmand %vm896, %vm897
          %v899 = vsel %vm898, %v849, 0
          %v900 = vsel %vm898, %v851, 0
          %v901 = vsel %vm898, %v853, 0
          %v902 = vsel %vm898, %v855, 0
          %v903 = vsel %vm898, %v857, 0
          %v904 = vsel %vm898, %v859, 0
          %v905 = vsel %vm898, %v861, 0
          %v906 = vsel %vm898, %v863, 0
          %v907 = vsel %vm898, %v865, 0
          %v908 = vsel %vm898, %v867, 0
          %v909 = vsel %vm898, %v869, 0
          %v910 = vsel %vm898, %v871, 0
          %v911 = vsel %vm898, %v873, 0
          %v912 = vsel %vm898, %v875, 0
          %v913 = vsel %vm898, %v877, 0
          %v914 = vsel %vm898, %v879, 0
          %931 = vrot.lane.b32.xlu0 %v685, 6
          %v932 = vpop.permute.xlu0 %931
          %933 = vrot.lane.b32.xlu0 %v686, 6
          %v934 = vpop.permute.xlu0 %933
          %935 = vrot.lane.b32.xlu0 %v687, 6
          %v936 = vpop.permute.xlu0 %935
          %937 = vrot.lane.b32.xlu0 %v688, 6
          %v938 = vpop.permute.xlu0 %937
          %939 = vrot.lane.b32.xlu0 %v689, 6
          %v940 = vpop.permute.xlu0 %939
          %941 = vrot.lane.b32.xlu0 %v690, 6
          %v942 = vpop.permute.xlu0 %941
          %943 = vrot.lane.b32.xlu0 %v691, 6
          %v944 = vpop.permute.xlu0 %943
          %945 = vrot.lane.b32.xlu0 %v692, 6
          %v946 = vpop.permute.xlu0 %945
          %947 = vrot.lane.b32.xlu0 %v693, 6
          %v948 = vpop.permute.xlu0 %947
          %949 = vrot.lane.b32.xlu0 %v694, 6
          %v950 = vpop.permute.xlu0 %949
          %951 = vrot.lane.b32.xlu0 %v695, 6
          %v952 = vpop.permute.xlu0 %951
          %953 = vrot.lane.b32.xlu0 %v696, 6
          %v954 = vpop.permute.xlu0 %953
          %955 = vrot.lane.b32.xlu0 %v697, 6
          %v956 = vpop.permute.xlu0 %955
          %957 = vrot.lane.b32.xlu0 %v698, 6
          %v958 = vpop.permute.xlu0 %957
          %959 = vrot.lane.b32.xlu0 %v699, 6
          %v960 = vpop.permute.xlu0 %959
          %961 = vrot.lane.b32.xlu0 %v700, 6
          %v962 = vpop.permute.xlu0 %961
          %979 = vrot.lane.b32.xlu0 %v899, 12
          %v980 = vpop.permute.xlu0 %979
          %981 = vrot.lane.b32.xlu0 %v900, 12
          %v982 = vpop.permute.xlu0 %981
          %983 = vrot.lane.b32.xlu0 %v901, 12
          %v984 = vpop.permute.xlu0 %983
          %985 = vrot.lane.b32.xlu0 %v902, 12
          %v986 = vpop.permute.xlu0 %985
          %987 = vrot.lane.b32.xlu0 %v903, 12
          %v988 = vpop.permute.xlu0 %987
          %989 = vrot.lane.b32.xlu0 %v904, 12
          %v990 = vpop.permute.xlu0 %989
          %991 = vrot.lane.b32.xlu0 %v905, 12
          %v992 = vpop.permute.xlu0 %991
          %993 = vrot.lane.b32.xlu0 %v906, 12
          %v994 = vpop.permute.xlu0 %993
          %995 = vrot.lane.b32.xlu0 %v907, 12
          %v996 = vpop.permute.xlu0 %995
          %997 = vrot.lane.b32.xlu0 %v908, 12
          %v998 = vpop.permute.xlu0 %997
          %999 = vrot.lane.b32.xlu0 %v909, 12
          %v1000 = vpop.permute.xlu0 %999
          %1001 = vrot.lane.b32.xlu0 %v910, 12
          %v1002 = vpop.permute.xlu0 %1001
          %1003 = vrot.lane.b32.xlu0 %v911, 12
          %v1004 = vpop.permute.xlu0 %1003
          %1005 = vrot.lane.b32.xlu0 %v912, 12
          %v1006 = vpop.permute.xlu0 %1005
          %1007 = vrot.lane.b32.xlu0 %v913, 12
          %v1008 = vpop.permute.xlu0 %1007
          %1009 = vrot.lane.b32.xlu0 %v914, 12
          %v1010 = vpop.permute.xlu0 %1009
          %vm1011 = vcmask 48128
          %v1014 = vsel %vm1011, %v832, %v932
          %v1017 = vsel %vm1011, %v833, %v934
          %v1020 = vsel %vm1011, %v834, %v936
          %v1023 = vsel %vm1011, %v835, %v938
          %v1026 = vsel %vm1011, %v836, %v940
          %v1029 = vsel %vm1011, %v837, %v942
          %v1032 = vsel %vm1011, %v838, %v944
          %v1035 = vsel %vm1011, %v839, %v946
          %v1038 = vsel %vm1011, %v840, %v948
          %v1041 = vsel %vm1011, %v841, %v950
          %v1044 = vsel %vm1011, %v842, %v952
          %v1047 = vsel %vm1011, %v843, %v954
          %v1050 = vsel %vm1011, %v844, %v956
          %v1053 = vsel %vm1011, %v845, %v958
          %v1056 = vsel %vm1011, %v846, %v960
          %v1059 = vsel %vm1011, %v847, %v962
          %vm1060 = vcmask 97280
          %v1062 = vsel %vm1060, %v1014, %v980
          %v1064 = vsel %vm1060, %v1017, %v982
          %v1066 = vsel %vm1060, %v1020, %v984
          %v1068 = vsel %vm1060, %v1023, %v986
          %v1070 = vsel %vm1060, %v1026, %v988
          %v1072 = vsel %vm1060, %v1029, %v990
          %v1074 = vsel %vm1060, %v1032, %v992
          %v1076 = vsel %vm1060, %v1035, %v994
          %v1078 = vsel %vm1060, %v1038, %v996
          %v1080 = vsel %vm1060, %v1041, %v998
          %v1082 = vsel %vm1060, %v1044, %v1000
          %v1084 = vsel %vm1060, %v1047, %v1002
          %v1086 = vsel %vm1060, %v1050, %v1004
          %v1088 = vsel %vm1060, %v1053, %v1006
          %v1090 = vsel %vm1060, %v1056, %v1008
          %v1092 = vsel %vm1060, %v1059, %v1010
          %v1109 = vunpack.c.l.b16 %v1062
          %v1110 = vunpack.c.h.b16 %v1062
          %v1111 = vunpack.c.l.b16 %v1064
          %v1112 = vunpack.c.h.b16 %v1064
          %v1113 = vunpack.c.l.b16 %v1066
          %v1114 = vunpack.c.h.b16 %v1066
          %v1115 = vunpack.c.l.b16 %v1068
          %v1116 = vunpack.c.h.b16 %v1068
          %v1117 = vunpack.c.l.b16 %v1070
          %v1118 = vunpack.c.h.b16 %v1070
          %v1119 = vunpack.c.l.b16 %v1072
          %v1120 = vunpack.c.h.b16 %v1072
          %v1121 = vunpack.c.l.b16 %v1074
          %v1122 = vunpack.c.h.b16 %v1074
          %v1123 = vunpack.c.l.b16 %v1076
          %v1124 = vunpack.c.h.b16 %v1076
          %v1125 = vunpack.c.l.b16 %v1078
          %v1126 = vunpack.c.h.b16 %v1078
          %v1127 = vunpack.c.l.b16 %v1080
          %v1128 = vunpack.c.h.b16 %v1080
          %v1129 = vunpack.c.l.b16 %v1082
          %v1130 = vunpack.c.h.b16 %v1082
          %v1131 = vunpack.c.l.b16 %v1084
          %v1132 = vunpack.c.h.b16 %v1084
          %v1133 = vunpack.c.l.b16 %v1086
          %v1134 = vunpack.c.h.b16 %v1086
          %v1135 = vunpack.c.l.b16 %v1088
          %v1136 = vunpack.c.h.b16 %v1088
          %v1137 = vunpack.c.l.b16 %v1090
          %v1138 = vunpack.c.h.b16 %v1090
          %v1139 = vunpack.c.l.b16 %v1092
          %v1140 = vunpack.c.h.b16 %v1092
          %v1141 = vpack.c.b16 %v1109, %v1109
          %v1142 = vpack.c.b16 %v1110, %v1110
          %v1143 = vpack.c.b16 %v1111, %v1111
          %v1144 = vpack.c.b16 %v1112, %v1112
          %v1145 = vpack.c.b16 %v1113, %v1113
          %v1146 = vpack.c.b16 %v1114, %v1114
          %v1147 = vpack.c.b16 %v1115, %v1115
          %v1148 = vpack.c.b16 %v1116, %v1116
          %v1149 = vpack.c.b16 %v1117, %v1117
          %v1150 = vpack.c.b16 %v1118, %v1118
          %v1151 = vpack.c.b16 %v1119, %v1119
          %v1152 = vpack.c.b16 %v1120, %v1120
          %v1153 = vpack.c.b16 %v1121, %v1121
          %v1154 = vpack.c.b16 %v1122, %v1122
          %v1155 = vpack.c.b16 %v1123, %v1123
          %v1156 = vpack.c.b16 %v1124, %v1124
          %v1157 = vpack.c.b16 %v1125, %v1125
          %v1158 = vpack.c.b16 %v1126, %v1126
          %v1159 = vpack.c.b16 %v1127, %v1127
          %v1160 = vpack.c.b16 %v1128, %v1128
          %v1161 = vpack.c.b16 %v1129, %v1129
          %v1162 = vpack.c.b16 %v1130, %v1130
          %v1163 = vpack.c.b16 %v1131, %v1131
          %v1164 = vpack.c.b16 %v1132, %v1132
          %v1165 = vpack.c.b16 %v1133, %v1133
          %v1166 = vpack.c.b16 %v1134, %v1134
          %v1167 = vpack.c.b16 %v1135, %v1135
          %v1168 = vpack.c.b16 %v1136, %v1136
          %v1169 = vpack.c.b16 %v1137, %v1137
          %v1170 = vpack.c.b16 %v1138, %v1138
          %v1171 = vpack.c.b16 %v1139, %v1139
          %v1172 = vpack.c.b16 %v1140, %v1140
          %s1205 = scalar_lea.vmem [#allocation2], 16
          %vm1206 = vcmask 142336
          %1207 = vst.msk [vmem:[%s1205] sm:$0xf] %vm1206, %v1141
          %1208 = vst.msk [vmem:[%s1205 + $0x8] sm:$0xf] %vm1206, %v1142
          %1209 = vst.msk [vmem:[%s1205 + $0x10] sm:$0xf] %vm1206, %v1143
          %1210 = vst.msk [vmem:[%s1205 + $0x18] sm:$0xf] %vm1206, %v1144
          %1211 = vst.msk [vmem:[%s1205 + $0x20] sm:$0xf] %vm1206, %v1145
          %1212 = vst.msk [vmem:[%s1205 + $0x28] sm:$0xf] %vm1206, %v1146
          %1213 = vst.msk [vmem:[%s1205 + $0x30] sm:$0xf] %vm1206, %v1147
          %1214 = vst.msk [vmem:[%s1205 + $0x38] sm:$0xf] %vm1206, %v1148
          %1215 = vst.msk [vmem:[%s1205 + $0x40] sm:$0xf] %vm1206, %v1149
          %1216 = vst.msk [vmem:[%s1205 + $0x48] sm:$0xf] %vm1206, %v1150
          %1217 = vst.msk [vmem:[%s1205 + $0x50] sm:$0xf] %vm1206, %v1151
          %1218 = vst.msk [vmem:[%s1205 + $0x58] sm:$0xf] %vm1206, %v1152
          %1219 = vst.msk [vmem:[%s1205 + $0x60] sm:$0xf] %vm1206, %v1153
          %1220 = vst.msk [vmem:[%s1205 + $0x68] sm:$0xf] %vm1206, %v1154
          %1221 = vst.msk [vmem:[%s1205 + $0x70] sm:$0xf] %vm1206, %v1155
          %1222 = vst.msk [vmem:[%s1205 + $0x78] sm:$0xf] %vm1206, %v1156
          %1223 = vst.msk [vmem:[%s1205 + $0x80] sm:$0xf] %vm1206, %v1157
          %1224 = vst.msk [vmem:[%s1205 + $0x88] sm:$0xf] %vm1206, %v1158
          %1225 = vst.msk [vmem:[%s1205 + $0x90] sm:$0xf] %vm1206, %v1159
          %1226 = vst.msk [vmem:[%s1205 + $0x98] sm:$0xf] %vm1206, %v1160
          %1227 = vst.msk [vmem:[%s1205 + $0xa0] sm:$0xf] %vm1206, %v1161
          %1228 = vst.msk [vmem:[%s1205 + $0xa8] sm:$0xf] %vm1206, %v1162
          %1229 = vst.msk [vmem:[%s1205 + $0xb0] sm:$0xf] %vm1206, %v1163
          %1230 = vst.msk [vmem:[%s1205 + $0xb8] sm:$0xf] %vm1206, %v1164
          %1231 = vst.msk [vmem:[%s1205 + $0xc0] sm:$0xf] %vm1206, %v1165
          %1232 = vst.msk [vmem:[%s1205 + $0xc8] sm:$0xf] %vm1206, %v1166
          %1233 = vst.msk [vmem:[%s1205 + $0xd0] sm:$0xf] %vm1206, %v1167
          %1234 = vst.msk [vmem:[%s1205 + $0xd8] sm:$0xf] %vm1206, %v1168
          %1235 = vst.msk [vmem:[%s1205 + $0xe0] sm:$0xf] %vm1206, %v1169
          %1236 = vst.msk [vmem:[%s1205 + $0xe8] sm:$0xf] %vm1206, %v1170
          %1237 = vst.msk [vmem:[%s1205 + $0xf0] sm:$0xf] %vm1206, %v1171
          %1238 = vst.msk [vmem:[%s1205 + $0xf8] sm:$0xf] %vm1206, %v1172
          %v1239 = vld [vmem:[%s1] sm:$0xf]
          %v1240 = vld [vmem:[%s1 + $0x4] sm:$0xf]
          %v1241 = vld [vmem:[%s1 + $0x8] sm:$0x1]
          %v1242 = vld [vmem:[%s1 + $0xc] sm:$0xf]
          %v1243 = vld [vmem:[%s1 + $0x10] sm:$0xf]
          %v1244 = vld [vmem:[%s1 + $0x14] sm:$0x1]
          %v1245 = vld [vmem:[%s1 + $0x18] sm:$0xf]
          %v1246 = vld [vmem:[%s1 + $0x1c] sm:$0xf]
          %v1247 = vld [vmem:[%s1 + $0x20] sm:$0x1]
          %v1248 = vld [vmem:[%s2] sm:$0x1]
          %v1249 = vld [vmem:[#allocation2] sm:$0xf]
          %v1250 = vld [vmem:[#allocation2 + $0x8] sm:$0xf]
          %v1251 = vld [vmem:[#allocation2 + $0x10] sm:$0xf]
          %v1252 = vld [vmem:[#allocation2 + $0x18] sm:$0xf]
          %v1253 = vld [vmem:[#allocation2 + $0x20] sm:$0xf]
          %v1254 = vld [vmem:[#allocation2 + $0x28] sm:$0xf]
          %v1255 = vld [vmem:[#allocation2 + $0x30] sm:$0xf]
          %v1256 = vld [vmem:[#allocation2 + $0x38] sm:$0xf]
          %v1257 = vld [vmem:[#allocation2 + $0x40] sm:$0xf]
          %v1258 = vld [vmem:[#allocation2 + $0x48] sm:$0xf]
          %v1259 = vld [vmem:[#allocation2 + $0x50] sm:$0xf]
          %v1260 = vld [vmem:[#allocation2 + $0x58] sm:$0xf]
          %v1261 = vld [vmem:[#allocation2 + $0x60] sm:$0xf]
          %v1262 = vld [vmem:[#allocation2 + $0x68] sm:$0xf]
          %v1263 = vld [vmem:[#allocation2 + $0x70] sm:$0xf]
          %v1264 = vld [vmem:[#allocation2 + $0x78] sm:$0xf]
          %v1265 = vld [vmem:[#allocation2 + $0x80] sm:$0xf]
          %v1266 = vld [vmem:[#allocation2 + $0x88] sm:$0xf]
          %v1267 = vld [vmem:[#allocation2 + $0x90] sm:$0xf]
          %v1268 = vld [vmem:[#allocation2 + $0x98] sm:$0xf]
          %v1269 = vld [vmem:[#allocation2 + $0xa0] sm:$0xf]
          %v1270 = vld [vmem:[#allocation2 + $0xa8] sm:$0xf]
          %v1271 = vld [vmem:[#allocation2 + $0xb0] sm:$0xf]
          %v1272 = vld [vmem:[#allocation2 + $0xb8] sm:$0xf]
          %v1273 = vld [vmem:[#allocation2 + $0xc0] sm:$0xf]
          %v1274 = vld [vmem:[#allocation2 + $0xc8] sm:$0xf]
          %v1275 = vld [vmem:[#allocation2 + $0xd0] sm:$0xf]
          %v1276 = vld [vmem:[#allocation2 + $0xd8] sm:$0xf]
          %v1277 = vld [vmem:[#allocation2 + $0xe0] sm:$0xf]
          %v1278 = vld [vmem:[#allocation2 + $0xe8] sm:$0xf]
          %v1279 = vld [vmem:[#allocation2 + $0xf0] sm:$0xf]
          %v1280 = vld [vmem:[#allocation2 + $0xf8] sm:$0xf]
          %v1281 = vld [vmem:[%s1205] sm:$0xf]
          %v1282 = vld [vmem:[%s1205 + $0x8] sm:$0xf]
          %v1283 = vld [vmem:[%s1205 + $0x10] sm:$0xf]
          %v1284 = vld [vmem:[%s1205 + $0x18] sm:$0xf]
          %v1285 = vld [vmem:[%s1205 + $0x20] sm:$0xf]
          %v1286 = vld [vmem:[%s1205 + $0x28] sm:$0xf]
          %v1287 = vld [vmem:[%s1205 + $0x30] sm:$0xf]
          %v1288 = vld [vmem:[%s1205 + $0x38] sm:$0xf]
          %v1289 = vld [vmem:[%s1205 + $0x40] sm:$0xf]
          %v1290 = vld [vmem:[%s1205 + $0x48] sm:$0xf]
          %v1291 = vld [vmem:[%s1205 + $0x50] sm:$0xf]
          %v1292 = vld [vmem:[%s1205 + $0x58] sm:$0xf]
          %v1293 = vld [vmem:[%s1205 + $0x60] sm:$0xf]
          %v1294 = vld [vmem:[%s1205 + $0x68] sm:$0xf]
          %v1295 = vld [vmem:[%s1205 + $0x70] sm:$0xf]
          %v1296 = vld [vmem:[%s1205 + $0x78] sm:$0xf]
          %v1297 = vld [vmem:[%s1205 + $0x80] sm:$0xf]
          %v1298 = vld [vmem:[%s1205 + $0x88] sm:$0xf]
          %v1299 = vld [vmem:[%s1205 + $0x90] sm:$0xf]
          %v1300 = vld [vmem:[%s1205 + $0x98] sm:$0xf]
          %v1301 = vld [vmem:[%s1205 + $0xa0] sm:$0xf]
          %v1302 = vld [vmem:[%s1205 + $0xa8] sm:$0xf]
          %v1303 = vld [vmem:[%s1205 + $0xb0] sm:$0xf]
          %v1304 = vld [vmem:[%s1205 + $0xb8] sm:$0xf]
          %v1305 = vld [vmem:[%s1205 + $0xc0] sm:$0xf]
          %v1306 = vld [vmem:[%s1205 + $0xc8] sm:$0xf]
          %v1307 = vld [vmem:[%s1205 + $0xd0] sm:$0xf]
          %v1308 = vld [vmem:[%s1205 + $0xd8] sm:$0xf]
          %v1309 = vld [vmem:[%s1205 + $0xe0] sm:$0xf]
          %v1310 = vld [vmem:[%s1205 + $0xe8] sm:$0xf]
          %v1311 = vld [vmem:[%s1205 + $0xf0] sm:$0xf]
          %v1312 = vld [vmem:[%s1205 + $0xf8] sm:$0xf]
          %v1345 = vunpack.c.l.b16 %v1281
          %v1346 = vunpack.c.l.b16 %v1282
          %v1347 = vunpack.c.l.b16 %v1283
          %v1348 = vunpack.c.l.b16 %v1284
          %v1349 = vunpack.c.l.b16 %v1285
          %v1350 = vunpack.c.l.b16 %v1286
          %v1351 = vunpack.c.l.b16 %v1287
          %v1352 = vunpack.c.l.b16 %v1288
          %v1353 = vunpack.c.l.b16 %v1289
          %v1354 = vunpack.c.l.b16 %v1290
          %v1355 = vunpack.c.l.b16 %v1291
          %v1356 = vunpack.c.l.b16 %v1292
          %v1357 = vunpack.c.l.b16 %v1293
          %v1358 = vunpack.c.l.b16 %v1294
          %v1359 = vunpack.c.l.b16 %v1295
          %v1360 = vunpack.c.l.b16 %v1296
          %v1361 = vunpack.c.l.b16 %v1297
          %v1362 = vunpack.c.l.b16 %v1298
          %v1363 = vunpack.c.l.b16 %v1299
          %v1364 = vunpack.c.l.b16 %v1300
          %v1365 = vunpack.c.l.b16 %v1301
          %v1366 = vunpack.c.l.b16 %v1302
          %v1367 = vunpack.c.l.b16 %v1303
          %v1368 = vunpack.c.l.b16 %v1304
          %v1369 = vunpack.c.l.b16 %v1305
          %v1370 = vunpack.c.l.b16 %v1306
          %v1371 = vunpack.c.l.b16 %v1307
          %v1372 = vunpack.c.l.b16 %v1308
          %v1373 = vunpack.c.l.b16 %v1309
          %v1374 = vunpack.c.l.b16 %v1310
          %v1375 = vunpack.c.l.b16 %v1311
          %v1376 = vunpack.c.l.b16 %v1312
          %v1377 = vpack.c.b16 %v1346, %v1345
          %v1378 = vpack.c.b16 %v1348, %v1347
          %v1379 = vpack.c.b16 %v1350, %v1349
          %v1380 = vpack.c.b16 %v1352, %v1351
          %v1381 = vpack.c.b16 %v1354, %v1353
          %v1382 = vpack.c.b16 %v1356, %v1355
          %v1383 = vpack.c.b16 %v1358, %v1357
          %v1384 = vpack.c.b16 %v1360, %v1359
          %v1385 = vpack.c.b16 %v1362, %v1361
          %v1386 = vpack.c.b16 %v1364, %v1363
          %v1387 = vpack.c.b16 %v1366, %v1365
          %v1388 = vpack.c.b16 %v1368, %v1367
          %v1389 = vpack.c.b16 %v1370, %v1369
          %v1390 = vpack.c.b16 %v1372, %v1371
          %v1391 = vpack.c.b16 %v1374, %v1373
          %v1392 = vpack.c.b16 %v1376, %v1375
          %v1396 = vunpack.c.l.b16 %v1242
          %v1397 = vunpack.c.l.b16 %v1243
          %v1398 = vunpack.c.l.b16 %v1244
          %v1399 = vpack.c.b16 %v1397, %v1396
          %v1400 = vpack.c.b16 %v1398, %v1398
          %vm1402 = vcmask 146432
          %v1404 = vsel %vm1402, %v1377, 0
          %v1407 = vsel %vm1402, %v1378, 0
          %v1410 = vsel %vm1402, %v1379, 0
          %v1413 = vsel %vm1402, %v1380, 0
          %v1416 = vsel %vm1402, %v1381, 0
          %v1419 = vsel %vm1402, %v1382, 0
          %v1422 = vsel %vm1402, %v1383, 0
          %v1425 = vsel %vm1402, %v1384, 0
          %v1428 = vsel %vm1402, %v1385, 0
          %v1431 = vsel %vm1402, %v1386, 0
          %v1434 = vsel %vm1402, %v1387, 0
          %v1437 = vsel %vm1402, %v1388, 0
          %v1440 = vsel %vm1402, %v1389, 0
          %v1443 = vsel %vm1402, %v1390, 0
          %v1446 = vsel %vm1402, %v1391, 0
          %v1449 = vsel %vm1402, %v1392, 0
          %vm1451 = vcmask 1040384
          %v1453 = vsel %vm1451, %v1400, 0
          %1455 = vmatprep.subr.bf16.mxu0 0
          %1456 = vmatpush1.bf16.msra.mxu0 0
          %1457 = vmatprep.subr.bf16.mxu0 0
          %1458 = vmatpush1.bf16.msra.mxu0 0
          %1459 = vmatprep.subr.bf16.mxu0 0
          %1460 = vmatpush1.bf16.msra.mxu0 0
          %1461 = vmatprep.subr.bf16.mxu0 0
          %1462 = vmatpush1.bf16.msra.mxu0 0
          %1463 = vmatprep.subr.bf16.mxu0 0
          %1464 = vmatpush1.bf16.msra.mxu0 0
          %1465 = vmatprep.subr.bf16.mxu0 0
          %1466 = vmatpush1.bf16.msra.mxu0 0
          %1467 = vmatprep.subr.bf16.mxu0 0
          %1468 = vmatpush1.bf16.msra.mxu0 %v1453
          %1469 = vmatprep.subr.bf16.mxu0 0
          %1470 = vmatpush1.bf16.msra.mxu0 %v1399
          %1471 = vmatprep.subr.bf16.mxu0 0
          %1472 = vmatpush2.bf16.msra.mxu0 0
          %1473 = vmatprep.subr.bf16.mxu0 0
          %1474 = vmatpush2.bf16.msra.mxu0 0
          %1475 = vmatprep.subr.bf16.mxu0 0
          %1476 = vmatpush2.bf16.msra.mxu0 0
          %1477 = vmatprep.subr.bf16.mxu0 0
          %1478 = vmatpush2.bf16.msra.mxu0 0
          %1479 = vmatprep.subr.bf16.mxu0 0
          %1480 = vmatpush2.bf16.msra.mxu0 0
          %1481 = vmatprep.subr.bf16.mxu0 0
          %1482 = vmatpush2.bf16.msra.mxu0 0
          %1483 = vmatprep.subr.bf16.mxu0 0
          %1484 = vmatpush2.bf16.msra.mxu0 0
          %1485 = vmatprep.subr.bf16.mxu0 0
          %1486 = vmatpush2.bf16.msra.mxu0 0
          %1487 = vmatprep.mubr.bf16.mxu0 0
          %1488 = vmatmul.mubr.bf16.gmra.mxu0 %v1404
          %v1489 = vpop.f32.mrf.mxu0
          %v1490 = vadd.f32 0.0, %v1489
          %v1491 = vpop.f32.mrf.mxu0
          %v1492 = vpop.f32.mrf.mxu0
          %v1493 = vadd.f32 0.0, %v1492
          %v1494 = vpop.f32.mrf.mxu0
          %1495 = vmatprep.mubr.bf16.mxu0 0
          %1496 = vmatmul.mubr.bf16.gmra.mxu0 %v1407
          %v1497 = vpop.f32.mrf.mxu0
          %v1498 = vadd.f32 0.0, %v1497
          %v1499 = vpop.f32.mrf.mxu0
          %v1500 = vpop.f32.mrf.mxu0
          %v1501 = vadd.f32 0.0, %v1500
          %v1502 = vpop.f32.mrf.mxu0
          %1503 = vmatprep.mubr.bf16.mxu0 0
          %1504 = vmatmul.mubr.bf16.gmra.mxu0 %v1410
          %v1505 = vpop.f32.mrf.mxu0
          %v1506 = vadd.f32 0.0, %v1505
          %v1507 = vpop.f32.mrf.mxu0
          %v1508 = vpop.f32.mrf.mxu0
          %v1509 = vadd.f32 0.0, %v1508
          %v1510 = vpop.f32.mrf.mxu0
          %1511 = vmatprep.mubr.bf16.mxu0 0
          %1512 = vmatmul.mubr.bf16.gmra.mxu0 %v1413
          %v1513 = vpop.f32.mrf.mxu0
          %v1514 = vadd.f32 0.0, %v1513
          %v1515 = vpop.f32.mrf.mxu0
          %v1516 = vpop.f32.mrf.mxu0
          %v1517 = vadd.f32 0.0, %v1516
          %v1518 = vpop.f32.mrf.mxu0
          %1519 = vmatprep.mubr.bf16.mxu0 0
          %1520 = vmatmul.mubr.bf16.gmra.mxu0 %v1416
          %v1521 = vpop.f32.mrf.mxu0
          %v1522 = vadd.f32 0.0, %v1521
          %v1523 = vpop.f32.mrf.mxu0
          %v1524 = vpop.f32.mrf.mxu0
          %v1525 = vadd.f32 0.0, %v1524
          %v1526 = vpop.f32.mrf.mxu0
          %1527 = vmatprep.mubr.bf16.mxu0 0
          %1528 = vmatmul.mubr.bf16.gmra.mxu0 %v1419
          %v1529 = vpop.f32.mrf.mxu0
          %v1530 = vadd.f32 0.0, %v1529
          %v1531 = vpop.f32.mrf.mxu0
          %v1532 = vpop.f32.mrf.mxu0
          %v1533 = vadd.f32 0.0, %v1532
          %v1534 = vpop.f32.mrf.mxu0
          %1535 = vmatprep.mubr.bf16.mxu0 0
          %1536 = vmatmul.mubr.bf16.gmra.mxu0 %v1422
          %v1537 = vpop.f32.mrf.mxu0
          %v1538 = vadd.f32 0.0, %v1537
          %v1539 = vpop.f32.mrf.mxu0
          %v1540 = vpop.f32.mrf.mxu0
          %v1541 = vadd.f32 0.0, %v1540
          %v1542 = vpop.f32.mrf.mxu0
          %1543 = vmatprep.mubr.bf16.mxu0 0
          %1544 = vmatmul.mubr.bf16.gmra.mxu0 %v1425
          %v1545 = vpop.f32.mrf.mxu0
          %v1546 = vadd.f32 0.0, %v1545
          %v1547 = vpop.f32.mrf.mxu0
          %v1548 = vpop.f32.mrf.mxu0
          %v1549 = vadd.f32 0.0, %v1548
          %v1550 = vpop.f32.mrf.mxu0
          %1551 = vmatprep.mubr.bf16.mxu0 0
          %1552 = vmatmul.mubr.bf16.gmra.mxu0 %v1428
          %v1553 = vpop.f32.mrf.mxu0
          %v1554 = vadd.f32 0.0, %v1553
          %v1555 = vpop.f32.mrf.mxu0
          %v1556 = vpop.f32.mrf.mxu0
          %v1557 = vadd.f32 0.0, %v1556
          %v1558 = vpop.f32.mrf.mxu0
          %1559 = vmatprep.mubr.bf16.mxu0 0
          %1560 = vmatmul.mubr.bf16.gmra.mxu0 %v1431
          %v1561 = vpop.f32.mrf.mxu0
          %v1562 = vadd.f32 0.0, %v1561
          %v1563 = vpop.f32.mrf.mxu0
          %v1564 = vpop.f32.mrf.mxu0
          %v1565 = vadd.f32 0.0, %v1564
          %v1566 = vpop.f32.mrf.mxu0
          %1567 = vmatprep.mubr.bf16.mxu0 0
          %1568 = vmatmul.mubr.bf16.gmra.mxu0 %v1434
          %v1569 = vpop.f32.mrf.mxu0
          %v1570 = vadd.f32 0.0, %v1569
          %v1571 = vpop.f32.mrf.mxu0
          %v1572 = vpop.f32.mrf.mxu0
          %v1573 = vadd.f32 0.0, %v1572
          %v1574 = vpop.f32.mrf.mxu0
          %1575 = vmatprep.mubr.bf16.mxu0 0
          %1576 = vmatmul.mubr.bf16.gmra.mxu0 %v1437
          %v1577 = vpop.f32.mrf.mxu0
          %v1578 = vadd.f32 0.0, %v1577
          %v1579 = vpop.f32.mrf.mxu0
          %v1580 = vpop.f32.mrf.mxu0
          %v1581 = vadd.f32 0.0, %v1580
          %v1582 = vpop.f32.mrf.mxu0
          %1583 = vmatprep.mubr.bf16.mxu0 0
          %1584 = vmatmul.mubr.bf16.gmra.mxu0 %v1440
          %v1585 = vpop.f32.mrf.mxu0
          %v1586 = vadd.f32 0.0, %v1585
          %v1587 = vpop.f32.mrf.mxu0
          %v1588 = vpop.f32.mrf.mxu0
          %v1589 = vadd.f32 0.0, %v1588
          %v1590 = vpop.f32.mrf.mxu0
          %1591 = vmatprep.mubr.bf16.mxu0 0
          %1592 = vmatmul.mubr.bf16.gmra.mxu0 %v1443
          %v1593 = vpop.f32.mrf.mxu0
          %v1594 = vadd.f32 0.0, %v1593
          %v1595 = vpop.f32.mrf.mxu0
          %v1596 = vpop.f32.mrf.mxu0
          %v1597 = vadd.f32 0.0, %v1596
          %v1598 = vpop.f32.mrf.mxu0
          %1599 = vmatprep.mubr.bf16.mxu0 0
          %1600 = vmatmul.mubr.bf16.gmra.mxu0 %v1446
          %v1601 = vpop.f32.mrf.mxu0
          %v1602 = vadd.f32 0.0, %v1601
          %v1603 = vpop.f32.mrf.mxu0
          %v1604 = vpop.f32.mrf.mxu0
          %v1605 = vadd.f32 0.0, %v1604
          %v1606 = vpop.f32.mrf.mxu0
          %1607 = vmatprep.mubr.bf16.mxu0 0
          %1608 = vmatmul.mubr.bf16.gmra.mxu0 %v1449
          %v1609 = vpop.f32.mrf.mxu0
          %v1610 = vadd.f32 0.0, %v1609
          %v1611 = vpop.f32.mrf.mxu0
          %v1612 = vpop.f32.mrf.mxu0
          %v1613 = vadd.f32 0.0, %v1612
          %v1614 = vpop.f32.mrf.mxu0
          %1615 = vdwg.mxu0
          %v1648 = vunpack.c.l.b16 %v1249
          %v1649 = vunpack.c.l.b16 %v1250
          %v1650 = vunpack.c.l.b16 %v1251
          %v1651 = vunpack.c.l.b16 %v1252
          %v1652 = vunpack.c.l.b16 %v1253
          %v1653 = vunpack.c.l.b16 %v1254
          %v1654 = vunpack.c.l.b16 %v1255
          %v1655 = vunpack.c.l.b16 %v1256
          %v1656 = vunpack.c.l.b16 %v1257
          %v1657 = vunpack.c.l.b16 %v1258
          %v1658 = vunpack.c.l.b16 %v1259
          %v1659 = vunpack.c.l.b16 %v1260
          %v1660 = vunpack.c.l.b16 %v1261
          %v1661 = vunpack.c.l.b16 %v1262
          %v1662 = vunpack.c.l.b16 %v1263
          %v1663 = vunpack.c.l.b16 %v1264
          %v1664 = vunpack.c.l.b16 %v1265
          %v1665 = vunpack.c.l.b16 %v1266
          %v1666 = vunpack.c.l.b16 %v1267
          %v1667 = vunpack.c.l.b16 %v1268
          %v1668 = vunpack.c.l.b16 %v1269
          %v1669 = vunpack.c.l.b16 %v1270
          %v1670 = vunpack.c.l.b16 %v1271
          %v1671 = vunpack.c.l.b16 %v1272
          %v1672 = vunpack.c.l.b16 %v1273
          %v1673 = vunpack.c.l.b16 %v1274
          %v1674 = vunpack.c.l.b16 %v1275
          %v1675 = vunpack.c.l.b16 %v1276
          %v1676 = vunpack.c.l.b16 %v1277
          %v1677 = vunpack.c.l.b16 %v1278
          %v1678 = vunpack.c.l.b16 %v1279
          %v1679 = vunpack.c.l.b16 %v1280
          %v1680 = vpack.c.b16 %v1649, %v1648
          %v1681 = vpack.c.b16 %v1651, %v1650
          %v1682 = vpack.c.b16 %v1653, %v1652
          %v1683 = vpack.c.b16 %v1655, %v1654
          %v1684 = vpack.c.b16 %v1657, %v1656
          %v1685 = vpack.c.b16 %v1659, %v1658
          %v1686 = vpack.c.b16 %v1661, %v1660
          %v1687 = vpack.c.b16 %v1663, %v1662
          %v1688 = vpack.c.b16 %v1665, %v1664
          %v1689 = vpack.c.b16 %v1667, %v1666
          %v1690 = vpack.c.b16 %v1669, %v1668
          %v1691 = vpack.c.b16 %v1671, %v1670
          %v1692 = vpack.c.b16 %v1673, %v1672
          %v1693 = vpack.c.b16 %v1675, %v1674
          %v1694 = vpack.c.b16 %v1677, %v1676
          %v1695 = vpack.c.b16 %v1679, %v1678
          %v1699 = vunpack.c.l.b16 %v1239
          %v1700 = vunpack.c.l.b16 %v1240
          %v1701 = vunpack.c.l.b16 %v1241
          %v1702 = vpack.c.b16 %v1700, %v1699
          %v1703 = vpack.c.b16 %v1701, %v1701
          %v1706 = vsel %vm1402, %v1680, 0
          %v1709 = vsel %vm1402, %v1681, 0
          %v1712 = vsel %vm1402, %v1682, 0
          %v1715 = vsel %vm1402, %v1683, 0
          %v1718 = vsel %vm1402, %v1684, 0
          %v1721 = vsel %vm1402, %v1685, 0
          %v1724 = vsel %vm1402, %v1686, 0
          %v1727 = vsel %vm1402, %v1687, 0
          %v1730 = vsel %vm1402, %v1688, 0
          %v1733 = vsel %vm1402, %v1689, 0
          %v1736 = vsel %vm1402, %v1690, 0
          %v1739 = vsel %vm1402, %v1691, 0
          %v1742 = vsel %vm1402, %v1692, 0
          %v1745 = vsel %vm1402, %v1693, 0
          %v1748 = vsel %vm1402, %v1694, 0
          %v1751 = vsel %vm1402, %v1695, 0
          %v1754 = vsel %vm1451, %v1703, 0
          %1756 = vmatprep.subr.bf16.mxu0 0
          %1757 = vmatpush1.bf16.msra.mxu0 0
          %1758 = vmatprep.subr.bf16.mxu0 0
          %1759 = vmatpush1.bf16.msra.mxu0 0
          %1760 = vmatprep.subr.bf16.mxu0 0
          %1761 = vmatpush1.bf16.msra.mxu0 0
          %1762 = vmatprep.subr.bf16.mxu0 0
          %1763 = vmatpush1.bf16.msra.mxu0 0
          %1764 = vmatprep.subr.bf16.mxu0 0
          %1765 = vmatpush1.bf16.msra.mxu0 0
          %1766 = vmatprep.subr.bf16.mxu0 0
          %1767 = vmatpush1.bf16.msra.mxu0 0
          %1768 = vmatprep.subr.bf16.mxu0 0
          %1769 = vmatpush1.bf16.msra.mxu0 %v1754
          %1770 = vmatprep.subr.bf16.mxu0 0
          %1771 = vmatpush1.bf16.msra.mxu0 %v1702
          %1772 = vmatprep.subr.bf16.mxu0 0
          %1773 = vmatpush2.bf16.msra.mxu0 0
          %1774 = vmatprep.subr.bf16.mxu0 0
          %1775 = vmatpush2.bf16.msra.mxu0 0
          %1776 = vmatprep.subr.bf16.mxu0 0
          %1777 = vmatpush2.bf16.msra.mxu0 0
          %1778 = vmatprep.subr.bf16.mxu0 0
          %1779 = vmatpush2.bf16.msra.mxu0 0
          %1780 = vmatprep.subr.bf16.mxu0 0
          %1781 = vmatpush2.bf16.msra.mxu0 0
          %1782 = vmatprep.subr.bf16.mxu0 0
          %1783 = vmatpush2.bf16.msra.mxu0 0
          %1784 = vmatprep.subr.bf16.mxu0 0
          %1785 = vmatpush2.bf16.msra.mxu0 0
          %1786 = vmatprep.subr.bf16.mxu0 0
          %1787 = vmatpush2.bf16.msra.mxu0 0
          %1788 = vmatprep.mubr.bf16.mxu0 0
          %1789 = vmatmul.mubr.bf16.gmra.mxu0 %v1706
          %v1790 = vpop.f32.mrf.mxu0
          %v1791 = vadd.f32 %v1490, %v1790
          %v1792 = vpop.f32.mrf.mxu0
          %v1793 = vpop.f32.mrf.mxu0
          %v1794 = vadd.f32 %v1493, %v1793
          %v1795 = vpop.f32.mrf.mxu0
          %1796 = vmatprep.mubr.bf16.mxu0 0
          %1797 = vmatmul.mubr.bf16.gmra.mxu0 %v1709
          %v1798 = vpop.f32.mrf.mxu0
          %v1799 = vadd.f32 %v1498, %v1798
          %v1800 = vpop.f32.mrf.mxu0
          %v1801 = vpop.f32.mrf.mxu0
          %v1802 = vadd.f32 %v1501, %v1801
          %v1803 = vpop.f32.mrf.mxu0
          %1804 = vmatprep.mubr.bf16.mxu0 0
          %1805 = vmatmul.mubr.bf16.gmra.mxu0 %v1712
          %v1806 = vpop.f32.mrf.mxu0
          %v1807 = vadd.f32 %v1506, %v1806
          %v1808 = vpop.f32.mrf.mxu0
          %v1809 = vpop.f32.mrf.mxu0
          %v1810 = vadd.f32 %v1509, %v1809
          %v1811 = vpop.f32.mrf.mxu0
          %1812 = vmatprep.mubr.bf16.mxu0 0
          %1813 = vmatmul.mubr.bf16.gmra.mxu0 %v1715
          %v1814 = vpop.f32.mrf.mxu0
          %v1815 = vadd.f32 %v1514, %v1814
          %v1816 = vpop.f32.mrf.mxu0
          %v1817 = vpop.f32.mrf.mxu0
          %v1818 = vadd.f32 %v1517, %v1817
          %v1819 = vpop.f32.mrf.mxu0
          %1820 = vmatprep.mubr.bf16.mxu0 0
          %1821 = vmatmul.mubr.bf16.gmra.mxu0 %v1718
          %v1822 = vpop.f32.mrf.mxu0
          %v1823 = vadd.f32 %v1522, %v1822
          %v1824 = vpop.f32.mrf.mxu0
          %v1825 = vpop.f32.mrf.mxu0
          %v1826 = vadd.f32 %v1525, %v1825
          %v1827 = vpop.f32.mrf.mxu0
          %1828 = vmatprep.mubr.bf16.mxu0 0
          %1829 = vmatmul.mubr.bf16.gmra.mxu0 %v1721
          %v1830 = vpop.f32.mrf.mxu0
          %v1831 = vadd.f32 %v1530, %v1830
          %v1832 = vpop.f32.mrf.mxu0
          %v1833 = vpop.f32.mrf.mxu0
          %v1834 = vadd.f32 %v1533, %v1833
          %v1835 = vpop.f32.mrf.mxu0
          %1836 = vmatprep.mubr.bf16.mxu0 0
          %1837 = vmatmul.mubr.bf16.gmra.mxu0 %v1724
          %v1838 = vpop.f32.mrf.mxu0
          %v1839 = vadd.f32 %v1538, %v1838
          %v1840 = vpop.f32.mrf.mxu0
          %v1841 = vpop.f32.mrf.mxu0
          %v1842 = vadd.f32 %v1541, %v1841
          %v1843 = vpop.f32.mrf.mxu0
          %1844 = vmatprep.mubr.bf16.mxu0 0
          %1845 = vmatmul.mubr.bf16.gmra.mxu0 %v1727
          %v1846 = vpop.f32.mrf.mxu0
          %v1847 = vadd.f32 %v1546, %v1846
          %v1848 = vpop.f32.mrf.mxu0
          %v1849 = vpop.f32.mrf.mxu0
          %v1850 = vadd.f32 %v1549, %v1849
          %v1851 = vpop.f32.mrf.mxu0
          %1852 = vmatprep.mubr.bf16.mxu0 0
          %1853 = vmatmul.mubr.bf16.gmra.mxu0 %v1730
          %v1854 = vpop.f32.mrf.mxu0
          %v1855 = vadd.f32 %v1554, %v1854
          %v1856 = vpop.f32.mrf.mxu0
          %v1857 = vpop.f32.mrf.mxu0
          %v1858 = vadd.f32 %v1557, %v1857
          %v1859 = vpop.f32.mrf.mxu0
          %1860 = vmatprep.mubr.bf16.mxu0 0
          %1861 = vmatmul.mubr.bf16.gmra.mxu0 %v1733
          %v1862 = vpop.f32.mrf.mxu0
          %v1863 = vadd.f32 %v1562, %v1862
          %v1864 = vpop.f32.mrf.mxu0
          %v1865 = vpop.f32.mrf.mxu0
          %v1866 = vadd.f32 %v1565, %v1865
          %v1867 = vpop.f32.mrf.mxu0
          %1868 = vmatprep.mubr.bf16.mxu0 0
          %1869 = vmatmul.mubr.bf16.gmra.mxu0 %v1736
          %v1870 = vpop.f32.mrf.mxu0
          %v1871 = vadd.f32 %v1570, %v1870
          %v1872 = vpop.f32.mrf.mxu0
          %v1873 = vpop.f32.mrf.mxu0
          %v1874 = vadd.f32 %v1573, %v1873
          %v1875 = vpop.f32.mrf.mxu0
          %1876 = vmatprep.mubr.bf16.mxu0 0
          %1877 = vmatmul.mubr.bf16.gmra.mxu0 %v1739
          %v1878 = vpop.f32.mrf.mxu0
          %v1879 = vadd.f32 %v1578, %v1878
          %v1880 = vpop.f32.mrf.mxu0
          %v1881 = vpop.f32.mrf.mxu0
          %v1882 = vadd.f32 %v1581, %v1881
          %v1883 = vpop.f32.mrf.mxu0
          %1884 = vmatprep.mubr.bf16.mxu0 0
          %1885 = vmatmul.mubr.bf16.gmra.mxu0 %v1742
          %v1886 = vpop.f32.mrf.mxu0
          %v1887 = vadd.f32 %v1586, %v1886
          %v1888 = vpop.f32.mrf.mxu0
          %v1889 = vpop.f32.mrf.mxu0
          %v1890 = vadd.f32 %v1589, %v1889
          %v1891 = vpop.f32.mrf.mxu0
          %1892 = vmatprep.mubr.bf16.mxu0 0
          %1893 = vmatmul.mubr.bf16.gmra.mxu0 %v1745
          %v1894 = vpop.f32.mrf.mxu0
          %v1895 = vadd.f32 %v1594, %v1894
          %v1896 = vpop.f32.mrf.mxu0
          %v1897 = vpop.f32.mrf.mxu0
          %v1898 = vadd.f32 %v1597, %v1897
          %v1899 = vpop.f32.mrf.mxu0
          %1900 = vmatprep.mubr.bf16.mxu0 0
          %1901 = vmatmul.mubr.bf16.gmra.mxu0 %v1748
          %v1902 = vpop.f32.mrf.mxu0
          %v1903 = vadd.f32 %v1602, %v1902
          %v1904 = vpop.f32.mrf.mxu0
          %v1905 = vpop.f32.mrf.mxu0
          %v1906 = vadd.f32 %v1605, %v1905
          %v1907 = vpop.f32.mrf.mxu0
          %1908 = vmatprep.mubr.bf16.mxu0 0
          %1909 = vmatmul.mubr.bf16.gmra.mxu0 %v1751
          %v1910 = vpop.f32.mrf.mxu0
          %v1911 = vadd.f32 %v1610, %v1910
          %v1912 = vpop.f32.mrf.mxu0
          %v1913 = vpop.f32.mrf.mxu0
          %v1914 = vadd.f32 %v1613, %v1913
          %v1915 = vpop.f32.mrf.mxu0
          %1916 = vdwg.mxu0
          %s1917 = scalar_lea.vmem [#allocation2], 32
          %v1918 = vld [vmem:[%s1917] sm:$0xf]
          %v1919 = vld [vmem:[%s1917 + $0x8] sm:$0xf]
          %v1920 = vld [vmem:[%s1917 + $0x10] sm:$0xf]
          %v1921 = vld [vmem:[%s1917 + $0x18] sm:$0xf]
          %v1922 = vld [vmem:[%s1917 + $0x20] sm:$0xf]
          %v1923 = vld [vmem:[%s1917 + $0x28] sm:$0xf]
          %v1924 = vld [vmem:[%s1917 + $0x30] sm:$0xf]
          %v1925 = vld [vmem:[%s1917 + $0x38] sm:$0xf]
          %v1926 = vld [vmem:[%s1917 + $0x40] sm:$0xf]
          %v1927 = vld [vmem:[%s1917 + $0x48] sm:$0xf]
          %v1928 = vld [vmem:[%s1917 + $0x50] sm:$0xf]
          %v1929 = vld [vmem:[%s1917 + $0x58] sm:$0xf]
          %v1930 = vld [vmem:[%s1917 + $0x60] sm:$0xf]
          %v1931 = vld [vmem:[%s1917 + $0x68] sm:$0xf]
          %v1932 = vld [vmem:[%s1917 + $0x70] sm:$0xf]
          %v1933 = vld [vmem:[%s1917 + $0x78] sm:$0xf]
          %v1934 = vld [vmem:[%s1917 + $0x80] sm:$0xf]
          %v1935 = vld [vmem:[%s1917 + $0x88] sm:$0xf]
          %v1936 = vld [vmem:[%s1917 + $0x90] sm:$0xf]
          %v1937 = vld [vmem:[%s1917 + $0x98] sm:$0xf]
          %v1938 = vld [vmem:[%s1917 + $0xa0] sm:$0xf]
          %v1939 = vld [vmem:[%s1917 + $0xa8] sm:$0xf]
          %v1940 = vld [vmem:[%s1917 + $0xb0] sm:$0xf]
          %v1941 = vld [vmem:[%s1917 + $0xb8] sm:$0xf]
          %v1942 = vld [vmem:[%s1917 + $0xc0] sm:$0xf]
          %v1943 = vld [vmem:[%s1917 + $0xc8] sm:$0xf]
          %v1944 = vld [vmem:[%s1917 + $0xd0] sm:$0xf]
          %v1945 = vld [vmem:[%s1917 + $0xd8] sm:$0xf]
          %v1946 = vld [vmem:[%s1917 + $0xe0] sm:$0xf]
          %v1947 = vld [vmem:[%s1917 + $0xe8] sm:$0xf]
          %v1948 = vld [vmem:[%s1917 + $0xf0] sm:$0xf]
          %v1949 = vld [vmem:[%s1917 + $0xf8] sm:$0xf]
          %v1982 = vunpack.c.l.b16 %v1918
          %v1983 = vunpack.c.l.b16 %v1919
          %v1984 = vunpack.c.l.b16 %v1920
          %v1985 = vunpack.c.l.b16 %v1921
          %v1986 = vunpack.c.l.b16 %v1922
          %v1987 = vunpack.c.l.b16 %v1923
          %v1988 = vunpack.c.l.b16 %v1924
          %v1989 = vunpack.c.l.b16 %v1925
          %v1990 = vunpack.c.l.b16 %v1926
          %v1991 = vunpack.c.l.b16 %v1927
          %v1992 = vunpack.c.l.b16 %v1928
          %v1993 = vunpack.c.l.b16 %v1929
          %v1994 = vunpack.c.l.b16 %v1930
          %v1995 = vunpack.c.l.b16 %v1931
          %v1996 = vunpack.c.l.b16 %v1932
          %v1997 = vunpack.c.l.b16 %v1933
          %v1998 = vunpack.c.l.b16 %v1934
          %v1999 = vunpack.c.l.b16 %v1935
          %v2000 = vunpack.c.l.b16 %v1936
          %v2001 = vunpack.c.l.b16 %v1937
          %v2002 = vunpack.c.l.b16 %v1938
          %v2003 = vunpack.c.l.b16 %v1939
          %v2004 = vunpack.c.l.b16 %v1940
          %v2005 = vunpack.c.l.b16 %v1941
          %v2006 = vunpack.c.l.b16 %v1942
          %v2007 = vunpack.c.l.b16 %v1943
          %v2008 = vunpack.c.l.b16 %v1944
          %v2009 = vunpack.c.l.b16 %v1945
          %v2010 = vunpack.c.l.b16 %v1946
          %v2011 = vunpack.c.l.b16 %v1947
          %v2012 = vunpack.c.l.b16 %v1948
          %v2013 = vunpack.c.l.b16 %v1949
          %v2014 = vpack.c.b16 %v1983, %v1982
          %v2015 = vpack.c.b16 %v1985, %v1984
          %v2016 = vpack.c.b16 %v1987, %v1986
          %v2017 = vpack.c.b16 %v1989, %v1988
          %v2018 = vpack.c.b16 %v1991, %v1990
          %v2019 = vpack.c.b16 %v1993, %v1992
          %v2020 = vpack.c.b16 %v1995, %v1994
          %v2021 = vpack.c.b16 %v1997, %v1996
          %v2022 = vpack.c.b16 %v1999, %v1998
          %v2023 = vpack.c.b16 %v2001, %v2000
          %v2024 = vpack.c.b16 %v2003, %v2002
          %v2025 = vpack.c.b16 %v2005, %v2004
          %v2026 = vpack.c.b16 %v2007, %v2006
          %v2027 = vpack.c.b16 %v2009, %v2008
          %v2028 = vpack.c.b16 %v2011, %v2010
          %v2029 = vpack.c.b16 %v2013, %v2012
          %v2033 = vunpack.c.l.b16 %v1245
          %v2034 = vunpack.c.l.b16 %v1246
          %v2035 = vunpack.c.l.b16 %v1247
          %v2036 = vpack.c.b16 %v2034, %v2033
          %v2037 = vpack.c.b16 %v2035, %v2035
          %v2040 = vsel %vm1402, %v2014, 0
          %v2043 = vsel %vm1402, %v2015, 0
          %v2046 = vsel %vm1402, %v2016, 0
          %v2049 = vsel %vm1402, %v2017, 0
          %v2052 = vsel %vm1402, %v2018, 0
          %v2055 = vsel %vm1402, %v2019, 0
          %v2058 = vsel %vm1402, %v2020, 0
          %v2061 = vsel %vm1402, %v2021, 0
          %v2064 = vsel %vm1402, %v2022, 0
          %v2067 = vsel %vm1402, %v2023, 0
          %v2070 = vsel %vm1402, %v2024, 0
          %v2073 = vsel %vm1402, %v2025, 0
          %v2076 = vsel %vm1402, %v2026, 0
          %v2079 = vsel %vm1402, %v2027, 0
          %v2082 = vsel %vm1402, %v2028, 0
          %v2085 = vsel %vm1402, %v2029, 0
          %v2088 = vsel %vm1451, %v2037, 0
          %2090 = vmatprep.subr.bf16.mxu0 0
          %2091 = vmatpush1.bf16.msra.mxu0 0
          %2092 = vmatprep.subr.bf16.mxu0 0
          %2093 = vmatpush1.bf16.msra.mxu0 0
          %2094 = vmatprep.subr.bf16.mxu0 0
          %2095 = vmatpush1.bf16.msra.mxu0 0
          %2096 = vmatprep.subr.bf16.mxu0 0
          %2097 = vmatpush1.bf16.msra.mxu0 0
          %2098 = vmatprep.subr.bf16.mxu0 0
          %2099 = vmatpush1.bf16.msra.mxu0 0
          %2100 = vmatprep.subr.bf16.mxu0 0
          %2101 = vmatpush1.bf16.msra.mxu0 0
          %2102 = vmatprep.subr.bf16.mxu0 0
          %2103 = vmatpush1.bf16.msra.mxu0 %v2088
          %2104 = vmatprep.subr.bf16.mxu0 0
          %2105 = vmatpush1.bf16.msra.mxu0 %v2036
          %2106 = vmatprep.subr.bf16.mxu0 0
          %2107 = vmatpush2.bf16.msra.mxu0 0
          %2108 = vmatprep.subr.bf16.mxu0 0
          %2109 = vmatpush2.bf16.msra.mxu0 0
          %2110 = vmatprep.subr.bf16.mxu0 0
          %2111 = vmatpush2.bf16.msra.mxu0 0
          %2112 = vmatprep.subr.bf16.mxu0 0
          %2113 = vmatpush2.bf16.msra.mxu0 0
          %2114 = vmatprep.subr.bf16.mxu0 0
          %2115 = vmatpush2.bf16.msra.mxu0 0
          %2116 = vmatprep.subr.bf16.mxu0 0
          %2117 = vmatpush2.bf16.msra.mxu0 0
          %2118 = vmatprep.subr.bf16.mxu0 0
          %2119 = vmatpush2.bf16.msra.mxu0 0
          %2120 = vmatprep.subr.bf16.mxu0 0
          %2121 = vmatpush2.bf16.msra.mxu0 0
          %2122 = vmatprep.mubr.bf16.mxu0 0
          %2123 = vmatmul.mubr.bf16.gmra.mxu0 %v2040
          %v2124 = vpop.f32.mrf.mxu0
          %v2125 = vadd.f32 0.0, %v2124
          %v2126 = vpop.f32.mrf.mxu0
          %v2127 = vpop.f32.mrf.mxu0
          %v2128 = vadd.f32 0.0, %v2127
          %v2129 = vpop.f32.mrf.mxu0
          %2130 = vmatprep.mubr.bf16.mxu0 0
          %2131 = vmatmul.mubr.bf16.gmra.mxu0 %v2043
          %v2132 = vpop.f32.mrf.mxu0
          %v2133 = vadd.f32 0.0, %v2132
          %v2134 = vpop.f32.mrf.mxu0
          %v2135 = vpop.f32.mrf.mxu0
          %v2136 = vadd.f32 0.0, %v2135
          %v2137 = vpop.f32.mrf.mxu0
          %2138 = vmatprep.mubr.bf16.mxu0 0
          %2139 = vmatmul.mubr.bf16.gmra.mxu0 %v2046
          %v2140 = vpop.f32.mrf.mxu0
          %v2141 = vadd.f32 0.0, %v2140
          %v2142 = vpop.f32.mrf.mxu0
          %v2143 = vpop.f32.mrf.mxu0
          %v2144 = vadd.f32 0.0, %v2143
          %v2145 = vpop.f32.mrf.mxu0
          %2146 = vmatprep.mubr.bf16.mxu0 0
          %2147 = vmatmul.mubr.bf16.gmra.mxu0 %v2049
          %v2148 = vpop.f32.mrf.mxu0
          %v2149 = vadd.f32 0.0, %v2148
          %v2150 = vpop.f32.mrf.mxu0
          %v2151 = vpop.f32.mrf.mxu0
          %v2152 = vadd.f32 0.0, %v2151
          %v2153 = vpop.f32.mrf.mxu0
          %2154 = vmatprep.mubr.bf16.mxu0 0
          %2155 = vmatmul.mubr.bf16.gmra.mxu0 %v2052
          %v2156 = vpop.f32.mrf.mxu0
          %v2157 = vadd.f32 0.0, %v2156
          %v2158 = vpop.f32.mrf.mxu0
          %v2159 = vpop.f32.mrf.mxu0
          %v2160 = vadd.f32 0.0, %v2159
          %v2161 = vpop.f32.mrf.mxu0
          %2162 = vmatprep.mubr.bf16.mxu0 0
          %2163 = vmatmul.mubr.bf16.gmra.mxu0 %v2055
          %v2164 = vpop.f32.mrf.mxu0
          %v2165 = vadd.f32 0.0, %v2164
          %v2166 = vpop.f32.mrf.mxu0
          %v2167 = vpop.f32.mrf.mxu0
          %v2168 = vadd.f32 0.0, %v2167
          %v2169 = vpop.f32.mrf.mxu0
          %2170 = vmatprep.mubr.bf16.mxu0 0
          %2171 = vmatmul.mubr.bf16.gmra.mxu0 %v2058
          %v2172 = vpop.f32.mrf.mxu0
          %v2173 = vadd.f32 0.0, %v2172
          %v2174 = vpop.f32.mrf.mxu0
          %v2175 = vpop.f32.mrf.mxu0
          %v2176 = vadd.f32 0.0, %v2175
          %v2177 = vpop.f32.mrf.mxu0
          %2178 = vmatprep.mubr.bf16.mxu0 0
          %2179 = vmatmul.mubr.bf16.gmra.mxu0 %v2061
          %v2180 = vpop.f32.mrf.mxu0
          %v2181 = vadd.f32 0.0, %v2180
          %v2182 = vpop.f32.mrf.mxu0
          %v2183 = vpop.f32.mrf.mxu0
          %v2184 = vadd.f32 0.0, %v2183
          %v2185 = vpop.f32.mrf.mxu0
          %2186 = vmatprep.mubr.bf16.mxu0 0
          %2187 = vmatmul.mubr.bf16.gmra.mxu0 %v2064
          %v2188 = vpop.f32.mrf.mxu0
          %v2189 = vadd.f32 0.0, %v2188
          %v2190 = vpop.f32.mrf.mxu0
          %v2191 = vpop.f32.mrf.mxu0
          %v2192 = vadd.f32 0.0, %v2191
          %v2193 = vpop.f32.mrf.mxu0
          %2194 = vmatprep.mubr.bf16.mxu0 0
          %2195 = vmatmul.mubr.bf16.gmra.mxu0 %v2067
          %v2196 = vpop.f32.mrf.mxu0
          %v2197 = vadd.f32 0.0, %v2196
          %v2198 = vpop.f32.mrf.mxu0
          %v2199 = vpop.f32.mrf.mxu0
          %v2200 = vadd.f32 0.0, %v2199
          %v2201 = vpop.f32.mrf.mxu0
          %2202 = vmatprep.mubr.bf16.mxu0 0
          %2203 = vmatmul.mubr.bf16.gmra.mxu0 %v2070
          %v2204 = vpop.f32.mrf.mxu0
          %v2205 = vadd.f32 0.0, %v2204
          %v2206 = vpop.f32.mrf.mxu0
          %v2207 = vpop.f32.mrf.mxu0
          %v2208 = vadd.f32 0.0, %v2207
          %v2209 = vpop.f32.mrf.mxu0
          %2210 = vmatprep.mubr.bf16.mxu0 0
          %2211 = vmatmul.mubr.bf16.gmra.mxu0 %v2073
          %v2212 = vpop.f32.mrf.mxu0
          %v2213 = vadd.f32 0.0, %v2212
          %v2214 = vpop.f32.mrf.mxu0
          %v2215 = vpop.f32.mrf.mxu0
          %v2216 = vadd.f32 0.0, %v2215
          %v2217 = vpop.f32.mrf.mxu0
          %2218 = vmatprep.mubr.bf16.mxu0 0
          %2219 = vmatmul.mubr.bf16.gmra.mxu0 %v2076
          %v2220 = vpop.f32.mrf.mxu0
          %v2221 = vadd.f32 0.0, %v2220
          %v2222 = vpop.f32.mrf.mxu0
          %v2223 = vpop.f32.mrf.mxu0
          %v2224 = vadd.f32 0.0, %v2223
          %v2225 = vpop.f32.mrf.mxu0
          %2226 = vmatprep.mubr.bf16.mxu0 0
          %2227 = vmatmul.mubr.bf16.gmra.mxu0 %v2079
          %v2228 = vpop.f32.mrf.mxu0
          %v2229 = vadd.f32 0.0, %v2228
          %v2230 = vpop.f32.mrf.mxu0
          %v2231 = vpop.f32.mrf.mxu0
          %v2232 = vadd.f32 0.0, %v2231
          %v2233 = vpop.f32.mrf.mxu0
          %2234 = vmatprep.mubr.bf16.mxu0 0
          %2235 = vmatmul.mubr.bf16.gmra.mxu0 %v2082
          %v2236 = vpop.f32.mrf.mxu0
          %v2237 = vadd.f32 0.0, %v2236
          %v2238 = vpop.f32.mrf.mxu0
          %v2239 = vpop.f32.mrf.mxu0
          %v2240 = vadd.f32 0.0, %v2239
          %v2241 = vpop.f32.mrf.mxu0
          %2242 = vmatprep.mubr.bf16.mxu0 0
          %2243 = vmatmul.mubr.bf16.gmra.mxu0 %v2085
          %v2244 = vpop.f32.mrf.mxu0
          %v2245 = vadd.f32 0.0, %v2244
          %v2246 = vpop.f32.mrf.mxu0
          %v2247 = vpop.f32.mrf.mxu0
          %v2248 = vadd.f32 0.0, %v2247
          %v2249 = vpop.f32.mrf.mxu0
          %2250 = vdwg.mxu0
          %v2251 = vadd.f32 %v1791, %v2125
          %v2252 = vadd.f32 %v1794, %v2128
          %v2253 = vadd.f32 %v1799, %v2133
          %v2254 = vadd.f32 %v1802, %v2136
          %v2255 = vadd.f32 %v1807, %v2141
          %v2256 = vadd.f32 %v1810, %v2144
          %v2257 = vadd.f32 %v1815, %v2149
          %v2258 = vadd.f32 %v1818, %v2152
          %v2259 = vadd.f32 %v1823, %v2157
          %v2260 = vadd.f32 %v1826, %v2160
          %v2261 = vadd.f32 %v1831, %v2165
          %v2262 = vadd.f32 %v1834, %v2168
          %v2263 = vadd.f32 %v1839, %v2173
          %v2264 = vadd.f32 %v1842, %v2176
          %v2265 = vadd.f32 %v1847, %v2181
          %v2266 = vadd.f32 %v1850, %v2184
          %v2267 = vadd.f32 %v1855, %v2189
          %v2268 = vadd.f32 %v1858, %v2192
          %v2269 = vadd.f32 %v1863, %v2197
          %v2270 = vadd.f32 %v1866, %v2200
          %v2271 = vadd.f32 %v1871, %v2205
          %v2272 = vadd.f32 %v1874, %v2208
          %v2273 = vadd.f32 %v1879, %v2213
          %v2274 = vadd.f32 %v1882, %v2216
          %v2275 = vadd.f32 %v1887, %v2221
          %v2276 = vadd.f32 %v1890, %v2224
          %v2277 = vadd.f32 %v1895, %v2229
          %v2278 = vadd.f32 %v1898, %v2232
          %v2279 = vadd.f32 %v1903, %v2237
          %v2280 = vadd.f32 %v1906, %v2240
          %v2281 = vadd.f32 %v1911, %v2245
          %v2282 = vadd.f32 %v1914, %v2248
          %v2284 = vlaneseq
          %v2285 = vshrl.u32 %v2284, 7
          %v2286 = vsub.s32 0, %v2285
          %v2287 = vrot.slane %v1248, %v2286
          %v2289 = vadd.f32 %v2251, %v2287
          %v2290 = vadd.f32 %v2252, %v2287
          %v2291 = vadd.f32 %v2253, %v2287
          %v2292 = vadd.f32 %v2254, %v2287
          %v2293 = vadd.f32 %v2255, %v2287
          %v2294 = vadd.f32 %v2256, %v2287
          %v2295 = vadd.f32 %v2257, %v2287
          %v2296 = vadd.f32 %v2258, %v2287
          %v2297 = vadd.f32 %v2259, %v2287
          %v2298 = vadd.f32 %v2260, %v2287
          %v2299 = vadd.f32 %v2261, %v2287
          %v2300 = vadd.f32 %v2262, %v2287
          %v2301 = vadd.f32 %v2263, %v2287
          %v2302 = vadd.f32 %v2264, %v2287
          %v2303 = vadd.f32 %v2265, %v2287
          %v2304 = vadd.f32 %v2266, %v2287
          %v2305 = vadd.f32 %v2267, %v2287
          %v2306 = vadd.f32 %v2268, %v2287
          %v2307 = vadd.f32 %v2269, %v2287
          %v2308 = vadd.f32 %v2270, %v2287
          %v2309 = vadd.f32 %v2271, %v2287
          %v2310 = vadd.f32 %v2272, %v2287
          %v2311 = vadd.f32 %v2273, %v2287
          %v2312 = vadd.f32 %v2274, %v2287
          %v2313 = vadd.f32 %v2275, %v2287
          %v2314 = vadd.f32 %v2276, %v2287
          %v2315 = vadd.f32 %v2277, %v2287
          %v2316 = vadd.f32 %v2278, %v2287
          %v2317 = vadd.f32 %v2279, %v2287
          %v2318 = vadd.f32 %v2280, %v2287
          %v2319 = vadd.f32 %v2281, %v2287
          %v2320 = vadd.f32 %v2282, %v2287
          %v2321 = vmax.f32 %v2289, 0.0
          %v2322 = vmax.f32 %v2290, 0.0
          %v2323 = vmax.f32 %v2291, 0.0
          %v2324 = vmax.f32 %v2292, 0.0
          %v2325 = vmax.f32 %v2293, 0.0
          %v2326 = vmax.f32 %v2294, 0.0
          %v2327 = vmax.f32 %v2295, 0.0
          %v2328 = vmax.f32 %v2296, 0.0
          %v2329 = vmax.f32 %v2297, 0.0
          %v2330 = vmax.f32 %v2298, 0.0
          %v2331 = vmax.f32 %v2299, 0.0
          %v2332 = vmax.f32 %v2300, 0.0
          %v2333 = vmax.f32 %v2301, 0.0
          %v2334 = vmax.f32 %v2302, 0.0
          %v2335 = vmax.f32 %v2303, 0.0
          %v2336 = vmax.f32 %v2304, 0.0
          %v2337 = vmax.f32 %v2305, 0.0
          %v2338 = vmax.f32 %v2306, 0.0
          %v2339 = vmax.f32 %v2307, 0.0
          %v2340 = vmax.f32 %v2308, 0.0
          %v2341 = vmax.f32 %v2309, 0.0
          %v2342 = vmax.f32 %v2310, 0.0
          %v2343 = vmax.f32 %v2311, 0.0
          %v2344 = vmax.f32 %v2312, 0.0
          %v2345 = vmax.f32 %v2313, 0.0
          %v2346 = vmax.f32 %v2314, 0.0
          %v2347 = vmax.f32 %v2315, 0.0
          %v2348 = vmax.f32 %v2316, 0.0
          %v2349 = vmax.f32 %v2317, 0.0
          %v2350 = vmax.f32 %v2318, 0.0
          %v2351 = vmax.f32 %v2319, 0.0
          %v2352 = vmax.f32 %v2320, 0.0
          %2385 = vrot.lane.b32.xlu0 %v460, 96
          %v2386 = vpop.permute.xlu0 %2385
          %2387 = vrot.lane.b32.xlu0 %v461, 96
          %v2388 = vpop.permute.xlu0 %2387
          %2389 = vrot.lane.b32.xlu0 %v462, 96
          %v2390 = vpop.permute.xlu0 %2389
          %2391 = vrot.lane.b32.xlu0 %v463, 96
          %v2392 = vpop.permute.xlu0 %2391
          %2393 = vrot.lane.b32.xlu0 %v464, 96
          %v2394 = vpop.permute.xlu0 %2393
          %2395 = vrot.lane.b32.xlu0 %v465, 96
          %v2396 = vpop.permute.xlu0 %2395
          %2397 = vrot.lane.b32.xlu0 %v466, 96
          %v2398 = vpop.permute.xlu0 %2397
          %2399 = vrot.lane.b32.xlu0 %v467, 96
          %v2400 = vpop.permute.xlu0 %2399
          %2401 = vrot.lane.b32.xlu0 %v468, 96
          %v2402 = vpop.permute.xlu0 %2401
          %2403 = vrot.lane.b32.xlu0 %v469, 96
          %v2404 = vpop.permute.xlu0 %2403
          %2405 = vrot.lane.b32.xlu0 %v470, 96
          %v2406 = vpop.permute.xlu0 %2405
          %2407 = vrot.lane.b32.xlu0 %v471, 96
          %v2408 = vpop.permute.xlu0 %2407
          %2409 = vrot.lane.b32.xlu0 %v472, 96
          %v2410 = vpop.permute.xlu0 %2409
          %2411 = vrot.lane.b32.xlu0 %v473, 96
          %v2412 = vpop.permute.xlu0 %2411
          %2413 = vrot.lane.b32.xlu0 %v474, 96
          %v2414 = vpop.permute.xlu0 %2413
          %2415 = vrot.lane.b32.xlu0 %v475, 96
          %v2416 = vpop.permute.xlu0 %2415
          %2417 = vrot.lane.b32.xlu0 %v476, 96
          %v2418 = vpop.permute.xlu0 %2417
          %2419 = vrot.lane.b32.xlu0 %v477, 96
          %v2420 = vpop.permute.xlu0 %2419
          %2421 = vrot.lane.b32.xlu0 %v478, 96
          %v2422 = vpop.permute.xlu0 %2421
          %2423 = vrot.lane.b32.xlu0 %v479, 96
          %v2424 = vpop.permute.xlu0 %2423
          %2425 = vrot.lane.b32.xlu0 %v480, 96
          %v2426 = vpop.permute.xlu0 %2425
          %2427 = vrot.lane.b32.xlu0 %v481, 96
          %v2428 = vpop.permute.xlu0 %2427
          %2429 = vrot.lane.b32.xlu0 %v482, 96
          %v2430 = vpop.permute.xlu0 %2429
          %2431 = vrot.lane.b32.xlu0 %v483, 96
          %v2432 = vpop.permute.xlu0 %2431
          %2433 = vrot.lane.b32.xlu0 %v484, 96
          %v2434 = vpop.permute.xlu0 %2433
          %2435 = vrot.lane.b32.xlu0 %v485, 96
          %v2436 = vpop.permute.xlu0 %2435
          %2437 = vrot.lane.b32.xlu0 %v486, 96
          %v2438 = vpop.permute.xlu0 %2437
          %2439 = vrot.lane.b32.xlu0 %v487, 96
          %v2440 = vpop.permute.xlu0 %2439
          %2441 = vrot.lane.b32.xlu0 %v488, 96
          %v2442 = vpop.permute.xlu0 %2441
          %2443 = vrot.lane.b32.xlu0 %v489, 96
          %v2444 = vpop.permute.xlu0 %2443
          %2445 = vrot.lane.b32.xlu0 %v490, 96
          %v2446 = vpop.permute.xlu0 %2445
          %2447 = vrot.lane.b32.xlu0 %v491, 96
          %v2448 = vpop.permute.xlu0 %2447
          %vm2481 = vcmask 261120
          %v2482 = vsel %vm2481, %v2321, %v2386
          %v2483 = vsel %vm2481, %v2322, %v2388
          %v2484 = vsel %vm2481, %v2323, %v2390
          %v2485 = vsel %vm2481, %v2324, %v2392
          %v2486 = vsel %vm2481, %v2325, %v2394
          %v2487 = vsel %vm2481, %v2326, %v2396
          %v2488 = vsel %vm2481, %v2327, %v2398
          %v2489 = vsel %vm2481, %v2328, %v2400
          %v2490 = vsel %vm2481, %v2329, %v2402
          %v2491 = vsel %vm2481, %v2330, %v2404
          %v2492 = vsel %vm2481, %v2331, %v2406
          %v2493 = vsel %vm2481, %v2332, %v2408
          %v2494 = vsel %vm2481, %v2333, %v2410
          %v2495 = vsel %vm2481, %v2334, %v2412
          %v2496 = vsel %vm2481, %v2335, %v2414
          %v2497 = vsel %vm2481, %v2336, %v2416
          %v2498 = vsel %vm2481, %v2337, %v2418
          %v2499 = vsel %vm2481, %v2338, %v2420
          %v2500 = vsel %vm2481, %v2339, %v2422
          %v2501 = vsel %vm2481, %v2340, %v2424
          %v2502 = vsel %vm2481, %v2341, %v2426
          %v2503 = vsel %vm2481, %v2342, %v2428
          %v2504 = vsel %vm2481, %v2343, %v2430
          %v2505 = vsel %vm2481, %v2344, %v2432
          %v2506 = vsel %vm2481, %v2345, %v2434
          %v2507 = vsel %vm2481, %v2346, %v2436
          %v2508 = vsel %vm2481, %v2347, %v2438
          %v2509 = vsel %vm2481, %v2348, %v2440
          %v2510 = vsel %vm2481, %v2349, %v2442
          %v2511 = vsel %vm2481, %v2350, %v2444
          %v2512 = vsel %vm2481, %v2351, %v2446
          %v2513 = vsel %vm2481, %v2352, %v2448
          %v2514 = vpack.c.bf16 %v2483, %v2482
          %v2515 = vpack.c.bf16 %v2485, %v2484
          %v2516 = vpack.c.bf16 %v2487, %v2486
          %v2517 = vpack.c.bf16 %v2489, %v2488
          %v2518 = vpack.c.bf16 %v2491, %v2490
          %v2519 = vpack.c.bf16 %v2493, %v2492
          %v2520 = vpack.c.bf16 %v2495, %v2494
          %v2521 = vpack.c.bf16 %v2497, %v2496
          %v2522 = vpack.c.bf16 %v2499, %v2498
          %v2523 = vpack.c.bf16 %v2501, %v2500
          %v2524 = vpack.c.bf16 %v2503, %v2502
          %v2525 = vpack.c.bf16 %v2505, %v2504
          %v2526 = vpack.c.bf16 %v2507, %v2506
          %v2527 = vpack.c.bf16 %v2509, %v2508
          %v2528 = vpack.c.bf16 %v2511, %v2510
          %v2529 = vpack.c.bf16 %v2513, %v2512
          %v2531 = vshrl.u32 %v2514, 16
          %v2533 = vrot.slane %v2531, 7
          %v2534 = vshll.u32 %v2514, 16
          %v2536 = vor.u32 %v2533, %v2534
          %v2538 = vshrl.u32 %v2515, 16
          %v2540 = vrot.slane %v2538, 7
          %v2541 = vshll.u32 %v2515, 16
          %v2543 = vor.u32 %v2540, %v2541
          %v2545 = vshrl.u32 %v2516, 16
          %v2547 = vrot.slane %v2545, 7
          %v2548 = vshll.u32 %v2516, 16
          %v2550 = vor.u32 %v2547, %v2548
          %v2552 = vshrl.u32 %v2517, 16
          %v2554 = vrot.slane %v2552, 7
          %v2555 = vshll.u32 %v2517, 16
          %v2557 = vor.u32 %v2554, %v2555
          %v2559 = vshrl.u32 %v2518, 16
          %v2561 = vrot.slane %v2559, 7
          %v2562 = vshll.u32 %v2518, 16
          %v2564 = vor.u32 %v2561, %v2562
          %v2566 = vshrl.u32 %v2519, 16
          %v2568 = vrot.slane %v2566, 7
          %v2569 = vshll.u32 %v2519, 16
          %v2571 = vor.u32 %v2568, %v2569
          %v2573 = vshrl.u32 %v2520, 16
          %v2575 = vrot.slane %v2573, 7
          %v2576 = vshll.u32 %v2520, 16
          %v2578 = vor.u32 %v2575, %v2576
          %v2580 = vshrl.u32 %v2521, 16
          %v2582 = vrot.slane %v2580, 7
          %v2583 = vshll.u32 %v2521, 16
          %v2585 = vor.u32 %v2582, %v2583
          %v2587 = vshrl.u32 %v2522, 16
          %v2589 = vrot.slane %v2587, 7
          %v2590 = vshll.u32 %v2522, 16
          %v2592 = vor.u32 %v2589, %v2590
          %v2594 = vshrl.u32 %v2523, 16
          %v2596 = vrot.slane %v2594, 7
          %v2597 = vshll.u32 %v2523, 16
          %v2599 = vor.u32 %v2596, %v2597
          %v2601 = vshrl.u32 %v2524, 16
          %v2603 = vrot.slane %v2601, 7
          %v2604 = vshll.u32 %v2524, 16
          %v2606 = vor.u32 %v2603, %v2604
          %v2608 = vshrl.u32 %v2525, 16
          %v2610 = vrot.slane %v2608, 7
          %v2611 = vshll.u32 %v2525, 16
          %v2613 = vor.u32 %v2610, %v2611
          %v2615 = vshrl.u32 %v2526, 16
          %v2617 = vrot.slane %v2615, 7
          %v2618 = vshll.u32 %v2526, 16
          %v2620 = vor.u32 %v2617, %v2618
          %v2622 = vshrl.u32 %v2527, 16
          %v2624 = vrot.slane %v2622, 7
          %v2625 = vshll.u32 %v2527, 16
          %v2627 = vor.u32 %v2624, %v2625
          %v2629 = vshrl.u32 %v2528, 16
          %v2631 = vrot.slane %v2629, 7
          %v2632 = vshll.u32 %v2528, 16
          %v2634 = vor.u32 %v2631, %v2632
          %v2636 = vshrl.u32 %v2529, 16
          %v2638 = vrot.slane %v2636, 7
          %v2639 = vshll.u32 %v2529, 16
          %v2641 = vor.u32 %v2638, %v2639
          %v2658 = vsel %vm831, 0, %v2536
          %v2659 = vsel %vm831, 0, %v2543
          %v2660 = vsel %vm831, 0, %v2550
          %v2661 = vsel %vm831, 0, %v2557
          %v2662 = vsel %vm831, 0, %v2564
          %v2663 = vsel %vm831, 0, %v2571
          %v2664 = vsel %vm831, 0, %v2578
          %v2665 = vsel %vm831, 0, %v2585
          %v2666 = vsel %vm831, 0, %v2592
          %v2667 = vsel %vm831, 0, %v2599
          %v2668 = vsel %vm831, 0, %v2606
          %v2669 = vsel %vm831, 0, %v2613
          %v2670 = vsel %vm831, 0, %v2620
          %v2671 = vsel %vm831, 0, %v2627
          %v2672 = vsel %vm831, 0, %v2634
          %v2673 = vsel %vm831, 0, %v2641
          %v2674 = vrot.slane %v2534, 1
          %v2675 = vor.u32 %v2531, %v2674
          %v2676 = vrot.slane %v2541, 1
          %v2677 = vor.u32 %v2538, %v2676
          %v2678 = vrot.slane %v2548, 1
          %v2679 = vor.u32 %v2545, %v2678
          %v2680 = vrot.slane %v2555, 1
          %v2681 = vor.u32 %v2552, %v2680
          %v2682 = vrot.slane %v2562, 1
          %v2683 = vor.u32 %v2559, %v2682
          %v2684 = vrot.slane %v2569, 1
          %v2685 = vor.u32 %v2566, %v2684
          %v2686 = vrot.slane %v2576, 1
          %v2687 = vor.u32 %v2573, %v2686
          %v2688 = vrot.slane %v2583, 1
          %v2689 = vor.u32 %v2580, %v2688
          %v2690 = vrot.slane %v2590, 1
          %v2691 = vor.u32 %v2587, %v2690
          %v2692 = vrot.slane %v2597, 1
          %v2693 = vor.u32 %v2594, %v2692
          %v2694 = vrot.slane %v2604, 1
          %v2695 = vor.u32 %v2601, %v2694
          %v2696 = vrot.slane %v2611, 1
          %v2697 = vor.u32 %v2608, %v2696
          %v2698 = vrot.slane %v2618, 1
          %v2699 = vor.u32 %v2615, %v2698
          %v2700 = vrot.slane %v2625, 1
          %v2701 = vor.u32 %v2622, %v2700
          %v2702 = vrot.slane %v2632, 1
          %v2703 = vor.u32 %v2629, %v2702
          %v2704 = vrot.slane %v2639, 1
          %v2705 = vor.u32 %v2636, %v2704
          %v2722 = vsel %vm898, %v2675, 0
          %v2723 = vsel %vm898, %v2677, 0
          %v2724 = vsel %vm898, %v2679, 0
          %v2725 = vsel %vm898, %v2681, 0
          %v2726 = vsel %vm898, %v2683, 0
          %v2727 = vsel %vm898, %v2685, 0
          %v2728 = vsel %vm898, %v2687, 0
          %v2729 = vsel %vm898, %v2689, 0
          %v2730 = vsel %vm898, %v2691, 0
          %v2731 = vsel %vm898, %v2693, 0
          %v2732 = vsel %vm898, %v2695, 0
          %v2733 = vsel %vm898, %v2697, 0
          %v2734 = vsel %vm898, %v2699, 0
          %v2735 = vsel %vm898, %v2701, 0
          %v2736 = vsel %vm898, %v2703, 0
          %v2737 = vsel %vm898, %v2705, 0
          %2754 = vrot.lane.b32.xlu0 %v2514, 64
          %v2755 = vpop.permute.xlu0 %2754
          %2756 = vrot.lane.b32.xlu0 %v2515, 64
          %v2757 = vpop.permute.xlu0 %2756
          %2758 = vrot.lane.b32.xlu0 %v2516, 64
          %v2759 = vpop.permute.xlu0 %2758
          %2760 = vrot.lane.b32.xlu0 %v2517, 64
          %v2761 = vpop.permute.xlu0 %2760
          %2762 = vrot.lane.b32.xlu0 %v2518, 64
          %v2763 = vpop.permute.xlu0 %2762
          %2764 = vrot.lane.b32.xlu0 %v2519, 64
          %v2765 = vpop.permute.xlu0 %2764
          %2766 = vrot.lane.b32.xlu0 %v2520, 64
          %v2767 = vpop.permute.xlu0 %2766
          %2768 = vrot.lane.b32.xlu0 %v2521, 64
          %v2769 = vpop.permute.xlu0 %2768
          %2770 = vrot.lane.b32.xlu0 %v2522, 64
          %v2771 = vpop.permute.xlu0 %2770
          %2772 = vrot.lane.b32.xlu0 %v2523, 64
          %v2773 = vpop.permute.xlu0 %2772
          %2774 = vrot.lane.b32.xlu0 %v2524, 64
          %v2775 = vpop.permute.xlu0 %2774
          %2776 = vrot.lane.b32.xlu0 %v2525, 64
          %v2777 = vpop.permute.xlu0 %2776
          %2778 = vrot.lane.b32.xlu0 %v2526, 64
          %v2779 = vpop.permute.xlu0 %2778
          %2780 = vrot.lane.b32.xlu0 %v2527, 64
          %v2781 = vpop.permute.xlu0 %2780
          %2782 = vrot.lane.b32.xlu0 %v2528, 64
          %v2783 = vpop.permute.xlu0 %2782
          %2784 = vrot.lane.b32.xlu0 %v2529, 64
          %v2785 = vpop.permute.xlu0 %2784
          %vm2786 = vcmask 523264
          %v2789 = vsel %vm2786, %v2658, %v2755
          %v2792 = vsel %vm2786, %v2659, %v2757
          %v2795 = vsel %vm2786, %v2660, %v2759
          %v2798 = vsel %vm2786, %v2661, %v2761
          %v2801 = vsel %vm2786, %v2662, %v2763
          %v2804 = vsel %vm2786, %v2663, %v2765
          %v2807 = vsel %vm2786, %v2664, %v2767
          %v2810 = vsel %vm2786, %v2665, %v2769
          %v2813 = vsel %vm2786, %v2666, %v2771
          %v2816 = vsel %vm2786, %v2667, %v2773
          %v2819 = vsel %vm2786, %v2668, %v2775
          %v2822 = vsel %vm2786, %v2669, %v2777
          %v2825 = vsel %vm2786, %v2670, %v2779
          %v2828 = vsel %vm2786, %v2671, %v2781
          %v2831 = vsel %vm2786, %v2672, %v2783
          %v2834 = vsel %vm2786, %v2673, %v2785
          %v2867 = vunpack.c.l.b16 %v2789
          %v2868 = vunpack.c.l.b16 %v2722
          %v2869 = vunpack.c.h.b16 %v2789
          %v2870 = vunpack.c.h.b16 %v2722
          %v2871 = vunpack.c.l.b16 %v2792
          %v2872 = vunpack.c.l.b16 %v2723
          %v2873 = vunpack.c.h.b16 %v2792
          %v2874 = vunpack.c.h.b16 %v2723
          %v2875 = vunpack.c.l.b16 %v2795
          %v2876 = vunpack.c.l.b16 %v2724
          %v2877 = vunpack.c.h.b16 %v2795
          %v2878 = vunpack.c.h.b16 %v2724
          %v2879 = vunpack.c.l.b16 %v2798
          %v2880 = vunpack.c.l.b16 %v2725
          %v2881 = vunpack.c.h.b16 %v2798
          %v2882 = vunpack.c.h.b16 %v2725
          %v2883 = vunpack.c.l.b16 %v2801
          %v2884 = vunpack.c.l.b16 %v2726
          %v2885 = vunpack.c.h.b16 %v2801
          %v2886 = vunpack.c.h.b16 %v2726
          %v2887 = vunpack.c.l.b16 %v2804
          %v2888 = vunpack.c.l.b16 %v2727
          %v2889 = vunpack.c.h.b16 %v2804
          %v2890 = vunpack.c.h.b16 %v2727
          %v2891 = vunpack.c.l.b16 %v2807
          %v2892 = vunpack.c.l.b16 %v2728
          %v2893 = vunpack.c.h.b16 %v2807
          %v2894 = vunpack.c.h.b16 %v2728
          %v2895 = vunpack.c.l.b16 %v2810
          %v2896 = vunpack.c.l.b16 %v2729
          %v2897 = vunpack.c.h.b16 %v2810
          %v2898 = vunpack.c.h.b16 %v2729
          %v2899 = vunpack.c.l.b16 %v2813
          %v2900 = vunpack.c.l.b16 %v2730
          %v2901 = vunpack.c.h.b16 %v2813
          %v2902 = vunpack.c.h.b16 %v2730
          %v2903 = vunpack.c.l.b16 %v2816
          %v2904 = vunpack.c.l.b16 %v2731
          %v2905 = vunpack.c.h.b16 %v2816
          %v2906 = vunpack.c.h.b16 %v2731
          %v2907 = vunpack.c.l.b16 %v2819
          %v2908 = vunpack.c.l.b16 %v2732
          %v2909 = vunpack.c.h.b16 %v2819
          %v2910 = vunpack.c.h.b16 %v2732
          %v2911 = vunpack.c.l.b16 %v2822
          %v2912 = vunpack.c.l.b16 %v2733
          %v2913 = vunpack.c.h.b16 %v2822
          %v2914 = vunpack.c.h.b16 %v2733
          %v2915 = vunpack.c.l.b16 %v2825
          %v2916 = vunpack.c.l.b16 %v2734
          %v2917 = vunpack.c.h.b16 %v2825
          %v2918 = vunpack.c.h.b16 %v2734
          %v2919 = vunpack.c.l.b16 %v2828
          %v2920 = vunpack.c.l.b16 %v2735
          %v2921 = vunpack.c.h.b16 %v2828
          %v2922 = vunpack.c.h.b16 %v2735
          %v2923 = vunpack.c.l.b16 %v2831
          %v2924 = vunpack.c.l.b16 %v2736
          %v2925 = vunpack.c.h.b16 %v2831
          %v2926 = vunpack.c.h.b16 %v2736
          %v2927 = vunpack.c.l.b16 %v2834
          %v2928 = vunpack.c.l.b16 %v2737
          %v2929 = vunpack.c.h.b16 %v2834
          %v2930 = vunpack.c.h.b16 %v2737
          %v2931 = vpack.c.b16 %v2868, %v2867
          %v2932 = vpack.c.b16 %v2870, %v2869
          %v2933 = vpack.c.b16 %v2872, %v2871
          %v2934 = vpack.c.b16 %v2874, %v2873
          %v2935 = vpack.c.b16 %v2876, %v2875
          %v2936 = vpack.c.b16 %v2878, %v2877
          %v2937 = vpack.c.b16 %v2880, %v2879
          %v2938 = vpack.c.b16 %v2882, %v2881
          %v2939 = vpack.c.b16 %v2884, %v2883
          %v2940 = vpack.c.b16 %v2886, %v2885
          %v2941 = vpack.c.b16 %v2888, %v2887
          %v2942 = vpack.c.b16 %v2890, %v2889
          %v2943 = vpack.c.b16 %v2892, %v2891
          %v2944 = vpack.c.b16 %v2894, %v2893
          %v2945 = vpack.c.b16 %v2896, %v2895
          %v2946 = vpack.c.b16 %v2898, %v2897
          %v2947 = vpack.c.b16 %v2900, %v2899
          %v2948 = vpack.c.b16 %v2902, %v2901
          %v2949 = vpack.c.b16 %v2904, %v2903
          %v2950 = vpack.c.b16 %v2906, %v2905
          %v2951 = vpack.c.b16 %v2908, %v2907
          %v2952 = vpack.c.b16 %v2910, %v2909
          %v2953 = vpack.c.b16 %v2912, %v2911
          %v2954 = vpack.c.b16 %v2914, %v2913
          %v2955 = vpack.c.b16 %v2916, %v2915
          %v2956 = vpack.c.b16 %v2918, %v2917
          %v2957 = vpack.c.b16 %v2920, %v2919
          %v2958 = vpack.c.b16 %v2922, %v2921
          %v2959 = vpack.c.b16 %v2924, %v2923
          %v2960 = vpack.c.b16 %v2926, %v2925
          %v2961 = vpack.c.b16 %v2928, %v2927
          %v2962 = vpack.c.b16 %v2930, %v2929
          %2995 = vst.msk [vmem:[%s1205] sm:$0xff] %vm384, %v2931
          %2996 = vst.msk [vmem:[%s1205 + $0x8] sm:$0xff] %vm384, %v2932
          %2997 = vst.msk [vmem:[%s1205 + $0x10] sm:$0xff] %vm384, %v2933
          %2998 = vst.msk [vmem:[%s1205 + $0x18] sm:$0xff] %vm384, %v2934
          %2999 = vst.msk [vmem:[%s1205 + $0x20] sm:$0xff] %vm384, %v2935
          %3000 = vst.msk [vmem:[%s1205 + $0x28] sm:$0xff] %vm384, %v2936
          %3001 = vst.msk [vmem:[%s1205 + $0x30] sm:$0xff] %vm384, %v2937
          %3002 = vst.msk [vmem:[%s1205 + $0x38] sm:$0xff] %vm384, %v2938
          %3003 = vst.msk [vmem:[%s1205 + $0x40] sm:$0xff] %vm384, %v2939
          %3004 = vst.msk [vmem:[%s1205 + $0x48] sm:$0xff] %vm384, %v2940
          %3005 = vst.msk [vmem:[%s1205 + $0x50] sm:$0xff] %vm384, %v2941
          %3006 = vst.msk [vmem:[%s1205 + $0x58] sm:$0xff] %vm384, %v2942
          %3007 = vst.msk [vmem:[%s1205 + $0x60] sm:$0xff] %vm384, %v2943
          %3008 = vst.msk [vmem:[%s1205 + $0x68] sm:$0xff] %vm384, %v2944
          %3009 = vst.msk [vmem:[%s1205 + $0x70] sm:$0xff] %vm384, %v2945
          %3010 = vst.msk [vmem:[%s1205 + $0x78] sm:$0xff] %vm384, %v2946
          %3011 = vst.msk [vmem:[%s1205 + $0x80] sm:$0xff] %vm384, %v2947
          %3012 = vst.msk [vmem:[%s1205 + $0x88] sm:$0xff] %vm384, %v2948
          %3013 = vst.msk [vmem:[%s1205 + $0x90] sm:$0xff] %vm384, %v2949
          %3014 = vst.msk [vmem:[%s1205 + $0x98] sm:$0xff] %vm384, %v2950
          %3015 = vst.msk [vmem:[%s1205 + $0xa0] sm:$0xff] %vm384, %v2951
          %3016 = vst.msk [vmem:[%s1205 + $0xa8] sm:$0xff] %vm384, %v2952
          %3017 = vst.msk [vmem:[%s1205 + $0xb0] sm:$0xff] %vm384, %v2953
          %3018 = vst.msk [vmem:[%s1205 + $0xb8] sm:$0xff] %vm384, %v2954
          %3019 = vst.msk [vmem:[%s1205 + $0xc0] sm:$0xff] %vm384, %v2955
          %3020 = vst.msk [vmem:[%s1205 + $0xc8] sm:$0xff] %vm384, %v2956
          %3021 = vst.msk [vmem:[%s1205 + $0xd0] sm:$0xff] %vm384, %v2957
          %3022 = vst.msk [vmem:[%s1205 + $0xd8] sm:$0xff] %vm384, %v2958
          %3023 = vst.msk [vmem:[%s1205 + $0xe0] sm:$0xff] %vm384, %v2959
          %3024 = vst.msk [vmem:[%s1205 + $0xe8] sm:$0xff] %vm384, %v2960
          %3025 = vst.msk [vmem:[%s1205 + $0xf0] sm:$0xff] %vm384, %v2961
          %3026 = vst.msk [vmem:[%s1205 + $0xf8] sm:$0xff] %vm384, %v2962
          %v3027 = vld [vmem:[%s3] sm:$0xf]
          %v3028 = vld [vmem:[%s3 + $0x4] sm:$0xf]
          %v3029 = vld [vmem:[%s3 + $0x8] sm:$0xf]
          %v3030 = vld [vmem:[%s3 + $0xc] sm:$0xf]
          %v3031 = vld [vmem:[%s3 + $0x10] sm:$0xf]
          %v3032 = vld [vmem:[%s3 + $0x14] sm:$0xf]
          %v3033 = vld [vmem:[%s3 + $0x18] sm:$0xf]
          %v3034 = vld [vmem:[%s3 + $0x1c] sm:$0xf]
          %v3035 = vld [vmem:[%s3 + $0x20] sm:$0xf]
          %v3036 = vld [vmem:[%s3 + $0x24] sm:$0xf]
          %v3037 = vld [vmem:[%s3 + $0x28] sm:$0xf]
          %v3038 = vld [vmem:[%s3 + $0x2c] sm:$0xf]
          %v3039 = vld [vmem:[%s3 + $0x30] sm:$0xf]
          %v3040 = vld [vmem:[%s3 + $0x34] sm:$0xf]
          %v3041 = vld [vmem:[%s3 + $0x38] sm:$0xf]
          %v3042 = vld [vmem:[%s3 + $0x3c] sm:$0xf]
          %v3043 = vld [vmem:[%s3 + $0x40] sm:$0xf]
          %v3044 = vld [vmem:[%s3 + $0x44] sm:$0xf]
          %v3045 = vld [vmem:[%s3 + $0x48] sm:$0xf]
          %v3046 = vld [vmem:[%s3 + $0x4c] sm:$0xf]
          %v3047 = vld [vmem:[%s3 + $0x50] sm:$0xf]
          %v3048 = vld [vmem:[%s3 + $0x54] sm:$0xf]
          %v3049 = vld [vmem:[%s3 + $0x58] sm:$0xf]
          %v3050 = vld [vmem:[%s3 + $0x5c] sm:$0xf]
          %v3051 = vld [vmem:[%s3 + $0x60] sm:$0xf]
          %v3052 = vld [vmem:[%s3 + $0x64] sm:$0xf]
          %v3053 = vld [vmem:[%s3 + $0x68] sm:$0xf]
          %v3054 = vld [vmem:[%s3 + $0x6c] sm:$0xf]
          %v3055 = vld [vmem:[%s3 + $0x70] sm:$0xf]
          %v3056 = vld [vmem:[%s3 + $0x74] sm:$0xf]
          %v3057 = vld [vmem:[%s3 + $0x78] sm:$0xf]
          %v3058 = vld [vmem:[%s3 + $0x7c] sm:$0xf]
          %v3059 = vld [vmem:[%s3 + $0x80] sm:$0xf]
          %v3060 = vld [vmem:[%s3 + $0x84] sm:$0xf]
          %v3061 = vld [vmem:[%s3 + $0x88] sm:$0xf]
          %v3062 = vld [vmem:[%s3 + $0x8c] sm:$0xf]
          %v3063 = vld [vmem:[%s3 + $0x90] sm:$0xf]
          %v3064 = vld [vmem:[%s3 + $0x94] sm:$0xf]
          %v3065 = vld [vmem:[%s3 + $0x98] sm:$0xf]
          %v3066 = vld [vmem:[%s3 + $0x9c] sm:$0xf]
          %v3067 = vld [vmem:[%s3 + $0xa0] sm:$0xf]
          %v3068 = vld [vmem:[%s3 + $0xa4] sm:$0xf]
          %v3069 = vld [vmem:[%s3 + $0xa8] sm:$0xf]
          %v3070 = vld [vmem:[%s3 + $0xac] sm:$0xf]
          %v3071 = vld [vmem:[%s3 + $0xb0] sm:$0xf]
          %v3072 = vld [vmem:[%s3 + $0xb4] sm:$0xf]
          %v3073 = vld [vmem:[%s3 + $0xb8] sm:$0xf]
          %v3074 = vld [vmem:[%s3 + $0xbc] sm:$0xf]
          %v3075 = vld [vmem:[%s3 + $0xc0] sm:$0xf]
          %v3076 = vld [vmem:[%s3 + $0xc4] sm:$0xf]
          %v3077 = vld [vmem:[%s3 + $0xc8] sm:$0xf]
          %v3078 = vld [vmem:[%s3 + $0xcc] sm:$0xf]
          %v3079 = vld [vmem:[%s3 + $0xd0] sm:$0xf]
          %v3080 = vld [vmem:[%s3 + $0xd4] sm:$0xf]
          %v3081 = vld [vmem:[%s3 + $0xd8] sm:$0xf]
          %v3082 = vld [vmem:[%s3 + $0xdc] sm:$0xf]
          %v3083 = vld [vmem:[%s3 + $0xe0] sm:$0xf]
          %v3084 = vld [vmem:[%s3 + $0xe4] sm:$0xf]
          %v3085 = vld [vmem:[%s3 + $0xe8] sm:$0xf]
          %v3086 = vld [vmem:[%s3 + $0xec] sm:$0xf]
          %v3087 = vld [vmem:[%s3 + $0xf0] sm:$0xf]
          %v3088 = vld [vmem:[%s3 + $0xf4] sm:$0xf]
          %v3089 = vld [vmem:[%s3 + $0xf8] sm:$0xf]
          %v3090 = vld [vmem:[%s3 + $0xfc] sm:$0xf]
          %v3091 = vld [vmem:[%s3 + $0x100] sm:$0xf]
          %v3092 = vld [vmem:[%s3 + $0x104] sm:$0xf]
          %v3093 = vld [vmem:[%s3 + $0x108] sm:$0xf]
          %v3094 = vld [vmem:[%s3 + $0x10c] sm:$0xf]
          %v3095 = vld [vmem:[%s3 + $0x110] sm:$0xf]
          %v3096 = vld [vmem:[%s3 + $0x114] sm:$0xf]
          %v3097 = vld [vmem:[%s3 + $0x118] sm:$0xf]
          %v3098 = vld [vmem:[%s3 + $0x11c] sm:$0xf]
          %v3099 = vld [vmem:[%s4] sm:$0x1]
          %v3100 = vld [vmem:[#allocation2] sm:$0xff]
          %v3101 = vld [vmem:[#allocation2 + $0x8] sm:$0xff]
          %v3102 = vld [vmem:[#allocation2 + $0x10] sm:$0xff]
          %v3103 = vld [vmem:[#allocation2 + $0x18] sm:$0xff]
          %v3104 = vld [vmem:[#allocation2 + $0x20] sm:$0xff]
          %v3105 = vld [vmem:[#allocation2 + $0x28] sm:$0xff]
          %v3106 = vld [vmem:[#allocation2 + $0x30] sm:$0xff]
          %v3107 = vld [vmem:[#allocation2 + $0x38] sm:$0xff]
          %v3108 = vld [vmem:[#allocation2 + $0x40] sm:$0xff]
          %v3109 = vld [vmem:[#allocation2 + $0x48] sm:$0xff]
          %v3110 = vld [vmem:[#allocation2 + $0x50] sm:$0xff]
          %v3111 = vld [vmem:[#allocation2 + $0x58] sm:$0xff]
          %v3112 = vld [vmem:[#allocation2 + $0x60] sm:$0xff]
          %v3113 = vld [vmem:[#allocation2 + $0x68] sm:$0xff]
          %v3114 = vld [vmem:[#allocation2 + $0x70] sm:$0xff]
          %v3115 = vld [vmem:[#allocation2 + $0x78] sm:$0xff]
          %v3116 = vld [vmem:[#allocation2 + $0x80] sm:$0xff]
          %v3117 = vld [vmem:[#allocation2 + $0x88] sm:$0xff]
          %v3118 = vld [vmem:[#allocation2 + $0x90] sm:$0xff]
          %v3119 = vld [vmem:[#allocation2 + $0x98] sm:$0xff]
          %v3120 = vld [vmem:[#allocation2 + $0xa0] sm:$0xff]
          %v3121 = vld [vmem:[#allocation2 + $0xa8] sm:$0xff]
          %v3122 = vld [vmem:[#allocation2 + $0xb0] sm:$0xff]
          %v3123 = vld [vmem:[#allocation2 + $0xb8] sm:$0xff]
          %v3124 = vld [vmem:[#allocation2 + $0xc0] sm:$0xff]
          %v3125 = vld [vmem:[#allocation2 + $0xc8] sm:$0xff]
          %v3126 = vld [vmem:[#allocation2 + $0xd0] sm:$0xff]
          %v3127 = vld [vmem:[#allocation2 + $0xd8] sm:$0xff]
          %v3128 = vld [vmem:[#allocation2 + $0xe0] sm:$0xff]
          %v3129 = vld [vmem:[#allocation2 + $0xe8] sm:$0xff]
          %v3130 = vld [vmem:[#allocation2 + $0xf0] sm:$0xff]
          %v3131 = vld [vmem:[#allocation2 + $0xf8] sm:$0xff]
          %v3132 = vld [vmem:[%s1205] sm:$0xff]
          %v3133 = vld [vmem:[%s1205 + $0x8] sm:$0xff]
          %v3134 = vld [vmem:[%s1205 + $0x10] sm:$0xff]
          %v3135 = vld [vmem:[%s1205 + $0x18] sm:$0xff]
          %v3136 = vld [vmem:[%s1205 + $0x20] sm:$0xff]
          %v3137 = vld [vmem:[%s1205 + $0x28] sm:$0xff]
          %v3138 = vld [vmem:[%s1205 + $0x30] sm:$0xff]
          %v3139 = vld [vmem:[%s1205 + $0x38] sm:$0xff]
          %v3140 = vld [vmem:[%s1205 + $0x40] sm:$0xff]
          %v3141 = vld [vmem:[%s1205 + $0x48] sm:$0xff]
          %v3142 = vld [vmem:[%s1205 + $0x50] sm:$0xff]
          %v3143 = vld [vmem:[%s1205 + $0x58] sm:$0xff]
          %v3144 = vld [vmem:[%s1205 + $0x60] sm:$0xff]
          %v3145 = vld [vmem:[%s1205 + $0x68] sm:$0xff]
          %v3146 = vld [vmem:[%s1205 + $0x70] sm:$0xff]
          %v3147 = vld [vmem:[%s1205 + $0x78] sm:$0xff]
          %v3148 = vld [vmem:[%s1205 + $0x80] sm:$0xff]
          %v3149 = vld [vmem:[%s1205 + $0x88] sm:$0xff]
          %v3150 = vld [vmem:[%s1205 + $0x90] sm:$0xff]
          %v3151 = vld [vmem:[%s1205 + $0x98] sm:$0xff]
          %v3152 = vld [vmem:[%s1205 + $0xa0] sm:$0xff]
          %v3153 = vld [vmem:[%s1205 + $0xa8] sm:$0xff]
          %v3154 = vld [vmem:[%s1205 + $0xb0] sm:$0xff]
          %v3155 = vld [vmem:[%s1205 + $0xb8] sm:$0xff]
          %v3156 = vld [vmem:[%s1205 + $0xc0] sm:$0xff]
          %v3157 = vld [vmem:[%s1205 + $0xc8] sm:$0xff]
          %v3158 = vld [vmem:[%s1205 + $0xd0] sm:$0xff]
          %v3159 = vld [vmem:[%s1205 + $0xd8] sm:$0xff]
          %v3160 = vld [vmem:[%s1205 + $0xe0] sm:$0xff]
          %v3161 = vld [vmem:[%s1205 + $0xe8] sm:$0xff]
          %v3162 = vld [vmem:[%s1205 + $0xf0] sm:$0xff]
          %v3163 = vld [vmem:[%s1205 + $0xf8] sm:$0xff]
          %v3196 = vunpack.c.l.b16 %v3132
          %v3197 = vunpack.c.h.b16 %v3132
          %v3198 = vunpack.c.l.b16 %v3133
          %v3199 = vunpack.c.h.b16 %v3133
          %v3200 = vunpack.c.l.b16 %v3134
          %v3201 = vunpack.c.h.b16 %v3134
          %v3202 = vunpack.c.l.b16 %v3135
          %v3203 = vunpack.c.h.b16 %v3135
          %v3204 = vunpack.c.l.b16 %v3136
          %v3205 = vunpack.c.h.b16 %v3136
          %v3206 = vunpack.c.l.b16 %v3137
          %v3207 = vunpack.c.h.b16 %v3137
          %v3208 = vunpack.c.l.b16 %v3138
          %v3209 = vunpack.c.h.b16 %v3138
          %v3210 = vunpack.c.l.b16 %v3139
          %v3211 = vunpack.c.h.b16 %v3139
          %v3212 = vunpack.c.l.b16 %v3140
          %v3213 = vunpack.c.h.b16 %v3140
          %v3214 = vunpack.c.l.b16 %v3141
          %v3215 = vunpack.c.h.b16 %v3141
          %v3216 = vunpack.c.l.b16 %v3142
          %v3217 = vunpack.c.h.b16 %v3142
          %v3218 = vunpack.c.l.b16 %v3143
          %v3219 = vunpack.c.h.b16 %v3143
          %v3220 = vunpack.c.l.b16 %v3144
          %v3221 = vunpack.c.h.b16 %v3144
          %v3222 = vunpack.c.l.b16 %v3145
          %v3223 = vunpack.c.h.b16 %v3145
          %v3224 = vunpack.c.l.b16 %v3146
          %v3225 = vunpack.c.h.b16 %v3146
          %v3226 = vunpack.c.l.b16 %v3147
          %v3227 = vunpack.c.h.b16 %v3147
          %v3228 = vunpack.c.l.b16 %v3148
          %v3229 = vunpack.c.h.b16 %v3148
          %v3230 = vunpack.c.l.b16 %v3149
          %v3231 = vunpack.c.h.b16 %v3149
          %v3232 = vunpack.c.l.b16 %v3150
          %v3233 = vunpack.c.h.b16 %v3150
          %v3234 = vunpack.c.l.b16 %v3151
          %v3235 = vunpack.c.h.b16 %v3151
          %v3236 = vunpack.c.l.b16 %v3152
          %v3237 = vunpack.c.h.b16 %v3152
          %v3238 = vunpack.c.l.b16 %v3153
          %v3239 = vunpack.c.h.b16 %v3153
          %v3240 = vunpack.c.l.b16 %v3154
          %v3241 = vunpack.c.h.b16 %v3154
          %v3242 = vunpack.c.l.b16 %v3155
          %v3243 = vunpack.c.h.b16 %v3155
          %v3244 = vunpack.c.l.b16 %v3156
          %v3245 = vunpack.c.h.b16 %v3156
          %v3246 = vunpack.c.l.b16 %v3157
          %v3247 = vunpack.c.h.b16 %v3157
          %v3248 = vunpack.c.l.b16 %v3158
          %v3249 = vunpack.c.h.b16 %v3158
          %v3250 = vunpack.c.l.b16 %v3159
          %v3251 = vunpack.c.h.b16 %v3159
          %v3252 = vunpack.c.l.b16 %v3160
          %v3253 = vunpack.c.h.b16 %v3160
          %v3254 = vunpack.c.l.b16 %v3161
          %v3255 = vunpack.c.h.b16 %v3161
          %v3256 = vunpack.c.l.b16 %v3162
          %v3257 = vunpack.c.h.b16 %v3162
          %v3258 = vunpack.c.l.b16 %v3163
          %v3259 = vunpack.c.h.b16 %v3163
          %v3260 = vpack.c.b16 %v3198, %v3196
          %v3261 = vpack.c.b16 %v3199, %v3197
          %v3262 = vpack.c.b16 %v3202, %v3200
          %v3263 = vpack.c.b16 %v3203, %v3201
          %v3264 = vpack.c.b16 %v3206, %v3204
          %v3265 = vpack.c.b16 %v3207, %v3205
          %v3266 = vpack.c.b16 %v3210, %v3208
          %v3267 = vpack.c.b16 %v3211, %v3209
          %v3268 = vpack.c.b16 %v3214, %v3212
          %v3269 = vpack.c.b16 %v3215, %v3213
          %v3270 = vpack.c.b16 %v3218, %v3216
          %v3271 = vpack.c.b16 %v3219, %v3217
          %v3272 = vpack.c.b16 %v3222, %v3220
          %v3273 = vpack.c.b16 %v3223, %v3221
          %v3274 = vpack.c.b16 %v3226, %v3224
          %v3275 = vpack.c.b16 %v3227, %v3225
          %v3276 = vpack.c.b16 %v3230, %v3228
          %v3277 = vpack.c.b16 %v3231, %v3229
          %v3278 = vpack.c.b16 %v3234, %v3232
          %v3279 = vpack.c.b16 %v3235, %v3233
          %v3280 = vpack.c.b16 %v3238, %v3236
          %v3281 = vpack.c.b16 %v3239, %v3237
          %v3282 = vpack.c.b16 %v3242, %v3240
          %v3283 = vpack.c.b16 %v3243, %v3241
          %v3284 = vpack.c.b16 %v3246, %v3244
          %v3285 = vpack.c.b16 %v3247, %v3245
          %v3286 = vpack.c.b16 %v3250, %v3248
          %v3287 = vpack.c.b16 %v3251, %v3249
          %v3288 = vpack.c.b16 %v3254, %v3252
          %v3289 = vpack.c.b16 %v3255, %v3253
          %v3290 = vpack.c.b16 %v3258, %v3256
          %v3291 = vpack.c.b16 %v3259, %v3257
          %v3332 = vunpack.c.l.b16 %v3051
          %v3333 = vunpack.c.l.b16 %v3052
          %v3334 = vunpack.c.l.b16 %v3053
          %v3335 = vunpack.c.l.b16 %v3054
          %v3336 = vunpack.c.l.b16 %v3055
          %v3337 = vunpack.c.l.b16 %v3056
          %v3338 = vunpack.c.l.b16 %v3057
          %v3339 = vunpack.c.l.b16 %v3058
          %v3340 = vunpack.c.l.b16 %v3059
          %v3341 = vunpack.c.l.b16 %v3060
          %v3342 = vunpack.c.l.b16 %v3061
          %v3343 = vunpack.c.l.b16 %v3062
          %v3344 = vunpack.c.l.b16 %v3063
          %v3345 = vunpack.c.l.b16 %v3064
          %v3346 = vunpack.c.l.b16 %v3065
          %v3347 = vunpack.c.l.b16 %v3066
          %v3348 = vunpack.c.l.b16 %v3067
          %v3349 = vunpack.c.l.b16 %v3068
          %v3350 = vunpack.c.l.b16 %v3069
          %v3351 = vunpack.c.l.b16 %v3070
          %v3352 = vunpack.c.l.b16 %v3071
          %v3353 = vunpack.c.l.b16 %v3072
          %v3354 = vunpack.c.l.b16 %v3073
          %v3355 = vunpack.c.l.b16 %v3074
          %v3356 = vpack.c.b16 %v3333, %v3332
          %v3357 = vpack.c.b16 %v3335, %v3334
          %v3358 = vpack.c.b16 %v3337, %v3336
          %v3359 = vpack.c.b16 %v3339, %v3338
          %v3360 = vpack.c.b16 %v3341, %v3340
          %v3361 = vpack.c.b16 %v3343, %v3342
          %v3362 = vpack.c.b16 %v3345, %v3344
          %v3363 = vpack.c.b16 %v3347, %v3346
          %v3364 = vpack.c.b16 %v3349, %v3348
          %v3365 = vpack.c.b16 %v3351, %v3350
          %v3366 = vpack.c.b16 %v3353, %v3352
          %v3367 = vpack.c.b16 %v3355, %v3354
          %v3381 = vsel %vm2786, %v3261, 0
          %v3384 = vsel %vm2786, %v3263, 0
          %v3387 = vsel %vm2786, %v3265, 0
          %v3390 = vsel %vm2786, %v3267, 0
          %v3393 = vsel %vm2786, %v3269, 0
          %v3396 = vsel %vm2786, %v3271, 0
          %v3399 = vsel %vm2786, %v3273, 0
          %v3402 = vsel %vm2786, %v3275, 0
          %v3405 = vsel %vm2786, %v3277, 0
          %v3408 = vsel %vm2786, %v3279, 0
          %v3411 = vsel %vm2786, %v3281, 0
          %v3414 = vsel %vm2786, %v3283, 0
          %v3417 = vsel %vm2786, %v3285, 0
          %v3420 = vsel %vm2786, %v3287, 0
          %v3423 = vsel %vm2786, %v3289, 0
          %v3426 = vsel %vm2786, %v3291, 0
          %3428 = vmatprep.subr.bf16.mxu0 0
          %3429 = vmatpush1.bf16.msra.mxu0 %v3363
          %3430 = vmatprep.subr.bf16.mxu0 0
          %3431 = vmatpush1.bf16.msra.mxu0 %v3362
          %3432 = vmatprep.subr.bf16.mxu0 0
          %3433 = vmatpush1.bf16.msra.mxu0 %v3361
          %3434 = vmatprep.subr.bf16.mxu0 0
          %3435 = vmatpush1.bf16.msra.mxu0 %v3360
          %3436 = vmatprep.subr.bf16.mxu0 0
          %3437 = vmatpush1.bf16.msra.mxu0 %v3359
          %3438 = vmatprep.subr.bf16.mxu0 0
          %3439 = vmatpush1.bf16.msra.mxu0 %v3358
          %3440 = vmatprep.subr.bf16.mxu0 0
          %3441 = vmatpush1.bf16.msra.mxu0 %v3357
          %3442 = vmatprep.subr.bf16.mxu0 0
          %3443 = vmatpush1.bf16.msra.mxu0 %v3356
          %3444 = vmatprep.subr.bf16.mxu0 0
          %3445 = vmatpush2.bf16.msra.mxu0 0
          %3446 = vmatprep.subr.bf16.mxu0 0
          %3447 = vmatpush2.bf16.msra.mxu0 0
          %3448 = vmatprep.subr.bf16.mxu0 0
          %3449 = vmatpush2.bf16.msra.mxu0 0
          %3450 = vmatprep.subr.bf16.mxu0 0
          %3451 = vmatpush2.bf16.msra.mxu0 0
          %3452 = vmatprep.subr.bf16.mxu0 0
          %3453 = vmatpush2.bf16.msra.mxu0 %v3367
          %3454 = vmatprep.subr.bf16.mxu0 0
          %3455 = vmatpush2.bf16.msra.mxu0 %v3366
          %3456 = vmatprep.subr.bf16.mxu0 0
          %3457 = vmatpush2.bf16.msra.mxu0 %v3365
          %3458 = vmatprep.subr.bf16.mxu0 0
          %3459 = vmatpush2.bf16.msra.mxu0 %v3364
          %3460 = vmatprep.mubr.bf16.mxu0 %v3381
          %3461 = vmatmul.mubr.bf16.gmra.mxu0 %v3260
          %v3462 = vpop.f32.mrf.mxu0
          %v3463 = vadd.f32 0.0, %v3462
          %v3464 = vpop.f32.mrf.mxu0
          %v3465 = vpop.f32.mrf.mxu0
          %v3466 = vadd.f32 0.0, %v3465
          %v3467 = vpop.f32.mrf.mxu0
          %3468 = vmatprep.mubr.bf16.mxu0 %v3384
          %3469 = vmatmul.mubr.bf16.gmra.mxu0 %v3262
          %v3470 = vpop.f32.mrf.mxu0
          %v3471 = vadd.f32 0.0, %v3470
          %v3472 = vpop.f32.mrf.mxu0
          %v3473 = vpop.f32.mrf.mxu0
          %v3474 = vadd.f32 0.0, %v3473
          %v3475 = vpop.f32.mrf.mxu0
          %3476 = vmatprep.mubr.bf16.mxu0 %v3387
          %3477 = vmatmul.mubr.bf16.gmra.mxu0 %v3264
          %v3478 = vpop.f32.mrf.mxu0
          %v3479 = vadd.f32 0.0, %v3478
          %v3480 = vpop.f32.mrf.mxu0
          %v3481 = vpop.f32.mrf.mxu0
          %v3482 = vadd.f32 0.0, %v3481
          %v3483 = vpop.f32.mrf.mxu0
          %3484 = vmatprep.mubr.bf16.mxu0 %v3390
          %3485 = vmatmul.mubr.bf16.gmra.mxu0 %v3266
          %v3486 = vpop.f32.mrf.mxu0
          %v3487 = vadd.f32 0.0, %v3486
          %v3488 = vpop.f32.mrf.mxu0
          %v3489 = vpop.f32.mrf.mxu0
          %v3490 = vadd.f32 0.0, %v3489
          %v3491 = vpop.f32.mrf.mxu0
          %3492 = vmatprep.mubr.bf16.mxu0 %v3393
          %3493 = vmatmul.mubr.bf16.gmra.mxu0 %v3268
          %v3494 = vpop.f32.mrf.mxu0
          %v3495 = vadd.f32 0.0, %v3494
          %v3496 = vpop.f32.mrf.mxu0
          %v3497 = vpop.f32.mrf.mxu0
          %v3498 = vadd.f32 0.0, %v3497
          %v3499 = vpop.f32.mrf.mxu0
          %3500 = vmatprep.mubr.bf16.mxu0 %v3396
          %3501 = vmatmul.mubr.bf16.gmra.mxu0 %v3270
          %v3502 = vpop.f32.mrf.mxu0
          %v3503 = vadd.f32 0.0, %v3502
          %v3504 = vpop.f32.mrf.mxu0
          %v3505 = vpop.f32.mrf.mxu0
          %v3506 = vadd.f32 0.0, %v3505
          %v3507 = vpop.f32.mrf.mxu0
          %3508 = vmatprep.mubr.bf16.mxu0 %v3399
          %3509 = vmatmul.mubr.bf16.gmra.mxu0 %v3272
          %v3510 = vpop.f32.mrf.mxu0
          %v3511 = vadd.f32 0.0, %v3510
          %v3512 = vpop.f32.mrf.mxu0
          %v3513 = vpop.f32.mrf.mxu0
          %v3514 = vadd.f32 0.0, %v3513
          %v3515 = vpop.f32.mrf.mxu0
          %3516 = vmatprep.mubr.bf16.mxu0 %v3402
          %3517 = vmatmul.mubr.bf16.gmra.mxu0 %v3274
          %v3518 = vpop.f32.mrf.mxu0
          %v3519 = vadd.f32 0.0, %v3518
          %v3520 = vpop.f32.mrf.mxu0
          %v3521 = vpop.f32.mrf.mxu0
          %v3522 = vadd.f32 0.0, %v3521
          %v3523 = vpop.f32.mrf.mxu0
          %3524 = vmatprep.mubr.bf16.mxu0 %v3405
          %3525 = vmatmul.mubr.bf16.gmra.mxu0 %v3276
          %v3526 = vpop.f32.mrf.mxu0
          %v3527 = vadd.f32 0.0, %v3526
          %v3528 = vpop.f32.mrf.mxu0
          %v3529 = vpop.f32.mrf.mxu0
          %v3530 = vadd.f32 0.0, %v3529
          %v3531 = vpop.f32.mrf.mxu0
          %3532 = vmatprep.mubr.bf16.mxu0 %v3408
          %3533 = vmatmul.mubr.bf16.gmra.mxu0 %v3278
          %v3534 = vpop.f32.mrf.mxu0
          %v3535 = vadd.f32 0.0, %v3534
          %v3536 = vpop.f32.mrf.mxu0
          %v3537 = vpop.f32.mrf.mxu0
          %v3538 = vadd.f32 0.0, %v3537
          %v3539 = vpop.f32.mrf.mxu0
          %3540 = vmatprep.mubr.bf16.mxu0 %v3411
          %3541 = vmatmul.mubr.bf16.gmra.mxu0 %v3280
          %v3542 = vpop.f32.mrf.mxu0
          %v3543 = vadd.f32 0.0, %v3542
          %v3544 = vpop.f32.mrf.mxu0
          %v3545 = vpop.f32.mrf.mxu0
          %v3546 = vadd.f32 0.0, %v3545
          %v3547 = vpop.f32.mrf.mxu0
          %3548 = vmatprep.mubr.bf16.mxu0 %v3414
          %3549 = vmatmul.mubr.bf16.gmra.mxu0 %v3282
          %v3550 = vpop.f32.mrf.mxu0
          %v3551 = vadd.f32 0.0, %v3550
          %v3552 = vpop.f32.mrf.mxu0
          %v3553 = vpop.f32.mrf.mxu0
          %v3554 = vadd.f32 0.0, %v3553
          %v3555 = vpop.f32.mrf.mxu0
          %3556 = vmatprep.mubr.bf16.mxu0 %v3417
          %3557 = vmatmul.mubr.bf16.gmra.mxu0 %v3284
          %v3558 = vpop.f32.mrf.mxu0
          %v3559 = vadd.f32 0.0, %v3558
          %v3560 = vpop.f32.mrf.mxu0
          %v3561 = vpop.f32.mrf.mxu0
          %v3562 = vadd.f32 0.0, %v3561
          %v3563 = vpop.f32.mrf.mxu0
          %3564 = vmatprep.mubr.bf16.mxu0 %v3420
          %3565 = vmatmul.mubr.bf16.gmra.mxu0 %v3286
          %v3566 = vpop.f32.mrf.mxu0
          %v3567 = vadd.f32 0.0, %v3566
          %v3568 = vpop.f32.mrf.mxu0
          %v3569 = vpop.f32.mrf.mxu0
          %v3570 = vadd.f32 0.0, %v3569
          %v3571 = vpop.f32.mrf.mxu0
          %3572 = vmatprep.mubr.bf16.mxu0 %v3423
          %3573 = vmatmul.mubr.bf16.gmra.mxu0 %v3288
          %v3574 = vpop.f32.mrf.mxu0
          %v3575 = vadd.f32 0.0, %v3574
          %v3576 = vpop.f32.mrf.mxu0
          %v3577 = vpop.f32.mrf.mxu0
          %v3578 = vadd.f32 0.0, %v3577
          %v3579 = vpop.f32.mrf.mxu0
          %3580 = vmatprep.mubr.bf16.mxu0 %v3426
          %3581 = vmatmul.mubr.bf16.gmra.mxu0 %v3290
          %v3582 = vpop.f32.mrf.mxu0
          %v3583 = vadd.f32 0.0, %v3582
          %v3584 = vpop.f32.mrf.mxu0
          %v3585 = vpop.f32.mrf.mxu0
          %v3586 = vadd.f32 0.0, %v3585
          %v3587 = vpop.f32.mrf.mxu0
          %3588 = vdwg.mxu0
          %v3621 = vunpack.c.l.b16 %v3100
          %v3622 = vunpack.c.h.b16 %v3100
          %v3623 = vunpack.c.l.b16 %v3101
          %v3624 = vunpack.c.h.b16 %v3101
          %v3625 = vunpack.c.l.b16 %v3102
          %v3626 = vunpack.c.h.b16 %v3102
          %v3627 = vunpack.c.l.b16 %v3103
          %v3628 = vunpack.c.h.b16 %v3103
          %v3629 = vunpack.c.l.b16 %v3104
          %v3630 = vunpack.c.h.b16 %v3104
          %v3631 = vunpack.c.l.b16 %v3105
          %v3632 = vunpack.c.h.b16 %v3105
          %v3633 = vunpack.c.l.b16 %v3106
          %v3634 = vunpack.c.h.b16 %v3106
          %v3635 = vunpack.c.l.b16 %v3107
          %v3636 = vunpack.c.h.b16 %v3107
          %v3637 = vunpack.c.l.b16 %v3108
          %v3638 = vunpack.c.h.b16 %v3108
          %v3639 = vunpack.c.l.b16 %v3109
          %v3640 = vunpack.c.h.b16 %v3109
          %v3641 = vunpack.c.l.b16 %v3110
          %v3642 = vunpack.c.h.b16 %v3110
          %v3643 = vunpack.c.l.b16 %v3111
          %v3644 = vunpack.c.h.b16 %v3111
          %v3645 = vunpack.c.l.b16 %v3112
          %v3646 = vunpack.c.h.b16 %v3112
          %v3647 = vunpack.c.l.b16 %v3113
          %v3648 = vunpack.c.h.b16 %v3113
          %v3649 = vunpack.c.l.b16 %v3114
          %v3650 = vunpack.c.h.b16 %v3114
          %v3651 = vunpack.c.l.b16 %v3115
          %v3652 = vunpack.c.h.b16 %v3115
          %v3653 = vunpack.c.l.b16 %v3116
          %v3654 = vunpack.c.h.b16 %v3116
          %v3655 = vunpack.c.l.b16 %v3117
          %v3656 = vunpack.c.h.b16 %v3117
          %v3657 = vunpack.c.l.b16 %v3118
          %v3658 = vunpack.c.h.b16 %v3118
          %v3659 = vunpack.c.l.b16 %v3119
          %v3660 = vunpack.c.h.b16 %v3119
          %v3661 = vunpack.c.l.b16 %v3120
          %v3662 = vunpack.c.h.b16 %v3120
          %v3663 = vunpack.c.l.b16 %v3121
          %v3664 = vunpack.c.h.b16 %v3121
          %v3665 = vunpack.c.l.b16 %v3122
          %v3666 = vunpack.c.h.b16 %v3122
          %v3667 = vunpack.c.l.b16 %v3123
          %v3668 = vunpack.c.h.b16 %v3123
          %v3669 = vunpack.c.l.b16 %v3124
          %v3670 = vunpack.c.h.b16 %v3124
          %v3671 = vunpack.c.l.b16 %v3125
          %v3672 = vunpack.c.h.b16 %v3125
          %v3673 = vunpack.c.l.b16 %v3126
          %v3674 = vunpack.c.h.b16 %v3126
          %v3675 = vunpack.c.l.b16 %v3127
          %v3676 = vunpack.c.h.b16 %v3127
          %v3677 = vunpack.c.l.b16 %v3128
          %v3678 = vunpack.c.h.b16 %v3128
          %v3679 = vunpack.c.l.b16 %v3129
          %v3680 = vunpack.c.h.b16 %v3129
          %v3681 = vunpack.c.l.b16 %v3130
          %v3682 = vunpack.c.h.b16 %v3130
          %v3683 = vunpack.c.l.b16 %v3131
          %v3684 = vunpack.c.h.b16 %v3131
          %v3685 = vpack.c.b16 %v3623, %v3621
          %v3686 = vpack.c.b16 %v3624, %v3622
          %v3687 = vpack.c.b16 %v3627, %v3625
          %v3688 = vpack.c.b16 %v3628, %v3626
          %v3689 = vpack.c.b16 %v3631, %v3629
          %v3690 = vpack.c.b16 %v3632, %v3630
          %v3691 = vpack.c.b16 %v3635, %v3633
          %v3692 = vpack.c.b16 %v3636, %v3634
          %v3693 = vpack.c.b16 %v3639, %v3637
          %v3694 = vpack.c.b16 %v3640, %v3638
          %v3695 = vpack.c.b16 %v3643, %v3641
          %v3696 = vpack.c.b16 %v3644, %v3642
          %v3697 = vpack.c.b16 %v3647, %v3645
          %v3698 = vpack.c.b16 %v3648, %v3646
          %v3699 = vpack.c.b16 %v3651, %v3649
          %v3700 = vpack.c.b16 %v3652, %v3650
          %v3701 = vpack.c.b16 %v3655, %v3653
          %v3702 = vpack.c.b16 %v3656, %v3654
          %v3703 = vpack.c.b16 %v3659, %v3657
          %v3704 = vpack.c.b16 %v3660, %v3658
          %v3705 = vpack.c.b16 %v3663, %v3661
          %v3706 = vpack.c.b16 %v3664, %v3662
          %v3707 = vpack.c.b16 %v3667, %v3665
          %v3708 = vpack.c.b16 %v3668, %v3666
          %v3709 = vpack.c.b16 %v3671, %v3669
          %v3710 = vpack.c.b16 %v3672, %v3670
          %v3711 = vpack.c.b16 %v3675, %v3673
          %v3712 = vpack.c.b16 %v3676, %v3674
          %v3713 = vpack.c.b16 %v3679, %v3677
          %v3714 = vpack.c.b16 %v3680, %v3678
          %v3715 = vpack.c.b16 %v3683, %v3681
          %v3716 = vpack.c.b16 %v3684, %v3682
          %v3757 = vunpack.c.l.b16 %v3027
          %v3758 = vunpack.c.l.b16 %v3028
          %v3759 = vunpack.c.l.b16 %v3029
          %v3760 = vunpack.c.l.b16 %v3030
          %v3761 = vunpack.c.l.b16 %v3031
          %v3762 = vunpack.c.l.b16 %v3032
          %v3763 = vunpack.c.l.b16 %v3033
          %v3764 = vunpack.c.l.b16 %v3034
          %v3765 = vunpack.c.l.b16 %v3035
          %v3766 = vunpack.c.l.b16 %v3036
          %v3767 = vunpack.c.l.b16 %v3037
          %v3768 = vunpack.c.l.b16 %v3038
          %v3769 = vunpack.c.l.b16 %v3039
          %v3770 = vunpack.c.l.b16 %v3040
          %v3771 = vunpack.c.l.b16 %v3041
          %v3772 = vunpack.c.l.b16 %v3042
          %v3773 = vunpack.c.l.b16 %v3043
          %v3774 = vunpack.c.l.b16 %v3044
          %v3775 = vunpack.c.l.b16 %v3045
          %v3776 = vunpack.c.l.b16 %v3046
          %v3777 = vunpack.c.l.b16 %v3047
          %v3778 = vunpack.c.l.b16 %v3048
          %v3779 = vunpack.c.l.b16 %v3049
          %v3780 = vunpack.c.l.b16 %v3050
          %v3781 = vpack.c.b16 %v3758, %v3757
          %v3782 = vpack.c.b16 %v3760, %v3759
          %v3783 = vpack.c.b16 %v3762, %v3761
          %v3784 = vpack.c.b16 %v3764, %v3763
          %v3785 = vpack.c.b16 %v3766, %v3765
          %v3786 = vpack.c.b16 %v3768, %v3767
          %v3787 = vpack.c.b16 %v3770, %v3769
          %v3788 = vpack.c.b16 %v3772, %v3771
          %v3789 = vpack.c.b16 %v3774, %v3773
          %v3790 = vpack.c.b16 %v3776, %v3775
          %v3791 = vpack.c.b16 %v3778, %v3777
          %v3792 = vpack.c.b16 %v3780, %v3779
          %v3806 = vsel %vm2786, %v3686, 0
          %v3809 = vsel %vm2786, %v3688, 0
          %v3812 = vsel %vm2786, %v3690, 0
          %v3815 = vsel %vm2786, %v3692, 0
          %v3818 = vsel %vm2786, %v3694, 0
          %v3821 = vsel %vm2786, %v3696, 0
          %v3824 = vsel %vm2786, %v3698, 0
          %v3827 = vsel %vm2786, %v3700, 0
          %v3830 = vsel %vm2786, %v3702, 0
          %v3833 = vsel %vm2786, %v3704, 0
          %v3836 = vsel %vm2786, %v3706, 0
          %v3839 = vsel %vm2786, %v3708, 0
          %v3842 = vsel %vm2786, %v3710, 0
          %v3845 = vsel %vm2786, %v3712, 0
          %v3848 = vsel %vm2786, %v3714, 0
          %v3851 = vsel %vm2786, %v3716, 0
          %3853 = vmatprep.subr.bf16.mxu0 0
          %3854 = vmatpush1.bf16.msra.mxu0 %v3788
          %3855 = vmatprep.subr.bf16.mxu0 0
          %3856 = vmatpush1.bf16.msra.mxu0 %v3787
          %3857 = vmatprep.subr.bf16.mxu0 0
          %3858 = vmatpush1.bf16.msra.mxu0 %v3786
          %3859 = vmatprep.subr.bf16.mxu0 0
          %3860 = vmatpush1.bf16.msra.mxu0 %v3785
          %3861 = vmatprep.subr.bf16.mxu0 0
          %3862 = vmatpush1.bf16.msra.mxu0 %v3784
          %3863 = vmatprep.subr.bf16.mxu0 0
          %3864 = vmatpush1.bf16.msra.mxu0 %v3783
          %3865 = vmatprep.subr.bf16.mxu0 0
          %3866 = vmatpush1.bf16.msra.mxu0 %v3782
          %3867 = vmatprep.subr.bf16.mxu0 0
          %3868 = vmatpush1.bf16.msra.mxu0 %v3781
          %3869 = vmatprep.subr.bf16.mxu0 0
          %3870 = vmatpush2.bf16.msra.mxu0 0
          %3871 = vmatprep.subr.bf16.mxu0 0
          %3872 = vmatpush2.bf16.msra.mxu0 0
          %3873 = vmatprep.subr.bf16.mxu0 0
          %3874 = vmatpush2.bf16.msra.mxu0 0
          %3875 = vmatprep.subr.bf16.mxu0 0
          %3876 = vmatpush2.bf16.msra.mxu0 0
          %3877 = vmatprep.subr.bf16.mxu0 0
          %3878 = vmatpush2.bf16.msra.mxu0 %v3792
          %3879 = vmatprep.subr.bf16.mxu0 0
          %3880 = vmatpush2.bf16.msra.mxu0 %v3791
          %3881 = vmatprep.subr.bf16.mxu0 0
          %3882 = vmatpush2.bf16.msra.mxu0 %v3790
          %3883 = vmatprep.subr.bf16.mxu0 0
          %3884 = vmatpush2.bf16.msra.mxu0 %v3789
          %3885 = vmatprep.mubr.bf16.mxu0 %v3806
          %3886 = vmatmul.mubr.bf16.gmra.mxu0 %v3685
          %v3887 = vpop.f32.mrf.mxu0
          %v3888 = vadd.f32 %v3463, %v3887
          %v3889 = vpop.f32.mrf.mxu0
          %v3890 = vpop.f32.mrf.mxu0
          %v3891 = vadd.f32 %v3466, %v3890
          %v3892 = vpop.f32.mrf.mxu0
          %3893 = vmatprep.mubr.bf16.mxu0 %v3809
          %3894 = vmatmul.mubr.bf16.gmra.mxu0 %v3687
          %v3895 = vpop.f32.mrf.mxu0
          %v3896 = vadd.f32 %v3471, %v3895
          %v3897 = vpop.f32.mrf.mxu0
          %v3898 = vpop.f32.mrf.mxu0
          %v3899 = vadd.f32 %v3474, %v3898
          %v3900 = vpop.f32.mrf.mxu0
          %3901 = vmatprep.mubr.bf16.mxu0 %v3812
          %3902 = vmatmul.mubr.bf16.gmra.mxu0 %v3689
          %v3903 = vpop.f32.mrf.mxu0
          %v3904 = vadd.f32 %v3479, %v3903
          %v3905 = vpop.f32.mrf.mxu0
          %v3906 = vpop.f32.mrf.mxu0
          %v3907 = vadd.f32 %v3482, %v3906
          %v3908 = vpop.f32.mrf.mxu0
          %3909 = vmatprep.mubr.bf16.mxu0 %v3815
          %3910 = vmatmul.mubr.bf16.gmra.mxu0 %v3691
          %v3911 = vpop.f32.mrf.mxu0
          %v3912 = vadd.f32 %v3487, %v3911
          %v3913 = vpop.f32.mrf.mxu0
          %v3914 = vpop.f32.mrf.mxu0
          %v3915 = vadd.f32 %v3490, %v3914
          %v3916 = vpop.f32.mrf.mxu0
          %3917 = vmatprep.mubr.bf16.mxu0 %v3818
          %3918 = vmatmul.mubr.bf16.gmra.mxu0 %v3693
          %v3919 = vpop.f32.mrf.mxu0
          %v3920 = vadd.f32 %v3495, %v3919
          %v3921 = vpop.f32.mrf.mxu0
          %v3922 = vpop.f32.mrf.mxu0
          %v3923 = vadd.f32 %v3498, %v3922
          %v3924 = vpop.f32.mrf.mxu0
          %3925 = vmatprep.mubr.bf16.mxu0 %v3821
          %3926 = vmatmul.mubr.bf16.gmra.mxu0 %v3695
          %v3927 = vpop.f32.mrf.mxu0
          %v3928 = vadd.f32 %v3503, %v3927
          %v3929 = vpop.f32.mrf.mxu0
          %v3930 = vpop.f32.mrf.mxu0
          %v3931 = vadd.f32 %v3506, %v3930
          %v3932 = vpop.f32.mrf.mxu0
          %3933 = vmatprep.mubr.bf16.mxu0 %v3824
          %3934 = vmatmul.mubr.bf16.gmra.mxu0 %v3697
          %v3935 = vpop.f32.mrf.mxu0
          %v3936 = vadd.f32 %v3511, %v3935
          %v3937 = vpop.f32.mrf.mxu0
          %v3938 = vpop.f32.mrf.mxu0
          %v3939 = vadd.f32 %v3514, %v3938
          %v3940 = vpop.f32.mrf.mxu0
          %3941 = vmatprep.mubr.bf16.mxu0 %v3827
          %3942 = vmatmul.mubr.bf16.gmra.mxu0 %v3699
          %v3943 = vpop.f32.mrf.mxu0
          %v3944 = vadd.f32 %v3519, %v3943
          %v3945 = vpop.f32.mrf.mxu0
          %v3946 = vpop.f32.mrf.mxu0
          %v3947 = vadd.f32 %v3522, %v3946
          %v3948 = vpop.f32.mrf.mxu0
          %3949 = vmatprep.mubr.bf16.mxu0 %v3830
          %3950 = vmatmul.mubr.bf16.gmra.mxu0 %v3701
          %v3951 = vpop.f32.mrf.mxu0
          %v3952 = vadd.f32 %v3527, %v3951
          %v3953 = vpop.f32.mrf.mxu0
          %v3954 = vpop.f32.mrf.mxu0
          %v3955 = vadd.f32 %v3530, %v3954
          %v3956 = vpop.f32.mrf.mxu0
          %3957 = vmatprep.mubr.bf16.mxu0 %v3833
          %3958 = vmatmul.mubr.bf16.gmra.mxu0 %v3703
          %v3959 = vpop.f32.mrf.mxu0
          %v3960 = vadd.f32 %v3535, %v3959
          %v3961 = vpop.f32.mrf.mxu0
          %v3962 = vpop.f32.mrf.mxu0
          %v3963 = vadd.f32 %v3538, %v3962
          %v3964 = vpop.f32.mrf.mxu0
          %3965 = vmatprep.mubr.bf16.mxu0 %v3836
          %3966 = vmatmul.mubr.bf16.gmra.mxu0 %v3705
          %v3967 = vpop.f32.mrf.mxu0
          %v3968 = vadd.f32 %v3543, %v3967
          %v3969 = vpop.f32.mrf.mxu0
          %v3970 = vpop.f32.mrf.mxu0
          %v3971 = vadd.f32 %v3546, %v3970
          %v3972 = vpop.f32.mrf.mxu0
          %3973 = vmatprep.mubr.bf16.mxu0 %v3839
          %3974 = vmatmul.mubr.bf16.gmra.mxu0 %v3707
          %v3975 = vpop.f32.mrf.mxu0
          %v3976 = vadd.f32 %v3551, %v3975
          %v3977 = vpop.f32.mrf.mxu0
          %v3978 = vpop.f32.mrf.mxu0
          %v3979 = vadd.f32 %v3554, %v3978
          %v3980 = vpop.f32.mrf.mxu0
          %3981 = vmatprep.mubr.bf16.mxu0 %v3842
          %3982 = vmatmul.mubr.bf16.gmra.mxu0 %v3709
          %v3983 = vpop.f32.mrf.mxu0
          %v3984 = vadd.f32 %v3559, %v3983
          %v3985 = vpop.f32.mrf.mxu0
          %v3986 = vpop.f32.mrf.mxu0
          %v3987 = vadd.f32 %v3562, %v3986
          %v3988 = vpop.f32.mrf.mxu0
          %3989 = vmatprep.mubr.bf16.mxu0 %v3845
          %3990 = vmatmul.mubr.bf16.gmra.mxu0 %v3711
          %v3991 = vpop.f32.mrf.mxu0
          %v3992 = vadd.f32 %v3567, %v3991
          %v3993 = vpop.f32.mrf.mxu0
          %v3994 = vpop.f32.mrf.mxu0
          %v3995 = vadd.f32 %v3570, %v3994
          %v3996 = vpop.f32.mrf.mxu0
          %3997 = vmatprep.mubr.bf16.mxu0 %v3848
          %3998 = vmatmul.mubr.bf16.gmra.mxu0 %v3713
          %v3999 = vpop.f32.mrf.mxu0
          %v4000 = vadd.f32 %v3575, %v3999
          %v4001 = vpop.f32.mrf.mxu0
          %v4002 = vpop.f32.mrf.mxu0
          %v4003 = vadd.f32 %v3578, %v4002
          %v4004 = vpop.f32.mrf.mxu0
          %4005 = vmatprep.mubr.bf16.mxu0 %v3851
          %4006 = vmatmul.mubr.bf16.gmra.mxu0 %v3715
          %v4007 = vpop.f32.mrf.mxu0
          %v4008 = vadd.f32 %v3583, %v4007
          %v4009 = vpop.f32.mrf.mxu0
          %v4010 = vpop.f32.mrf.mxu0
          %v4011 = vadd.f32 %v3586, %v4010
          %v4012 = vpop.f32.mrf.mxu0
          %4013 = vdwg.mxu0
          %v4014 = vld [vmem:[%s1917] sm:$0xff]
          %v4015 = vld [vmem:[%s1917 + $0x8] sm:$0xff]
          %v4016 = vld [vmem:[%s1917 + $0x10] sm:$0xff]
          %v4017 = vld [vmem:[%s1917 + $0x18] sm:$0xff]
          %v4018 = vld [vmem:[%s1917 + $0x20] sm:$0xff]
          %v4019 = vld [vmem:[%s1917 + $0x28] sm:$0xff]
          %v4020 = vld [vmem:[%s1917 + $0x30] sm:$0xff]
          %v4021 = vld [vmem:[%s1917 + $0x38] sm:$0xff]
          %v4022 = vld [vmem:[%s1917 + $0x40] sm:$0xff]
          %v4023 = vld [vmem:[%s1917 + $0x48] sm:$0xff]
          %v4024 = vld [vmem:[%s1917 + $0x50] sm:$0xff]
          %v4025 = vld [vmem:[%s1917 + $0x58] sm:$0xff]
          %v4026 = vld [vmem:[%s1917 + $0x60] sm:$0xff]
          %v4027 = vld [vmem:[%s1917 + $0x68] sm:$0xff]
          %v4028 = vld [vmem:[%s1917 + $0x70] sm:$0xff]
          %v4029 = vld [vmem:[%s1917 + $0x78] sm:$0xff]
          %v4030 = vld [vmem:[%s1917 + $0x80] sm:$0xff]
          %v4031 = vld [vmem:[%s1917 + $0x88] sm:$0xff]
          %v4032 = vld [vmem:[%s1917 + $0x90] sm:$0xff]
          %v4033 = vld [vmem:[%s1917 + $0x98] sm:$0xff]
          %v4034 = vld [vmem:[%s1917 + $0xa0] sm:$0xff]
          %v4035 = vld [vmem:[%s1917 + $0xa8] sm:$0xff]
          %v4036 = vld [vmem:[%s1917 + $0xb0] sm:$0xff]
          %v4037 = vld [vmem:[%s1917 + $0xb8] sm:$0xff]
          %v4038 = vld [vmem:[%s1917 + $0xc0] sm:$0xff]
          %v4039 = vld [vmem:[%s1917 + $0xc8] sm:$0xff]
          %v4040 = vld [vmem:[%s1917 + $0xd0] sm:$0xff]
          %v4041 = vld [vmem:[%s1917 + $0xd8] sm:$0xff]
          %v4042 = vld [vmem:[%s1917 + $0xe0] sm:$0xff]
          %v4043 = vld [vmem:[%s1917 + $0xe8] sm:$0xff]
          %v4044 = vld [vmem:[%s1917 + $0xf0] sm:$0xff]
          %v4045 = vld [vmem:[%s1917 + $0xf8] sm:$0xff]
          %v4078 = vunpack.c.l.b16 %v4014
          %v4079 = vunpack.c.h.b16 %v4014
          %v4080 = vunpack.c.l.b16 %v4015
          %v4081 = vunpack.c.h.b16 %v4015
          %v4082 = vunpack.c.l.b16 %v4016
          %v4083 = vunpack.c.h.b16 %v4016
          %v4084 = vunpack.c.l.b16 %v4017
          %v4085 = vunpack.c.h.b16 %v4017
          %v4086 = vunpack.c.l.b16 %v4018
          %v4087 = vunpack.c.h.b16 %v4018
          %v4088 = vunpack.c.l.b16 %v4019
          %v4089 = vunpack.c.h.b16 %v4019
          %v4090 = vunpack.c.l.b16 %v4020
          %v4091 = vunpack.c.h.b16 %v4020
          %v4092 = vunpack.c.l.b16 %v4021
          %v4093 = vunpack.c.h.b16 %v4021
          %v4094 = vunpack.c.l.b16 %v4022
          %v4095 = vunpack.c.h.b16 %v4022
          %v4096 = vunpack.c.l.b16 %v4023
          %v4097 = vunpack.c.h.b16 %v4023
          %v4098 = vunpack.c.l.b16 %v4024
          %v4099 = vunpack.c.h.b16 %v4024
          %v4100 = vunpack.c.l.b16 %v4025
          %v4101 = vunpack.c.h.b16 %v4025
          %v4102 = vunpack.c.l.b16 %v4026
          %v4103 = vunpack.c.h.b16 %v4026
          %v4104 = vunpack.c.l.b16 %v4027
          %v4105 = vunpack.c.h.b16 %v4027
          %v4106 = vunpack.c.l.b16 %v4028
          %v4107 = vunpack.c.h.b16 %v4028
          %v4108 = vunpack.c.l.b16 %v4029
          %v4109 = vunpack.c.h.b16 %v4029
          %v4110 = vunpack.c.l.b16 %v4030
          %v4111 = vunpack.c.h.b16 %v4030
          %v4112 = vunpack.c.l.b16 %v4031
          %v4113 = vunpack.c.h.b16 %v4031
          %v4114 = vunpack.c.l.b16 %v4032
          %v4115 = vunpack.c.h.b16 %v4032
          %v4116 = vunpack.c.l.b16 %v4033
          %v4117 = vunpack.c.h.b16 %v4033
          %v4118 = vunpack.c.l.b16 %v4034
          %v4119 = vunpack.c.h.b16 %v4034
          %v4120 = vunpack.c.l.b16 %v4035
          %v4121 = vunpack.c.h.b16 %v4035
          %v4122 = vunpack.c.l.b16 %v4036
          %v4123 = vunpack.c.h.b16 %v4036
          %v4124 = vunpack.c.l.b16 %v4037
          %v4125 = vunpack.c.h.b16 %v4037
          %v4126 = vunpack.c.l.b16 %v4038
          %v4127 = vunpack.c.h.b16 %v4038
          %v4128 = vunpack.c.l.b16 %v4039
          %v4129 = vunpack.c.h.b16 %v4039
          %v4130 = vunpack.c.l.b16 %v4040
          %v4131 = vunpack.c.h.b16 %v4040
          %v4132 = vunpack.c.l.b16 %v4041
          %v4133 = vunpack.c.h.b16 %v4041
          %v4134 = vunpack.c.l.b16 %v4042
          %v4135 = vunpack.c.h.b16 %v4042
          %v4136 = vunpack.c.l.b16 %v4043
          %v4137 = vunpack.c.h.b16 %v4043
          %v4138 = vunpack.c.l.b16 %v4044
          %v4139 = vunpack.c.h.b16 %v4044
          %v4140 = vunpack.c.l.b16 %v4045
          %v4141 = vunpack.c.h.b16 %v4045
          %v4142 = vpack.c.b16 %v4080, %v4078
          %v4143 = vpack.c.b16 %v4081, %v4079
          %v4144 = vpack.c.b16 %v4084, %v4082
          %v4145 = vpack.c.b16 %v4085, %v4083
          %v4146 = vpack.c.b16 %v4088, %v4086
          %v4147 = vpack.c.b16 %v4089, %v4087
          %v4148 = vpack.c.b16 %v4092, %v4090
          %v4149 = vpack.c.b16 %v4093, %v4091
          %v4150 = vpack.c.b16 %v4096, %v4094
          %v4151 = vpack.c.b16 %v4097, %v4095
          %v4152 = vpack.c.b16 %v4100, %v4098
          %v4153 = vpack.c.b16 %v4101, %v4099
          %v4154 = vpack.c.b16 %v4104, %v4102
          %v4155 = vpack.c.b16 %v4105, %v4103
          %v4156 = vpack.c.b16 %v4108, %v4106
          %v4157 = vpack.c.b16 %v4109, %v4107
          %v4158 = vpack.c.b16 %v4112, %v4110
          %v4159 = vpack.c.b16 %v4113, %v4111
          %v4160 = vpack.c.b16 %v4116, %v4114
          %v4161 = vpack.c.b16 %v4117, %v4115
          %v4162 = vpack.c.b16 %v4120, %v4118
          %v4163 = vpack.c.b16 %v4121, %v4119
          %v4164 = vpack.c.b16 %v4124, %v4122
          %v4165 = vpack.c.b16 %v4125, %v4123
          %v4166 = vpack.c.b16 %v4128, %v4126
          %v4167 = vpack.c.b16 %v4129, %v4127
          %v4168 = vpack.c.b16 %v4132, %v4130
          %v4169 = vpack.c.b16 %v4133, %v4131
          %v4170 = vpack.c.b16 %v4136, %v4134
          %v4171 = vpack.c.b16 %v4137, %v4135
          %v4172 = vpack.c.b16 %v4140, %v4138
          %v4173 = vpack.c.b16 %v4141, %v4139
          %v4214 = vunpack.c.l.b16 %v3075
          %v4215 = vunpack.c.l.b16 %v3076
          %v4216 = vunpack.c.l.b16 %v3077
          %v4217 = vunpack.c.l.b16 %v3078
          %v4218 = vunpack.c.l.b16 %v3079
          %v4219 = vunpack.c.l.b16 %v3080
          %v4220 = vunpack.c.l.b16 %v3081
          %v4221 = vunpack.c.l.b16 %v3082
          %v4222 = vunpack.c.l.b16 %v3083
          %v4223 = vunpack.c.l.b16 %v3084
          %v4224 = vunpack.c.l.b16 %v3085
          %v4225 = vunpack.c.l.b16 %v3086
          %v4226 = vunpack.c.l.b16 %v3087
          %v4227 = vunpack.c.l.b16 %v3088
          %v4228 = vunpack.c.l.b16 %v3089
          %v4229 = vunpack.c.l.b16 %v3090
          %v4230 = vunpack.c.l.b16 %v3091
          %v4231 = vunpack.c.l.b16 %v3092
          %v4232 = vunpack.c.l.b16 %v3093
          %v4233 = vunpack.c.l.b16 %v3094
          %v4234 = vunpack.c.l.b16 %v3095
          %v4235 = vunpack.c.l.b16 %v3096
          %v4236 = vunpack.c.l.b16 %v3097
          %v4237 = vunpack.c.l.b16 %v3098
          %v4238 = vpack.c.b16 %v4215, %v4214
          %v4239 = vpack.c.b16 %v4217, %v4216
          %v4240 = vpack.c.b16 %v4219, %v4218
          %v4241 = vpack.c.b16 %v4221, %v4220
          %v4242 = vpack.c.b16 %v4223, %v4222
          %v4243 = vpack.c.b16 %v4225, %v4224
          %v4244 = vpack.c.b16 %v4227, %v4226
          %v4245 = vpack.c.b16 %v4229, %v4228
          %v4246 = vpack.c.b16 %v4231, %v4230
          %v4247 = vpack.c.b16 %v4233, %v4232
          %v4248 = vpack.c.b16 %v4235, %v4234
          %v4249 = vpack.c.b16 %v4237, %v4236
          %v4263 = vsel %vm2786, %v4143, 0
          %v4266 = vsel %vm2786, %v4145, 0
          %v4269 = vsel %vm2786, %v4147, 0
          %v4272 = vsel %vm2786, %v4149, 0
          %v4275 = vsel %vm2786, %v4151, 0
          %v4278 = vsel %vm2786, %v4153, 0
          %v4281 = vsel %vm2786, %v4155, 0
          %v4284 = vsel %vm2786, %v4157, 0
          %v4287 = vsel %vm2786, %v4159, 0
          %v4290 = vsel %vm2786, %v4161, 0
          %v4293 = vsel %vm2786, %v4163, 0
          %v4296 = vsel %vm2786, %v4165, 0
          %v4299 = vsel %vm2786, %v4167, 0
          %v4302 = vsel %vm2786, %v4169, 0
          %v4305 = vsel %vm2786, %v4171, 0
          %v4308 = vsel %vm2786, %v4173, 0
          %4310 = vmatprep.subr.bf16.mxu0 0
          %4311 = vmatpush1.bf16.msra.mxu0 %v4245
          %4312 = vmatprep.subr.bf16.mxu0 0
          %4313 = vmatpush1.bf16.msra.mxu0 %v4244
          %4314 = vmatprep.subr.bf16.mxu0 0
          %4315 = vmatpush1.bf16.msra.mxu0 %v4243
          %4316 = vmatprep.subr.bf16.mxu0 0
          %4317 = vmatpush1.bf16.msra.mxu0 %v4242
          %4318 = vmatprep.subr.bf16.mxu0 0
          %4319 = vmatpush1.bf16.msra.mxu0 %v4241
          %4320 = vmatprep.subr.bf16.mxu0 0
          %4321 = vmatpush1.bf16.msra.mxu0 %v4240
          %4322 = vmatprep.subr.bf16.mxu0 0
          %4323 = vmatpush1.bf16.msra.mxu0 %v4239
          %4324 = vmatprep.subr.bf16.mxu0 0
          %4325 = vmatpush1.bf16.msra.mxu0 %v4238
          %4326 = vmatprep.subr.bf16.mxu0 0
          %4327 = vmatpush2.bf16.msra.mxu0 0
          %4328 = vmatprep.subr.bf16.mxu0 0
          %4329 = vmatpush2.bf16.msra.mxu0 0
          %4330 = vmatprep.subr.bf16.mxu0 0
          %4331 = vmatpush2.bf16.msra.mxu0 0
          %4332 = vmatprep.subr.bf16.mxu0 0
          %4333 = vmatpush2.bf16.msra.mxu0 0
          %4334 = vmatprep.subr.bf16.mxu0 0
          %4335 = vmatpush2.bf16.msra.mxu0 %v4249
          %4336 = vmatprep.subr.bf16.mxu0 0
          %4337 = vmatpush2.bf16.msra.mxu0 %v4248
          %4338 = vmatprep.subr.bf16.mxu0 0
          %4339 = vmatpush2.bf16.msra.mxu0 %v4247
          %4340 = vmatprep.subr.bf16.mxu0 0
          %4341 = vmatpush2.bf16.msra.mxu0 %v4246
          %4342 = vmatprep.mubr.bf16.mxu0 %v4263
          %4343 = vmatmul.mubr.bf16.gmra.mxu0 %v4142
          %v4344 = vpop.f32.mrf.mxu0
          %v4345 = vadd.f32 0.0, %v4344
          %v4346 = vpop.f32.mrf.mxu0
          %v4347 = vpop.f32.mrf.mxu0
          %v4348 = vadd.f32 0.0, %v4347
          %v4349 = vpop.f32.mrf.mxu0
          %4350 = vmatprep.mubr.bf16.mxu0 %v4266
          %4351 = vmatmul.mubr.bf16.gmra.mxu0 %v4144
          %v4352 = vpop.f32.mrf.mxu0
          %v4353 = vadd.f32 0.0, %v4352
          %v4354 = vpop.f32.mrf.mxu0
          %v4355 = vpop.f32.mrf.mxu0
          %v4356 = vadd.f32 0.0, %v4355
          %v4357 = vpop.f32.mrf.mxu0
          %4358 = vmatprep.mubr.bf16.mxu0 %v4269
          %4359 = vmatmul.mubr.bf16.gmra.mxu0 %v4146
          %v4360 = vpop.f32.mrf.mxu0
          %v4361 = vadd.f32 0.0, %v4360
          %v4362 = vpop.f32.mrf.mxu0
          %v4363 = vpop.f32.mrf.mxu0
          %v4364 = vadd.f32 0.0, %v4363
          %v4365 = vpop.f32.mrf.mxu0
          %4366 = vmatprep.mubr.bf16.mxu0 %v4272
          %4367 = vmatmul.mubr.bf16.gmra.mxu0 %v4148
          %v4368 = vpop.f32.mrf.mxu0
          %v4369 = vadd.f32 0.0, %v4368
          %v4370 = vpop.f32.mrf.mxu0
          %v4371 = vpop.f32.mrf.mxu0
          %v4372 = vadd.f32 0.0, %v4371
          %v4373 = vpop.f32.mrf.mxu0
          %4374 = vmatprep.mubr.bf16.mxu0 %v4275
          %4375 = vmatmul.mubr.bf16.gmra.mxu0 %v4150
          %v4376 = vpop.f32.mrf.mxu0
          %v4377 = vadd.f32 0.0, %v4376
          %v4378 = vpop.f32.mrf.mxu0
          %v4379 = vpop.f32.mrf.mxu0
          %v4380 = vadd.f32 0.0, %v4379
          %v4381 = vpop.f32.mrf.mxu0
          %4382 = vmatprep.mubr.bf16.mxu0 %v4278
          %4383 = vmatmul.mubr.bf16.gmra.mxu0 %v4152
          %v4384 = vpop.f32.mrf.mxu0
          %v4385 = vadd.f32 0.0, %v4384
          %v4386 = vpop.f32.mrf.mxu0
          %v4387 = vpop.f32.mrf.mxu0
          %v4388 = vadd.f32 0.0, %v4387
          %v4389 = vpop.f32.mrf.mxu0
          %4390 = vmatprep.mubr.bf16.mxu0 %v4281
          %4391 = vmatmul.mubr.bf16.gmra.mxu0 %v4154
          %v4392 = vpop.f32.mrf.mxu0
          %v4393 = vadd.f32 0.0, %v4392
          %v4394 = vpop.f32.mrf.mxu0
          %v4395 = vpop.f32.mrf.mxu0
          %v4396 = vadd.f32 0.0, %v4395
          %v4397 = vpop.f32.mrf.mxu0
          %4398 = vmatprep.mubr.bf16.mxu0 %v4284
          %4399 = vmatmul.mubr.bf16.gmra.mxu0 %v4156
          %v4400 = vpop.f32.mrf.mxu0
          %v4401 = vadd.f32 0.0, %v4400
          %v4402 = vpop.f32.mrf.mxu0
          %v4403 = vpop.f32.mrf.mxu0
          %v4404 = vadd.f32 0.0, %v4403
          %v4405 = vpop.f32.mrf.mxu0
          %4406 = vmatprep.mubr.bf16.mxu0 %v4287
          %4407 = vmatmul.mubr.bf16.gmra.mxu0 %v4158
          %v4408 = vpop.f32.mrf.mxu0
          %v4409 = vadd.f32 0.0, %v4408
          %v4410 = vpop.f32.mrf.mxu0
          %v4411 = vpop.f32.mrf.mxu0
          %v4412 = vadd.f32 0.0, %v4411
          %v4413 = vpop.f32.mrf.mxu0
          %4414 = vmatprep.mubr.bf16.mxu0 %v4290
          %4415 = vmatmul.mubr.bf16.gmra.mxu0 %v4160
          %v4416 = vpop.f32.mrf.mxu0
          %v4417 = vadd.f32 0.0, %v4416
          %v4418 = vpop.f32.mrf.mxu0
          %v4419 = vpop.f32.mrf.mxu0
          %v4420 = vadd.f32 0.0, %v4419
          %v4421 = vpop.f32.mrf.mxu0
          %4422 = vmatprep.mubr.bf16.mxu0 %v4293
          %4423 = vmatmul.mubr.bf16.gmra.mxu0 %v4162
          %v4424 = vpop.f32.mrf.mxu0
          %v4425 = vadd.f32 0.0, %v4424
          %v4426 = vpop.f32.mrf.mxu0
          %v4427 = vpop.f32.mrf.mxu0
          %v4428 = vadd.f32 0.0, %v4427
          %v4429 = vpop.f32.mrf.mxu0
          %4430 = vmatprep.mubr.bf16.mxu0 %v4296
          %4431 = vmatmul.mubr.bf16.gmra.mxu0 %v4164
          %v4432 = vpop.f32.mrf.mxu0
          %v4433 = vadd.f32 0.0, %v4432
          %v4434 = vpop.f32.mrf.mxu0
          %v4435 = vpop.f32.mrf.mxu0
          %v4436 = vadd.f32 0.0, %v4435
          %v4437 = vpop.f32.mrf.mxu0
          %4438 = vmatprep.mubr.bf16.mxu0 %v4299
          %4439 = vmatmul.mubr.bf16.gmra.mxu0 %v4166
          %v4440 = vpop.f32.mrf.mxu0
          %v4441 = vadd.f32 0.0, %v4440
          %v4442 = vpop.f32.mrf.mxu0
          %v4443 = vpop.f32.mrf.mxu0
          %v4444 = vadd.f32 0.0, %v4443
          %v4445 = vpop.f32.mrf.mxu0
          %4446 = vmatprep.mubr.bf16.mxu0 %v4302
          %4447 = vmatmul.mubr.bf16.gmra.mxu0 %v4168
          %v4448 = vpop.f32.mrf.mxu0
          %v4449 = vadd.f32 0.0, %v4448
          %v4450 = vpop.f32.mrf.mxu0
          %v4451 = vpop.f32.mrf.mxu0
          %v4452 = vadd.f32 0.0, %v4451
          %v4453 = vpop.f32.mrf.mxu0
          %4454 = vmatprep.mubr.bf16.mxu0 %v4305
          %4455 = vmatmul.mubr.bf16.gmra.mxu0 %v4170
          %v4456 = vpop.f32.mrf.mxu0
          %v4457 = vadd.f32 0.0, %v4456
          %v4458 = vpop.f32.mrf.mxu0
          %v4459 = vpop.f32.mrf.mxu0
          %v4460 = vadd.f32 0.0, %v4459
          %v4461 = vpop.f32.mrf.mxu0
          %4462 = vmatprep.mubr.bf16.mxu0 %v4308
          %4463 = vmatmul.mubr.bf16.gmra.mxu0 %v4172
          %v4464 = vpop.f32.mrf.mxu0
          %v4465 = vadd.f32 0.0, %v4464
          %v4466 = vpop.f32.mrf.mxu0
          %v4467 = vpop.f32.mrf.mxu0
          %v4468 = vadd.f32 0.0, %v4467
          %v4469 = vpop.f32.mrf.mxu0
          %4470 = vdwg.mxu0
          %v4471 = vadd.f32 %v3888, %v4345
          %v4472 = vadd.f32 %v3891, %v4348
          %v4473 = vadd.f32 %v3896, %v4353
          %v4474 = vadd.f32 %v3899, %v4356
          %v4475 = vadd.f32 %v3904, %v4361
          %v4476 = vadd.f32 %v3907, %v4364
          %v4477 = vadd.f32 %v3912, %v4369
          %v4478 = vadd.f32 %v3915, %v4372
          %v4479 = vadd.f32 %v3920, %v4377
          %v4480 = vadd.f32 %v3923, %v4380
          %v4481 = vadd.f32 %v3928, %v4385
          %v4482 = vadd.f32 %v3931, %v4388
          %v4483 = vadd.f32 %v3936, %v4393
          %v4484 = vadd.f32 %v3939, %v4396
          %v4485 = vadd.f32 %v3944, %v4401
          %v4486 = vadd.f32 %v3947, %v4404
          %v4487 = vadd.f32 %v3952, %v4409
          %v4488 = vadd.f32 %v3955, %v4412
          %v4489 = vadd.f32 %v3960, %v4417
          %v4490 = vadd.f32 %v3963, %v4420
          %v4491 = vadd.f32 %v3968, %v4425
          %v4492 = vadd.f32 %v3971, %v4428
          %v4493 = vadd.f32 %v3976, %v4433
          %v4494 = vadd.f32 %v3979, %v4436
          %v4495 = vadd.f32 %v3984, %v4441
          %v4496 = vadd.f32 %v3987, %v4444
          %v4497 = vadd.f32 %v3992, %v4449
          %v4498 = vadd.f32 %v3995, %v4452
          %v4499 = vadd.f32 %v4000, %v4457
          %v4500 = vadd.f32 %v4003, %v4460
          %v4501 = vadd.f32 %v4008, %v4465
          %v4502 = vadd.f32 %v4011, %v4468
          %v4504 = vlaneseq
          %v4505 = vshrl.u32 %v4504, 7
          %v4506 = vsub.s32 0, %v4505
          %v4507 = vrot.slane %v3099, %v4506
          %v4509 = vadd.f32 %v4471, %v4507
          %v4510 = vadd.f32 %v4472, %v4507
          %v4511 = vadd.f32 %v4473, %v4507
          %v4512 = vadd.f32 %v4474, %v4507
          %v4513 = vadd.f32 %v4475, %v4507
          %v4514 = vadd.f32 %v4476, %v4507
          %v4515 = vadd.f32 %v4477, %v4507
          %v4516 = vadd.f32 %v4478, %v4507
          %v4517 = vadd.f32 %v4479, %v4507
          %v4518 = vadd.f32 %v4480, %v4507
          %v4519 = vadd.f32 %v4481, %v4507
          %v4520 = vadd.f32 %v4482, %v4507
          %v4521 = vadd.f32 %v4483, %v4507
          %v4522 = vadd.f32 %v4484, %v4507
          %v4523 = vadd.f32 %v4485, %v4507
          %v4524 = vadd.f32 %v4486, %v4507
          %v4525 = vadd.f32 %v4487, %v4507
          %v4526 = vadd.f32 %v4488, %v4507
          %v4527 = vadd.f32 %v4489, %v4507
          %v4528 = vadd.f32 %v4490, %v4507
          %v4529 = vadd.f32 %v4491, %v4507
          %v4530 = vadd.f32 %v4492, %v4507
          %v4531 = vadd.f32 %v4493, %v4507
          %v4532 = vadd.f32 %v4494, %v4507
          %v4533 = vadd.f32 %v4495, %v4507
          %v4534 = vadd.f32 %v4496, %v4507
          %v4535 = vadd.f32 %v4497, %v4507
          %v4536 = vadd.f32 %v4498, %v4507
          %v4537 = vadd.f32 %v4499, %v4507
          %v4538 = vadd.f32 %v4500, %v4507
          %v4539 = vadd.f32 %v4501, %v4507
          %v4540 = vadd.f32 %v4502, %v4507
          %v4541 = vsub.f32 0.0, %v4509
          %v4542 = vsub.f32 0.0, %v4510
          %v4543 = vsub.f32 0.0, %v4511
          %v4544 = vsub.f32 0.0, %v4512
          %v4545 = vsub.f32 0.0, %v4513
          %v4546 = vsub.f32 0.0, %v4514
          %v4547 = vsub.f32 0.0, %v4515
          %v4548 = vsub.f32 0.0, %v4516
          %v4549 = vsub.f32 0.0, %v4517
          %v4550 = vsub.f32 0.0, %v4518
          %v4551 = vsub.f32 0.0, %v4519
          %v4552 = vsub.f32 0.0, %v4520
          %v4553 = vsub.f32 0.0, %v4521
          %v4554 = vsub.f32 0.0, %v4522
          %v4555 = vsub.f32 0.0, %v4523
          %v4556 = vsub.f32 0.0, %v4524
          %v4557 = vsub.f32 0.0, %v4525
          %v4558 = vsub.f32 0.0, %v4526
          %v4559 = vsub.f32 0.0, %v4527
          %v4560 = vsub.f32 0.0, %v4528
          %v4561 = vsub.f32 0.0, %v4529
          %v4562 = vsub.f32 0.0, %v4530
          %v4563 = vsub.f32 0.0, %v4531
          %v4564 = vsub.f32 0.0, %v4532
          %v4565 = vsub.f32 0.0, %v4533
          %v4566 = vsub.f32 0.0, %v4534
          %v4567 = vsub.f32 0.0, %v4535
          %v4568 = vsub.f32 0.0, %v4536
          %v4569 = vsub.f32 0.0, %v4537
          %v4570 = vsub.f32 0.0, %v4538
          %v4571 = vsub.f32 0.0, %v4539
          %v4572 = vsub.f32 0.0, %v4540
          %v4573 = vmul.f32 %v4541, 1.442695
          %v4574 = vpow.pop %v4573
          %v4575 = vmul.f32 %v4542, 1.442695
          %v4576 = vpow.pop %v4575
          %v4577 = vmul.f32 %v4543, 1.442695
          %v4578 = vpow.pop %v4577
          %v4579 = vmul.f32 %v4544, 1.442695
          %v4580 = vpow.pop %v4579
          %v4581 = vmul.f32 %v4545, 1.442695
          %v4582 = vpow.pop %v4581
          %v4583 = vmul.f32 %v4546, 1.442695
          %v4584 = vpow.pop %v4583
          %v4585 = vmul.f32 %v4547, 1.442695
          %v4586 = vpow.pop %v4585
          %v4587 = vmul.f32 %v4548, 1.442695
          %v4588 = vpow.pop %v4587
          %v4589 = vmul.f32 %v4549, 1.442695
          %v4590 = vpow.pop %v4589
          %v4591 = vmul.f32 %v4550, 1.442695
          %v4592 = vpow.pop %v4591
          %v4593 = vmul.f32 %v4551, 1.442695
          %v4594 = vpow.pop %v4593
          %v4595 = vmul.f32 %v4552, 1.442695
          %v4596 = vpow.pop %v4595
          %v4597 = vmul.f32 %v4553, 1.442695
          %v4598 = vpow.pop %v4597
          %v4599 = vmul.f32 %v4554, 1.442695
          %v4600 = vpow.pop %v4599
          %v4601 = vmul.f32 %v4555, 1.442695
          %v4602 = vpow.pop %v4601
          %v4603 = vmul.f32 %v4556, 1.442695
          %v4604 = vpow.pop %v4603
          %v4605 = vmul.f32 %v4557, 1.442695
          %v4606 = vpow.pop %v4605
          %v4607 = vmul.f32 %v4558, 1.442695
          %v4608 = vpow.pop %v4607
          %v4609 = vmul.f32 %v4559, 1.442695
          %v4610 = vpow.pop %v4609
          %v4611 = vmul.f32 %v4560, 1.442695
          %v4612 = vpow.pop %v4611
          %v4613 = vmul.f32 %v4561, 1.442695
          %v4614 = vpow.pop %v4613
          %v4615 = vmul.f32 %v4562, 1.442695
          %v4616 = vpow.pop %v4615
          %v4617 = vmul.f32 %v4563, 1.442695
          %v4618 = vpow.pop %v4617
          %v4619 = vmul.f32 %v4564, 1.442695
          %v4620 = vpow.pop %v4619
          %v4621 = vmul.f32 %v4565, 1.442695
          %v4622 = vpow.pop %v4621
          %v4623 = vmul.f32 %v4566, 1.442695
          %v4624 = vpow.pop %v4623
          %v4625 = vmul.f32 %v4567, 1.442695
          %v4626 = vpow.pop %v4625
          %v4627 = vmul.f32 %v4568, 1.442695
          %v4628 = vpow.pop %v4627
          %v4629 = vmul.f32 %v4569, 1.442695
          %v4630 = vpow.pop %v4629
          %v4631 = vmul.f32 %v4570, 1.442695
          %v4632 = vpow.pop %v4631
          %v4633 = vmul.f32 %v4571, 1.442695
          %v4634 = vpow.pop %v4633
          %v4635 = vmul.f32 %v4572, 1.442695
          %v4636 = vpow.pop %v4635
          %v4637 = vadd.f32 %v4574, 1.0
          %v4638 = vadd.f32 %v4576, 1.0
          %v4639 = vadd.f32 %v4578, 1.0
          %v4640 = vadd.f32 %v4580, 1.0
          %v4641 = vadd.f32 %v4582, 1.0
          %v4642 = vadd.f32 %v4584, 1.0
          %v4643 = vadd.f32 %v4586, 1.0
          %v4644 = vadd.f32 %v4588, 1.0
          %v4645 = vadd.f32 %v4590, 1.0
          %v4646 = vadd.f32 %v4592, 1.0
          %v4647 = vadd.f32 %v4594, 1.0
          %v4648 = vadd.f32 %v4596, 1.0
          %v4649 = vadd.f32 %v4598, 1.0
          %v4650 = vadd.f32 %v4600, 1.0
          %v4651 = vadd.f32 %v4602, 1.0
          %v4652 = vadd.f32 %v4604, 1.0
          %v4653 = vadd.f32 %v4606, 1.0
          %v4654 = vadd.f32 %v4608, 1.0
          %v4655 = vadd.f32 %v4610, 1.0
          %v4656 = vadd.f32 %v4612, 1.0
          %v4657 = vadd.f32 %v4614, 1.0
          %v4658 = vadd.f32 %v4616, 1.0
          %v4659 = vadd.f32 %v4618, 1.0
          %v4660 = vadd.f32 %v4620, 1.0
          %v4661 = vadd.f32 %v4622, 1.0
          %v4662 = vadd.f32 %v4624, 1.0
          %v4663 = vadd.f32 %v4626, 1.0
          %v4664 = vadd.f32 %v4628, 1.0
          %v4665 = vadd.f32 %v4630, 1.0
          %v4666 = vadd.f32 %v4632, 1.0
          %v4667 = vadd.f32 %v4634, 1.0
          %v4668 = vadd.f32 %v4636, 1.0
          %v4669 = vrcp.pop %v4637
          %v4670 = vrcp.pop %v4638
          %v4671 = vrcp.pop %v4639
          %v4672 = vrcp.pop %v4640
          %v4673 = vrcp.pop %v4641
          %v4674 = vrcp.pop %v4642
          %v4675 = vrcp.pop %v4643
          %v4676 = vrcp.pop %v4644
          %v4677 = vrcp.pop %v4645
          %v4678 = vrcp.pop %v4646
          %v4679 = vrcp.pop %v4647
          %v4680 = vrcp.pop %v4648
          %v4681 = vrcp.pop %v4649
          %v4682 = vrcp.pop %v4650
          %v4683 = vrcp.pop %v4651
          %v4684 = vrcp.pop %v4652
          %v4685 = vrcp.pop %v4653
          %v4686 = vrcp.pop %v4654
          %v4687 = vrcp.pop %v4655
          %v4688 = vrcp.pop %v4656
          %v4689 = vrcp.pop %v4657
          %v4690 = vrcp.pop %v4658
          %v4691 = vrcp.pop %v4659
          %v4692 = vrcp.pop %v4660
          %v4693 = vrcp.pop %v4661
          %v4694 = vrcp.pop %v4662
          %v4695 = vrcp.pop %v4663
          %v4696 = vrcp.pop %v4664
          %v4697 = vrcp.pop %v4665
          %v4698 = vrcp.pop %v4666
          %v4699 = vrcp.pop %v4667
          %v4700 = vrcp.pop %v4668
          %v4701 = vtanh.pop %v4509
          %v4702 = vtanh.pop %v4510
          %v4703 = vtanh.pop %v4511
          %v4704 = vtanh.pop %v4512
          %v4705 = vtanh.pop %v4513
          %v4706 = vtanh.pop %v4514
          %v4707 = vtanh.pop %v4515
          %v4708 = vtanh.pop %v4516
          %v4709 = vtanh.pop %v4517
          %v4710 = vtanh.pop %v4518
          %v4711 = vtanh.pop %v4519
          %v4712 = vtanh.pop %v4520
          %v4713 = vtanh.pop %v4521
          %v4714 = vtanh.pop %v4522
          %v4715 = vtanh.pop %v4523
          %v4716 = vtanh.pop %v4524
          %v4717 = vtanh.pop %v4525
          %v4718 = vtanh.pop %v4526
          %v4719 = vtanh.pop %v4527
          %v4720 = vtanh.pop %v4528
          %v4721 = vtanh.pop %v4529
          %v4722 = vtanh.pop %v4530
          %v4723 = vtanh.pop %v4531
          %v4724 = vtanh.pop %v4532
          %v4725 = vtanh.pop %v4533
          %v4726 = vtanh.pop %v4534
          %v4727 = vtanh.pop %v4535
          %v4728 = vtanh.pop %v4536
          %v4729 = vtanh.pop %v4537
          %v4730 = vtanh.pop %v4538
          %v4731 = vtanh.pop %v4539
          %v4732 = vtanh.pop %v4540
          %v4733 = vmul.f32 %v4669, %v492
          %v4734 = vmul.f32 %v4670, %v493
          %v4735 = vmul.f32 %v4671, %v494
          %v4736 = vmul.f32 %v4672, %v495
          %v4737 = vmul.f32 %v4673, %v496
          %v4738 = vmul.f32 %v4674, %v497
          %v4739 = vmul.f32 %v4675, %v498
          %v4740 = vmul.f32 %v4676, %v499
          %v4741 = vmul.f32 %v4677, %v500
          %v4742 = vmul.f32 %v4678, %v501
          %v4743 = vmul.f32 %v4679, %v502
          %v4744 = vmul.f32 %v4680, %v503
          %v4745 = vmul.f32 %v4681, %v504
          %v4746 = vmul.f32 %v4682, %v505
          %v4747 = vmul.f32 %v4683, %v506
          %v4748 = vmul.f32 %v4684, %v507
          %v4749 = vmul.f32 %v4685, %v508
          %v4750 = vmul.f32 %v4686, %v509
          %v4751 = vmul.f32 %v4687, %v510
          %v4752 = vmul.f32 %v4688, %v511
          %v4753 = vmul.f32 %v4689, %v512
          %v4754 = vmul.f32 %v4690, %v513
          %v4755 = vmul.f32 %v4691, %v514
          %v4756 = vmul.f32 %v4692, %v515
          %v4757 = vmul.f32 %v4693, %v516
          %v4758 = vmul.f32 %v4694, %v517
          %v4759 = vmul.f32 %v4695, %v518
          %v4760 = vmul.f32 %v4696, %v519
          %v4761 = vmul.f32 %v4697, %v520
          %v4762 = vmul.f32 %v4698, %v521
          %v4763 = vmul.f32 %v4699, %v522
          %v4764 = vmul.f32 %v4700, %v523
          %4797 = vrot.lane.b32.xlu0 %v4701, 32
          %v4798 = vpop.permute.xlu0 %4797
          %4799 = vrot.lane.b32.xlu0 %v4702, 32
          %v4800 = vpop.permute.xlu0 %4799
          %4801 = vrot.lane.b32.xlu0 %v4703, 32
          %v4802 = vpop.permute.xlu0 %4801
          %4803 = vrot.lane.b32.xlu0 %v4704, 32
          %v4804 = vpop.permute.xlu0 %4803
          %4805 = vrot.lane.b32.xlu0 %v4705, 32
          %v4806 = vpop.permute.xlu0 %4805
          %4807 = vrot.lane.b32.xlu0 %v4706, 32
          %v4808 = vpop.permute.xlu0 %4807
          %4809 = vrot.lane.b32.xlu0 %v4707, 32
          %v4810 = vpop.permute.xlu0 %4809
          %4811 = vrot.lane.b32.xlu0 %v4708, 32
          %v4812 = vpop.permute.xlu0 %4811
          %4813 = vrot.lane.b32.xlu0 %v4709, 32
          %v4814 = vpop.permute.xlu0 %4813
          %4815 = vrot.lane.b32.xlu0 %v4710, 32
          %v4816 = vpop.permute.xlu0 %4815
          %4817 = vrot.lane.b32.xlu0 %v4711, 32
          %v4818 = vpop.permute.xlu0 %4817
          %4819 = vrot.lane.b32.xlu0 %v4712, 32
          %v4820 = vpop.permute.xlu0 %4819
          %4821 = vrot.lane.b32.xlu0 %v4713, 32
          %v4822 = vpop.permute.xlu0 %4821
          %4823 = vrot.lane.b32.xlu0 %v4714, 32
          %v4824 = vpop.permute.xlu0 %4823
          %4825 = vrot.lane.b32.xlu0 %v4715, 32
          %v4826 = vpop.permute.xlu0 %4825
          %4827 = vrot.lane.b32.xlu0 %v4716, 32
          %v4828 = vpop.permute.xlu0 %4827
          %4829 = vrot.lane.b32.xlu0 %v4717, 32
          %v4830 = vpop.permute.xlu0 %4829
          %4831 = vrot.lane.b32.xlu0 %v4718, 32
          %v4832 = vpop.permute.xlu0 %4831
          %4833 = vrot.lane.b32.xlu0 %v4719, 32
          %v4834 = vpop.permute.xlu0 %4833
          %4835 = vrot.lane.b32.xlu0 %v4720, 32
          %v4836 = vpop.permute.xlu0 %4835
          %4837 = vrot.lane.b32.xlu0 %v4721, 32
          %v4838 = vpop.permute.xlu0 %4837
          %4839 = vrot.lane.b32.xlu0 %v4722, 32
          %v4840 = vpop.permute.xlu0 %4839
          %4841 = vrot.lane.b32.xlu0 %v4723, 32
          %v4842 = vpop.permute.xlu0 %4841
          %4843 = vrot.lane.b32.xlu0 %v4724, 32
          %v4844 = vpop.permute.xlu0 %4843
          %4845 = vrot.lane.b32.xlu0 %v4725, 32
          %v4846 = vpop.permute.xlu0 %4845
          %4847 = vrot.lane.b32.xlu0 %v4726, 32
          %v4848 = vpop.permute.xlu0 %4847
          %4849 = vrot.lane.b32.xlu0 %v4727, 32
          %v4850 = vpop.permute.xlu0 %4849
          %4851 = vrot.lane.b32.xlu0 %v4728, 32
          %v4852 = vpop.permute.xlu0 %4851
          %4853 = vrot.lane.b32.xlu0 %v4729, 32
          %v4854 = vpop.permute.xlu0 %4853
          %4855 = vrot.lane.b32.xlu0 %v4730, 32
          %v4856 = vpop.permute.xlu0 %4855
          %4857 = vrot.lane.b32.xlu0 %v4731, 32
          %v4858 = vpop.permute.xlu0 %4857
          %4859 = vrot.lane.b32.xlu0 %v4732, 32
          %v4860 = vpop.permute.xlu0 %4859
          %v4893 = vmul.f32 %v4669, %v4798
          %v4894 = vmul.f32 %v4670, %v4800
          %v4895 = vmul.f32 %v4671, %v4802
          %v4896 = vmul.f32 %v4672, %v4804
          %v4897 = vmul.f32 %v4673, %v4806
          %v4898 = vmul.f32 %v4674, %v4808
          %v4899 = vmul.f32 %v4675, %v4810
          %v4900 = vmul.f32 %v4676, %v4812
          %v4901 = vmul.f32 %v4677, %v4814
          %v4902 = vmul.f32 %v4678, %v4816
          %v4903 = vmul.f32 %v4679, %v4818
          %v4904 = vmul.f32 %v4680, %v4820
          %v4905 = vmul.f32 %v4681, %v4822
          %v4906 = vmul.f32 %v4682, %v4824
          %v4907 = vmul.f32 %v4683, %v4826
          %v4908 = vmul.f32 %v4684, %v4828
          %v4909 = vmul.f32 %v4685, %v4830
          %v4910 = vmul.f32 %v4686, %v4832
          %v4911 = vmul.f32 %v4687, %v4834
          %v4912 = vmul.f32 %v4688, %v4836
          %v4913 = vmul.f32 %v4689, %v4838
          %v4914 = vmul.f32 %v4690, %v4840
          %v4915 = vmul.f32 %v4691, %v4842
          %v4916 = vmul.f32 %v4692, %v4844
          %v4917 = vmul.f32 %v4693, %v4846
          %v4918 = vmul.f32 %v4694, %v4848
          %v4919 = vmul.f32 %v4695, %v4850
          %v4920 = vmul.f32 %v4696, %v4852
          %v4921 = vmul.f32 %v4697, %v4854
          %v4922 = vmul.f32 %v4698, %v4856
          %v4923 = vmul.f32 %v4699, %v4858
          %v4924 = vmul.f32 %v4700, %v4860
          %4957 = vrot.lane.b32.xlu0 %v4893, 32
          %v4958 = vpop.permute.xlu0 %4957
          %4959 = vrot.lane.b32.xlu0 %v4894, 32
          %v4960 = vpop.permute.xlu0 %4959
          %4961 = vrot.lane.b32.xlu0 %v4895, 32
          %v4962 = vpop.permute.xlu0 %4961
          %4963 = vrot.lane.b32.xlu0 %v4896, 32
          %v4964 = vpop.permute.xlu0 %4963
          %4965 = vrot.lane.b32.xlu0 %v4897, 32
          %v4966 = vpop.permute.xlu0 %4965
          %4967 = vrot.lane.b32.xlu0 %v4898, 32
          %v4968 = vpop.permute.xlu0 %4967
          %4969 = vrot.lane.b32.xlu0 %v4899, 32
          %v4970 = vpop.permute.xlu0 %4969
          %4971 = vrot.lane.b32.xlu0 %v4900, 32
          %v4972 = vpop.permute.xlu0 %4971
          %4973 = vrot.lane.b32.xlu0 %v4901, 32
          %v4974 = vpop.permute.xlu0 %4973
          %4975 = vrot.lane.b32.xlu0 %v4902, 32
          %v4976 = vpop.permute.xlu0 %4975
          %4977 = vrot.lane.b32.xlu0 %v4903, 32
          %v4978 = vpop.permute.xlu0 %4977
          %4979 = vrot.lane.b32.xlu0 %v4904, 32
          %v4980 = vpop.permute.xlu0 %4979
          %4981 = vrot.lane.b32.xlu0 %v4905, 32
          %v4982 = vpop.permute.xlu0 %4981
          %4983 = vrot.lane.b32.xlu0 %v4906, 32
          %v4984 = vpop.permute.xlu0 %4983
          %4985 = vrot.lane.b32.xlu0 %v4907, 32
          %v4986 = vpop.permute.xlu0 %4985
          %4987 = vrot.lane.b32.xlu0 %v4908, 32
          %v4988 = vpop.permute.xlu0 %4987
          %4989 = vrot.lane.b32.xlu0 %v4909, 32
          %v4990 = vpop.permute.xlu0 %4989
          %4991 = vrot.lane.b32.xlu0 %v4910, 32
          %v4992 = vpop.permute.xlu0 %4991
          %4993 = vrot.lane.b32.xlu0 %v4911, 32
          %v4994 = vpop.permute.xlu0 %4993
          %4995 = vrot.lane.b32.xlu0 %v4912, 32
          %v4996 = vpop.permute.xlu0 %4995
          %4997 = vrot.lane.b32.xlu0 %v4913, 32
          %v4998 = vpop.permute.xlu0 %4997
          %4999 = vrot.lane.b32.xlu0 %v4914, 32
          %v5000 = vpop.permute.xlu0 %4999
          %5001 = vrot.lane.b32.xlu0 %v4915, 32
          %v5002 = vpop.permute.xlu0 %5001
          %5003 = vrot.lane.b32.xlu0 %v4916, 32
          %v5004 = vpop.permute.xlu0 %5003
          %5005 = vrot.lane.b32.xlu0 %v4917, 32
          %v5006 = vpop.permute.xlu0 %5005
          %5007 = vrot.lane.b32.xlu0 %v4918, 32
          %v5008 = vpop.permute.xlu0 %5007
          %5009 = vrot.lane.b32.xlu0 %v4919, 32
          %v5010 = vpop.permute.xlu0 %5009
          %5011 = vrot.lane.b32.xlu0 %v4920, 32
          %v5012 = vpop.permute.xlu0 %5011
          %5013 = vrot.lane.b32.xlu0 %v4921, 32
          %v5014 = vpop.permute.xlu0 %5013
          %5015 = vrot.lane.b32.xlu0 %v4922, 32
          %v5016 = vpop.permute.xlu0 %5015
          %5017 = vrot.lane.b32.xlu0 %v4923, 32
          %v5018 = vpop.permute.xlu0 %5017
          %5019 = vrot.lane.b32.xlu0 %v4924, 32
          %v5020 = vpop.permute.xlu0 %5019
          %v5053 = vadd.f32 %v4733, %v4958
          %v5054 = vadd.f32 %v4734, %v4960
          %v5055 = vadd.f32 %v4735, %v4962
          %v5056 = vadd.f32 %v4736, %v4964
          %v5057 = vadd.f32 %v4737, %v4966
          %v5058 = vadd.f32 %v4738, %v4968
          %v5059 = vadd.f32 %v4739, %v4970
          %v5060 = vadd.f32 %v4740, %v4972
          %v5061 = vadd.f32 %v4741, %v4974
          %v5062 = vadd.f32 %v4742, %v4976
          %v5063 = vadd.f32 %v4743, %v4978
          %v5064 = vadd.f32 %v4744, %v4980
          %v5065 = vadd.f32 %v4745, %v4982
          %v5066 = vadd.f32 %v4746, %v4984
          %v5067 = vadd.f32 %v4747, %v4986
          %v5068 = vadd.f32 %v4748, %v4988
          %v5069 = vadd.f32 %v4749, %v4990
          %v5070 = vadd.f32 %v4750, %v4992
          %v5071 = vadd.f32 %v4751, %v4994
          %v5072 = vadd.f32 %v4752, %v4996
          %v5073 = vadd.f32 %v4753, %v4998
          %v5074 = vadd.f32 %v4754, %v5000
          %v5075 = vadd.f32 %v4755, %v5002
          %v5076 = vadd.f32 %v4756, %v5004
          %v5077 = vadd.f32 %v4757, %v5006
          %v5078 = vadd.f32 %v4758, %v5008
          %v5079 = vadd.f32 %v4759, %v5010
          %v5080 = vadd.f32 %v4760, %v5012
          %v5081 = vadd.f32 %v4761, %v5014
          %v5082 = vadd.f32 %v4762, %v5016
          %v5083 = vadd.f32 %v4763, %v5018
          %v5084 = vadd.f32 %v4764, %v5020
          %v5085 = vtanh.pop %v5053
          %v5086 = vtanh.pop %v5054
          %v5087 = vtanh.pop %v5055
          %v5088 = vtanh.pop %v5056
          %v5089 = vtanh.pop %v5057
          %v5090 = vtanh.pop %v5058
          %v5091 = vtanh.pop %v5059
          %v5092 = vtanh.pop %v5060
          %v5093 = vtanh.pop %v5061
          %v5094 = vtanh.pop %v5062
          %v5095 = vtanh.pop %v5063
          %v5096 = vtanh.pop %v5064
          %v5097 = vtanh.pop %v5065
          %v5098 = vtanh.pop %v5066
          %v5099 = vtanh.pop %v5067
          %v5100 = vtanh.pop %v5068
          %v5101 = vtanh.pop %v5069
          %v5102 = vtanh.pop %v5070
          %v5103 = vtanh.pop %v5071
          %v5104 = vtanh.pop %v5072
          %v5105 = vtanh.pop %v5073
          %v5106 = vtanh.pop %v5074
          %v5107 = vtanh.pop %v5075
          %v5108 = vtanh.pop %v5076
          %v5109 = vtanh.pop %v5077
          %v5110 = vtanh.pop %v5078
          %v5111 = vtanh.pop %v5079
          %v5112 = vtanh.pop %v5080
          %v5113 = vtanh.pop %v5081
          %v5114 = vtanh.pop %v5082
          %v5115 = vtanh.pop %v5083
          %v5116 = vtanh.pop %v5084
          %5149 = vrot.lane.b32.xlu0 %v5085, 32
          %v5150 = vpop.permute.xlu0 %5149
          %5151 = vrot.lane.b32.xlu0 %v5086, 32
          %v5152 = vpop.permute.xlu0 %5151
          %5153 = vrot.lane.b32.xlu0 %v5087, 32
          %v5154 = vpop.permute.xlu0 %5153
          %5155 = vrot.lane.b32.xlu0 %v5088, 32
          %v5156 = vpop.permute.xlu0 %5155
          %5157 = vrot.lane.b32.xlu0 %v5089, 32
          %v5158 = vpop.permute.xlu0 %5157
          %5159 = vrot.lane.b32.xlu0 %v5090, 32
          %v5160 = vpop.permute.xlu0 %5159
          %5161 = vrot.lane.b32.xlu0 %v5091, 32
          %v5162 = vpop.permute.xlu0 %5161
          %5163 = vrot.lane.b32.xlu0 %v5092, 32
          %v5164 = vpop.permute.xlu0 %5163
          %5165 = vrot.lane.b32.xlu0 %v5093, 32
          %v5166 = vpop.permute.xlu0 %5165
          %5167 = vrot.lane.b32.xlu0 %v5094, 32
          %v5168 = vpop.permute.xlu0 %5167
          %5169 = vrot.lane.b32.xlu0 %v5095, 32
          %v5170 = vpop.permute.xlu0 %5169
          %5171 = vrot.lane.b32.xlu0 %v5096, 32
          %v5172 = vpop.permute.xlu0 %5171
          %5173 = vrot.lane.b32.xlu0 %v5097, 32
          %v5174 = vpop.permute.xlu0 %5173
          %5175 = vrot.lane.b32.xlu0 %v5098, 32
          %v5176 = vpop.permute.xlu0 %5175
          %5177 = vrot.lane.b32.xlu0 %v5099, 32
          %v5178 = vpop.permute.xlu0 %5177
          %5179 = vrot.lane.b32.xlu0 %v5100, 32
          %v5180 = vpop.permute.xlu0 %5179
          %5181 = vrot.lane.b32.xlu0 %v5101, 32
          %v5182 = vpop.permute.xlu0 %5181
          %5183 = vrot.lane.b32.xlu0 %v5102, 32
          %v5184 = vpop.permute.xlu0 %5183
          %5185 = vrot.lane.b32.xlu0 %v5103, 32
          %v5186 = vpop.permute.xlu0 %5185
          %5187 = vrot.lane.b32.xlu0 %v5104, 32
          %v5188 = vpop.permute.xlu0 %5187
          %5189 = vrot.lane.b32.xlu0 %v5105, 32
          %v5190 = vpop.permute.xlu0 %5189
          %5191 = vrot.lane.b32.xlu0 %v5106, 32
          %v5192 = vpop.permute.xlu0 %5191
          %5193 = vrot.lane.b32.xlu0 %v5107, 32
          %v5194 = vpop.permute.xlu0 %5193
          %5195 = vrot.lane.b32.xlu0 %v5108, 32
          %v5196 = vpop.permute.xlu0 %5195
          %5197 = vrot.lane.b32.xlu0 %v5109, 32
          %v5198 = vpop.permute.xlu0 %5197
          %5199 = vrot.lane.b32.xlu0 %v5110, 32
          %v5200 = vpop.permute.xlu0 %5199
          %5201 = vrot.lane.b32.xlu0 %v5111, 32
          %v5202 = vpop.permute.xlu0 %5201
          %5203 = vrot.lane.b32.xlu0 %v5112, 32
          %v5204 = vpop.permute.xlu0 %5203
          %5205 = vrot.lane.b32.xlu0 %v5113, 32
          %v5206 = vpop.permute.xlu0 %5205
          %5207 = vrot.lane.b32.xlu0 %v5114, 32
          %v5208 = vpop.permute.xlu0 %5207
          %5209 = vrot.lane.b32.xlu0 %v5115, 32
          %v5210 = vpop.permute.xlu0 %5209
          %5211 = vrot.lane.b32.xlu0 %v5116, 32
          %v5212 = vpop.permute.xlu0 %5211
          %v5245 = vmul.f32 %v4669, %v5150
          %v5246 = vmul.f32 %v4670, %v5152
          %v5247 = vmul.f32 %v4671, %v5154
          %v5248 = vmul.f32 %v4672, %v5156
          %v5249 = vmul.f32 %v4673, %v5158
          %v5250 = vmul.f32 %v4674, %v5160
          %v5251 = vmul.f32 %v4675, %v5162
          %v5252 = vmul.f32 %v4676, %v5164
          %v5253 = vmul.f32 %v4677, %v5166
          %v5254 = vmul.f32 %v4678, %v5168
          %v5255 = vmul.f32 %v4679, %v5170
          %v5256 = vmul.f32 %v4680, %v5172
          %v5257 = vmul.f32 %v4681, %v5174
          %v5258 = vmul.f32 %v4682, %v5176
          %v5259 = vmul.f32 %v4683, %v5178
          %v5260 = vmul.f32 %v4684, %v5180
          %v5261 = vmul.f32 %v4685, %v5182
          %v5262 = vmul.f32 %v4686, %v5184
          %v5263 = vmul.f32 %v4687, %v5186
          %v5264 = vmul.f32 %v4688, %v5188
          %v5265 = vmul.f32 %v4689, %v5190
          %v5266 = vmul.f32 %v4690, %v5192
          %v5267 = vmul.f32 %v4691, %v5194
          %v5268 = vmul.f32 %v4692, %v5196
          %v5269 = vmul.f32 %v4693, %v5198
          %v5270 = vmul.f32 %v4694, %v5200
          %v5271 = vmul.f32 %v4695, %v5202
          %v5272 = vmul.f32 %v4696, %v5204
          %v5273 = vmul.f32 %v4697, %v5206
          %v5274 = vmul.f32 %v4698, %v5208
          %v5275 = vmul.f32 %v4699, %v5210
          %v5276 = vmul.f32 %v4700, %v5212
          %5309 = vrot.lane.b32.xlu0 %v5245, 64
          %v5310 = vpop.permute.xlu0 %5309
          %5311 = vrot.lane.b32.xlu0 %v5246, 64
          %v5312 = vpop.permute.xlu0 %5311
          %5313 = vrot.lane.b32.xlu0 %v5247, 64
          %v5314 = vpop.permute.xlu0 %5313
          %5315 = vrot.lane.b32.xlu0 %v5248, 64
          %v5316 = vpop.permute.xlu0 %5315
          %5317 = vrot.lane.b32.xlu0 %v5249, 64
          %v5318 = vpop.permute.xlu0 %5317
          %5319 = vrot.lane.b32.xlu0 %v5250, 64
          %v5320 = vpop.permute.xlu0 %5319
          %5321 = vrot.lane.b32.xlu0 %v5251, 64
          %v5322 = vpop.permute.xlu0 %5321
          %5323 = vrot.lane.b32.xlu0 %v5252, 64
          %v5324 = vpop.permute.xlu0 %5323
          %5325 = vrot.lane.b32.xlu0 %v5253, 64
          %v5326 = vpop.permute.xlu0 %5325
          %5327 = vrot.lane.b32.xlu0 %v5254, 64
          %v5328 = vpop.permute.xlu0 %5327
          %5329 = vrot.lane.b32.xlu0 %v5255, 64
          %v5330 = vpop.permute.xlu0 %5329
          %5331 = vrot.lane.b32.xlu0 %v5256, 64
          %v5332 = vpop.permute.xlu0 %5331
          %5333 = vrot.lane.b32.xlu0 %v5257, 64
          %v5334 = vpop.permute.xlu0 %5333
          %5335 = vrot.lane.b32.xlu0 %v5258, 64
          %v5336 = vpop.permute.xlu0 %5335
          %5337 = vrot.lane.b32.xlu0 %v5259, 64
          %v5338 = vpop.permute.xlu0 %5337
          %5339 = vrot.lane.b32.xlu0 %v5260, 64
          %v5340 = vpop.permute.xlu0 %5339
          %5341 = vrot.lane.b32.xlu0 %v5261, 64
          %v5342 = vpop.permute.xlu0 %5341
          %5343 = vrot.lane.b32.xlu0 %v5262, 64
          %v5344 = vpop.permute.xlu0 %5343
          %5345 = vrot.lane.b32.xlu0 %v5263, 64
          %v5346 = vpop.permute.xlu0 %5345
          %5347 = vrot.lane.b32.xlu0 %v5264, 64
          %v5348 = vpop.permute.xlu0 %5347
          %5349 = vrot.lane.b32.xlu0 %v5265, 64
          %v5350 = vpop.permute.xlu0 %5349
          %5351 = vrot.lane.b32.xlu0 %v5266, 64
          %v5352 = vpop.permute.xlu0 %5351
          %5353 = vrot.lane.b32.xlu0 %v5267, 64
          %v5354 = vpop.permute.xlu0 %5353
          %5355 = vrot.lane.b32.xlu0 %v5268, 64
          %v5356 = vpop.permute.xlu0 %5355
          %5357 = vrot.lane.b32.xlu0 %v5269, 64
          %v5358 = vpop.permute.xlu0 %5357
          %5359 = vrot.lane.b32.xlu0 %v5270, 64
          %v5360 = vpop.permute.xlu0 %5359
          %5361 = vrot.lane.b32.xlu0 %v5271, 64
          %v5362 = vpop.permute.xlu0 %5361
          %5363 = vrot.lane.b32.xlu0 %v5272, 64
          %v5364 = vpop.permute.xlu0 %5363
          %5365 = vrot.lane.b32.xlu0 %v5273, 64
          %v5366 = vpop.permute.xlu0 %5365
          %5367 = vrot.lane.b32.xlu0 %v5274, 64
          %v5368 = vpop.permute.xlu0 %5367
          %5369 = vrot.lane.b32.xlu0 %v5275, 64
          %v5370 = vpop.permute.xlu0 %5369
          %5371 = vrot.lane.b32.xlu0 %v5276, 64
          %v5372 = vpop.permute.xlu0 %5371
          loop: start=0, step=1, limit=5
          $region72: #{prenet_lstm_forward.1} parent=68 // loop_pre_header
            _
          $region73: #{prenet_lstm_forward.1} parent=68 // loop_header
            %s5406 = sphi 0, %s5410
            %p5407 = scmp.ge.s32.totalorder %s5406, 5
            %v5411 = vphi %v5310, %v8992
            %v5412 = vphi %v5312, %v8993
            %v5413 = vphi %v5314, %v8994
            %v5414 = vphi %v5316, %v8995
            %v5415 = vphi %v5318, %v8996
            %v5416 = vphi %v5320, %v8997
            %v5417 = vphi %v5322, %v8998
            %v5418 = vphi %v5324, %v8999
            %v5419 = vphi %v5326, %v9000
            %v5420 = vphi %v5328, %v9001
            %v5421 = vphi %v5330, %v9002
            %v5422 = vphi %v5332, %v9003
            %v5423 = vphi %v5334, %v9004
            %v5424 = vphi %v5336, %v9005
            %v5425 = vphi %v5338, %v9006
            %v5426 = vphi %v5340, %v9007
            %v5427 = vphi %v5342, %v9008
            %v5428 = vphi %v5344, %v9009
            %v5429 = vphi %v5346, %v9010
            %v5430 = vphi %v5348, %v9011
            %v5431 = vphi %v5350, %v9012
            %v5432 = vphi %v5352, %v9013
            %v5433 = vphi %v5354, %v9014
            %v5434 = vphi %v5356, %v9015
            %v5435 = vphi %v5358, %v9016
            %v5436 = vphi %v5360, %v9017
            %v5437 = vphi %v5362, %v9018
            %v5438 = vphi %v5364, %v9019
            %v5439 = vphi %v5366, %v9020
            %v5440 = vphi %v5368, %v9021
            %v5441 = vphi %v5370, %v9022
            %v5442 = vphi %v5372, %v9023
          $region74: #{prenet_lstm_forward.1} parent=68 // loop_header_branch
            %5409 = sbr.rel (%p5407) target = $region78
          $region75: #{prenet_lstm_forward.1} parent=68 // loop_body
            %v5443 = vpack.c.bf16 %v5412, %v5411
            %v5444 = vpack.c.bf16 %v5414, %v5413
            %v5445 = vpack.c.bf16 %v5416, %v5415
            %v5446 = vpack.c.bf16 %v5418, %v5417
            %v5447 = vpack.c.bf16 %v5420, %v5419
            %v5448 = vpack.c.bf16 %v5422, %v5421
            %v5449 = vpack.c.bf16 %v5424, %v5423
            %v5450 = vpack.c.bf16 %v5426, %v5425
            %v5451 = vpack.c.bf16 %v5428, %v5427
            %v5452 = vpack.c.bf16 %v5430, %v5429
            %v5453 = vpack.c.bf16 %v5432, %v5431
            %v5454 = vpack.c.bf16 %v5434, %v5433
            %v5455 = vpack.c.bf16 %v5436, %v5435
            %v5456 = vpack.c.bf16 %v5438, %v5437
            %v5457 = vpack.c.bf16 %v5440, %v5439
            %v5458 = vpack.c.bf16 %v5442, %v5441
            %v5460 = vshrl.u32 %v5443, 16
            %v5462 = vrot.slane %v5460, 7
            %v5463 = vshll.u32 %v5443, 16
            %v5465 = vor.u32 %v5462, %v5463
            %v5467 = vshrl.u32 %v5444, 16
            %v5469 = vrot.slane %v5467, 7
            %v5470 = vshll.u32 %v5444, 16
            %v5472 = vor.u32 %v5469, %v5470
            %v5474 = vshrl.u32 %v5445, 16
            %v5476 = vrot.slane %v5474, 7
            %v5477 = vshll.u32 %v5445, 16
            %v5479 = vor.u32 %v5476, %v5477
            %v5481 = vshrl.u32 %v5446, 16
            %v5483 = vrot.slane %v5481, 7
            %v5484 = vshll.u32 %v5446, 16
            %v5486 = vor.u32 %v5483, %v5484
            %v5488 = vshrl.u32 %v5447, 16
            %v5490 = vrot.slane %v5488, 7
            %v5491 = vshll.u32 %v5447, 16
            %v5493 = vor.u32 %v5490, %v5491
            %v5495 = vshrl.u32 %v5448, 16
            %v5497 = vrot.slane %v5495, 7
            %v5498 = vshll.u32 %v5448, 16
            %v5500 = vor.u32 %v5497, %v5498
            %v5502 = vshrl.u32 %v5449, 16
            %v5504 = vrot.slane %v5502, 7
            %v5505 = vshll.u32 %v5449, 16
            %v5507 = vor.u32 %v5504, %v5505
            %v5509 = vshrl.u32 %v5450, 16
            %v5511 = vrot.slane %v5509, 7
            %v5512 = vshll.u32 %v5450, 16
            %v5514 = vor.u32 %v5511, %v5512
            %v5516 = vshrl.u32 %v5451, 16
            %v5518 = vrot.slane %v5516, 7
            %v5519 = vshll.u32 %v5451, 16
            %v5521 = vor.u32 %v5518, %v5519
            %v5523 = vshrl.u32 %v5452, 16
            %v5525 = vrot.slane %v5523, 7
            %v5526 = vshll.u32 %v5452, 16
            %v5528 = vor.u32 %v5525, %v5526
            %v5530 = vshrl.u32 %v5453, 16
            %v5532 = vrot.slane %v5530, 7
            %v5533 = vshll.u32 %v5453, 16
            %v5535 = vor.u32 %v5532, %v5533
            %v5537 = vshrl.u32 %v5454, 16
            %v5539 = vrot.slane %v5537, 7
            %v5540 = vshll.u32 %v5454, 16
            %v5542 = vor.u32 %v5539, %v5540
            %v5544 = vshrl.u32 %v5455, 16
            %v5546 = vrot.slane %v5544, 7
            %v5547 = vshll.u32 %v5455, 16
            %v5549 = vor.u32 %v5546, %v5547
            %v5551 = vshrl.u32 %v5456, 16
            %v5553 = vrot.slane %v5551, 7
            %v5554 = vshll.u32 %v5456, 16
            %v5556 = vor.u32 %v5553, %v5554
            %v5558 = vshrl.u32 %v5457, 16
            %v5560 = vrot.slane %v5558, 7
            %v5561 = vshll.u32 %v5457, 16
            %v5563 = vor.u32 %v5560, %v5561
            %v5565 = vshrl.u32 %v5458, 16
            %v5567 = vrot.slane %v5565, 7
            %v5568 = vshll.u32 %v5458, 16
            %v5570 = vor.u32 %v5567, %v5568
            %v5587 = vsel %vm831, 0, %v5465
            %v5588 = vsel %vm831, 0, %v5472
            %v5589 = vsel %vm831, 0, %v5479
            %v5590 = vsel %vm831, 0, %v5486
            %v5591 = vsel %vm831, 0, %v5493
            %v5592 = vsel %vm831, 0, %v5500
            %v5593 = vsel %vm831, 0, %v5507
            %v5594 = vsel %vm831, 0, %v5514
            %v5595 = vsel %vm831, 0, %v5521
            %v5596 = vsel %vm831, 0, %v5528
            %v5597 = vsel %vm831, 0, %v5535
            %v5598 = vsel %vm831, 0, %v5542
            %v5599 = vsel %vm831, 0, %v5549
            %v5600 = vsel %vm831, 0, %v5556
            %v5601 = vsel %vm831, 0, %v5563
            %v5602 = vsel %vm831, 0, %v5570
            %v5603 = vrot.slane %v5463, 1
            %v5604 = vor.u32 %v5460, %v5603
            %v5605 = vrot.slane %v5470, 1
            %v5606 = vor.u32 %v5467, %v5605
            %v5607 = vrot.slane %v5477, 1
            %v5608 = vor.u32 %v5474, %v5607
            %v5609 = vrot.slane %v5484, 1
            %v5610 = vor.u32 %v5481, %v5609
            %v5611 = vrot.slane %v5491, 1
            %v5612 = vor.u32 %v5488, %v5611
            %v5613 = vrot.slane %v5498, 1
            %v5614 = vor.u32 %v5495, %v5613
            %v5615 = vrot.slane %v5505, 1
            %v5616 = vor.u32 %v5502, %v5615
            %v5617 = vrot.slane %v5512, 1
            %v5618 = vor.u32 %v5509, %v5617
            %v5619 = vrot.slane %v5519, 1
            %v5620 = vor.u32 %v5516, %v5619
            %v5621 = vrot.slane %v5526, 1
            %v5622 = vor.u32 %v5523, %v5621
            %v5623 = vrot.slane %v5533, 1
            %v5624 = vor.u32 %v5530, %v5623
            %v5625 = vrot.slane %v5540, 1
            %v5626 = vor.u32 %v5537, %v5625
            %v5627 = vrot.slane %v5547, 1
            %v5628 = vor.u32 %v5544, %v5627
            %v5629 = vrot.slane %v5554, 1
            %v5630 = vor.u32 %v5551, %v5629
            %v5631 = vrot.slane %v5561, 1
            %v5632 = vor.u32 %v5558, %v5631
            %v5633 = vrot.slane %v5568, 1
            %v5634 = vor.u32 %v5565, %v5633
            %v5651 = vsel %vm898, %v5604, 0
            %v5652 = vsel %vm898, %v5606, 0
            %v5653 = vsel %vm898, %v5608, 0
            %v5654 = vsel %vm898, %v5610, 0
            %v5655 = vsel %vm898, %v5612, 0
            %v5656 = vsel %vm898, %v5614, 0
            %v5657 = vsel %vm898, %v5616, 0
            %v5658 = vsel %vm898, %v5618, 0
            %v5659 = vsel %vm898, %v5620, 0
            %v5660 = vsel %vm898, %v5622, 0
            %v5661 = vsel %vm898, %v5624, 0
            %v5662 = vsel %vm898, %v5626, 0
            %v5663 = vsel %vm898, %v5628, 0
            %v5664 = vsel %vm898, %v5630, 0
            %v5665 = vsel %vm898, %v5632, 0
            %v5666 = vsel %vm898, %v5634, 0
            %5683 = vrot.lane.b32.xlu0 %v5443, 32
            %v5684 = vpop.permute.xlu0 %5683
            %5685 = vrot.lane.b32.xlu0 %v5444, 32
            %v5686 = vpop.permute.xlu0 %5685
            %5687 = vrot.lane.b32.xlu0 %v5445, 32
            %v5688 = vpop.permute.xlu0 %5687
            %5689 = vrot.lane.b32.xlu0 %v5446, 32
            %v5690 = vpop.permute.xlu0 %5689
            %5691 = vrot.lane.b32.xlu0 %v5447, 32
            %v5692 = vpop.permute.xlu0 %5691
            %5693 = vrot.lane.b32.xlu0 %v5448, 32
            %v5694 = vpop.permute.xlu0 %5693
            %5695 = vrot.lane.b32.xlu0 %v5449, 32
            %v5696 = vpop.permute.xlu0 %5695
            %5697 = vrot.lane.b32.xlu0 %v5450, 32
            %v5698 = vpop.permute.xlu0 %5697
            %5699 = vrot.lane.b32.xlu0 %v5451, 32
            %v5700 = vpop.permute.xlu0 %5699
            %5701 = vrot.lane.b32.xlu0 %v5452, 32
            %v5702 = vpop.permute.xlu0 %5701
            %5703 = vrot.lane.b32.xlu0 %v5453, 32
            %v5704 = vpop.permute.xlu0 %5703
            %5705 = vrot.lane.b32.xlu0 %v5454, 32
            %v5706 = vpop.permute.xlu0 %5705
            %5707 = vrot.lane.b32.xlu0 %v5455, 32
            %v5708 = vpop.permute.xlu0 %5707
            %5709 = vrot.lane.b32.xlu0 %v5456, 32
            %v5710 = vpop.permute.xlu0 %5709
            %5711 = vrot.lane.b32.xlu0 %v5457, 32
            %v5712 = vpop.permute.xlu0 %5711
            %5713 = vrot.lane.b32.xlu0 %v5458, 32
            %v5714 = vpop.permute.xlu0 %5713
            %5731 = vrot.lane.b32.xlu0 %v5651, 64
            %v5732 = vpop.permute.xlu0 %5731
            %5733 = vrot.lane.b32.xlu0 %v5652, 64
            %v5734 = vpop.permute.xlu0 %5733
            %5735 = vrot.lane.b32.xlu0 %v5653, 64
            %v5736 = vpop.permute.xlu0 %5735
            %5737 = vrot.lane.b32.xlu0 %v5654, 64
            %v5738 = vpop.permute.xlu0 %5737
            %5739 = vrot.lane.b32.xlu0 %v5655, 64
            %v5740 = vpop.permute.xlu0 %5739
            %5741 = vrot.lane.b32.xlu0 %v5656, 64
            %v5742 = vpop.permute.xlu0 %5741
            %5743 = vrot.lane.b32.xlu0 %v5657, 64
            %v5744 = vpop.permute.xlu0 %5743
            %5745 = vrot.lane.b32.xlu0 %v5658, 64
            %v5746 = vpop.permute.xlu0 %5745
            %5747 = vrot.lane.b32.xlu0 %v5659, 64
            %v5748 = vpop.permute.xlu0 %5747
            %5749 = vrot.lane.b32.xlu0 %v5660, 64
            %v5750 = vpop.permute.xlu0 %5749
            %5751 = vrot.lane.b32.xlu0 %v5661, 64
            %v5752 = vpop.permute.xlu0 %5751
            %5753 = vrot.lane.b32.xlu0 %v5662, 64
            %v5754 = vpop.permute.xlu0 %5753
            %5755 = vrot.lane.b32.xlu0 %v5663, 64
            %v5756 = vpop.permute.xlu0 %5755
            %5757 = vrot.lane.b32.xlu0 %v5664, 64
            %v5758 = vpop.permute.xlu0 %5757
            %5759 = vrot.lane.b32.xlu0 %v5665, 64
            %v5760 = vpop.permute.xlu0 %5759
            %5761 = vrot.lane.b32.xlu0 %v5666, 64
            %v5762 = vpop.permute.xlu0 %5761
            %v5765 = vsel %vm2481, %v5587, %v5684
            %v5768 = vsel %vm2481, %v5588, %v5686
            %v5771 = vsel %vm2481, %v5589, %v5688
            %v5774 = vsel %vm2481, %v5590, %v5690
            %v5777 = vsel %vm2481, %v5591, %v5692
            %v5780 = vsel %vm2481, %v5592, %v5694
            %v5783 = vsel %vm2481, %v5593, %v5696
            %v5786 = vsel %vm2481, %v5594, %v5698
            %v5789 = vsel %vm2481, %v5595, %v5700
            %v5792 = vsel %vm2481, %v5596, %v5702
            %v5795 = vsel %vm2481, %v5597, %v5704
            %v5798 = vsel %vm2481, %v5598, %v5706
            %v5801 = vsel %vm2481, %v5599, %v5708
            %v5804 = vsel %vm2481, %v5600, %v5710
            %v5807 = vsel %vm2481, %v5601, %v5712
            %v5810 = vsel %vm2481, %v5602, %v5714
            %v5812 = vsel %vm2786, %v5765, %v5732
            %v5814 = vsel %vm2786, %v5768, %v5734
            %v5816 = vsel %vm2786, %v5771, %v5736
            %v5818 = vsel %vm2786, %v5774, %v5738
            %v5820 = vsel %vm2786, %v5777, %v5740
            %v5822 = vsel %vm2786, %v5780, %v5742
            %v5824 = vsel %vm2786, %v5783, %v5744
            %v5826 = vsel %vm2786, %v5786, %v5746
            %v5828 = vsel %vm2786, %v5789, %v5748
            %v5830 = vsel %vm2786, %v5792, %v5750
            %v5832 = vsel %vm2786, %v5795, %v5752
            %v5834 = vsel %vm2786, %v5798, %v5754
            %v5836 = vsel %vm2786, %v5801, %v5756
            %v5838 = vsel %vm2786, %v5804, %v5758
            %v5840 = vsel %vm2786, %v5807, %v5760
            %v5842 = vsel %vm2786, %v5810, %v5762
            %v5859 = vunpack.c.l.b16 %v5812
            %v5860 = vunpack.c.h.b16 %v5812
            %v5861 = vunpack.c.l.b16 %v5814
            %v5862 = vunpack.c.h.b16 %v5814
            %v5863 = vunpack.c.l.b16 %v5816
            %v5864 = vunpack.c.h.b16 %v5816
            %v5865 = vunpack.c.l.b16 %v5818
            %v5866 = vunpack.c.h.b16 %v5818
            %v5867 = vunpack.c.l.b16 %v5820
            %v5868 = vunpack.c.h.b16 %v5820
            %v5869 = vunpack.c.l.b16 %v5822
            %v5870 = vunpack.c.h.b16 %v5822
            %v5871 = vunpack.c.l.b16 %v5824
            %v5872 = vunpack.c.h.b16 %v5824
            %v5873 = vunpack.c.l.b16 %v5826
            %v5874 = vunpack.c.h.b16 %v5826
            %v5875 = vunpack.c.l.b16 %v5828
            %v5876 = vunpack.c.h.b16 %v5828
            %v5877 = vunpack.c.l.b16 %v5830
            %v5878 = vunpack.c.h.b16 %v5830
            %v5879 = vunpack.c.l.b16 %v5832
            %v5880 = vunpack.c.h.b16 %v5832
            %v5881 = vunpack.c.l.b16 %v5834
            %v5882 = vunpack.c.h.b16 %v5834
            %v5883 = vunpack.c.l.b16 %v5836
            %v5884 = vunpack.c.h.b16 %v5836
            %v5885 = vunpack.c.l.b16 %v5838
            %v5886 = vunpack.c.h.b16 %v5838
            %v5887 = vunpack.c.l.b16 %v5840
            %v5888 = vunpack.c.h.b16 %v5840
            %v5889 = vunpack.c.l.b16 %v5842
            %v5890 = vunpack.c.h.b16 %v5842
            %v5891 = vpack.c.b16 %v5859, %v5859
            %v5892 = vpack.c.b16 %v5860, %v5860
            %v5893 = vpack.c.b16 %v5861, %v5861
            %v5894 = vpack.c.b16 %v5862, %v5862
            %v5895 = vpack.c.b16 %v5863, %v5863
            %v5896 = vpack.c.b16 %v5864, %v5864
            %v5897 = vpack.c.b16 %v5865, %v5865
            %v5898 = vpack.c.b16 %v5866, %v5866
            %v5899 = vpack.c.b16 %v5867, %v5867
            %v5900 = vpack.c.b16 %v5868, %v5868
            %v5901 = vpack.c.b16 %v5869, %v5869
            %v5902 = vpack.c.b16 %v5870, %v5870
            %v5903 = vpack.c.b16 %v5871, %v5871
            %v5904 = vpack.c.b16 %v5872, %v5872
            %v5905 = vpack.c.b16 %v5873, %v5873
            %v5906 = vpack.c.b16 %v5874, %v5874
            %v5907 = vpack.c.b16 %v5875, %v5875
            %v5908 = vpack.c.b16 %v5876, %v5876
            %v5909 = vpack.c.b16 %v5877, %v5877
            %v5910 = vpack.c.b16 %v5878, %v5878
            %v5911 = vpack.c.b16 %v5879, %v5879
            %v5912 = vpack.c.b16 %v5880, %v5880
            %v5913 = vpack.c.b16 %v5881, %v5881
            %v5914 = vpack.c.b16 %v5882, %v5882
            %v5915 = vpack.c.b16 %v5883, %v5883
            %v5916 = vpack.c.b16 %v5884, %v5884
            %v5917 = vpack.c.b16 %v5885, %v5885
            %v5918 = vpack.c.b16 %v5886, %v5886
            %v5919 = vpack.c.b16 %v5887, %v5887
            %v5920 = vpack.c.b16 %v5888, %v5888
            %v5921 = vpack.c.b16 %v5889, %v5889
            %v5922 = vpack.c.b16 %v5890, %v5890
            %vm5955 = vcmask 781312
            %5956 = vst.msk [vmem:[%s1205] sm:$0xf] %vm5955, %v5891
            %5957 = vst.msk [vmem:[%s1205 + $0x8] sm:$0xf] %vm5955, %v5892
            %5958 = vst.msk [vmem:[%s1205 + $0x10] sm:$0xf] %vm5955, %v5893
            %5959 = vst.msk [vmem:[%s1205 + $0x18] sm:$0xf] %vm5955, %v5894
            %5960 = vst.msk [vmem:[%s1205 + $0x20] sm:$0xf] %vm5955, %v5895
            %5961 = vst.msk [vmem:[%s1205 + $0x28] sm:$0xf] %vm5955, %v5896
            %5962 = vst.msk [vmem:[%s1205 + $0x30] sm:$0xf] %vm5955, %v5897
            %5963 = vst.msk [vmem:[%s1205 + $0x38] sm:$0xf] %vm5955, %v5898
            %5964 = vst.msk [vmem:[%s1205 + $0x40] sm:$0xf] %vm5955, %v5899
            %5965 = vst.msk [vmem:[%s1205 + $0x48] sm:$0xf] %vm5955, %v5900
            %5966 = vst.msk [vmem:[%s1205 + $0x50] sm:$0xf] %vm5955, %v5901
            %5967 = vst.msk [vmem:[%s1205 + $0x58] sm:$0xf] %vm5955, %v5902
            %5968 = vst.msk [vmem:[%s1205 + $0x60] sm:$0xf] %vm5955, %v5903
            %5969 = vst.msk [vmem:[%s1205 + $0x68] sm:$0xf] %vm5955, %v5904
            %5970 = vst.msk [vmem:[%s1205 + $0x70] sm:$0xf] %vm5955, %v5905
            %5971 = vst.msk [vmem:[%s1205 + $0x78] sm:$0xf] %vm5955, %v5906
            %5972 = vst.msk [vmem:[%s1205 + $0x80] sm:$0xf] %vm5955, %v5907
            %5973 = vst.msk [vmem:[%s1205 + $0x88] sm:$0xf] %vm5955, %v5908
            %5974 = vst.msk [vmem:[%s1205 + $0x90] sm:$0xf] %vm5955, %v5909
            %5975 = vst.msk [vmem:[%s1205 + $0x98] sm:$0xf] %vm5955, %v5910
            %5976 = vst.msk [vmem:[%s1205 + $0xa0] sm:$0xf] %vm5955, %v5911
            %5977 = vst.msk [vmem:[%s1205 + $0xa8] sm:$0xf] %vm5955, %v5912
            %5978 = vst.msk [vmem:[%s1205 + $0xb0] sm:$0xf] %vm5955, %v5913
            %5979 = vst.msk [vmem:[%s1205 + $0xb8] sm:$0xf] %vm5955, %v5914
            %5980 = vst.msk [vmem:[%s1205 + $0xc0] sm:$0xf] %vm5955, %v5915
            %5981 = vst.msk [vmem:[%s1205 + $0xc8] sm:$0xf] %vm5955, %v5916
            %5982 = vst.msk [vmem:[%s1205 + $0xd0] sm:$0xf] %vm5955, %v5917
            %5983 = vst.msk [vmem:[%s1205 + $0xd8] sm:$0xf] %vm5955, %v5918
            %5984 = vst.msk [vmem:[%s1205 + $0xe0] sm:$0xf] %vm5955, %v5919
            %5985 = vst.msk [vmem:[%s1205 + $0xe8] sm:$0xf] %vm5955, %v5920
            %5986 = vst.msk [vmem:[%s1205 + $0xf0] sm:$0xf] %vm5955, %v5921
            %5987 = vst.msk [vmem:[%s1205 + $0xf8] sm:$0xf] %vm5955, %v5922
            %s5988 = smul.u32 %s5406, 36
            %s5989 = smul.addr %s5988, 4
            %s5990 = scalar_lea.vmem %s5, %s5989
            %v5991 = vld [vmem:[%s5990] sm:$0xf]
            %v5992 = vld [vmem:[%s5990 + $0x4] sm:$0xf]
            %v5993 = vld [vmem:[%s5990 + $0x8] sm:$0xf]
            %v5994 = vld [vmem:[%s5990 + $0xc] sm:$0xf]
            %v5995 = vld [vmem:[%s5990 + $0x10] sm:$0xf]
            %v5996 = vld [vmem:[%s5990 + $0x14] sm:$0xf]
            %v5997 = vld [vmem:[%s5990 + $0x18] sm:$0xf]
            %v5998 = vld [vmem:[%s5990 + $0x1c] sm:$0xf]
            %v5999 = vld [vmem:[%s5990 + $0x20] sm:$0xf]
            %v6000 = vld [vmem:[%s5990 + $0x24] sm:$0xf]
            %v6001 = vld [vmem:[%s5990 + $0x28] sm:$0xf]
            %v6002 = vld [vmem:[%s5990 + $0x2c] sm:$0xf]
            %v6003 = vld [vmem:[%s5990 + $0x30] sm:$0xf]
            %v6004 = vld [vmem:[%s5990 + $0x34] sm:$0xf]
            %v6005 = vld [vmem:[%s5990 + $0x38] sm:$0xf]
            %v6006 = vld [vmem:[%s5990 + $0x3c] sm:$0xf]
            %v6007 = vld [vmem:[%s5990 + $0x40] sm:$0xf]
            %v6008 = vld [vmem:[%s5990 + $0x44] sm:$0xf]
            %v6009 = vld [vmem:[%s5990 + $0x48] sm:$0xf]
            %v6010 = vld [vmem:[%s5990 + $0x4c] sm:$0xf]
            %v6011 = vld [vmem:[%s5990 + $0x50] sm:$0xf]
            %v6012 = vld [vmem:[%s5990 + $0x54] sm:$0xf]
            %v6013 = vld [vmem:[%s5990 + $0x58] sm:$0xf]
            %v6014 = vld [vmem:[%s5990 + $0x5c] sm:$0xf]
            %v6015 = vld [vmem:[%s5990 + $0x60] sm:$0xf]
            %v6016 = vld [vmem:[%s5990 + $0x64] sm:$0xf]
            %v6017 = vld [vmem:[%s5990 + $0x68] sm:$0xf]
            %v6018 = vld [vmem:[%s5990 + $0x6c] sm:$0xf]
            %v6019 = vld [vmem:[%s5990 + $0x70] sm:$0xf]
            %v6020 = vld [vmem:[%s5990 + $0x74] sm:$0xf]
            %v6021 = vld [vmem:[%s5990 + $0x78] sm:$0xf]
            %v6022 = vld [vmem:[%s5990 + $0x7c] sm:$0xf]
            %v6023 = vld [vmem:[%s5990 + $0x80] sm:$0xf]
            %v6024 = vld [vmem:[%s5990 + $0x84] sm:$0xf]
            %v6025 = vld [vmem:[%s5990 + $0x88] sm:$0xf]
            %v6026 = vld [vmem:[%s5990 + $0x8c] sm:$0xf]
            %s6027 = scalar_lea.vmem %s6, %s5406
            %v6028 = vld [vmem:[%s6027] sm:$0x1]
            %v6029 = vld [vmem:[#allocation2] sm:$0xf]
            %v6030 = vld [vmem:[#allocation2 + $0x8] sm:$0xf]
            %v6031 = vld [vmem:[#allocation2 + $0x10] sm:$0xf]
            %v6032 = vld [vmem:[#allocation2 + $0x18] sm:$0xf]
            %v6033 = vld [vmem:[#allocation2 + $0x20] sm:$0xf]
            %v6034 = vld [vmem:[#allocation2 + $0x28] sm:$0xf]
            %v6035 = vld [vmem:[#allocation2 + $0x30] sm:$0xf]
            %v6036 = vld [vmem:[#allocation2 + $0x38] sm:$0xf]
            %v6037 = vld [vmem:[#allocation2 + $0x40] sm:$0xf]
            %v6038 = vld [vmem:[#allocation2 + $0x48] sm:$0xf]
            %v6039 = vld [vmem:[#allocation2 + $0x50] sm:$0xf]
            %v6040 = vld [vmem:[#allocation2 + $0x58] sm:$0xf]
            %v6041 = vld [vmem:[#allocation2 + $0x60] sm:$0xf]
            %v6042 = vld [vmem:[#allocation2 + $0x68] sm:$0xf]
            %v6043 = vld [vmem:[#allocation2 + $0x70] sm:$0xf]
            %v6044 = vld [vmem:[#allocation2 + $0x78] sm:$0xf]
            %v6045 = vld [vmem:[#allocation2 + $0x80] sm:$0xf]
            %v6046 = vld [vmem:[#allocation2 + $0x88] sm:$0xf]
            %v6047 = vld [vmem:[#allocation2 + $0x90] sm:$0xf]
            %v6048 = vld [vmem:[#allocation2 + $0x98] sm:$0xf]
            %v6049 = vld [vmem:[#allocation2 + $0xa0] sm:$0xf]
            %v6050 = vld [vmem:[#allocation2 + $0xa8] sm:$0xf]
            %v6051 = vld [vmem:[#allocation2 + $0xb0] sm:$0xf]
            %v6052 = vld [vmem:[#allocation2 + $0xb8] sm:$0xf]
            %v6053 = vld [vmem:[#allocation2 + $0xc0] sm:$0xf]
            %v6054 = vld [vmem:[#allocation2 + $0xc8] sm:$0xf]
            %v6055 = vld [vmem:[#allocation2 + $0xd0] sm:$0xf]
            %v6056 = vld [vmem:[#allocation2 + $0xd8] sm:$0xf]
            %v6057 = vld [vmem:[#allocation2 + $0xe0] sm:$0xf]
            %v6058 = vld [vmem:[#allocation2 + $0xe8] sm:$0xf]
            %v6059 = vld [vmem:[#allocation2 + $0xf0] sm:$0xf]
            %v6060 = vld [vmem:[#allocation2 + $0xf8] sm:$0xf]
            %v6061 = vld [vmem:[%s1205] sm:$0xf]
            %v6062 = vld [vmem:[%s1205 + $0x8] sm:$0xf]
            %v6063 = vld [vmem:[%s1205 + $0x10] sm:$0xf]
            %v6064 = vld [vmem:[%s1205 + $0x18] sm:$0xf]
            %v6065 = vld [vmem:[%s1205 + $0x20] sm:$0xf]
            %v6066 = vld [vmem:[%s1205 + $0x28] sm:$0xf]
            %v6067 = vld [vmem:[%s1205 + $0x30] sm:$0xf]
            %v6068 = vld [vmem:[%s1205 + $0x38] sm:$0xf]
            %v6069 = vld [vmem:[%s1205 + $0x40] sm:$0xf]
            %v6070 = vld [vmem:[%s1205 + $0x48] sm:$0xf]
            %v6071 = vld [vmem:[%s1205 + $0x50] sm:$0xf]
            %v6072 = vld [vmem:[%s1205 + $0x58] sm:$0xf]
            %v6073 = vld [vmem:[%s1205 + $0x60] sm:$0xf]
            %v6074 = vld [vmem:[%s1205 + $0x68] sm:$0xf]
            %v6075 = vld [vmem:[%s1205 + $0x70] sm:$0xf]
            %v6076 = vld [vmem:[%s1205 + $0x78] sm:$0xf]
            %v6077 = vld [vmem:[%s1205 + $0x80] sm:$0xf]
            %v6078 = vld [vmem:[%s1205 + $0x88] sm:$0xf]
            %v6079 = vld [vmem:[%s1205 + $0x90] sm:$0xf]
            %v6080 = vld [vmem:[%s1205 + $0x98] sm:$0xf]
            %v6081 = vld [vmem:[%s1205 + $0xa0] sm:$0xf]
            %v6082 = vld [vmem:[%s1205 + $0xa8] sm:$0xf]
            %v6083 = vld [vmem:[%s1205 + $0xb0] sm:$0xf]
            %v6084 = vld [vmem:[%s1205 + $0xb8] sm:$0xf]
            %v6085 = vld [vmem:[%s1205 + $0xc0] sm:$0xf]
            %v6086 = vld [vmem:[%s1205 + $0xc8] sm:$0xf]
            %v6087 = vld [vmem:[%s1205 + $0xd0] sm:$0xf]
            %v6088 = vld [vmem:[%s1205 + $0xd8] sm:$0xf]
            %v6089 = vld [vmem:[%s1205 + $0xe0] sm:$0xf]
            %v6090 = vld [vmem:[%s1205 + $0xe8] sm:$0xf]
            %v6091 = vld [vmem:[%s1205 + $0xf0] sm:$0xf]
            %v6092 = vld [vmem:[%s1205 + $0xf8] sm:$0xf]
            %v6125 = vunpack.c.l.b16 %v6061
            %v6126 = vunpack.c.l.b16 %v6062
            %v6127 = vunpack.c.l.b16 %v6063
            %v6128 = vunpack.c.l.b16 %v6064
            %v6129 = vunpack.c.l.b16 %v6065
            %v6130 = vunpack.c.l.b16 %v6066
            %v6131 = vunpack.c.l.b16 %v6067
            %v6132 = vunpack.c.l.b16 %v6068
            %v6133 = vunpack.c.l.b16 %v6069
            %v6134 = vunpack.c.l.b16 %v6070
            %v6135 = vunpack.c.l.b16 %v6071
            %v6136 = vunpack.c.l.b16 %v6072
            %v6137 = vunpack.c.l.b16 %v6073
            %v6138 = vunpack.c.l.b16 %v6074
            %v6139 = vunpack.c.l.b16 %v6075
            %v6140 = vunpack.c.l.b16 %v6076
            %v6141 = vunpack.c.l.b16 %v6077
            %v6142 = vunpack.c.l.b16 %v6078
            %v6143 = vunpack.c.l.b16 %v6079
            %v6144 = vunpack.c.l.b16 %v6080
            %v6145 = vunpack.c.l.b16 %v6081
            %v6146 = vunpack.c.l.b16 %v6082
            %v6147 = vunpack.c.l.b16 %v6083
            %v6148 = vunpack.c.l.b16 %v6084
            %v6149 = vunpack.c.l.b16 %v6085
            %v6150 = vunpack.c.l.b16 %v6086
            %v6151 = vunpack.c.l.b16 %v6087
            %v6152 = vunpack.c.l.b16 %v6088
            %v6153 = vunpack.c.l.b16 %v6089
            %v6154 = vunpack.c.l.b16 %v6090
            %v6155 = vunpack.c.l.b16 %v6091
            %v6156 = vunpack.c.l.b16 %v6092
            %v6157 = vpack.c.b16 %v6126, %v6125
            %v6158 = vpack.c.b16 %v6128, %v6127
            %v6159 = vpack.c.b16 %v6130, %v6129
            %v6160 = vpack.c.b16 %v6132, %v6131
            %v6161 = vpack.c.b16 %v6134, %v6133
            %v6162 = vpack.c.b16 %v6136, %v6135
            %v6163 = vpack.c.b16 %v6138, %v6137
            %v6164 = vpack.c.b16 %v6140, %v6139
            %v6165 = vpack.c.b16 %v6142, %v6141
            %v6166 = vpack.c.b16 %v6144, %v6143
            %v6167 = vpack.c.b16 %v6146, %v6145
            %v6168 = vpack.c.b16 %v6148, %v6147
            %v6169 = vpack.c.b16 %v6150, %v6149
            %v6170 = vpack.c.b16 %v6152, %v6151
            %v6171 = vpack.c.b16 %v6154, %v6153
            %v6172 = vpack.c.b16 %v6156, %v6155
            %v6185 = vunpack.c.l.b16 %v6003
            %v6186 = vunpack.c.l.b16 %v6004
            %v6187 = vunpack.c.l.b16 %v6005
            %v6188 = vunpack.c.l.b16 %v6006
            %v6189 = vunpack.c.l.b16 %v6007
            %v6190 = vunpack.c.l.b16 %v6008
            %v6191 = vunpack.c.l.b16 %v6009
            %v6192 = vunpack.c.l.b16 %v6010
            %v6193 = vunpack.c.l.b16 %v6011
            %v6194 = vunpack.c.l.b16 %v6012
            %v6195 = vunpack.c.l.b16 %v6013
            %v6196 = vunpack.c.l.b16 %v6014
            %v6197 = vpack.c.b16 %v6186, %v6185
            %v6198 = vpack.c.b16 %v6188, %v6187
            %v6199 = vpack.c.b16 %v6190, %v6189
            %v6200 = vpack.c.b16 %v6192, %v6191
            %v6201 = vpack.c.b16 %v6194, %v6193
            %v6202 = vpack.c.b16 %v6196, %v6195
            %vm6209 = vcmask 785408
            %v6211 = vsel %vm6209, %v6157, 0
            %v6214 = vsel %vm6209, %v6158, 0
            %v6217 = vsel %vm6209, %v6159, 0
            %v6220 = vsel %vm6209, %v6160, 0
            %v6223 = vsel %vm6209, %v6161, 0
            %v6226 = vsel %vm6209, %v6162, 0
            %v6229 = vsel %vm6209, %v6163, 0
            %v6232 = vsel %vm6209, %v6164, 0
            %v6235 = vsel %vm6209, %v6165, 0
            %v6238 = vsel %vm6209, %v6166, 0
            %v6241 = vsel %vm6209, %v6167, 0
            %v6244 = vsel %vm6209, %v6168, 0
            %v6247 = vsel %vm6209, %v6169, 0
            %v6250 = vsel %vm6209, %v6170, 0
            %v6253 = vsel %vm6209, %v6171, 0
            %v6256 = vsel %vm6209, %v6172, 0
            %6258 = vmatprep.subr.bf16.mxu0 0
            %6259 = vmatpush1.bf16.msra.mxu0 0
            %6260 = vmatprep.subr.bf16.mxu0 0
            %6261 = vmatpush1.bf16.msra.mxu0 0
            %6262 = vmatprep.subr.bf16.mxu0 0
            %6263 = vmatpush1.bf16.msra.mxu0 %v6202
            %6264 = vmatprep.subr.bf16.mxu0 0
            %6265 = vmatpush1.bf16.msra.mxu0 %v6201
            %6266 = vmatprep.subr.bf16.mxu0 0
            %6267 = vmatpush1.bf16.msra.mxu0 %v6200
            %6268 = vmatprep.subr.bf16.mxu0 0
            %6269 = vmatpush1.bf16.msra.mxu0 %v6199
            %6270 = vmatprep.subr.bf16.mxu0 0
            %6271 = vmatpush1.bf16.msra.mxu0 %v6198
            %6272 = vmatprep.subr.bf16.mxu0 0
            %6273 = vmatpush1.bf16.msra.mxu0 %v6197
            %6274 = vmatprep.subr.bf16.mxu0 0
            %6275 = vmatpush2.bf16.msra.mxu0 0
            %6276 = vmatprep.subr.bf16.mxu0 0
            %6277 = vmatpush2.bf16.msra.mxu0 0
            %6278 = vmatprep.subr.bf16.mxu0 0
            %6279 = vmatpush2.bf16.msra.mxu0 0
            %6280 = vmatprep.subr.bf16.mxu0 0
            %6281 = vmatpush2.bf16.msra.mxu0 0
            %6282 = vmatprep.subr.bf16.mxu0 0
            %6283 = vmatpush2.bf16.msra.mxu0 0
            %6284 = vmatprep.subr.bf16.mxu0 0
            %6285 = vmatpush2.bf16.msra.mxu0 0
            %6286 = vmatprep.subr.bf16.mxu0 0
            %6287 = vmatpush2.bf16.msra.mxu0 0
            %6288 = vmatprep.subr.bf16.mxu0 0
            %6289 = vmatpush2.bf16.msra.mxu0 0
            %6290 = vmatprep.mubr.bf16.mxu0 0
            %6291 = vmatmul.mubr.bf16.gmra.mxu0 %v6211
            %v6292 = vpop.f32.mrf.mxu0
            %v6293 = vadd.f32 0.0, %v6292
            %v6294 = vpop.f32.mrf.mxu0
            %v6295 = vpop.f32.mrf.mxu0
            %v6296 = vadd.f32 0.0, %v6295
            %v6297 = vpop.f32.mrf.mxu0
            %6298 = vmatprep.mubr.bf16.mxu0 0
            %6299 = vmatmul.mubr.bf16.gmra.mxu0 %v6214
            %v6300 = vpop.f32.mrf.mxu0
            %v6301 = vadd.f32 0.0, %v6300
            %v6302 = vpop.f32.mrf.mxu0
            %v6303 = vpop.f32.mrf.mxu0
            %v6304 = vadd.f32 0.0, %v6303
            %v6305 = vpop.f32.mrf.mxu0
            %6306 = vmatprep.mubr.bf16.mxu0 0
            %6307 = vmatmul.mubr.bf16.gmra.mxu0 %v6217
            %v6308 = vpop.f32.mrf.mxu0
            %v6309 = vadd.f32 0.0, %v6308
            %v6310 = vpop.f32.mrf.mxu0
            %v6311 = vpop.f32.mrf.mxu0
            %v6312 = vadd.f32 0.0, %v6311
            %v6313 = vpop.f32.mrf.mxu0
            %6314 = vmatprep.mubr.bf16.mxu0 0
            %6315 = vmatmul.mubr.bf16.gmra.mxu0 %v6220
            %v6316 = vpop.f32.mrf.mxu0
            %v6317 = vadd.f32 0.0, %v6316
            %v6318 = vpop.f32.mrf.mxu0
            %v6319 = vpop.f32.mrf.mxu0
            %v6320 = vadd.f32 0.0, %v6319
            %v6321 = vpop.f32.mrf.mxu0
            %6322 = vmatprep.mubr.bf16.mxu0 0
            %6323 = vmatmul.mubr.bf16.gmra.mxu0 %v6223
            %v6324 = vpop.f32.mrf.mxu0
            %v6325 = vadd.f32 0.0, %v6324
            %v6326 = vpop.f32.mrf.mxu0
            %v6327 = vpop.f32.mrf.mxu0
            %v6328 = vadd.f32 0.0, %v6327
            %v6329 = vpop.f32.mrf.mxu0
            %6330 = vmatprep.mubr.bf16.mxu0 0
            %6331 = vmatmul.mubr.bf16.gmra.mxu0 %v6226
            %v6332 = vpop.f32.mrf.mxu0
            %v6333 = vadd.f32 0.0, %v6332
            %v6334 = vpop.f32.mrf.mxu0
            %v6335 = vpop.f32.mrf.mxu0
            %v6336 = vadd.f32 0.0, %v6335
            %v6337 = vpop.f32.mrf.mxu0
            %6338 = vmatprep.mubr.bf16.mxu0 0
            %6339 = vmatmul.mubr.bf16.gmra.mxu0 %v6229
            %v6340 = vpop.f32.mrf.mxu0
            %v6341 = vadd.f32 0.0, %v6340
            %v6342 = vpop.f32.mrf.mxu0
            %v6343 = vpop.f32.mrf.mxu0
            %v6344 = vadd.f32 0.0, %v6343
            %v6345 = vpop.f32.mrf.mxu0
            %6346 = vmatprep.mubr.bf16.mxu0 0
            %6347 = vmatmul.mubr.bf16.gmra.mxu0 %v6232
            %v6348 = vpop.f32.mrf.mxu0
            %v6349 = vadd.f32 0.0, %v6348
            %v6350 = vpop.f32.mrf.mxu0
            %v6351 = vpop.f32.mrf.mxu0
            %v6352 = vadd.f32 0.0, %v6351
            %v6353 = vpop.f32.mrf.mxu0
            %6354 = vmatprep.mubr.bf16.mxu0 0
            %6355 = vmatmul.mubr.bf16.gmra.mxu0 %v6235
            %v6356 = vpop.f32.mrf.mxu0
            %v6357 = vadd.f32 0.0, %v6356
            %v6358 = vpop.f32.mrf.mxu0
            %v6359 = vpop.f32.mrf.mxu0
            %v6360 = vadd.f32 0.0, %v6359
            %v6361 = vpop.f32.mrf.mxu0
            %6362 = vmatprep.mubr.bf16.mxu0 0
            %6363 = vmatmul.mubr.bf16.gmra.mxu0 %v6238
            %v6364 = vpop.f32.mrf.mxu0
            %v6365 = vadd.f32 0.0, %v6364
            %v6366 = vpop.f32.mrf.mxu0
            %v6367 = vpop.f32.mrf.mxu0
            %v6368 = vadd.f32 0.0, %v6367
            %v6369 = vpop.f32.mrf.mxu0
            %6370 = vmatprep.mubr.bf16.mxu0 0
            %6371 = vmatmul.mubr.bf16.gmra.mxu0 %v6241
            %v6372 = vpop.f32.mrf.mxu0
            %v6373 = vadd.f32 0.0, %v6372
            %v6374 = vpop.f32.mrf.mxu0
            %v6375 = vpop.f32.mrf.mxu0
            %v6376 = vadd.f32 0.0, %v6375
            %v6377 = vpop.f32.mrf.mxu0
            %6378 = vmatprep.mubr.bf16.mxu0 0
            %6379 = vmatmul.mubr.bf16.gmra.mxu0 %v6244
            %v6380 = vpop.f32.mrf.mxu0
            %v6381 = vadd.f32 0.0, %v6380
            %v6382 = vpop.f32.mrf.mxu0
            %v6383 = vpop.f32.mrf.mxu0
            %v6384 = vadd.f32 0.0, %v6383
            %v6385 = vpop.f32.mrf.mxu0
            %6386 = vmatprep.mubr.bf16.mxu0 0
            %6387 = vmatmul.mubr.bf16.gmra.mxu0 %v6247
            %v6388 = vpop.f32.mrf.mxu0
            %v6389 = vadd.f32 0.0, %v6388
            %v6390 = vpop.f32.mrf.mxu0
            %v6391 = vpop.f32.mrf.mxu0
            %v6392 = vadd.f32 0.0, %v6391
            %v6393 = vpop.f32.mrf.mxu0
            %6394 = vmatprep.mubr.bf16.mxu0 0
            %6395 = vmatmul.mubr.bf16.gmra.mxu0 %v6250
            %v6396 = vpop.f32.mrf.mxu0
            %v6397 = vadd.f32 0.0, %v6396
            %v6398 = vpop.f32.mrf.mxu0
            %v6399 = vpop.f32.mrf.mxu0
            %v6400 = vadd.f32 0.0, %v6399
            %v6401 = vpop.f32.mrf.mxu0
            %6402 = vmatprep.mubr.bf16.mxu0 0
            %6403 = vmatmul.mubr.bf16.gmra.mxu0 %v6253
            %v6404 = vpop.f32.mrf.mxu0
            %v6405 = vadd.f32 0.0, %v6404
            %v6406 = vpop.f32.mrf.mxu0
            %v6407 = vpop.f32.mrf.mxu0
            %v6408 = vadd.f32 0.0, %v6407
            %v6409 = vpop.f32.mrf.mxu0
            %6410 = vmatprep.mubr.bf16.mxu0 0
            %6411 = vmatmul.mubr.bf16.gmra.mxu0 %v6256
            %v6412 = vpop.f32.mrf.mxu0
            %v6413 = vadd.f32 0.0, %v6412
            %v6414 = vpop.f32.mrf.mxu0
            %v6415 = vpop.f32.mrf.mxu0
            %v6416 = vadd.f32 0.0, %v6415
            %v6417 = vpop.f32.mrf.mxu0
            %6418 = vdwg.mxu0
            %v6451 = vunpack.c.l.b16 %v6029
            %v6452 = vunpack.c.l.b16 %v6030
            %v6453 = vunpack.c.l.b16 %v6031
            %v6454 = vunpack.c.l.b16 %v6032
            %v6455 = vunpack.c.l.b16 %v6033
            %v6456 = vunpack.c.l.b16 %v6034
            %v6457 = vunpack.c.l.b16 %v6035
            %v6458 = vunpack.c.l.b16 %v6036
            %v6459 = vunpack.c.l.b16 %v6037
            %v6460 = vunpack.c.l.b16 %v6038
            %v6461 = vunpack.c.l.b16 %v6039
            %v6462 = vunpack.c.l.b16 %v6040
            %v6463 = vunpack.c.l.b16 %v6041
            %v6464 = vunpack.c.l.b16 %v6042
            %v6465 = vunpack.c.l.b16 %v6043
            %v6466 = vunpack.c.l.b16 %v6044
            %v6467 = vunpack.c.l.b16 %v6045
            %v6468 = vunpack.c.l.b16 %v6046
            %v6469 = vunpack.c.l.b16 %v6047
            %v6470 = vunpack.c.l.b16 %v6048
            %v6471 = vunpack.c.l.b16 %v6049
            %v6472 = vunpack.c.l.b16 %v6050
            %v6473 = vunpack.c.l.b16 %v6051
            %v6474 = vunpack.c.l.b16 %v6052
            %v6475 = vunpack.c.l.b16 %v6053
            %v6476 = vunpack.c.l.b16 %v6054
            %v6477 = vunpack.c.l.b16 %v6055
            %v6478 = vunpack.c.l.b16 %v6056
            %v6479 = vunpack.c.l.b16 %v6057
            %v6480 = vunpack.c.l.b16 %v6058
            %v6481 = vunpack.c.l.b16 %v6059
            %v6482 = vunpack.c.l.b16 %v6060
            %v6483 = vpack.c.b16 %v6452, %v6451
            %v6484 = vpack.c.b16 %v6454, %v6453
            %v6485 = vpack.c.b16 %v6456, %v6455
            %v6486 = vpack.c.b16 %v6458, %v6457
            %v6487 = vpack.c.b16 %v6460, %v6459
            %v6488 = vpack.c.b16 %v6462, %v6461
            %v6489 = vpack.c.b16 %v6464, %v6463
            %v6490 = vpack.c.b16 %v6466, %v6465
            %v6491 = vpack.c.b16 %v6468, %v6467
            %v6492 = vpack.c.b16 %v6470, %v6469
            %v6493 = vpack.c.b16 %v6472, %v6471
            %v6494 = vpack.c.b16 %v6474, %v6473
            %v6495 = vpack.c.b16 %v6476, %v6475
            %v6496 = vpack.c.b16 %v6478, %v6477
            %v6497 = vpack.c.b16 %v6480, %v6479
            %v6498 = vpack.c.b16 %v6482, %v6481
            %v6511 = vunpack.c.l.b16 %v5991
            %v6512 = vunpack.c.l.b16 %v5992
            %v6513 = vunpack.c.l.b16 %v5993
            %v6514 = vunpack.c.l.b16 %v5994
            %v6515 = vunpack.c.l.b16 %v5995
            %v6516 = vunpack.c.l.b16 %v5996
            %v6517 = vunpack.c.l.b16 %v5997
            %v6518 = vunpack.c.l.b16 %v5998
            %v6519 = vunpack.c.l.b16 %v5999
            %v6520 = vunpack.c.l.b16 %v6000
            %v6521 = vunpack.c.l.b16 %v6001
            %v6522 = vunpack.c.l.b16 %v6002
            %v6523 = vpack.c.b16 %v6512, %v6511
            %v6524 = vpack.c.b16 %v6514, %v6513
            %v6525 = vpack.c.b16 %v6516, %v6515
            %v6526 = vpack.c.b16 %v6518, %v6517
            %v6527 = vpack.c.b16 %v6520, %v6519
            %v6528 = vpack.c.b16 %v6522, %v6521
            %v6536 = vsel %vm6209, %v6483, 0
            %v6539 = vsel %vm6209, %v6484, 0
            %v6542 = vsel %vm6209, %v6485, 0
            %v6545 = vsel %vm6209, %v6486, 0
            %v6548 = vsel %vm6209, %v6487, 0
            %v6551 = vsel %vm6209, %v6488, 0
            %v6554 = vsel %vm6209, %v6489, 0
            %v6557 = vsel %vm6209, %v6490, 0
            %v6560 = vsel %vm6209, %v6491, 0
            %v6563 = vsel %vm6209, %v6492, 0
            %v6566 = vsel %vm6209, %v6493, 0
            %v6569 = vsel %vm6209, %v6494, 0
            %v6572 = vsel %vm6209, %v6495, 0
            %v6575 = vsel %vm6209, %v6496, 0
            %v6578 = vsel %vm6209, %v6497, 0
            %v6581 = vsel %vm6209, %v6498, 0
            %6583 = vmatprep.subr.bf16.mxu0 0
            %6584 = vmatpush1.bf16.msra.mxu0 0
            %6585 = vmatprep.subr.bf16.mxu0 0
            %6586 = vmatpush1.bf16.msra.mxu0 0
            %6587 = vmatprep.subr.bf16.mxu0 0
            %6588 = vmatpush1.bf16.msra.mxu0 %v6528
            %6589 = vmatprep.subr.bf16.mxu0 0
            %6590 = vmatpush1.bf16.msra.mxu0 %v6527
            %6591 = vmatprep.subr.bf16.mxu0 0
            %6592 = vmatpush1.bf16.msra.mxu0 %v6526
            %6593 = vmatprep.subr.bf16.mxu0 0
            %6594 = vmatpush1.bf16.msra.mxu0 %v6525
            %6595 = vmatprep.subr.bf16.mxu0 0
            %6596 = vmatpush1.bf16.msra.mxu0 %v6524
            %6597 = vmatprep.subr.bf16.mxu0 0
            %6598 = vmatpush1.bf16.msra.mxu0 %v6523
            %6599 = vmatprep.subr.bf16.mxu0 0
            %6600 = vmatpush2.bf16.msra.mxu0 0
            %6601 = vmatprep.subr.bf16.mxu0 0
            %6602 = vmatpush2.bf16.msra.mxu0 0
            %6603 = vmatprep.subr.bf16.mxu0 0
            %6604 = vmatpush2.bf16.msra.mxu0 0
            %6605 = vmatprep.subr.bf16.mxu0 0
            %6606 = vmatpush2.bf16.msra.mxu0 0
            %6607 = vmatprep.subr.bf16.mxu0 0
            %6608 = vmatpush2.bf16.msra.mxu0 0
            %6609 = vmatprep.subr.bf16.mxu0 0
            %6610 = vmatpush2.bf16.msra.mxu0 0
            %6611 = vmatprep.subr.bf16.mxu0 0
            %6612 = vmatpush2.bf16.msra.mxu0 0
            %6613 = vmatprep.subr.bf16.mxu0 0
            %6614 = vmatpush2.bf16.msra.mxu0 0
            %6615 = vmatprep.mubr.bf16.mxu0 0
            %6616 = vmatmul.mubr.bf16.gmra.mxu0 %v6536
            %v6617 = vpop.f32.mrf.mxu0
            %v6618 = vadd.f32 %v6293, %v6617
            %v6619 = vpop.f32.mrf.mxu0
            %v6620 = vpop.f32.mrf.mxu0
            %v6621 = vadd.f32 %v6296, %v6620
            %v6622 = vpop.f32.mrf.mxu0
            %6623 = vmatprep.mubr.bf16.mxu0 0
            %6624 = vmatmul.mubr.bf16.gmra.mxu0 %v6539
            %v6625 = vpop.f32.mrf.mxu0
            %v6626 = vadd.f32 %v6301, %v6625
            %v6627 = vpop.f32.mrf.mxu0
            %v6628 = vpop.f32.mrf.mxu0
            %v6629 = vadd.f32 %v6304, %v6628
            %v6630 = vpop.f32.mrf.mxu0
            %6631 = vmatprep.mubr.bf16.mxu0 0
            %6632 = vmatmul.mubr.bf16.gmra.mxu0 %v6542
            %v6633 = vpop.f32.mrf.mxu0
            %v6634 = vadd.f32 %v6309, %v6633
            %v6635 = vpop.f32.mrf.mxu0
            %v6636 = vpop.f32.mrf.mxu0
            %v6637 = vadd.f32 %v6312, %v6636
            %v6638 = vpop.f32.mrf.mxu0
            %6639 = vmatprep.mubr.bf16.mxu0 0
            %6640 = vmatmul.mubr.bf16.gmra.mxu0 %v6545
            %v6641 = vpop.f32.mrf.mxu0
            %v6642 = vadd.f32 %v6317, %v6641
            %v6643 = vpop.f32.mrf.mxu0
            %v6644 = vpop.f32.mrf.mxu0
            %v6645 = vadd.f32 %v6320, %v6644
            %v6646 = vpop.f32.mrf.mxu0
            %6647 = vmatprep.mubr.bf16.mxu0 0
            %6648 = vmatmul.mubr.bf16.gmra.mxu0 %v6548
            %v6649 = vpop.f32.mrf.mxu0
            %v6650 = vadd.f32 %v6325, %v6649
            %v6651 = vpop.f32.mrf.mxu0
            %v6652 = vpop.f32.mrf.mxu0
            %v6653 = vadd.f32 %v6328, %v6652
            %v6654 = vpop.f32.mrf.mxu0
            %6655 = vmatprep.mubr.bf16.mxu0 0
            %6656 = vmatmul.mubr.bf16.gmra.mxu0 %v6551
            %v6657 = vpop.f32.mrf.mxu0
            %v6658 = vadd.f32 %v6333, %v6657
            %v6659 = vpop.f32.mrf.mxu0
            %v6660 = vpop.f32.mrf.mxu0
            %v6661 = vadd.f32 %v6336, %v6660
            %v6662 = vpop.f32.mrf.mxu0
            %6663 = vmatprep.mubr.bf16.mxu0 0
            %6664 = vmatmul.mubr.bf16.gmra.mxu0 %v6554
            %v6665 = vpop.f32.mrf.mxu0
            %v6666 = vadd.f32 %v6341, %v6665
            %v6667 = vpop.f32.mrf.mxu0
            %v6668 = vpop.f32.mrf.mxu0
            %v6669 = vadd.f32 %v6344, %v6668
            %v6670 = vpop.f32.mrf.mxu0
            %6671 = vmatprep.mubr.bf16.mxu0 0
            %6672 = vmatmul.mubr.bf16.gmra.mxu0 %v6557
            %v6673 = vpop.f32.mrf.mxu0
            %v6674 = vadd.f32 %v6349, %v6673
            %v6675 = vpop.f32.mrf.mxu0
            %v6676 = vpop.f32.mrf.mxu0
            %v6677 = vadd.f32 %v6352, %v6676
            %v6678 = vpop.f32.mrf.mxu0
            %6679 = vmatprep.mubr.bf16.mxu0 0
            %6680 = vmatmul.mubr.bf16.gmra.mxu0 %v6560
            %v6681 = vpop.f32.mrf.mxu0
            %v6682 = vadd.f32 %v6357, %v6681
            %v6683 = vpop.f32.mrf.mxu0
            %v6684 = vpop.f32.mrf.mxu0
            %v6685 = vadd.f32 %v6360, %v6684
            %v6686 = vpop.f32.mrf.mxu0
            %6687 = vmatprep.mubr.bf16.mxu0 0
            %6688 = vmatmul.mubr.bf16.gmra.mxu0 %v6563
            %v6689 = vpop.f32.mrf.mxu0
            %v6690 = vadd.f32 %v6365, %v6689
            %v6691 = vpop.f32.mrf.mxu0
            %v6692 = vpop.f32.mrf.mxu0
            %v6693 = vadd.f32 %v6368, %v6692
            %v6694 = vpop.f32.mrf.mxu0
            %6695 = vmatprep.mubr.bf16.mxu0 0
            %6696 = vmatmul.mubr.bf16.gmra.mxu0 %v6566
            %v6697 = vpop.f32.mrf.mxu0
            %v6698 = vadd.f32 %v6373, %v6697
            %v6699 = vpop.f32.mrf.mxu0
            %v6700 = vpop.f32.mrf.mxu0
            %v6701 = vadd.f32 %v6376, %v6700
            %v6702 = vpop.f32.mrf.mxu0
            %6703 = vmatprep.mubr.bf16.mxu0 0
            %6704 = vmatmul.mubr.bf16.gmra.mxu0 %v6569
            %v6705 = vpop.f32.mrf.mxu0
            %v6706 = vadd.f32 %v6381, %v6705
            %v6707 = vpop.f32.mrf.mxu0
            %v6708 = vpop.f32.mrf.mxu0
            %v6709 = vadd.f32 %v6384, %v6708
            %v6710 = vpop.f32.mrf.mxu0
            %6711 = vmatprep.mubr.bf16.mxu0 0
            %6712 = vmatmul.mubr.bf16.gmra.mxu0 %v6572
            %v6713 = vpop.f32.mrf.mxu0
            %v6714 = vadd.f32 %v6389, %v6713
            %v6715 = vpop.f32.mrf.mxu0
            %v6716 = vpop.f32.mrf.mxu0
            %v6717 = vadd.f32 %v6392, %v6716
            %v6718 = vpop.f32.mrf.mxu0
            %6719 = vmatprep.mubr.bf16.mxu0 0
            %6720 = vmatmul.mubr.bf16.gmra.mxu0 %v6575
            %v6721 = vpop.f32.mrf.mxu0
            %v6722 = vadd.f32 %v6397, %v6721
            %v6723 = vpop.f32.mrf.mxu0
            %v6724 = vpop.f32.mrf.mxu0
            %v6725 = vadd.f32 %v6400, %v6724
            %v6726 = vpop.f32.mrf.mxu0
            %6727 = vmatprep.mubr.bf16.mxu0 0
            %6728 = vmatmul.mubr.bf16.gmra.mxu0 %v6578
            %v6729 = vpop.f32.mrf.mxu0
            %v6730 = vadd.f32 %v6405, %v6729
            %v6731 = vpop.f32.mrf.mxu0
            %v6732 = vpop.f32.mrf.mxu0
            %v6733 = vadd.f32 %v6408, %v6732
            %v6734 = vpop.f32.mrf.mxu0
            %6735 = vmatprep.mubr.bf16.mxu0 0
            %6736 = vmatmul.mubr.bf16.gmra.mxu0 %v6581
            %v6737 = vpop.f32.mrf.mxu0
            %v6738 = vadd.f32 %v6413, %v6737
            %v6739 = vpop.f32.mrf.mxu0
            %v6740 = vpop.f32.mrf.mxu0
            %v6741 = vadd.f32 %v6416, %v6740
            %v6742 = vpop.f32.mrf.mxu0
            %6743 = vdwg.mxu0
            %v6744 = vld [vmem:[%s1917] sm:$0xf]
            %v6745 = vld [vmem:[%s1917 + $0x8] sm:$0xf]
            %v6746 = vld [vmem:[%s1917 + $0x10] sm:$0xf]
            %v6747 = vld [vmem:[%s1917 + $0x18] sm:$0xf]
            %v6748 = vld [vmem:[%s1917 + $0x20] sm:$0xf]
            %v6749 = vld [vmem:[%s1917 + $0x28] sm:$0xf]
            %v6750 = vld [vmem:[%s1917 + $0x30] sm:$0xf]
            %v6751 = vld [vmem:[%s1917 + $0x38] sm:$0xf]
            %v6752 = vld [vmem:[%s1917 + $0x40] sm:$0xf]
            %v6753 = vld [vmem:[%s1917 + $0x48] sm:$0xf]
            %v6754 = vld [vmem:[%s1917 + $0x50] sm:$0xf]
            %v6755 = vld [vmem:[%s1917 + $0x58] sm:$0xf]
            %v6756 = vld [vmem:[%s1917 + $0x60] sm:$0xf]
            %v6757 = vld [vmem:[%s1917 + $0x68] sm:$0xf]
            %v6758 = vld [vmem:[%s1917 + $0x70] sm:$0xf]
            %v6759 = vld [vmem:[%s1917 + $0x78] sm:$0xf]
            %v6760 = vld [vmem:[%s1917 + $0x80] sm:$0xf]
            %v6761 = vld [vmem:[%s1917 + $0x88] sm:$0xf]
            %v6762 = vld [vmem:[%s1917 + $0x90] sm:$0xf]
            %v6763 = vld [vmem:[%s1917 + $0x98] sm:$0xf]
            %v6764 = vld [vmem:[%s1917 + $0xa0] sm:$0xf]
            %v6765 = vld [vmem:[%s1917 + $0xa8] sm:$0xf]
            %v6766 = vld [vmem:[%s1917 + $0xb0] sm:$0xf]
            %v6767 = vld [vmem:[%s1917 + $0xb8] sm:$0xf]
            %v6768 = vld [vmem:[%s1917 + $0xc0] sm:$0xf]
            %v6769 = vld [vmem:[%s1917 + $0xc8] sm:$0xf]
            %v6770 = vld [vmem:[%s1917 + $0xd0] sm:$0xf]
            %v6771 = vld [vmem:[%s1917 + $0xd8] sm:$0xf]
            %v6772 = vld [vmem:[%s1917 + $0xe0] sm:$0xf]
            %v6773 = vld [vmem:[%s1917 + $0xe8] sm:$0xf]
            %v6774 = vld [vmem:[%s1917 + $0xf0] sm:$0xf]
            %v6775 = vld [vmem:[%s1917 + $0xf8] sm:$0xf]
            %v6808 = vunpack.c.l.b16 %v6744
            %v6809 = vunpack.c.l.b16 %v6745
            %v6810 = vunpack.c.l.b16 %v6746
            %v6811 = vunpack.c.l.b16 %v6747
            %v6812 = vunpack.c.l.b16 %v6748
            %v6813 = vunpack.c.l.b16 %v6749
            %v6814 = vunpack.c.l.b16 %v6750
            %v6815 = vunpack.c.l.b16 %v6751
            %v6816 = vunpack.c.l.b16 %v6752
            %v6817 = vunpack.c.l.b16 %v6753
            %v6818 = vunpack.c.l.b16 %v6754
            %v6819 = vunpack.c.l.b16 %v6755
            %v6820 = vunpack.c.l.b16 %v6756
            %v6821 = vunpack.c.l.b16 %v6757
            %v6822 = vunpack.c.l.b16 %v6758
            %v6823 = vunpack.c.l.b16 %v6759
            %v6824 = vunpack.c.l.b16 %v6760
            %v6825 = vunpack.c.l.b16 %v6761
            %v6826 = vunpack.c.l.b16 %v6762
            %v6827 = vunpack.c.l.b16 %v6763
            %v6828 = vunpack.c.l.b16 %v6764
            %v6829 = vunpack.c.l.b16 %v6765
            %v6830 = vunpack.c.l.b16 %v6766
            %v6831 = vunpack.c.l.b16 %v6767
            %v6832 = vunpack.c.l.b16 %v6768
            %v6833 = vunpack.c.l.b16 %v6769
            %v6834 = vunpack.c.l.b16 %v6770
            %v6835 = vunpack.c.l.b16 %v6771
            %v6836 = vunpack.c.l.b16 %v6772
            %v6837 = vunpack.c.l.b16 %v6773
            %v6838 = vunpack.c.l.b16 %v6774
            %v6839 = vunpack.c.l.b16 %v6775
            %v6840 = vpack.c.b16 %v6809, %v6808
            %v6841 = vpack.c.b16 %v6811, %v6810
            %v6842 = vpack.c.b16 %v6813, %v6812
            %v6843 = vpack.c.b16 %v6815, %v6814
            %v6844 = vpack.c.b16 %v6817, %v6816
            %v6845 = vpack.c.b16 %v6819, %v6818
            %v6846 = vpack.c.b16 %v6821, %v6820
            %v6847 = vpack.c.b16 %v6823, %v6822
            %v6848 = vpack.c.b16 %v6825, %v6824
            %v6849 = vpack.c.b16 %v6827, %v6826
            %v6850 = vpack.c.b16 %v6829, %v6828
            %v6851 = vpack.c.b16 %v6831, %v6830
            %v6852 = vpack.c.b16 %v6833, %v6832
            %v6853 = vpack.c.b16 %v6835, %v6834
            %v6854 = vpack.c.b16 %v6837, %v6836
            %v6855 = vpack.c.b16 %v6839, %v6838
            %v6868 = vunpack.c.l.b16 %v6015
            %v6869 = vunpack.c.l.b16 %v6016
            %v6870 = vunpack.c.l.b16 %v6017
            %v6871 = vunpack.c.l.b16 %v6018
            %v6872 = vunpack.c.l.b16 %v6019
            %v6873 = vunpack.c.l.b16 %v6020
            %v6874 = vunpack.c.l.b16 %v6021
            %v6875 = vunpack.c.l.b16 %v6022
            %v6876 = vunpack.c.l.b16 %v6023
            %v6877 = vunpack.c.l.b16 %v6024
            %v6878 = vunpack.c.l.b16 %v6025
            %v6879 = vunpack.c.l.b16 %v6026
            %v6880 = vpack.c.b16 %v6869, %v6868
            %v6881 = vpack.c.b16 %v6871, %v6870
            %v6882 = vpack.c.b16 %v6873, %v6872
            %v6883 = vpack.c.b16 %v6875, %v6874
            %v6884 = vpack.c.b16 %v6877, %v6876
            %v6885 = vpack.c.b16 %v6879, %v6878
            %v6893 = vsel %vm6209, %v6840, 0
            %v6896 = vsel %vm6209, %v6841, 0
            %v6899 = vsel %vm6209, %v6842, 0
            %v6902 = vsel %vm6209, %v6843, 0
            %v6905 = vsel %vm6209, %v6844, 0
            %v6908 = vsel %vm6209, %v6845, 0
            %v6911 = vsel %vm6209, %v6846, 0
            %v6914 = vsel %vm6209, %v6847, 0
            %v6917 = vsel %vm6209, %v6848, 0
            %v6920 = vsel %vm6209, %v6849, 0
            %v6923 = vsel %vm6209, %v6850, 0
            %v6926 = vsel %vm6209, %v6851, 0
            %v6929 = vsel %vm6209, %v6852, 0
            %v6932 = vsel %vm6209, %v6853, 0
            %v6935 = vsel %vm6209, %v6854, 0
            %v6938 = vsel %vm6209, %v6855, 0
            %6940 = vmatprep.subr.bf16.mxu0 0
            %6941 = vmatpush1.bf16.msra.mxu0 0
            %6942 = vmatprep.subr.bf16.mxu0 0
            %6943 = vmatpush1.bf16.msra.mxu0 0
            %6944 = vmatprep.subr.bf16.mxu0 0
            %6945 = vmatpush1.bf16.msra.mxu0 %v6885
            %6946 = vmatprep.subr.bf16.mxu0 0
            %6947 = vmatpush1.bf16.msra.mxu0 %v6884
            %6948 = vmatprep.subr.bf16.mxu0 0
            %6949 = vmatpush1.bf16.msra.mxu0 %v6883
            %6950 = vmatprep.subr.bf16.mxu0 0
            %6951 = vmatpush1.bf16.msra.mxu0 %v6882
            %6952 = vmatprep.subr.bf16.mxu0 0
            %6953 = vmatpush1.bf16.msra.mxu0 %v6881
            %6954 = vmatprep.subr.bf16.mxu0 0
            %6955 = vmatpush1.bf16.msra.mxu0 %v6880
            %6956 = vmatprep.subr.bf16.mxu0 0
            %6957 = vmatpush2.bf16.msra.mxu0 0
            %6958 = vmatprep.subr.bf16.mxu0 0
            %6959 = vmatpush2.bf16.msra.mxu0 0
            %6960 = vmatprep.subr.bf16.mxu0 0
            %6961 = vmatpush2.bf16.msra.mxu0 0
            %6962 = vmatprep.subr.bf16.mxu0 0
            %6963 = vmatpush2.bf16.msra.mxu0 0
            %6964 = vmatprep.subr.bf16.mxu0 0
            %6965 = vmatpush2.bf16.msra.mxu0 0
            %6966 = vmatprep.subr.bf16.mxu0 0
            %6967 = vmatpush2.bf16.msra.mxu0 0
            %6968 = vmatprep.subr.bf16.mxu0 0
            %6969 = vmatpush2.bf16.msra.mxu0 0
            %6970 = vmatprep.subr.bf16.mxu0 0
            %6971 = vmatpush2.bf16.msra.mxu0 0
            %6972 = vmatprep.mubr.bf16.mxu0 0
            %6973 = vmatmul.mubr.bf16.gmra.mxu0 %v6893
            %v6974 = vpop.f32.mrf.mxu0
            %v6975 = vadd.f32 0.0, %v6974
            %v6976 = vpop.f32.mrf.mxu0
            %v6977 = vpop.f32.mrf.mxu0
            %v6978 = vadd.f32 0.0, %v6977
            %v6979 = vpop.f32.mrf.mxu0
            %6980 = vmatprep.mubr.bf16.mxu0 0
            %6981 = vmatmul.mubr.bf16.gmra.mxu0 %v6896
            %v6982 = vpop.f32.mrf.mxu0
            %v6983 = vadd.f32 0.0, %v6982
            %v6984 = vpop.f32.mrf.mxu0
            %v6985 = vpop.f32.mrf.mxu0
            %v6986 = vadd.f32 0.0, %v6985
            %v6987 = vpop.f32.mrf.mxu0
            %6988 = vmatprep.mubr.bf16.mxu0 0
            %6989 = vmatmul.mubr.bf16.gmra.mxu0 %v6899
            %v6990 = vpop.f32.mrf.mxu0
            %v6991 = vadd.f32 0.0, %v6990
            %v6992 = vpop.f32.mrf.mxu0
            %v6993 = vpop.f32.mrf.mxu0
            %v6994 = vadd.f32 0.0, %v6993
            %v6995 = vpop.f32.mrf.mxu0
            %6996 = vmatprep.mubr.bf16.mxu0 0
            %6997 = vmatmul.mubr.bf16.gmra.mxu0 %v6902
            %v6998 = vpop.f32.mrf.mxu0
            %v6999 = vadd.f32 0.0, %v6998
            %v7000 = vpop.f32.mrf.mxu0
            %v7001 = vpop.f32.mrf.mxu0
            %v7002 = vadd.f32 0.0, %v7001
            %v7003 = vpop.f32.mrf.mxu0
            %7004 = vmatprep.mubr.bf16.mxu0 0
            %7005 = vmatmul.mubr.bf16.gmra.mxu0 %v6905
            %v7006 = vpop.f32.mrf.mxu0
            %v7007 = vadd.f32 0.0, %v7006
            %v7008 = vpop.f32.mrf.mxu0
            %v7009 = vpop.f32.mrf.mxu0
            %v7010 = vadd.f32 0.0, %v7009
            %v7011 = vpop.f32.mrf.mxu0
            %7012 = vmatprep.mubr.bf16.mxu0 0
            %7013 = vmatmul.mubr.bf16.gmra.mxu0 %v6908
            %v7014 = vpop.f32.mrf.mxu0
            %v7015 = vadd.f32 0.0, %v7014
            %v7016 = vpop.f32.mrf.mxu0
            %v7017 = vpop.f32.mrf.mxu0
            %v7018 = vadd.f32 0.0, %v7017
            %v7019 = vpop.f32.mrf.mxu0
            %7020 = vmatprep.mubr.bf16.mxu0 0
            %7021 = vmatmul.mubr.bf16.gmra.mxu0 %v6911
            %v7022 = vpop.f32.mrf.mxu0
            %v7023 = vadd.f32 0.0, %v7022
            %v7024 = vpop.f32.mrf.mxu0
            %v7025 = vpop.f32.mrf.mxu0
            %v7026 = vadd.f32 0.0, %v7025
            %v7027 = vpop.f32.mrf.mxu0
            %7028 = vmatprep.mubr.bf16.mxu0 0
            %7029 = vmatmul.mubr.bf16.gmra.mxu0 %v6914
            %v7030 = vpop.f32.mrf.mxu0
            %v7031 = vadd.f32 0.0, %v7030
            %v7032 = vpop.f32.mrf.mxu0
            %v7033 = vpop.f32.mrf.mxu0
            %v7034 = vadd.f32 0.0, %v7033
            %v7035 = vpop.f32.mrf.mxu0
            %7036 = vmatprep.mubr.bf16.mxu0 0
            %7037 = vmatmul.mubr.bf16.gmra.mxu0 %v6917
            %v7038 = vpop.f32.mrf.mxu0
            %v7039 = vadd.f32 0.0, %v7038
            %v7040 = vpop.f32.mrf.mxu0
            %v7041 = vpop.f32.mrf.mxu0
            %v7042 = vadd.f32 0.0, %v7041
            %v7043 = vpop.f32.mrf.mxu0
            %7044 = vmatprep.mubr.bf16.mxu0 0
            %7045 = vmatmul.mubr.bf16.gmra.mxu0 %v6920
            %v7046 = vpop.f32.mrf.mxu0
            %v7047 = vadd.f32 0.0, %v7046
            %v7048 = vpop.f32.mrf.mxu0
            %v7049 = vpop.f32.mrf.mxu0
            %v7050 = vadd.f32 0.0, %v7049
            %v7051 = vpop.f32.mrf.mxu0
            %7052 = vmatprep.mubr.bf16.mxu0 0
            %7053 = vmatmul.mubr.bf16.gmra.mxu0 %v6923
            %v7054 = vpop.f32.mrf.mxu0
            %v7055 = vadd.f32 0.0, %v7054
            %v7056 = vpop.f32.mrf.mxu0
            %v7057 = vpop.f32.mrf.mxu0
            %v7058 = vadd.f32 0.0, %v7057
            %v7059 = vpop.f32.mrf.mxu0
            %7060 = vmatprep.mubr.bf16.mxu0 0
            %7061 = vmatmul.mubr.bf16.gmra.mxu0 %v6926
            %v7062 = vpop.f32.mrf.mxu0
            %v7063 = vadd.f32 0.0, %v7062
            %v7064 = vpop.f32.mrf.mxu0
            %v7065 = vpop.f32.mrf.mxu0
            %v7066 = vadd.f32 0.0, %v7065
            %v7067 = vpop.f32.mrf.mxu0
            %7068 = vmatprep.mubr.bf16.mxu0 0
            %7069 = vmatmul.mubr.bf16.gmra.mxu0 %v6929
            %v7070 = vpop.f32.mrf.mxu0
            %v7071 = vadd.f32 0.0, %v7070
            %v7072 = vpop.f32.mrf.mxu0
            %v7073 = vpop.f32.mrf.mxu0
            %v7074 = vadd.f32 0.0, %v7073
            %v7075 = vpop.f32.mrf.mxu0
            %7076 = vmatprep.mubr.bf16.mxu0 0
            %7077 = vmatmul.mubr.bf16.gmra.mxu0 %v6932
            %v7078 = vpop.f32.mrf.mxu0
            %v7079 = vadd.f32 0.0, %v7078
            %v7080 = vpop.f32.mrf.mxu0
            %v7081 = vpop.f32.mrf.mxu0
            %v7082 = vadd.f32 0.0, %v7081
            %v7083 = vpop.f32.mrf.mxu0
            %7084 = vmatprep.mubr.bf16.mxu0 0
            %7085 = vmatmul.mubr.bf16.gmra.mxu0 %v6935
            %v7086 = vpop.f32.mrf.mxu0
            %v7087 = vadd.f32 0.0, %v7086
            %v7088 = vpop.f32.mrf.mxu0
            %v7089 = vpop.f32.mrf.mxu0
            %v7090 = vadd.f32 0.0, %v7089
            %v7091 = vpop.f32.mrf.mxu0
            %7092 = vmatprep.mubr.bf16.mxu0 0
            %7093 = vmatmul.mubr.bf16.gmra.mxu0 %v6938
            %v7094 = vpop.f32.mrf.mxu0
            %v7095 = vadd.f32 0.0, %v7094
            %v7096 = vpop.f32.mrf.mxu0
            %v7097 = vpop.f32.mrf.mxu0
            %v7098 = vadd.f32 0.0, %v7097
            %v7099 = vpop.f32.mrf.mxu0
            %7100 = vdwg.mxu0
            %v7101 = vadd.f32 %v6618, %v6975
            %v7102 = vadd.f32 %v6621, %v6978
            %v7103 = vadd.f32 %v6626, %v6983
            %v7104 = vadd.f32 %v6629, %v6986
            %v7105 = vadd.f32 %v6634, %v6991
            %v7106 = vadd.f32 %v6637, %v6994
            %v7107 = vadd.f32 %v6642, %v6999
            %v7108 = vadd.f32 %v6645, %v7002
            %v7109 = vadd.f32 %v6650, %v7007
            %v7110 = vadd.f32 %v6653, %v7010
            %v7111 = vadd.f32 %v6658, %v7015
            %v7112 = vadd.f32 %v6661, %v7018
            %v7113 = vadd.f32 %v6666, %v7023
            %v7114 = vadd.f32 %v6669, %v7026
            %v7115 = vadd.f32 %v6674, %v7031
            %v7116 = vadd.f32 %v6677, %v7034
            %v7117 = vadd.f32 %v6682, %v7039
            %v7118 = vadd.f32 %v6685, %v7042
            %v7119 = vadd.f32 %v6690, %v7047
            %v7120 = vadd.f32 %v6693, %v7050
            %v7121 = vadd.f32 %v6698, %v7055
            %v7122 = vadd.f32 %v6701, %v7058
            %v7123 = vadd.f32 %v6706, %v7063
            %v7124 = vadd.f32 %v6709, %v7066
            %v7125 = vadd.f32 %v6714, %v7071
            %v7126 = vadd.f32 %v6717, %v7074
            %v7127 = vadd.f32 %v6722, %v7079
            %v7128 = vadd.f32 %v6725, %v7082
            %v7129 = vadd.f32 %v6730, %v7087
            %v7130 = vadd.f32 %v6733, %v7090
            %v7131 = vadd.f32 %v6738, %v7095
            %v7132 = vadd.f32 %v6741, %v7098
            %v7134 = vlaneseq
            %v7135 = vshrl.u32 %v7134, 7
            %v7136 = vsub.s32 0, %v7135
            %v7137 = vrot.slane %v6028, %v7136
            %v7139 = vadd.f32 %v7101, %v7137
            %v7140 = vadd.f32 %v7102, %v7137
            %v7141 = vadd.f32 %v7103, %v7137
            %v7142 = vadd.f32 %v7104, %v7137
            %v7143 = vadd.f32 %v7105, %v7137
            %v7144 = vadd.f32 %v7106, %v7137
            %v7145 = vadd.f32 %v7107, %v7137
            %v7146 = vadd.f32 %v7108, %v7137
            %v7147 = vadd.f32 %v7109, %v7137
            %v7148 = vadd.f32 %v7110, %v7137
            %v7149 = vadd.f32 %v7111, %v7137
            %v7150 = vadd.f32 %v7112, %v7137
            %v7151 = vadd.f32 %v7113, %v7137
            %v7152 = vadd.f32 %v7114, %v7137
            %v7153 = vadd.f32 %v7115, %v7137
            %v7154 = vadd.f32 %v7116, %v7137
            %v7155 = vadd.f32 %v7117, %v7137
            %v7156 = vadd.f32 %v7118, %v7137
            %v7157 = vadd.f32 %v7119, %v7137
            %v7158 = vadd.f32 %v7120, %v7137
            %v7159 = vadd.f32 %v7121, %v7137
            %v7160 = vadd.f32 %v7122, %v7137
            %v7161 = vadd.f32 %v7123, %v7137
            %v7162 = vadd.f32 %v7124, %v7137
            %v7163 = vadd.f32 %v7125, %v7137
            %v7164 = vadd.f32 %v7126, %v7137
            %v7165 = vadd.f32 %v7127, %v7137
            %v7166 = vadd.f32 %v7128, %v7137
            %v7167 = vadd.f32 %v7129, %v7137
            %v7168 = vadd.f32 %v7130, %v7137
            %v7169 = vadd.f32 %v7131, %v7137
            %v7170 = vadd.f32 %v7132, %v7137
            %v7171 = vmax.f32 %v7139, 0.0
            %v7172 = vmax.f32 %v7140, 0.0
            %v7173 = vmax.f32 %v7141, 0.0
            %v7174 = vmax.f32 %v7142, 0.0
            %v7175 = vmax.f32 %v7143, 0.0
            %v7176 = vmax.f32 %v7144, 0.0
            %v7177 = vmax.f32 %v7145, 0.0
            %v7178 = vmax.f32 %v7146, 0.0
            %v7179 = vmax.f32 %v7147, 0.0
            %v7180 = vmax.f32 %v7148, 0.0
            %v7181 = vmax.f32 %v7149, 0.0
            %v7182 = vmax.f32 %v7150, 0.0
            %v7183 = vmax.f32 %v7151, 0.0
            %v7184 = vmax.f32 %v7152, 0.0
            %v7185 = vmax.f32 %v7153, 0.0
            %v7186 = vmax.f32 %v7154, 0.0
            %v7187 = vmax.f32 %v7155, 0.0
            %v7188 = vmax.f32 %v7156, 0.0
            %v7189 = vmax.f32 %v7157, 0.0
            %v7190 = vmax.f32 %v7158, 0.0
            %v7191 = vmax.f32 %v7159, 0.0
            %v7192 = vmax.f32 %v7160, 0.0
            %v7193 = vmax.f32 %v7161, 0.0
            %v7194 = vmax.f32 %v7162, 0.0
            %v7195 = vmax.f32 %v7163, 0.0
            %v7196 = vmax.f32 %v7164, 0.0
            %v7197 = vmax.f32 %v7165, 0.0
            %v7198 = vmax.f32 %v7166, 0.0
            %v7199 = vmax.f32 %v7167, 0.0
            %v7200 = vmax.f32 %v7168, 0.0
            %v7201 = vmax.f32 %v7169, 0.0
            %v7202 = vmax.f32 %v7170, 0.0
            %v7203 = vpack.c.bf16 %v7172, %v7171
            %v7204 = vpack.c.bf16 %v7174, %v7173
            %v7205 = vpack.c.bf16 %v7176, %v7175
            %v7206 = vpack.c.bf16 %v7178, %v7177
            %v7207 = vpack.c.bf16 %v7180, %v7179
            %v7208 = vpack.c.bf16 %v7182, %v7181
            %v7209 = vpack.c.bf16 %v7184, %v7183
            %v7210 = vpack.c.bf16 %v7186, %v7185
            %v7211 = vpack.c.bf16 %v7188, %v7187
            %v7212 = vpack.c.bf16 %v7190, %v7189
            %v7213 = vpack.c.bf16 %v7192, %v7191
            %v7214 = vpack.c.bf16 %v7194, %v7193
            %v7215 = vpack.c.bf16 %v7196, %v7195
            %v7216 = vpack.c.bf16 %v7198, %v7197
            %v7217 = vpack.c.bf16 %v7200, %v7199
            %v7218 = vpack.c.bf16 %v7202, %v7201
            %v7220 = vshrl.u32 %v7203, 16
            %v7222 = vrot.slane %v7220, 7
            %v7223 = vshll.u32 %v7203, 16
            %v7225 = vor.u32 %v7222, %v7223
            %v7227 = vshrl.u32 %v7204, 16
            %v7229 = vrot.slane %v7227, 7
            %v7230 = vshll.u32 %v7204, 16
            %v7232 = vor.u32 %v7229, %v7230
            %v7234 = vshrl.u32 %v7205, 16
            %v7236 = vrot.slane %v7234, 7
            %v7237 = vshll.u32 %v7205, 16
            %v7239 = vor.u32 %v7236, %v7237
            %v7241 = vshrl.u32 %v7206, 16
            %v7243 = vrot.slane %v7241, 7
            %v7244 = vshll.u32 %v7206, 16
            %v7246 = vor.u32 %v7243, %v7244
            %v7248 = vshrl.u32 %v7207, 16
            %v7250 = vrot.slane %v7248, 7
            %v7251 = vshll.u32 %v7207, 16
            %v7253 = vor.u32 %v7250, %v7251
            %v7255 = vshrl.u32 %v7208, 16
            %v7257 = vrot.slane %v7255, 7
            %v7258 = vshll.u32 %v7208, 16
            %v7260 = vor.u32 %v7257, %v7258
            %v7262 = vshrl.u32 %v7209, 16
            %v7264 = vrot.slane %v7262, 7
            %v7265 = vshll.u32 %v7209, 16
            %v7267 = vor.u32 %v7264, %v7265
            %v7269 = vshrl.u32 %v7210, 16
            %v7271 = vrot.slane %v7269, 7
            %v7272 = vshll.u32 %v7210, 16
            %v7274 = vor.u32 %v7271, %v7272
            %v7276 = vshrl.u32 %v7211, 16
            %v7278 = vrot.slane %v7276, 7
            %v7279 = vshll.u32 %v7211, 16
            %v7281 = vor.u32 %v7278, %v7279
            %v7283 = vshrl.u32 %v7212, 16
            %v7285 = vrot.slane %v7283, 7
            %v7286 = vshll.u32 %v7212, 16
            %v7288 = vor.u32 %v7285, %v7286
            %v7290 = vshrl.u32 %v7213, 16
            %v7292 = vrot.slane %v7290, 7
            %v7293 = vshll.u32 %v7213, 16
            %v7295 = vor.u32 %v7292, %v7293
            %v7297 = vshrl.u32 %v7214, 16
            %v7299 = vrot.slane %v7297, 7
            %v7300 = vshll.u32 %v7214, 16
            %v7302 = vor.u32 %v7299, %v7300
            %v7304 = vshrl.u32 %v7215, 16
            %v7306 = vrot.slane %v7304, 7
            %v7307 = vshll.u32 %v7215, 16
            %v7309 = vor.u32 %v7306, %v7307
            %v7311 = vshrl.u32 %v7216, 16
            %v7313 = vrot.slane %v7311, 7
            %v7314 = vshll.u32 %v7216, 16
            %v7316 = vor.u32 %v7313, %v7314
            %v7318 = vshrl.u32 %v7217, 16
            %v7320 = vrot.slane %v7318, 7
            %v7321 = vshll.u32 %v7217, 16
            %v7323 = vor.u32 %v7320, %v7321
            %v7325 = vshrl.u32 %v7218, 16
            %v7327 = vrot.slane %v7325, 7
            %v7328 = vshll.u32 %v7218, 16
            %v7330 = vor.u32 %v7327, %v7328
            %v7347 = vsel %vm831, 0, %v7225
            %v7348 = vsel %vm831, 0, %v7232
            %v7349 = vsel %vm831, 0, %v7239
            %v7350 = vsel %vm831, 0, %v7246
            %v7351 = vsel %vm831, 0, %v7253
            %v7352 = vsel %vm831, 0, %v7260
            %v7353 = vsel %vm831, 0, %v7267
            %v7354 = vsel %vm831, 0, %v7274
            %v7355 = vsel %vm831, 0, %v7281
            %v7356 = vsel %vm831, 0, %v7288
            %v7357 = vsel %vm831, 0, %v7295
            %v7358 = vsel %vm831, 0, %v7302
            %v7359 = vsel %vm831, 0, %v7309
            %v7360 = vsel %vm831, 0, %v7316
            %v7361 = vsel %vm831, 0, %v7323
            %v7362 = vsel %vm831, 0, %v7330
            %v7363 = vrot.slane %v7223, 1
            %v7364 = vor.u32 %v7220, %v7363
            %v7365 = vrot.slane %v7230, 1
            %v7366 = vor.u32 %v7227, %v7365
            %v7367 = vrot.slane %v7237, 1
            %v7368 = vor.u32 %v7234, %v7367
            %v7369 = vrot.slane %v7244, 1
            %v7370 = vor.u32 %v7241, %v7369
            %v7371 = vrot.slane %v7251, 1
            %v7372 = vor.u32 %v7248, %v7371
            %v7373 = vrot.slane %v7258, 1
            %v7374 = vor.u32 %v7255, %v7373
            %v7375 = vrot.slane %v7265, 1
            %v7376 = vor.u32 %v7262, %v7375
            %v7377 = vrot.slane %v7272, 1
            %v7378 = vor.u32 %v7269, %v7377
            %v7379 = vrot.slane %v7279, 1
            %v7380 = vor.u32 %v7276, %v7379
            %v7381 = vrot.slane %v7286, 1
            %v7382 = vor.u32 %v7283, %v7381
            %v7383 = vrot.slane %v7293, 1
            %v7384 = vor.u32 %v7290, %v7383
            %v7385 = vrot.slane %v7300, 1
            %v7386 = vor.u32 %v7297, %v7385
            %v7387 = vrot.slane %v7307, 1
            %v7388 = vor.u32 %v7304, %v7387
            %v7389 = vrot.slane %v7314, 1
            %v7390 = vor.u32 %v7311, %v7389
            %v7391 = vrot.slane %v7321, 1
            %v7392 = vor.u32 %v7318, %v7391
            %v7393 = vrot.slane %v7328, 1
            %v7394 = vor.u32 %v7325, %v7393
            %v7411 = vsel %vm898, %v7364, 0
            %v7412 = vsel %vm898, %v7366, 0
            %v7413 = vsel %vm898, %v7368, 0
            %v7414 = vsel %vm898, %v7370, 0
            %v7415 = vsel %vm898, %v7372, 0
            %v7416 = vsel %vm898, %v7374, 0
            %v7417 = vsel %vm898, %v7376, 0
            %v7418 = vsel %vm898, %v7378, 0
            %v7419 = vsel %vm898, %v7380, 0
            %v7420 = vsel %vm898, %v7382, 0
            %v7421 = vsel %vm898, %v7384, 0
            %v7422 = vsel %vm898, %v7386, 0
            %v7423 = vsel %vm898, %v7388, 0
            %v7424 = vsel %vm898, %v7390, 0
            %v7425 = vsel %vm898, %v7392, 0
            %v7426 = vsel %vm898, %v7394, 0
            %7443 = vrot.lane.b32.xlu0 %v7203, 32
            %v7444 = vpop.permute.xlu0 %7443
            %7445 = vrot.lane.b32.xlu0 %v7204, 32
            %v7446 = vpop.permute.xlu0 %7445
            %7447 = vrot.lane.b32.xlu0 %v7205, 32
            %v7448 = vpop.permute.xlu0 %7447
            %7449 = vrot.lane.b32.xlu0 %v7206, 32
            %v7450 = vpop.permute.xlu0 %7449
            %7451 = vrot.lane.b32.xlu0 %v7207, 32
            %v7452 = vpop.permute.xlu0 %7451
            %7453 = vrot.lane.b32.xlu0 %v7208, 32
            %v7454 = vpop.permute.xlu0 %7453
            %7455 = vrot.lane.b32.xlu0 %v7209, 32
            %v7456 = vpop.permute.xlu0 %7455
            %7457 = vrot.lane.b32.xlu0 %v7210, 32
            %v7458 = vpop.permute.xlu0 %7457
            %7459 = vrot.lane.b32.xlu0 %v7211, 32
            %v7460 = vpop.permute.xlu0 %7459
            %7461 = vrot.lane.b32.xlu0 %v7212, 32
            %v7462 = vpop.permute.xlu0 %7461
            %7463 = vrot.lane.b32.xlu0 %v7213, 32
            %v7464 = vpop.permute.xlu0 %7463
            %7465 = vrot.lane.b32.xlu0 %v7214, 32
            %v7466 = vpop.permute.xlu0 %7465
            %7467 = vrot.lane.b32.xlu0 %v7215, 32
            %v7468 = vpop.permute.xlu0 %7467
            %7469 = vrot.lane.b32.xlu0 %v7216, 32
            %v7470 = vpop.permute.xlu0 %7469
            %7471 = vrot.lane.b32.xlu0 %v7217, 32
            %v7472 = vpop.permute.xlu0 %7471
            %7473 = vrot.lane.b32.xlu0 %v7218, 32
            %v7474 = vpop.permute.xlu0 %7473
            %7491 = vrot.lane.b32.xlu0 %v7411, 64
            %v7492 = vpop.permute.xlu0 %7491
            %7493 = vrot.lane.b32.xlu0 %v7412, 64
            %v7494 = vpop.permute.xlu0 %7493
            %7495 = vrot.lane.b32.xlu0 %v7413, 64
            %v7496 = vpop.permute.xlu0 %7495
            %7497 = vrot.lane.b32.xlu0 %v7414, 64
            %v7498 = vpop.permute.xlu0 %7497
            %7499 = vrot.lane.b32.xlu0 %v7415, 64
            %v7500 = vpop.permute.xlu0 %7499
            %7501 = vrot.lane.b32.xlu0 %v7416, 64
            %v7502 = vpop.permute.xlu0 %7501
            %7503 = vrot.lane.b32.xlu0 %v7417, 64
            %v7504 = vpop.permute.xlu0 %7503
            %7505 = vrot.lane.b32.xlu0 %v7418, 64
            %v7506 = vpop.permute.xlu0 %7505
            %7507 = vrot.lane.b32.xlu0 %v7419, 64
            %v7508 = vpop.permute.xlu0 %7507
            %7509 = vrot.lane.b32.xlu0 %v7420, 64
            %v7510 = vpop.permute.xlu0 %7509
            %7511 = vrot.lane.b32.xlu0 %v7421, 64
            %v7512 = vpop.permute.xlu0 %7511
            %7513 = vrot.lane.b32.xlu0 %v7422, 64
            %v7514 = vpop.permute.xlu0 %7513
            %7515 = vrot.lane.b32.xlu0 %v7423, 64
            %v7516 = vpop.permute.xlu0 %7515
            %7517 = vrot.lane.b32.xlu0 %v7424, 64
            %v7518 = vpop.permute.xlu0 %7517
            %7519 = vrot.lane.b32.xlu0 %v7425, 64
            %v7520 = vpop.permute.xlu0 %7519
            %7521 = vrot.lane.b32.xlu0 %v7426, 64
            %v7522 = vpop.permute.xlu0 %7521
            %v7525 = vsel %vm2481, %v7347, %v7444
            %v7528 = vsel %vm2481, %v7348, %v7446
            %v7531 = vsel %vm2481, %v7349, %v7448
            %v7534 = vsel %vm2481, %v7350, %v7450
            %v7537 = vsel %vm2481, %v7351, %v7452
            %v7540 = vsel %vm2481, %v7352, %v7454
            %v7543 = vsel %vm2481, %v7353, %v7456
            %v7546 = vsel %vm2481, %v7354, %v7458
            %v7549 = vsel %vm2481, %v7355, %v7460
            %v7552 = vsel %vm2481, %v7356, %v7462
            %v7555 = vsel %vm2481, %v7357, %v7464
            %v7558 = vsel %vm2481, %v7358, %v7466
            %v7561 = vsel %vm2481, %v7359, %v7468
            %v7564 = vsel %vm2481, %v7360, %v7470
            %v7567 = vsel %vm2481, %v7361, %v7472
            %v7570 = vsel %vm2481, %v7362, %v7474
            %v7572 = vsel %vm2786, %v7525, %v7492
            %v7574 = vsel %vm2786, %v7528, %v7494
            %v7576 = vsel %vm2786, %v7531, %v7496
            %v7578 = vsel %vm2786, %v7534, %v7498
            %v7580 = vsel %vm2786, %v7537, %v7500
            %v7582 = vsel %vm2786, %v7540, %v7502
            %v7584 = vsel %vm2786, %v7543, %v7504
            %v7586 = vsel %vm2786, %v7546, %v7506
            %v7588 = vsel %vm2786, %v7549, %v7508
            %v7590 = vsel %vm2786, %v7552, %v7510
            %v7592 = vsel %vm2786, %v7555, %v7512
            %v7594 = vsel %vm2786, %v7558, %v7514
            %v7596 = vsel %vm2786, %v7561, %v7516
            %v7598 = vsel %vm2786, %v7564, %v7518
            %v7600 = vsel %vm2786, %v7567, %v7520
            %v7602 = vsel %vm2786, %v7570, %v7522
            %v7619 = vunpack.c.l.b16 %v7572
            %v7620 = vunpack.c.h.b16 %v7572
            %v7621 = vunpack.c.l.b16 %v7574
            %v7622 = vunpack.c.h.b16 %v7574
            %v7623 = vunpack.c.l.b16 %v7576
            %v7624 = vunpack.c.h.b16 %v7576
            %v7625 = vunpack.c.l.b16 %v7578
            %v7626 = vunpack.c.h.b16 %v7578
            %v7627 = vunpack.c.l.b16 %v7580
            %v7628 = vunpack.c.h.b16 %v7580
            %v7629 = vunpack.c.l.b16 %v7582
            %v7630 = vunpack.c.h.b16 %v7582
            %v7631 = vunpack.c.l.b16 %v7584
            %v7632 = vunpack.c.h.b16 %v7584
            %v7633 = vunpack.c.l.b16 %v7586
            %v7634 = vunpack.c.h.b16 %v7586
            %v7635 = vunpack.c.l.b16 %v7588
            %v7636 = vunpack.c.h.b16 %v7588
            %v7637 = vunpack.c.l.b16 %v7590
            %v7638 = vunpack.c.h.b16 %v7590
            %v7639 = vunpack.c.l.b16 %v7592
            %v7640 = vunpack.c.h.b16 %v7592
            %v7641 = vunpack.c.l.b16 %v7594
            %v7642 = vunpack.c.h.b16 %v7594
            %v7643 = vunpack.c.l.b16 %v7596
            %v7644 = vunpack.c.h.b16 %v7596
            %v7645 = vunpack.c.l.b16 %v7598
            %v7646 = vunpack.c.h.b16 %v7598
            %v7647 = vunpack.c.l.b16 %v7600
            %v7648 = vunpack.c.h.b16 %v7600
            %v7649 = vunpack.c.l.b16 %v7602
            %v7650 = vunpack.c.h.b16 %v7602
            %v7651 = vpack.c.b16 %v7619, %v7619
            %v7652 = vpack.c.b16 %v7620, %v7620
            %v7653 = vpack.c.b16 %v7621, %v7621
            %v7654 = vpack.c.b16 %v7622, %v7622
            %v7655 = vpack.c.b16 %v7623, %v7623
            %v7656 = vpack.c.b16 %v7624, %v7624
            %v7657 = vpack.c.b16 %v7625, %v7625
            %v7658 = vpack.c.b16 %v7626, %v7626
            %v7659 = vpack.c.b16 %v7627, %v7627
            %v7660 = vpack.c.b16 %v7628, %v7628
            %v7661 = vpack.c.b16 %v7629, %v7629
            %v7662 = vpack.c.b16 %v7630, %v7630
            %v7663 = vpack.c.b16 %v7631, %v7631
            %v7664 = vpack.c.b16 %v7632, %v7632
            %v7665 = vpack.c.b16 %v7633, %v7633
            %v7666 = vpack.c.b16 %v7634, %v7634
            %v7667 = vpack.c.b16 %v7635, %v7635
            %v7668 = vpack.c.b16 %v7636, %v7636
            %v7669 = vpack.c.b16 %v7637, %v7637
            %v7670 = vpack.c.b16 %v7638, %v7638
            %v7671 = vpack.c.b16 %v7639, %v7639
            %v7672 = vpack.c.b16 %v7640, %v7640
            %v7673 = vpack.c.b16 %v7641, %v7641
            %v7674 = vpack.c.b16 %v7642, %v7642
            %v7675 = vpack.c.b16 %v7643, %v7643
            %v7676 = vpack.c.b16 %v7644, %v7644
            %v7677 = vpack.c.b16 %v7645, %v7645
            %v7678 = vpack.c.b16 %v7646, %v7646
            %v7679 = vpack.c.b16 %v7647, %v7647
            %v7680 = vpack.c.b16 %v7648, %v7648
            %v7681 = vpack.c.b16 %v7649, %v7649
            %v7682 = vpack.c.b16 %v7650, %v7650
            %7715 = vst.msk [vmem:[%s1205] sm:$0xf] %vm5955, %v7651
            %7716 = vst.msk [vmem:[%s1205 + $0x8] sm:$0xf] %vm5955, %v7652
            %7717 = vst.msk [vmem:[%s1205 + $0x10] sm:$0xf] %vm5955, %v7653
            %7718 = vst.msk [vmem:[%s1205 + $0x18] sm:$0xf] %vm5955, %v7654
            %7719 = vst.msk [vmem:[%s1205 + $0x20] sm:$0xf] %vm5955, %v7655
            %7720 = vst.msk [vmem:[%s1205 + $0x28] sm:$0xf] %vm5955, %v7656
            %7721 = vst.msk [vmem:[%s1205 + $0x30] sm:$0xf] %vm5955, %v7657
            %7722 = vst.msk [vmem:[%s1205 + $0x38] sm:$0xf] %vm5955, %v7658
            %7723 = vst.msk [vmem:[%s1205 + $0x40] sm:$0xf] %vm5955, %v7659
            %7724 = vst.msk [vmem:[%s1205 + $0x48] sm:$0xf] %vm5955, %v7660
            %7725 = vst.msk [vmem:[%s1205 + $0x50] sm:$0xf] %vm5955, %v7661
            %7726 = vst.msk [vmem:[%s1205 + $0x58] sm:$0xf] %vm5955, %v7662
            %7727 = vst.msk [vmem:[%s1205 + $0x60] sm:$0xf] %vm5955, %v7663
            %7728 = vst.msk [vmem:[%s1205 + $0x68] sm:$0xf] %vm5955, %v7664
            %7729 = vst.msk [vmem:[%s1205 + $0x70] sm:$0xf] %vm5955, %v7665
            %7730 = vst.msk [vmem:[%s1205 + $0x78] sm:$0xf] %vm5955, %v7666
            %7731 = vst.msk [vmem:[%s1205 + $0x80] sm:$0xf] %vm5955, %v7667
            %7732 = vst.msk [vmem:[%s1205 + $0x88] sm:$0xf] %vm5955, %v7668
            %7733 = vst.msk [vmem:[%s1205 + $0x90] sm:$0xf] %vm5955, %v7669
            %7734 = vst.msk [vmem:[%s1205 + $0x98] sm:$0xf] %vm5955, %v7670
            %7735 = vst.msk [vmem:[%s1205 + $0xa0] sm:$0xf] %vm5955, %v7671
            %7736 = vst.msk [vmem:[%s1205 + $0xa8] sm:$0xf] %vm5955, %v7672
            %7737 = vst.msk [vmem:[%s1205 + $0xb0] sm:$0xf] %vm5955, %v7673
            %7738 = vst.msk [vmem:[%s1205 + $0xb8] sm:$0xf] %vm5955, %v7674
            %7739 = vst.msk [vmem:[%s1205 + $0xc0] sm:$0xf] %vm5955, %v7675
            %7740 = vst.msk [vmem:[%s1205 + $0xc8] sm:$0xf] %vm5955, %v7676
            %7741 = vst.msk [vmem:[%s1205 + $0xd0] sm:$0xf] %vm5955, %v7677
            %7742 = vst.msk [vmem:[%s1205 + $0xd8] sm:$0xf] %vm5955, %v7678
            %7743 = vst.msk [vmem:[%s1205 + $0xe0] sm:$0xf] %vm5955, %v7679
            %7744 = vst.msk [vmem:[%s1205 + $0xe8] sm:$0xf] %vm5955, %v7680
            %7745 = vst.msk [vmem:[%s1205 + $0xf0] sm:$0xf] %vm5955, %v7681
            %7746 = vst.msk [vmem:[%s1205 + $0xf8] sm:$0xf] %vm5955, %v7682
            %s7747 = smul.addr %s5988, 4
            %s7748 = scalar_lea.vmem %s7, %s7747
            %v7749 = vld [vmem:[%s7748] sm:$0xf]
            %v7750 = vld [vmem:[%s7748 + $0x4] sm:$0xf]
            %v7751 = vld [vmem:[%s7748 + $0x8] sm:$0xf]
            %v7752 = vld [vmem:[%s7748 + $0xc] sm:$0xf]
            %v7753 = vld [vmem:[%s7748 + $0x10] sm:$0xf]
            %v7754 = vld [vmem:[%s7748 + $0x14] sm:$0xf]
            %v7755 = vld [vmem:[%s7748 + $0x18] sm:$0xf]
            %v7756 = vld [vmem:[%s7748 + $0x1c] sm:$0xf]
            %v7757 = vld [vmem:[%s7748 + $0x20] sm:$0xf]
            %v7758 = vld [vmem:[%s7748 + $0x24] sm:$0xf]
            %v7759 = vld [vmem:[%s7748 + $0x28] sm:$0xf]
            %v7760 = vld [vmem:[%s7748 + $0x2c] sm:$0xf]
            %v7761 = vld [vmem:[%s7748 + $0x30] sm:$0xf]
            %v7762 = vld [vmem:[%s7748 + $0x34] sm:$0xf]
            %v7763 = vld [vmem:[%s7748 + $0x38] sm:$0xf]
            %v7764 = vld [vmem:[%s7748 + $0x3c] sm:$0xf]
            %v7765 = vld [vmem:[%s7748 + $0x40] sm:$0xf]
            %v7766 = vld [vmem:[%s7748 + $0x44] sm:$0xf]
            %v7767 = vld [vmem:[%s7748 + $0x48] sm:$0xf]
            %v7768 = vld [vmem:[%s7748 + $0x4c] sm:$0xf]
            %v7769 = vld [vmem:[%s7748 + $0x50] sm:$0xf]
            %v7770 = vld [vmem:[%s7748 + $0x54] sm:$0xf]
            %v7771 = vld [vmem:[%s7748 + $0x58] sm:$0xf]
            %v7772 = vld [vmem:[%s7748 + $0x5c] sm:$0xf]
            %v7773 = vld [vmem:[%s7748 + $0x60] sm:$0xf]
            %v7774 = vld [vmem:[%s7748 + $0x64] sm:$0xf]
            %v7775 = vld [vmem:[%s7748 + $0x68] sm:$0xf]
            %v7776 = vld [vmem:[%s7748 + $0x6c] sm:$0xf]
            %v7777 = vld [vmem:[%s7748 + $0x70] sm:$0xf]
            %v7778 = vld [vmem:[%s7748 + $0x74] sm:$0xf]
            %v7779 = vld [vmem:[%s7748 + $0x78] sm:$0xf]
            %v7780 = vld [vmem:[%s7748 + $0x7c] sm:$0xf]
            %v7781 = vld [vmem:[%s7748 + $0x80] sm:$0xf]
            %v7782 = vld [vmem:[%s7748 + $0x84] sm:$0xf]
            %v7783 = vld [vmem:[%s7748 + $0x88] sm:$0xf]
            %v7784 = vld [vmem:[%s7748 + $0x8c] sm:$0xf]
            %s7785 = scalar_lea.vmem %s8, %s5406
            %v7786 = vld [vmem:[%s7785] sm:$0x1]
            %v7787 = vld [vmem:[#allocation2] sm:$0xf]
            %v7788 = vld [vmem:[#allocation2 + $0x8] sm:$0xf]
            %v7789 = vld [vmem:[#allocation2 + $0x10] sm:$0xf]
            %v7790 = vld [vmem:[#allocation2 + $0x18] sm:$0xf]
            %v7791 = vld [vmem:[#allocation2 + $0x20] sm:$0xf]
            %v7792 = vld [vmem:[#allocation2 + $0x28] sm:$0xf]
            %v7793 = vld [vmem:[#allocation2 + $0x30] sm:$0xf]
            %v7794 = vld [vmem:[#allocation2 + $0x38] sm:$0xf]
            %v7795 = vld [vmem:[#allocation2 + $0x40] sm:$0xf]
            %v7796 = vld [vmem:[#allocation2 + $0x48] sm:$0xf]
            %v7797 = vld [vmem:[#allocation2 + $0x50] sm:$0xf]
            %v7798 = vld [vmem:[#allocation2 + $0x58] sm:$0xf]
            %v7799 = vld [vmem:[#allocation2 + $0x60] sm:$0xf]
            %v7800 = vld [vmem:[#allocation2 + $0x68] sm:$0xf]
            %v7801 = vld [vmem:[#allocation2 + $0x70] sm:$0xf]
            %v7802 = vld [vmem:[#allocation2 + $0x78] sm:$0xf]
            %v7803 = vld [vmem:[#allocation2 + $0x80] sm:$0xf]
            %v7804 = vld [vmem:[#allocation2 + $0x88] sm:$0xf]
            %v7805 = vld [vmem:[#allocation2 + $0x90] sm:$0xf]
            %v7806 = vld [vmem:[#allocation2 + $0x98] sm:$0xf]
            %v7807 = vld [vmem:[#allocation2 + $0xa0] sm:$0xf]
            %v7808 = vld [vmem:[#allocation2 + $0xa8] sm:$0xf]
            %v7809 = vld [vmem:[#allocation2 + $0xb0] sm:$0xf]
            %v7810 = vld [vmem:[#allocation2 + $0xb8] sm:$0xf]
            %v7811 = vld [vmem:[#allocation2 + $0xc0] sm:$0xf]
            %v7812 = vld [vmem:[#allocation2 + $0xc8] sm:$0xf]
            %v7813 = vld [vmem:[#allocation2 + $0xd0] sm:$0xf]
            %v7814 = vld [vmem:[#allocation2 + $0xd8] sm:$0xf]
            %v7815 = vld [vmem:[#allocation2 + $0xe0] sm:$0xf]
            %v7816 = vld [vmem:[#allocation2 + $0xe8] sm:$0xf]
            %v7817 = vld [vmem:[#allocation2 + $0xf0] sm:$0xf]
            %v7818 = vld [vmem:[#allocation2 + $0xf8] sm:$0xf]
            %v7819 = vld [vmem:[%s1205] sm:$0xf]
            %v7820 = vld [vmem:[%s1205 + $0x8] sm:$0xf]
            %v7821 = vld [vmem:[%s1205 + $0x10] sm:$0xf]
            %v7822 = vld [vmem:[%s1205 + $0x18] sm:$0xf]
            %v7823 = vld [vmem:[%s1205 + $0x20] sm:$0xf]
            %v7824 = vld [vmem:[%s1205 + $0x28] sm:$0xf]
            %v7825 = vld [vmem:[%s1205 + $0x30] sm:$0xf]
            %v7826 = vld [vmem:[%s1205 + $0x38] sm:$0xf]
            %v7827 = vld [vmem:[%s1205 + $0x40] sm:$0xf]
            %v7828 = vld [vmem:[%s1205 + $0x48] sm:$0xf]
            %v7829 = vld [vmem:[%s1205 + $0x50] sm:$0xf]
            %v7830 = vld [vmem:[%s1205 + $0x58] sm:$0xf]
            %v7831 = vld [vmem:[%s1205 + $0x60] sm:$0xf]
            %v7832 = vld [vmem:[%s1205 + $0x68] sm:$0xf]
            %v7833 = vld [vmem:[%s1205 + $0x70] sm:$0xf]
            %v7834 = vld [vmem:[%s1205 + $0x78] sm:$0xf]
            %v7835 = vld [vmem:[%s1205 + $0x80] sm:$0xf]
            %v7836 = vld [vmem:[%s1205 + $0x88] sm:$0xf]
            %v7837 = vld [vmem:[%s1205 + $0x90] sm:$0xf]
            %v7838 = vld [vmem:[%s1205 + $0x98] sm:$0xf]
            %v7839 = vld [vmem:[%s1205 + $0xa0] sm:$0xf]
            %v7840 = vld [vmem:[%s1205 + $0xa8] sm:$0xf]
            %v7841 = vld [vmem:[%s1205 + $0xb0] sm:$0xf]
            %v7842 = vld [vmem:[%s1205 + $0xb8] sm:$0xf]
            %v7843 = vld [vmem:[%s1205 + $0xc0] sm:$0xf]
            %v7844 = vld [vmem:[%s1205 + $0xc8] sm:$0xf]
            %v7845 = vld [vmem:[%s1205 + $0xd0] sm:$0xf]
            %v7846 = vld [vmem:[%s1205 + $0xd8] sm:$0xf]
            %v7847 = vld [vmem:[%s1205 + $0xe0] sm:$0xf]
            %v7848 = vld [vmem:[%s1205 + $0xe8] sm:$0xf]
            %v7849 = vld [vmem:[%s1205 + $0xf0] sm:$0xf]
            %v7850 = vld [vmem:[%s1205 + $0xf8] sm:$0xf]
            %v7883 = vunpack.c.l.b16 %v7819
            %v7884 = vunpack.c.l.b16 %v7820
            %v7885 = vunpack.c.l.b16 %v7821
            %v7886 = vunpack.c.l.b16 %v7822
            %v7887 = vunpack.c.l.b16 %v7823
            %v7888 = vunpack.c.l.b16 %v7824
            %v7889 = vunpack.c.l.b16 %v7825
            %v7890 = vunpack.c.l.b16 %v7826
            %v7891 = vunpack.c.l.b16 %v7827
            %v7892 = vunpack.c.l.b16 %v7828
            %v7893 = vunpack.c.l.b16 %v7829
            %v7894 = vunpack.c.l.b16 %v7830
            %v7895 = vunpack.c.l.b16 %v7831
            %v7896 = vunpack.c.l.b16 %v7832
            %v7897 = vunpack.c.l.b16 %v7833
            %v7898 = vunpack.c.l.b16 %v7834
            %v7899 = vunpack.c.l.b16 %v7835
            %v7900 = vunpack.c.l.b16 %v7836
            %v7901 = vunpack.c.l.b16 %v7837
            %v7902 = vunpack.c.l.b16 %v7838
            %v7903 = vunpack.c.l.b16 %v7839
            %v7904 = vunpack.c.l.b16 %v7840
            %v7905 = vunpack.c.l.b16 %v7841
            %v7906 = vunpack.c.l.b16 %v7842
            %v7907 = vunpack.c.l.b16 %v7843
            %v7908 = vunpack.c.l.b16 %v7844
            %v7909 = vunpack.c.l.b16 %v7845
            %v7910 = vunpack.c.l.b16 %v7846
            %v7911 = vunpack.c.l.b16 %v7847
            %v7912 = vunpack.c.l.b16 %v7848
            %v7913 = vunpack.c.l.b16 %v7849
            %v7914 = vunpack.c.l.b16 %v7850
            %v7915 = vpack.c.b16 %v7884, %v7883
            %v7916 = vpack.c.b16 %v7886, %v7885
            %v7917 = vpack.c.b16 %v7888, %v7887
            %v7918 = vpack.c.b16 %v7890, %v7889
            %v7919 = vpack.c.b16 %v7892, %v7891
            %v7920 = vpack.c.b16 %v7894, %v7893
            %v7921 = vpack.c.b16 %v7896, %v7895
            %v7922 = vpack.c.b16 %v7898, %v7897
            %v7923 = vpack.c.b16 %v7900, %v7899
            %v7924 = vpack.c.b16 %v7902, %v7901
            %v7925 = vpack.c.b16 %v7904, %v7903
            %v7926 = vpack.c.b16 %v7906, %v7905
            %v7927 = vpack.c.b16 %v7908, %v7907
            %v7928 = vpack.c.b16 %v7910, %v7909
            %v7929 = vpack.c.b16 %v7912, %v7911
            %v7930 = vpack.c.b16 %v7914, %v7913
            %v7943 = vunpack.c.l.b16 %v7761
            %v7944 = vunpack.c.l.b16 %v7762
            %v7945 = vunpack.c.l.b16 %v7763
            %v7946 = vunpack.c.l.b16 %v7764
            %v7947 = vunpack.c.l.b16 %v7765
            %v7948 = vunpack.c.l.b16 %v7766
            %v7949 = vunpack.c.l.b16 %v7767
            %v7950 = vunpack.c.l.b16 %v7768
            %v7951 = vunpack.c.l.b16 %v7769
            %v7952 = vunpack.c.l.b16 %v7770
            %v7953 = vunpack.c.l.b16 %v7771
            %v7954 = vunpack.c.l.b16 %v7772
            %v7955 = vpack.c.b16 %v7944, %v7943
            %v7956 = vpack.c.b16 %v7946, %v7945
            %v7957 = vpack.c.b16 %v7948, %v7947
            %v7958 = vpack.c.b16 %v7950, %v7949
            %v7959 = vpack.c.b16 %v7952, %v7951
            %v7960 = vpack.c.b16 %v7954, %v7953
            %v7968 = vsel %vm6209, %v7915, 0
            %v7971 = vsel %vm6209, %v7916, 0
            %v7974 = vsel %vm6209, %v7917, 0
            %v7977 = vsel %vm6209, %v7918, 0
            %v7980 = vsel %vm6209, %v7919, 0
            %v7983 = vsel %vm6209, %v7920, 0
            %v7986 = vsel %vm6209, %v7921, 0
            %v7989 = vsel %vm6209, %v7922, 0
            %v7992 = vsel %vm6209, %v7923, 0
            %v7995 = vsel %vm6209, %v7924, 0
            %v7998 = vsel %vm6209, %v7925, 0
            %v8001 = vsel %vm6209, %v7926, 0
            %v8004 = vsel %vm6209, %v7927, 0
            %v8007 = vsel %vm6209, %v7928, 0
            %v8010 = vsel %vm6209, %v7929, 0
            %v8013 = vsel %vm6209, %v7930, 0
            %8015 = vmatprep.subr.bf16.mxu0 0
            %8016 = vmatpush1.bf16.msra.mxu0 0
            %8017 = vmatprep.subr.bf16.mxu0 0
            %8018 = vmatpush1.bf16.msra.mxu0 0
            %8019 = vmatprep.subr.bf16.mxu0 0
            %8020 = vmatpush1.bf16.msra.mxu0 %v7960
            %8021 = vmatprep.subr.bf16.mxu0 0
            %8022 = vmatpush1.bf16.msra.mxu0 %v7959
            %8023 = vmatprep.subr.bf16.mxu0 0
            %8024 = vmatpush1.bf16.msra.mxu0 %v7958
            %8025 = vmatprep.subr.bf16.mxu0 0
            %8026 = vmatpush1.bf16.msra.mxu0 %v7957
            %8027 = vmatprep.subr.bf16.mxu0 0
            %8028 = vmatpush1.bf16.msra.mxu0 %v7956
            %8029 = vmatprep.subr.bf16.mxu0 0
            %8030 = vmatpush1.bf16.msra.mxu0 %v7955
            %8031 = vmatprep.subr.bf16.mxu0 0
            %8032 = vmatpush2.bf16.msra.mxu0 0
            %8033 = vmatprep.subr.bf16.mxu0 0
            %8034 = vmatpush2.bf16.msra.mxu0 0
            %8035 = vmatprep.subr.bf16.mxu0 0
            %8036 = vmatpush2.bf16.msra.mxu0 0
            %8037 = vmatprep.subr.bf16.mxu0 0
            %8038 = vmatpush2.bf16.msra.mxu0 0
            %8039 = vmatprep.subr.bf16.mxu0 0
            %8040 = vmatpush2.bf16.msra.mxu0 0
            %8041 = vmatprep.subr.bf16.mxu0 0
            %8042 = vmatpush2.bf16.msra.mxu0 0
            %8043 = vmatprep.subr.bf16.mxu0 0
            %8044 = vmatpush2.bf16.msra.mxu0 0
            %8045 = vmatprep.subr.bf16.mxu0 0
            %8046 = vmatpush2.bf16.msra.mxu0 0
            %8047 = vmatprep.mubr.bf16.mxu0 0
            %8048 = vmatmul.mubr.bf16.gmra.mxu0 %v7968
            %v8049 = vpop.f32.mrf.mxu0
            %v8050 = vadd.f32 0.0, %v8049
            %v8051 = vpop.f32.mrf.mxu0
            %v8052 = vpop.f32.mrf.mxu0
            %v8053 = vadd.f32 0.0, %v8052
            %v8054 = vpop.f32.mrf.mxu0
            %8055 = vmatprep.mubr.bf16.mxu0 0
            %8056 = vmatmul.mubr.bf16.gmra.mxu0 %v7971
            %v8057 = vpop.f32.mrf.mxu0
            %v8058 = vadd.f32 0.0, %v8057
            %v8059 = vpop.f32.mrf.mxu0
            %v8060 = vpop.f32.mrf.mxu0
            %v8061 = vadd.f32 0.0, %v8060
            %v8062 = vpop.f32.mrf.mxu0
            %8063 = vmatprep.mubr.bf16.mxu0 0
            %8064 = vmatmul.mubr.bf16.gmra.mxu0 %v7974
            %v8065 = vpop.f32.mrf.mxu0
            %v8066 = vadd.f32 0.0, %v8065
            %v8067 = vpop.f32.mrf.mxu0
            %v8068 = vpop.f32.mrf.mxu0
            %v8069 = vadd.f32 0.0, %v8068
            %v8070 = vpop.f32.mrf.mxu0
            %8071 = vmatprep.mubr.bf16.mxu0 0
            %8072 = vmatmul.mubr.bf16.gmra.mxu0 %v7977
            %v8073 = vpop.f32.mrf.mxu0
            %v8074 = vadd.f32 0.0, %v8073
            %v8075 = vpop.f32.mrf.mxu0
            %v8076 = vpop.f32.mrf.mxu0
            %v8077 = vadd.f32 0.0, %v8076
            %v8078 = vpop.f32.mrf.mxu0
            %8079 = vmatprep.mubr.bf16.mxu0 0
            %8080 = vmatmul.mubr.bf16.gmra.mxu0 %v7980
            %v8081 = vpop.f32.mrf.mxu0
            %v8082 = vadd.f32 0.0, %v8081
            %v8083 = vpop.f32.mrf.mxu0
            %v8084 = vpop.f32.mrf.mxu0
            %v8085 = vadd.f32 0.0, %v8084
            %v8086 = vpop.f32.mrf.mxu0
            %8087 = vmatprep.mubr.bf16.mxu0 0
            %8088 = vmatmul.mubr.bf16.gmra.mxu0 %v7983
            %v8089 = vpop.f32.mrf.mxu0
            %v8090 = vadd.f32 0.0, %v8089
            %v8091 = vpop.f32.mrf.mxu0
            %v8092 = vpop.f32.mrf.mxu0
            %v8093 = vadd.f32 0.0, %v8092
            %v8094 = vpop.f32.mrf.mxu0
            %8095 = vmatprep.mubr.bf16.mxu0 0
            %8096 = vmatmul.mubr.bf16.gmra.mxu0 %v7986
            %v8097 = vpop.f32.mrf.mxu0
            %v8098 = vadd.f32 0.0, %v8097
            %v8099 = vpop.f32.mrf.mxu0
            %v8100 = vpop.f32.mrf.mxu0
            %v8101 = vadd.f32 0.0, %v8100
            %v8102 = vpop.f32.mrf.mxu0
            %8103 = vmatprep.mubr.bf16.mxu0 0
            %8104 = vmatmul.mubr.bf16.gmra.mxu0 %v7989
            %v8105 = vpop.f32.mrf.mxu0
            %v8106 = vadd.f32 0.0, %v8105
            %v8107 = vpop.f32.mrf.mxu0
            %v8108 = vpop.f32.mrf.mxu0
            %v8109 = vadd.f32 0.0, %v8108
            %v8110 = vpop.f32.mrf.mxu0
            %8111 = vmatprep.mubr.bf16.mxu0 0
            %8112 = vmatmul.mubr.bf16.gmra.mxu0 %v7992
            %v8113 = vpop.f32.mrf.mxu0
            %v8114 = vadd.f32 0.0, %v8113
            %v8115 = vpop.f32.mrf.mxu0
            %v8116 = vpop.f32.mrf.mxu0
            %v8117 = vadd.f32 0.0, %v8116
            %v8118 = vpop.f32.mrf.mxu0
            %8119 = vmatprep.mubr.bf16.mxu0 0
            %8120 = vmatmul.mubr.bf16.gmra.mxu0 %v7995
            %v8121 = vpop.f32.mrf.mxu0
            %v8122 = vadd.f32 0.0, %v8121
            %v8123 = vpop.f32.mrf.mxu0
            %v8124 = vpop.f32.mrf.mxu0
            %v8125 = vadd.f32 0.0, %v8124
            %v8126 = vpop.f32.mrf.mxu0
            %8127 = vmatprep.mubr.bf16.mxu0 0
            %8128 = vmatmul.mubr.bf16.gmra.mxu0 %v7998
            %v8129 = vpop.f32.mrf.mxu0
            %v8130 = vadd.f32 0.0, %v8129
            %v8131 = vpop.f32.mrf.mxu0
            %v8132 = vpop.f32.mrf.mxu0
            %v8133 = vadd.f32 0.0, %v8132
            %v8134 = vpop.f32.mrf.mxu0
            %8135 = vmatprep.mubr.bf16.mxu0 0
            %8136 = vmatmul.mubr.bf16.gmra.mxu0 %v8001
            %v8137 = vpop.f32.mrf.mxu0
            %v8138 = vadd.f32 0.0, %v8137
            %v8139 = vpop.f32.mrf.mxu0
            %v8140 = vpop.f32.mrf.mxu0
            %v8141 = vadd.f32 0.0, %v8140
            %v8142 = vpop.f32.mrf.mxu0
            %8143 = vmatprep.mubr.bf16.mxu0 0
            %8144 = vmatmul.mubr.bf16.gmra.mxu0 %v8004
            %v8145 = vpop.f32.mrf.mxu0
            %v8146 = vadd.f32 0.0, %v8145
            %v8147 = vpop.f32.mrf.mxu0
            %v8148 = vpop.f32.mrf.mxu0
            %v8149 = vadd.f32 0.0, %v8148
            %v8150 = vpop.f32.mrf.mxu0
            %8151 = vmatprep.mubr.bf16.mxu0 0
            %8152 = vmatmul.mubr.bf16.gmra.mxu0 %v8007
            %v8153 = vpop.f32.mrf.mxu0
            %v8154 = vadd.f32 0.0, %v8153
            %v8155 = vpop.f32.mrf.mxu0
            %v8156 = vpop.f32.mrf.mxu0
            %v8157 = vadd.f32 0.0, %v8156
            %v8158 = vpop.f32.mrf.mxu0
            %8159 = vmatprep.mubr.bf16.mxu0 0
            %8160 = vmatmul.mubr.bf16.gmra.mxu0 %v8010
            %v8161 = vpop.f32.mrf.mxu0
            %v8162 = vadd.f32 0.0, %v8161
            %v8163 = vpop.f32.mrf.mxu0
            %v8164 = vpop.f32.mrf.mxu0
            %v8165 = vadd.f32 0.0, %v8164
            %v8166 = vpop.f32.mrf.mxu0
            %8167 = vmatprep.mubr.bf16.mxu0 0
            %8168 = vmatmul.mubr.bf16.gmra.mxu0 %v8013
            %v8169 = vpop.f32.mrf.mxu0
            %v8170 = vadd.f32 0.0, %v8169
            %v8171 = vpop.f32.mrf.mxu0
            %v8172 = vpop.f32.mrf.mxu0
            %v8173 = vadd.f32 0.0, %v8172
            %v8174 = vpop.f32.mrf.mxu0
            %8175 = vdwg.mxu0
            %v8208 = vunpack.c.l.b16 %v7787
            %v8209 = vunpack.c.l.b16 %v7788
            %v8210 = vunpack.c.l.b16 %v7789
            %v8211 = vunpack.c.l.b16 %v7790
            %v8212 = vunpack.c.l.b16 %v7791
            %v8213 = vunpack.c.l.b16 %v7792
            %v8214 = vunpack.c.l.b16 %v7793
            %v8215 = vunpack.c.l.b16 %v7794
            %v8216 = vunpack.c.l.b16 %v7795
            %v8217 = vunpack.c.l.b16 %v7796
            %v8218 = vunpack.c.l.b16 %v7797
            %v8219 = vunpack.c.l.b16 %v7798
            %v8220 = vunpack.c.l.b16 %v7799
            %v8221 = vunpack.c.l.b16 %v7800
            %v8222 = vunpack.c.l.b16 %v7801
            %v8223 = vunpack.c.l.b16 %v7802
            %v8224 = vunpack.c.l.b16 %v7803
            %v8225 = vunpack.c.l.b16 %v7804
            %v8226 = vunpack.c.l.b16 %v7805
            %v8227 = vunpack.c.l.b16 %v7806
            %v8228 = vunpack.c.l.b16 %v7807
            %v8229 = vunpack.c.l.b16 %v7808
            %v8230 = vunpack.c.l.b16 %v7809
            %v8231 = vunpack.c.l.b16 %v7810
            %v8232 = vunpack.c.l.b16 %v7811
            %v8233 = vunpack.c.l.b16 %v7812
            %v8234 = vunpack.c.l.b16 %v7813
            %v8235 = vunpack.c.l.b16 %v7814
            %v8236 = vunpack.c.l.b16 %v7815
            %v8237 = vunpack.c.l.b16 %v7816
            %v8238 = vunpack.c.l.b16 %v7817
            %v8239 = vunpack.c.l.b16 %v7818
            %v8240 = vpack.c.b16 %v8209, %v8208
            %v8241 = vpack.c.b16 %v8211, %v8210
            %v8242 = vpack.c.b16 %v8213, %v8212
            %v8243 = vpack.c.b16 %v8215, %v8214
            %v8244 = vpack.c.b16 %v8217, %v8216
            %v8245 = vpack.c.b16 %v8219, %v8218
            %v8246 = vpack.c.b16 %v8221, %v8220
            %v8247 = vpack.c.b16 %v8223, %v8222
            %v8248 = vpack.c.b16 %v8225, %v8224
            %v8249 = vpack.c.b16 %v8227, %v8226
            %v8250 = vpack.c.b16 %v8229, %v8228
            %v8251 = vpack.c.b16 %v8231, %v8230
            %v8252 = vpack.c.b16 %v8233, %v8232
            %v8253 = vpack.c.b16 %v8235, %v8234
            %v8254 = vpack.c.b16 %v8237, %v8236
            %v8255 = vpack.c.b16 %v8239, %v8238
            %v8268 = vunpack.c.l.b16 %v7749
            %v8269 = vunpack.c.l.b16 %v7750
            %v8270 = vunpack.c.l.b16 %v7751
            %v8271 = vunpack.c.l.b16 %v7752
            %v8272 = vunpack.c.l.b16 %v7753
            %v8273 = vunpack.c.l.b16 %v7754
            %v8274 = vunpack.c.l.b16 %v7755
            %v8275 = vunpack.c.l.b16 %v7756
            %v8276 = vunpack.c.l.b16 %v7757
            %v8277 = vunpack.c.l.b16 %v7758
            %v8278 = vunpack.c.l.b16 %v7759
            %v8279 = vunpack.c.l.b16 %v7760
            %v8280 = vpack.c.b16 %v8269, %v8268
            %v8281 = vpack.c.b16 %v8271, %v8270
            %v8282 = vpack.c.b16 %v8273, %v8272
            %v8283 = vpack.c.b16 %v8275, %v8274
            %v8284 = vpack.c.b16 %v8277, %v8276
            %v8285 = vpack.c.b16 %v8279, %v8278
            %v8293 = vsel %vm6209, %v8240, 0
            %v8296 = vsel %vm6209, %v8241, 0
            %v8299 = vsel %vm6209, %v8242, 0
            %v8302 = vsel %vm6209, %v8243, 0
            %v8305 = vsel %vm6209, %v8244, 0
            %v8308 = vsel %vm6209, %v8245, 0
            %v8311 = vsel %vm6209, %v8246, 0
            %v8314 = vsel %vm6209, %v8247, 0
            %v8317 = vsel %vm6209, %v8248, 0
            %v8320 = vsel %vm6209, %v8249, 0
            %v8323 = vsel %vm6209, %v8250, 0
            %v8326 = vsel %vm6209, %v8251, 0
            %v8329 = vsel %vm6209, %v8252, 0
            %v8332 = vsel %vm6209, %v8253, 0
            %v8335 = vsel %vm6209, %v8254, 0
            %v8338 = vsel %vm6209, %v8255, 0
            %8340 = vmatprep.subr.bf16.mxu0 0
            %8341 = vmatpush1.bf16.msra.mxu0 0
            %8342 = vmatprep.subr.bf16.mxu0 0
            %8343 = vmatpush1.bf16.msra.mxu0 0
            %8344 = vmatprep.subr.bf16.mxu0 0
            %8345 = vmatpush1.bf16.msra.mxu0 %v8285
            %8346 = vmatprep.subr.bf16.mxu0 0
            %8347 = vmatpush1.bf16.msra.mxu0 %v8284
            %8348 = vmatprep.subr.bf16.mxu0 0
            %8349 = vmatpush1.bf16.msra.mxu0 %v8283
            %8350 = vmatprep.subr.bf16.mxu0 0
            %8351 = vmatpush1.bf16.msra.mxu0 %v8282
            %8352 = vmatprep.subr.bf16.mxu0 0
            %8353 = vmatpush1.bf16.msra.mxu0 %v8281
            %8354 = vmatprep.subr.bf16.mxu0 0
            %8355 = vmatpush1.bf16.msra.mxu0 %v8280
            %8356 = vmatprep.subr.bf16.mxu0 0
            %8357 = vmatpush2.bf16.msra.mxu0 0
            %8358 = vmatprep.subr.bf16.mxu0 0
            %8359 = vmatpush2.bf16.msra.mxu0 0
            %8360 = vmatprep.subr.bf16.mxu0 0
            %8361 = vmatpush2.bf16.msra.mxu0 0
            %8362 = vmatprep.subr.bf16.mxu0 0
            %8363 = vmatpush2.bf16.msra.mxu0 0
            %8364 = vmatprep.subr.bf16.mxu0 0
            %8365 = vmatpush2.bf16.msra.mxu0 0
            %8366 = vmatprep.subr.bf16.mxu0 0
            %8367 = vmatpush2.bf16.msra.mxu0 0
            %8368 = vmatprep.subr.bf16.mxu0 0
            %8369 = vmatpush2.bf16.msra.mxu0 0
            %8370 = vmatprep.subr.bf16.mxu0 0
            %8371 = vmatpush2.bf16.msra.mxu0 0
            %8372 = vmatprep.mubr.bf16.mxu0 0
            %8373 = vmatmul.mubr.bf16.gmra.mxu0 %v8293
            %v8374 = vpop.f32.mrf.mxu0
            %v8375 = vadd.f32 %v8050, %v8374
            %v8376 = vpop.f32.mrf.mxu0
            %v8377 = vpop.f32.mrf.mxu0
            %v8378 = vadd.f32 %v8053, %v8377
            %v8379 = vpop.f32.mrf.mxu0
            %8380 = vmatprep.mubr.bf16.mxu0 0
            %8381 = vmatmul.mubr.bf16.gmra.mxu0 %v8296
            %v8382 = vpop.f32.mrf.mxu0
            %v8383 = vadd.f32 %v8058, %v8382
            %v8384 = vpop.f32.mrf.mxu0
            %v8385 = vpop.f32.mrf.mxu0
            %v8386 = vadd.f32 %v8061, %v8385
            %v8387 = vpop.f32.mrf.mxu0
            %8388 = vmatprep.mubr.bf16.mxu0 0
            %8389 = vmatmul.mubr.bf16.gmra.mxu0 %v8299
            %v8390 = vpop.f32.mrf.mxu0
            %v8391 = vadd.f32 %v8066, %v8390
            %v8392 = vpop.f32.mrf.mxu0
            %v8393 = vpop.f32.mrf.mxu0
            %v8394 = vadd.f32 %v8069, %v8393
            %v8395 = vpop.f32.mrf.mxu0
            %8396 = vmatprep.mubr.bf16.mxu0 0
            %8397 = vmatmul.mubr.bf16.gmra.mxu0 %v8302
            %v8398 = vpop.f32.mrf.mxu0
            %v8399 = vadd.f32 %v8074, %v8398
            %v8400 = vpop.f32.mrf.mxu0
            %v8401 = vpop.f32.mrf.mxu0
            %v8402 = vadd.f32 %v8077, %v8401
            %v8403 = vpop.f32.mrf.mxu0
            %8404 = vmatprep.mubr.bf16.mxu0 0
            %8405 = vmatmul.mubr.bf16.gmra.mxu0 %v8305
            %v8406 = vpop.f32.mrf.mxu0
            %v8407 = vadd.f32 %v8082, %v8406
            %v8408 = vpop.f32.mrf.mxu0
            %v8409 = vpop.f32.mrf.mxu0
            %v8410 = vadd.f32 %v8085, %v8409
            %v8411 = vpop.f32.mrf.mxu0
            %8412 = vmatprep.mubr.bf16.mxu0 0
            %8413 = vmatmul.mubr.bf16.gmra.mxu0 %v8308
            %v8414 = vpop.f32.mrf.mxu0
            %v8415 = vadd.f32 %v8090, %v8414
            %v8416 = vpop.f32.mrf.mxu0
            %v8417 = vpop.f32.mrf.mxu0
            %v8418 = vadd.f32 %v8093, %v8417
            %v8419 = vpop.f32.mrf.mxu0
            %8420 = vmatprep.mubr.bf16.mxu0 0
            %8421 = vmatmul.mubr.bf16.gmra.mxu0 %v8311
            %v8422 = vpop.f32.mrf.mxu0
            %v8423 = vadd.f32 %v8098, %v8422
            %v8424 = vpop.f32.mrf.mxu0
            %v8425 = vpop.f32.mrf.mxu0
            %v8426 = vadd.f32 %v8101, %v8425
            %v8427 = vpop.f32.mrf.mxu0
            %8428 = vmatprep.mubr.bf16.mxu0 0
            %8429 = vmatmul.mubr.bf16.gmra.mxu0 %v8314
            %v8430 = vpop.f32.mrf.mxu0
            %v8431 = vadd.f32 %v8106, %v8430
            %v8432 = vpop.f32.mrf.mxu0
            %v8433 = vpop.f32.mrf.mxu0
            %v8434 = vadd.f32 %v8109, %v8433
            %v8435 = vpop.f32.mrf.mxu0
            %8436 = vmatprep.mubr.bf16.mxu0 0
            %8437 = vmatmul.mubr.bf16.gmra.mxu0 %v8317
            %v8438 = vpop.f32.mrf.mxu0
            %v8439 = vadd.f32 %v8114, %v8438
            %v8440 = vpop.f32.mrf.mxu0
            %v8441 = vpop.f32.mrf.mxu0
            %v8442 = vadd.f32 %v8117, %v8441
            %v8443 = vpop.f32.mrf.mxu0
            %8444 = vmatprep.mubr.bf16.mxu0 0
            %8445 = vmatmul.mubr.bf16.gmra.mxu0 %v8320
            %v8446 = vpop.f32.mrf.mxu0
            %v8447 = vadd.f32 %v8122, %v8446
            %v8448 = vpop.f32.mrf.mxu0
            %v8449 = vpop.f32.mrf.mxu0
            %v8450 = vadd.f32 %v8125, %v8449
            %v8451 = vpop.f32.mrf.mxu0
            %8452 = vmatprep.mubr.bf16.mxu0 0
            %8453 = vmatmul.mubr.bf16.gmra.mxu0 %v8323
            %v8454 = vpop.f32.mrf.mxu0
            %v8455 = vadd.f32 %v8130, %v8454
            %v8456 = vpop.f32.mrf.mxu0
            %v8457 = vpop.f32.mrf.mxu0
            %v8458 = vadd.f32 %v8133, %v8457
            %v8459 = vpop.f32.mrf.mxu0
            %8460 = vmatprep.mubr.bf16.mxu0 0
            %8461 = vmatmul.mubr.bf16.gmra.mxu0 %v8326
            %v8462 = vpop.f32.mrf.mxu0
            %v8463 = vadd.f32 %v8138, %v8462
            %v8464 = vpop.f32.mrf.mxu0
            %v8465 = vpop.f32.mrf.mxu0
            %v8466 = vadd.f32 %v8141, %v8465
            %v8467 = vpop.f32.mrf.mxu0
            %8468 = vmatprep.mubr.bf16.mxu0 0
            %8469 = vmatmul.mubr.bf16.gmra.mxu0 %v8329
            %v8470 = vpop.f32.mrf.mxu0
            %v8471 = vadd.f32 %v8146, %v8470
            %v8472 = vpop.f32.mrf.mxu0
            %v8473 = vpop.f32.mrf.mxu0
            %v8474 = vadd.f32 %v8149, %v8473
            %v8475 = vpop.f32.mrf.mxu0
            %8476 = vmatprep.mubr.bf16.mxu0 0
            %8477 = vmatmul.mubr.bf16.gmra.mxu0 %v8332
            %v8478 = vpop.f32.mrf.mxu0
            %v8479 = vadd.f32 %v8154, %v8478
            %v8480 = vpop.f32.mrf.mxu0
            %v8481 = vpop.f32.mrf.mxu0
            %v8482 = vadd.f32 %v8157, %v8481
            %v8483 = vpop.f32.mrf.mxu0
            %8484 = vmatprep.mubr.bf16.mxu0 0
            %8485 = vmatmul.mubr.bf16.gmra.mxu0 %v8335
            %v8486 = vpop.f32.mrf.mxu0
            %v8487 = vadd.f32 %v8162, %v8486
            %v8488 = vpop.f32.mrf.mxu0
            %v8489 = vpop.f32.mrf.mxu0
            %v8490 = vadd.f32 %v8165, %v8489
            %v8491 = vpop.f32.mrf.mxu0
            %8492 = vmatprep.mubr.bf16.mxu0 0
            %8493 = vmatmul.mubr.bf16.gmra.mxu0 %v8338
            %v8494 = vpop.f32.mrf.mxu0
            %v8495 = vadd.f32 %v8170, %v8494
            %v8496 = vpop.f32.mrf.mxu0
            %v8497 = vpop.f32.mrf.mxu0
            %v8498 = vadd.f32 %v8173, %v8497
            %v8499 = vpop.f32.mrf.mxu0
            %8500 = vdwg.mxu0
            %v8501 = vld [vmem:[%s1917] sm:$0xf]
            %v8502 = vld [vmem:[%s1917 + $0x8] sm:$0xf]
            %v8503 = vld [vmem:[%s1917 + $0x10] sm:$0xf]
            %v8504 = vld [vmem:[%s1917 + $0x18] sm:$0xf]
            %v8505 = vld [vmem:[%s1917 + $0x20] sm:$0xf]
            %v8506 = vld [vmem:[%s1917 + $0x28] sm:$0xf]
            %v8507 = vld [vmem:[%s1917 + $0x30] sm:$0xf]
            %v8508 = vld [vmem:[%s1917 + $0x38] sm:$0xf]
            %v8509 = vld [vmem:[%s1917 + $0x40] sm:$0xf]
            %v8510 = vld [vmem:[%s1917 + $0x48] sm:$0xf]
            %v8511 = vld [vmem:[%s1917 + $0x50] sm:$0xf]
            %v8512 = vld [vmem:[%s1917 + $0x58] sm:$0xf]
            %v8513 = vld [vmem:[%s1917 + $0x60] sm:$0xf]
            %v8514 = vld [vmem:[%s1917 + $0x68] sm:$0xf]
            %v8515 = vld [vmem:[%s1917 + $0x70] sm:$0xf]
            %v8516 = vld [vmem:[%s1917 + $0x78] sm:$0xf]
            %v8517 = vld [vmem:[%s1917 + $0x80] sm:$0xf]
            %v8518 = vld [vmem:[%s1917 + $0x88] sm:$0xf]
            %v8519 = vld [vmem:[%s1917 + $0x90] sm:$0xf]
            %v8520 = vld [vmem:[%s1917 + $0x98] sm:$0xf]
            %v8521 = vld [vmem:[%s1917 + $0xa0] sm:$0xf]
            %v8522 = vld [vmem:[%s1917 + $0xa8] sm:$0xf]
            %v8523 = vld [vmem:[%s1917 + $0xb0] sm:$0xf]
            %v8524 = vld [vmem:[%s1917 + $0xb8] sm:$0xf]
            %v8525 = vld [vmem:[%s1917 + $0xc0] sm:$0xf]
            %v8526 = vld [vmem:[%s1917 + $0xc8] sm:$0xf]
            %v8527 = vld [vmem:[%s1917 + $0xd0] sm:$0xf]
            %v8528 = vld [vmem:[%s1917 + $0xd8] sm:$0xf]
            %v8529 = vld [vmem:[%s1917 + $0xe0] sm:$0xf]
            %v8530 = vld [vmem:[%s1917 + $0xe8] sm:$0xf]
            %v8531 = vld [vmem:[%s1917 + $0xf0] sm:$0xf]
            %v8532 = vld [vmem:[%s1917 + $0xf8] sm:$0xf]
            %v8565 = vunpack.c.l.b16 %v8501
            %v8566 = vunpack.c.l.b16 %v8502
            %v8567 = vunpack.c.l.b16 %v8503
            %v8568 = vunpack.c.l.b16 %v8504
            %v8569 = vunpack.c.l.b16 %v8505
            %v8570 = vunpack.c.l.b16 %v8506
            %v8571 = vunpack.c.l.b16 %v8507
            %v8572 = vunpack.c.l.b16 %v8508
            %v8573 = vunpack.c.l.b16 %v8509
            %v8574 = vunpack.c.l.b16 %v8510
            %v8575 = vunpack.c.l.b16 %v8511
            %v8576 = vunpack.c.l.b16 %v8512
            %v8577 = vunpack.c.l.b16 %v8513
            %v8578 = vunpack.c.l.b16 %v8514
            %v8579 = vunpack.c.l.b16 %v8515
            %v8580 = vunpack.c.l.b16 %v8516
            %v8581 = vunpack.c.l.b16 %v8517
            %v8582 = vunpack.c.l.b16 %v8518
            %v8583 = vunpack.c.l.b16 %v8519
            %v8584 = vunpack.c.l.b16 %v8520
            %v8585 = vunpack.c.l.b16 %v8521
            %v8586 = vunpack.c.l.b16 %v8522
            %v8587 = vunpack.c.l.b16 %v8523
            %v8588 = vunpack.c.l.b16 %v8524
            %v8589 = vunpack.c.l.b16 %v8525
            %v8590 = vunpack.c.l.b16 %v8526
            %v8591 = vunpack.c.l.b16 %v8527
            %v8592 = vunpack.c.l.b16 %v8528
            %v8593 = vunpack.c.l.b16 %v8529
            %v8594 = vunpack.c.l.b16 %v8530
            %v8595 = vunpack.c.l.b16 %v8531
            %v8596 = vunpack.c.l.b16 %v8532
            %v8597 = vpack.c.b16 %v8566, %v8565
            %v8598 = vpack.c.b16 %v8568, %v8567
            %v8599 = vpack.c.b16 %v8570, %v8569
            %v8600 = vpack.c.b16 %v8572, %v8571
            %v8601 = vpack.c.b16 %v8574, %v8573
            %v8602 = vpack.c.b16 %v8576, %v8575
            %v8603 = vpack.c.b16 %v8578, %v8577
            %v8604 = vpack.c.b16 %v8580, %v8579
            %v8605 = vpack.c.b16 %v8582, %v8581
            %v8606 = vpack.c.b16 %v8584, %v8583
            %v8607 = vpack.c.b16 %v8586, %v8585
            %v8608 = vpack.c.b16 %v8588, %v8587
            %v8609 = vpack.c.b16 %v8590, %v8589
            %v8610 = vpack.c.b16 %v8592, %v8591
            %v8611 = vpack.c.b16 %v8594, %v8593
            %v8612 = vpack.c.b16 %v8596, %v8595
            %v8625 = vunpack.c.l.b16 %v7773
            %v8626 = vunpack.c.l.b16 %v7774
            %v8627 = vunpack.c.l.b16 %v7775
            %v8628 = vunpack.c.l.b16 %v7776
            %v8629 = vunpack.c.l.b16 %v7777
            %v8630 = vunpack.c.l.b16 %v7778
            %v8631 = vunpack.c.l.b16 %v7779
            %v8632 = vunpack.c.l.b16 %v7780
            %v8633 = vunpack.c.l.b16 %v7781
            %v8634 = vunpack.c.l.b16 %v7782
            %v8635 = vunpack.c.l.b16 %v7783
            %v8636 = vunpack.c.l.b16 %v7784
            %v8637 = vpack.c.b16 %v8626, %v8625
            %v8638 = vpack.c.b16 %v8628, %v8627
            %v8639 = vpack.c.b16 %v8630, %v8629
            %v8640 = vpack.c.b16 %v8632, %v8631
            %v8641 = vpack.c.b16 %v8634, %v8633
            %v8642 = vpack.c.b16 %v8636, %v8635
            %v8650 = vsel %vm6209, %v8597, 0
            %v8653 = vsel %vm6209, %v8598, 0
            %v8656 = vsel %vm6209, %v8599, 0
            %v8659 = vsel %vm6209, %v8600, 0
            %v8662 = vsel %vm6209, %v8601, 0
            %v8665 = vsel %vm6209, %v8602, 0
            %v8668 = vsel %vm6209, %v8603, 0
            %v8671 = vsel %vm6209, %v8604, 0
            %v8674 = vsel %vm6209, %v8605, 0
            %v8677 = vsel %vm6209, %v8606, 0
            %v8680 = vsel %vm6209, %v8607, 0
            %v8683 = vsel %vm6209, %v8608, 0
            %v8686 = vsel %vm6209, %v8609, 0
            %v8689 = vsel %vm6209, %v8610, 0
            %v8692 = vsel %vm6209, %v8611, 0
            %v8695 = vsel %vm6209, %v8612, 0
            %8697 = vmatprep.subr.bf16.mxu0 0
            %8698 = vmatpush1.bf16.msra.mxu0 0
            %8699 = vmatprep.subr.bf16.mxu0 0
            %8700 = vmatpush1.bf16.msra.mxu0 0
            %8701 = vmatprep.subr.bf16.mxu0 0
            %8702 = vmatpush1.bf16.msra.mxu0 %v8642
            %8703 = vmatprep.subr.bf16.mxu0 0
            %8704 = vmatpush1.bf16.msra.mxu0 %v8641
            %8705 = vmatprep.subr.bf16.mxu0 0
            %8706 = vmatpush1.bf16.msra.mxu0 %v8640
            %8707 = vmatprep.subr.bf16.mxu0 0
            %8708 = vmatpush1.bf16.msra.mxu0 %v8639
            %8709 = vmatprep.subr.bf16.mxu0 0
            %8710 = vmatpush1.bf16.msra.mxu0 %v8638
            %8711 = vmatprep.subr.bf16.mxu0 0
            %8712 = vmatpush1.bf16.msra.mxu0 %v8637
            %8713 = vmatprep.subr.bf16.mxu0 0
            %8714 = vmatpush2.bf16.msra.mxu0 0
            %8715 = vmatprep.subr.bf16.mxu0 0
            %8716 = vmatpush2.bf16.msra.mxu0 0
            %8717 = vmatprep.subr.bf16.mxu0 0
            %8718 = vmatpush2.bf16.msra.mxu0 0
            %8719 = vmatprep.subr.bf16.mxu0 0
            %8720 = vmatpush2.bf16.msra.mxu0 0
            %8721 = vmatprep.subr.bf16.mxu0 0
            %8722 = vmatpush2.bf16.msra.mxu0 0
            %8723 = vmatprep.subr.bf16.mxu0 0
            %8724 = vmatpush2.bf16.msra.mxu0 0
            %8725 = vmatprep.subr.bf16.mxu0 0
            %8726 = vmatpush2.bf16.msra.mxu0 0
            %8727 = vmatprep.subr.bf16.mxu0 0
            %8728 = vmatpush2.bf16.msra.mxu0 0
            %8729 = vmatprep.mubr.bf16.mxu0 0
            %8730 = vmatmul.mubr.bf16.gmra.mxu0 %v8650
            %v8731 = vpop.f32.mrf.mxu0
            %v8732 = vadd.f32 0.0, %v8731
            %v8733 = vpop.f32.mrf.mxu0
            %v8734 = vpop.f32.mrf.mxu0
            %v8735 = vadd.f32 0.0, %v8734
            %v8736 = vpop.f32.mrf.mxu0
            %8737 = vmatprep.mubr.bf16.mxu0 0
            %8738 = vmatmul.mubr.bf16.gmra.mxu0 %v8653
            %v8739 = vpop.f32.mrf.mxu0
            %v8740 = vadd.f32 0.0, %v8739
            %v8741 = vpop.f32.mrf.mxu0
            %v8742 = vpop.f32.mrf.mxu0
            %v8743 = vadd.f32 0.0, %v8742
            %v8744 = vpop.f32.mrf.mxu0
            %8745 = vmatprep.mubr.bf16.mxu0 0
            %8746 = vmatmul.mubr.bf16.gmra.mxu0 %v8656
            %v8747 = vpop.f32.mrf.mxu0
            %v8748 = vadd.f32 0.0, %v8747
            %v8749 = vpop.f32.mrf.mxu0
            %v8750 = vpop.f32.mrf.mxu0
            %v8751 = vadd.f32 0.0, %v8750
            %v8752 = vpop.f32.mrf.mxu0
            %8753 = vmatprep.mubr.bf16.mxu0 0
            %8754 = vmatmul.mubr.bf16.gmra.mxu0 %v8659
            %v8755 = vpop.f32.mrf.mxu0
            %v8756 = vadd.f32 0.0, %v8755
            %v8757 = vpop.f32.mrf.mxu0
            %v8758 = vpop.f32.mrf.mxu0
            %v8759 = vadd.f32 0.0, %v8758
            %v8760 = vpop.f32.mrf.mxu0
            %8761 = vmatprep.mubr.bf16.mxu0 0
            %8762 = vmatmul.mubr.bf16.gmra.mxu0 %v8662
            %v8763 = vpop.f32.mrf.mxu0
            %v8764 = vadd.f32 0.0, %v8763
            %v8765 = vpop.f32.mrf.mxu0
            %v8766 = vpop.f32.mrf.mxu0
            %v8767 = vadd.f32 0.0, %v8766
            %v8768 = vpop.f32.mrf.mxu0
            %8769 = vmatprep.mubr.bf16.mxu0 0
            %8770 = vmatmul.mubr.bf16.gmra.mxu0 %v8665
            %v8771 = vpop.f32.mrf.mxu0
            %v8772 = vadd.f32 0.0, %v8771
            %v8773 = vpop.f32.mrf.mxu0
            %v8774 = vpop.f32.mrf.mxu0
            %v8775 = vadd.f32 0.0, %v8774
            %v8776 = vpop.f32.mrf.mxu0
            %8777 = vmatprep.mubr.bf16.mxu0 0
            %8778 = vmatmul.mubr.bf16.gmra.mxu0 %v8668
            %v8779 = vpop.f32.mrf.mxu0
            %v8780 = vadd.f32 0.0, %v8779
            %v8781 = vpop.f32.mrf.mxu0
            %v8782 = vpop.f32.mrf.mxu0
            %v8783 = vadd.f32 0.0, %v8782
            %v8784 = vpop.f32.mrf.mxu0
            %8785 = vmatprep.mubr.bf16.mxu0 0
            %8786 = vmatmul.mubr.bf16.gmra.mxu0 %v8671
            %v8787 = vpop.f32.mrf.mxu0
            %v8788 = vadd.f32 0.0, %v8787
            %v8789 = vpop.f32.mrf.mxu0
            %v8790 = vpop.f32.mrf.mxu0
            %v8791 = vadd.f32 0.0, %v8790
            %v8792 = vpop.f32.mrf.mxu0
            %8793 = vmatprep.mubr.bf16.mxu0 0
            %8794 = vmatmul.mubr.bf16.gmra.mxu0 %v8674
            %v8795 = vpop.f32.mrf.mxu0
            %v8796 = vadd.f32 0.0, %v8795
            %v8797 = vpop.f32.mrf.mxu0
            %v8798 = vpop.f32.mrf.mxu0
            %v8799 = vadd.f32 0.0, %v8798
            %v8800 = vpop.f32.mrf.mxu0
            %8801 = vmatprep.mubr.bf16.mxu0 0
            %8802 = vmatmul.mubr.bf16.gmra.mxu0 %v8677
            %v8803 = vpop.f32.mrf.mxu0
            %v8804 = vadd.f32 0.0, %v8803
            %v8805 = vpop.f32.mrf.mxu0
            %v8806 = vpop.f32.mrf.mxu0
            %v8807 = vadd.f32 0.0, %v8806
            %v8808 = vpop.f32.mrf.mxu0
            %8809 = vmatprep.mubr.bf16.mxu0 0
            %8810 = vmatmul.mubr.bf16.gmra.mxu0 %v8680
            %v8811 = vpop.f32.mrf.mxu0
            %v8812 = vadd.f32 0.0, %v8811
            %v8813 = vpop.f32.mrf.mxu0
            %v8814 = vpop.f32.mrf.mxu0
            %v8815 = vadd.f32 0.0, %v8814
            %v8816 = vpop.f32.mrf.mxu0
            %8817 = vmatprep.mubr.bf16.mxu0 0
            %8818 = vmatmul.mubr.bf16.gmra.mxu0 %v8683
            %v8819 = vpop.f32.mrf.mxu0
            %v8820 = vadd.f32 0.0, %v8819
            %v8821 = vpop.f32.mrf.mxu0
            %v8822 = vpop.f32.mrf.mxu0
            %v8823 = vadd.f32 0.0, %v8822
            %v8824 = vpop.f32.mrf.mxu0
            %8825 = vmatprep.mubr.bf16.mxu0 0
            %8826 = vmatmul.mubr.bf16.gmra.mxu0 %v8686
            %v8827 = vpop.f32.mrf.mxu0
            %v8828 = vadd.f32 0.0, %v8827
            %v8829 = vpop.f32.mrf.mxu0
            %v8830 = vpop.f32.mrf.mxu0
            %v8831 = vadd.f32 0.0, %v8830
            %v8832 = vpop.f32.mrf.mxu0
            %8833 = vmatprep.mubr.bf16.mxu0 0
            %8834 = vmatmul.mubr.bf16.gmra.mxu0 %v8689
            %v8835 = vpop.f32.mrf.mxu0
            %v8836 = vadd.f32 0.0, %v8835
            %v8837 = vpop.f32.mrf.mxu0
            %v8838 = vpop.f32.mrf.mxu0
            %v8839 = vadd.f32 0.0, %v8838
            %v8840 = vpop.f32.mrf.mxu0
            %8841 = vmatprep.mubr.bf16.mxu0 0
            %8842 = vmatmul.mubr.bf16.gmra.mxu0 %v8692
            %v8843 = vpop.f32.mrf.mxu0
            %v8844 = vadd.f32 0.0, %v8843
            %v8845 = vpop.f32.mrf.mxu0
            %v8846 = vpop.f32.mrf.mxu0
            %v8847 = vadd.f32 0.0, %v8846
            %v8848 = vpop.f32.mrf.mxu0
            %8849 = vmatprep.mubr.bf16.mxu0 0
            %8850 = vmatmul.mubr.bf16.gmra.mxu0 %v8695
            %v8851 = vpop.f32.mrf.mxu0
            %v8852 = vadd.f32 0.0, %v8851
            %v8853 = vpop.f32.mrf.mxu0
            %v8854 = vpop.f32.mrf.mxu0
            %v8855 = vadd.f32 0.0, %v8854
            %v8856 = vpop.f32.mrf.mxu0
            %8857 = vdwg.mxu0
            %v8858 = vadd.f32 %v8375, %v8732
            %v8859 = vadd.f32 %v8378, %v8735
            %v8860 = vadd.f32 %v8383, %v8740
            %v8861 = vadd.f32 %v8386, %v8743
            %v8862 = vadd.f32 %v8391, %v8748
            %v8863 = vadd.f32 %v8394, %v8751
            %v8864 = vadd.f32 %v8399, %v8756
            %v8865 = vadd.f32 %v8402, %v8759
            %v8866 = vadd.f32 %v8407, %v8764
            %v8867 = vadd.f32 %v8410, %v8767
            %v8868 = vadd.f32 %v8415, %v8772
            %v8869 = vadd.f32 %v8418, %v8775
            %v8870 = vadd.f32 %v8423, %v8780
            %v8871 = vadd.f32 %v8426, %v8783
            %v8872 = vadd.f32 %v8431, %v8788
            %v8873 = vadd.f32 %v8434, %v8791
            %v8874 = vadd.f32 %v8439, %v8796
            %v8875 = vadd.f32 %v8442, %v8799
            %v8876 = vadd.f32 %v8447, %v8804
            %v8877 = vadd.f32 %v8450, %v8807
            %v8878 = vadd.f32 %v8455, %v8812
            %v8879 = vadd.f32 %v8458, %v8815
            %v8880 = vadd.f32 %v8463, %v8820
            %v8881 = vadd.f32 %v8466, %v8823
            %v8882 = vadd.f32 %v8471, %v8828
            %v8883 = vadd.f32 %v8474, %v8831
            %v8884 = vadd.f32 %v8479, %v8836
            %v8885 = vadd.f32 %v8482, %v8839
            %v8886 = vadd.f32 %v8487, %v8844
            %v8887 = vadd.f32 %v8490, %v8847
            %v8888 = vadd.f32 %v8495, %v8852
            %v8889 = vadd.f32 %v8498, %v8855
            %v8891 = vlaneseq
            %v8892 = vshrl.u32 %v8891, 7
            %v8893 = vsub.s32 0, %v8892
            %v8894 = vrot.slane %v7786, %v8893
            %v8896 = vadd.f32 %v8858, %v8894
            %v8897 = vadd.f32 %v8859, %v8894
            %v8898 = vadd.f32 %v8860, %v8894
            %v8899 = vadd.f32 %v8861, %v8894
            %v8900 = vadd.f32 %v8862, %v8894
            %v8901 = vadd.f32 %v8863, %v8894
            %v8902 = vadd.f32 %v8864, %v8894
            %v8903 = vadd.f32 %v8865, %v8894
            %v8904 = vadd.f32 %v8866, %v8894
            %v8905 = vadd.f32 %v8867, %v8894
            %v8906 = vadd.f32 %v8868, %v8894
            %v8907 = vadd.f32 %v8869, %v8894
            %v8908 = vadd.f32 %v8870, %v8894
            %v8909 = vadd.f32 %v8871, %v8894
            %v8910 = vadd.f32 %v8872, %v8894
            %v8911 = vadd.f32 %v8873, %v8894
            %v8912 = vadd.f32 %v8874, %v8894
            %v8913 = vadd.f32 %v8875, %v8894
            %v8914 = vadd.f32 %v8876, %v8894
            %v8915 = vadd.f32 %v8877, %v8894
            %v8916 = vadd.f32 %v8878, %v8894
            %v8917 = vadd.f32 %v8879, %v8894
            %v8918 = vadd.f32 %v8880, %v8894
            %v8919 = vadd.f32 %v8881, %v8894
            %v8920 = vadd.f32 %v8882, %v8894
            %v8921 = vadd.f32 %v8883, %v8894
            %v8922 = vadd.f32 %v8884, %v8894
            %v8923 = vadd.f32 %v8885, %v8894
            %v8924 = vadd.f32 %v8886, %v8894
            %v8925 = vadd.f32 %v8887, %v8894
            %v8926 = vadd.f32 %v8888, %v8894
            %v8927 = vadd.f32 %v8889, %v8894
            %v8928 = vmax.f32 %v8896, 0.0
            %v8929 = vmax.f32 %v8897, 0.0
            %v8930 = vmax.f32 %v8898, 0.0
            %v8931 = vmax.f32 %v8899, 0.0
            %v8932 = vmax.f32 %v8900, 0.0
            %v8933 = vmax.f32 %v8901, 0.0
            %v8934 = vmax.f32 %v8902, 0.0
            %v8935 = vmax.f32 %v8903, 0.0
            %v8936 = vmax.f32 %v8904, 0.0
            %v8937 = vmax.f32 %v8905, 0.0
            %v8938 = vmax.f32 %v8906, 0.0
            %v8939 = vmax.f32 %v8907, 0.0
            %v8940 = vmax.f32 %v8908, 0.0
            %v8941 = vmax.f32 %v8909, 0.0
            %v8942 = vmax.f32 %v8910, 0.0
            %v8943 = vmax.f32 %v8911, 0.0
            %v8944 = vmax.f32 %v8912, 0.0
            %v8945 = vmax.f32 %v8913, 0.0
            %v8946 = vmax.f32 %v8914, 0.0
            %v8947 = vmax.f32 %v8915, 0.0
            %v8948 = vmax.f32 %v8916, 0.0
            %v8949 = vmax.f32 %v8917, 0.0
            %v8950 = vmax.f32 %v8918, 0.0
            %v8951 = vmax.f32 %v8919, 0.0
            %v8952 = vmax.f32 %v8920, 0.0
            %v8953 = vmax.f32 %v8921, 0.0
            %v8954 = vmax.f32 %v8922, 0.0
            %v8955 = vmax.f32 %v8923, 0.0
            %v8956 = vmax.f32 %v8924, 0.0
            %v8957 = vmax.f32 %v8925, 0.0
            %v8958 = vmax.f32 %v8926, 0.0
            %v8959 = vmax.f32 %v8927, 0.0
            %v8960 = vadd.f32 %v8928, %v5411
            %v8961 = vadd.f32 %v8929, %v5412
            %v8962 = vadd.f32 %v8930, %v5413
            %v8963 = vadd.f32 %v8931, %v5414
            %v8964 = vadd.f32 %v8932, %v5415
            %v8965 = vadd.f32 %v8933, %v5416
            %v8966 = vadd.f32 %v8934, %v5417
            %v8967 = vadd.f32 %v8935, %v5418
            %v8968 = vadd.f32 %v8936, %v5419
            %v8969 = vadd.f32 %v8937, %v5420
            %v8970 = vadd.f32 %v8938, %v5421
            %v8971 = vadd.f32 %v8939, %v5422
            %v8972 = vadd.f32 %v8940, %v5423
            %v8973 = vadd.f32 %v8941, %v5424
            %v8974 = vadd.f32 %v8942, %v5425
            %v8975 = vadd.f32 %v8943, %v5426
            %v8976 = vadd.f32 %v8944, %v5427
            %v8977 = vadd.f32 %v8945, %v5428
            %v8978 = vadd.f32 %v8946, %v5429
            %v8979 = vadd.f32 %v8947, %v5430
            %v8980 = vadd.f32 %v8948, %v5431
            %v8981 = vadd.f32 %v8949, %v5432
            %v8982 = vadd.f32 %v8950, %v5433
            %v8983 = vadd.f32 %v8951, %v5434
            %v8984 = vadd.f32 %v8952, %v5435
            %v8985 = vadd.f32 %v8953, %v5436
            %v8986 = vadd.f32 %v8954, %v5437
            %v8987 = vadd.f32 %v8955, %v5438
            %v8988 = vadd.f32 %v8956, %v5439
            %v8989 = vadd.f32 %v8957, %v5440
            %v8990 = vadd.f32 %v8958, %v5441
            %v8991 = vadd.f32 %v8959, %v5442
            %v8992 = vmax.f32 %v8960, 0.0
            %v8993 = vmax.f32 %v8961, 0.0
            %v8994 = vmax.f32 %v8962, 0.0
            %v8995 = vmax.f32 %v8963, 0.0
            %v8996 = vmax.f32 %v8964, 0.0
            %v8997 = vmax.f32 %v8965, 0.0
            %v8998 = vmax.f32 %v8966, 0.0
            %v8999 = vmax.f32 %v8967, 0.0
            %v9000 = vmax.f32 %v8968, 0.0
            %v9001 = vmax.f32 %v8969, 0.0
            %v9002 = vmax.f32 %v8970, 0.0
            %v9003 = vmax.f32 %v8971, 0.0
            %v9004 = vmax.f32 %v8972, 0.0
            %v9005 = vmax.f32 %v8973, 0.0
            %v9006 = vmax.f32 %v8974, 0.0
            %v9007 = vmax.f32 %v8975, 0.0
            %v9008 = vmax.f32 %v8976, 0.0
            %v9009 = vmax.f32 %v8977, 0.0
            %v9010 = vmax.f32 %v8978, 0.0
            %v9011 = vmax.f32 %v8979, 0.0
            %v9012 = vmax.f32 %v8980, 0.0
            %v9013 = vmax.f32 %v8981, 0.0
            %v9014 = vmax.f32 %v8982, 0.0
            %v9015 = vmax.f32 %v8983, 0.0
            %v9016 = vmax.f32 %v8984, 0.0
            %v9017 = vmax.f32 %v8985, 0.0
            %v9018 = vmax.f32 %v8986, 0.0
            %v9019 = vmax.f32 %v8987, 0.0
            %v9020 = vmax.f32 %v8988, 0.0
            %v9021 = vmax.f32 %v8989, 0.0
            %v9022 = vmax.f32 %v8990, 0.0
            %v9023 = vmax.f32 %v8991, 0.0
          $region76: #{prenet_lstm_forward.1} parent=68 // loop_footer
            %s5410 = sadd.s32 1, %s5406
          $region77: #{prenet_lstm_forward.1} parent=68 // loop_footer_branch
            %5405 = sbr.rel target = $region73
          $region78: #{prenet_lstm_forward.1} parent=68 // loop_exit
            _
          %v9024 = vpack.c.bf16 %v5412, %v5411
          %v9025 = vpack.c.bf16 %v5414, %v5413
          %v9026 = vpack.c.bf16 %v5416, %v5415
          %v9027 = vpack.c.bf16 %v5418, %v5417
          %v9028 = vpack.c.bf16 %v5420, %v5419
          %v9029 = vpack.c.bf16 %v5422, %v5421
          %v9030 = vpack.c.bf16 %v5424, %v5423
          %v9031 = vpack.c.bf16 %v5426, %v5425
          %v9032 = vpack.c.bf16 %v5428, %v5427
          %v9033 = vpack.c.bf16 %v5430, %v5429
          %v9034 = vpack.c.bf16 %v5432, %v5431
          %v9035 = vpack.c.bf16 %v5434, %v5433
          %v9036 = vpack.c.bf16 %v5436, %v5435
          %v9037 = vpack.c.bf16 %v5438, %v5437
          %v9038 = vpack.c.bf16 %v5440, %v5439
          %v9039 = vpack.c.bf16 %v5442, %v5441
          %v9041 = vshrl.u32 %v9024, 16
          %v9043 = vrot.slane %v9041, 7
          %v9044 = vshll.u32 %v9024, 16
          %v9046 = vor.u32 %v9043, %v9044
          %v9048 = vshrl.u32 %v9025, 16
          %v9050 = vrot.slane %v9048, 7
          %v9051 = vshll.u32 %v9025, 16
          %v9053 = vor.u32 %v9050, %v9051
          %v9055 = vshrl.u32 %v9026, 16
          %v9057 = vrot.slane %v9055, 7
          %v9058 = vshll.u32 %v9026, 16
          %v9060 = vor.u32 %v9057, %v9058
          %v9062 = vshrl.u32 %v9027, 16
          %v9064 = vrot.slane %v9062, 7
          %v9065 = vshll.u32 %v9027, 16
          %v9067 = vor.u32 %v9064, %v9065
          %v9069 = vshrl.u32 %v9028, 16
          %v9071 = vrot.slane %v9069, 7
          %v9072 = vshll.u32 %v9028, 16
          %v9074 = vor.u32 %v9071, %v9072
          %v9076 = vshrl.u32 %v9029, 16
          %v9078 = vrot.slane %v9076, 7
          %v9079 = vshll.u32 %v9029, 16
          %v9081 = vor.u32 %v9078, %v9079
          %v9083 = vshrl.u32 %v9030, 16
          %v9085 = vrot.slane %v9083, 7
          %v9086 = vshll.u32 %v9030, 16
          %v9088 = vor.u32 %v9085, %v9086
          %v9090 = vshrl.u32 %v9031, 16
          %v9092 = vrot.slane %v9090, 7
          %v9093 = vshll.u32 %v9031, 16
          %v9095 = vor.u32 %v9092, %v9093
          %v9097 = vshrl.u32 %v9032, 16
          %v9099 = vrot.slane %v9097, 7
          %v9100 = vshll.u32 %v9032, 16
          %v9102 = vor.u32 %v9099, %v9100
          %v9104 = vshrl.u32 %v9033, 16
          %v9106 = vrot.slane %v9104, 7
          %v9107 = vshll.u32 %v9033, 16
          %v9109 = vor.u32 %v9106, %v9107
          %v9111 = vshrl.u32 %v9034, 16
          %v9113 = vrot.slane %v9111, 7
          %v9114 = vshll.u32 %v9034, 16
          %v9116 = vor.u32 %v9113, %v9114
          %v9118 = vshrl.u32 %v9035, 16
          %v9120 = vrot.slane %v9118, 7
          %v9121 = vshll.u32 %v9035, 16
          %v9123 = vor.u32 %v9120, %v9121
          %v9125 = vshrl.u32 %v9036, 16
          %v9127 = vrot.slane %v9125, 7
          %v9128 = vshll.u32 %v9036, 16
          %v9130 = vor.u32 %v9127, %v9128
          %v9132 = vshrl.u32 %v9037, 16
          %v9134 = vrot.slane %v9132, 7
          %v9135 = vshll.u32 %v9037, 16
          %v9137 = vor.u32 %v9134, %v9135
          %v9139 = vshrl.u32 %v9038, 16
          %v9141 = vrot.slane %v9139, 7
          %v9142 = vshll.u32 %v9038, 16
          %v9144 = vor.u32 %v9141, %v9142
          %v9146 = vshrl.u32 %v9039, 16
          %v9148 = vrot.slane %v9146, 7
          %v9149 = vshll.u32 %v9039, 16
          %v9151 = vor.u32 %v9148, %v9149
          %v9168 = vsel %vm831, 0, %v9046
          %v9169 = vsel %vm831, 0, %v9053
          %v9170 = vsel %vm831, 0, %v9060
          %v9171 = vsel %vm831, 0, %v9067
          %v9172 = vsel %vm831, 0, %v9074
          %v9173 = vsel %vm831, 0, %v9081
          %v9174 = vsel %vm831, 0, %v9088
          %v9175 = vsel %vm831, 0, %v9095
          %v9176 = vsel %vm831, 0, %v9102
          %v9177 = vsel %vm831, 0, %v9109
          %v9178 = vsel %vm831, 0, %v9116
          %v9179 = vsel %vm831, 0, %v9123
          %v9180 = vsel %vm831, 0, %v9130
          %v9181 = vsel %vm831, 0, %v9137
          %v9182 = vsel %vm831, 0, %v9144
          %v9183 = vsel %vm831, 0, %v9151
          %v9184 = vrot.slane %v9044, 1
          %v9185 = vor.u32 %v9041, %v9184
          %v9186 = vrot.slane %v9051, 1
          %v9187 = vor.u32 %v9048, %v9186
          %v9188 = vrot.slane %v9058, 1
          %v9189 = vor.u32 %v9055, %v9188
          %v9190 = vrot.slane %v9065, 1
          %v9191 = vor.u32 %v9062, %v9190
          %v9192 = vrot.slane %v9072, 1
          %v9193 = vor.u32 %v9069, %v9192
          %v9194 = vrot.slane %v9079, 1
          %v9195 = vor.u32 %v9076, %v9194
          %v9196 = vrot.slane %v9086, 1
          %v9197 = vor.u32 %v9083, %v9196
          %v9198 = vrot.slane %v9093, 1
          %v9199 = vor.u32 %v9090, %v9198
          %v9200 = vrot.slane %v9100, 1
          %v9201 = vor.u32 %v9097, %v9200
          %v9202 = vrot.slane %v9107, 1
          %v9203 = vor.u32 %v9104, %v9202
          %v9204 = vrot.slane %v9114, 1
          %v9205 = vor.u32 %v9111, %v9204
          %v9206 = vrot.slane %v9121, 1
          %v9207 = vor.u32 %v9118, %v9206
          %v9208 = vrot.slane %v9128, 1
          %v9209 = vor.u32 %v9125, %v9208
          %v9210 = vrot.slane %v9135, 1
          %v9211 = vor.u32 %v9132, %v9210
          %v9212 = vrot.slane %v9142, 1
          %v9213 = vor.u32 %v9139, %v9212
          %v9214 = vrot.slane %v9149, 1
          %v9215 = vor.u32 %v9146, %v9214
          %v9232 = vsel %vm898, %v9185, 0
          %v9233 = vsel %vm898, %v9187, 0
          %v9234 = vsel %vm898, %v9189, 0
          %v9235 = vsel %vm898, %v9191, 0
          %v9236 = vsel %vm898, %v9193, 0
          %v9237 = vsel %vm898, %v9195, 0
          %v9238 = vsel %vm898, %v9197, 0
          %v9239 = vsel %vm898, %v9199, 0
          %v9240 = vsel %vm898, %v9201, 0
          %v9241 = vsel %vm898, %v9203, 0
          %v9242 = vsel %vm898, %v9205, 0
          %v9243 = vsel %vm898, %v9207, 0
          %v9244 = vsel %vm898, %v9209, 0
          %v9245 = vsel %vm898, %v9211, 0
          %v9246 = vsel %vm898, %v9213, 0
          %v9247 = vsel %vm898, %v9215, 0
          %9264 = vrot.lane.b32.xlu0 %v9024, 32
          %v9265 = vpop.permute.xlu0 %9264
          %9266 = vrot.lane.b32.xlu0 %v9025, 32
          %v9267 = vpop.permute.xlu0 %9266
          %9268 = vrot.lane.b32.xlu0 %v9026, 32
          %v9269 = vpop.permute.xlu0 %9268
          %9270 = vrot.lane.b32.xlu0 %v9027, 32
          %v9271 = vpop.permute.xlu0 %9270
          %9272 = vrot.lane.b32.xlu0 %v9028, 32
          %v9273 = vpop.permute.xlu0 %9272
          %9274 = vrot.lane.b32.xlu0 %v9029, 32
          %v9275 = vpop.permute.xlu0 %9274
          %9276 = vrot.lane.b32.xlu0 %v9030, 32
          %v9277 = vpop.permute.xlu0 %9276
          %9278 = vrot.lane.b32.xlu0 %v9031, 32
          %v9279 = vpop.permute.xlu0 %9278
          %9280 = vrot.lane.b32.xlu0 %v9032, 32
          %v9281 = vpop.permute.xlu0 %9280
          %9282 = vrot.lane.b32.xlu0 %v9033, 32
          %v9283 = vpop.permute.xlu0 %9282
          %9284 = vrot.lane.b32.xlu0 %v9034, 32
          %v9285 = vpop.permute.xlu0 %9284
          %9286 = vrot.lane.b32.xlu0 %v9035, 32
          %v9287 = vpop.permute.xlu0 %9286
          %9288 = vrot.lane.b32.xlu0 %v9036, 32
          %v9289 = vpop.permute.xlu0 %9288
          %9290 = vrot.lane.b32.xlu0 %v9037, 32
          %v9291 = vpop.permute.xlu0 %9290
          %9292 = vrot.lane.b32.xlu0 %v9038, 32
          %v9293 = vpop.permute.xlu0 %9292
          %9294 = vrot.lane.b32.xlu0 %v9039, 32
          %v9295 = vpop.permute.xlu0 %9294
          %9312 = vrot.lane.b32.xlu0 %v9232, 64
          %v9313 = vpop.permute.xlu0 %9312
          %9314 = vrot.lane.b32.xlu0 %v9233, 64
          %v9315 = vpop.permute.xlu0 %9314
          %9316 = vrot.lane.b32.xlu0 %v9234, 64
          %v9317 = vpop.permute.xlu0 %9316
          %9318 = vrot.lane.b32.xlu0 %v9235, 64
          %v9319 = vpop.permute.xlu0 %9318
          %9320 = vrot.lane.b32.xlu0 %v9236, 64
          %v9321 = vpop.permute.xlu0 %9320
          %9322 = vrot.lane.b32.xlu0 %v9237, 64
          %v9323 = vpop.permute.xlu0 %9322
          %9324 = vrot.lane.b32.xlu0 %v9238, 64
          %v9325 = vpop.permute.xlu0 %9324
          %9326 = vrot.lane.b32.xlu0 %v9239, 64
          %v9327 = vpop.permute.xlu0 %9326
          %9328 = vrot.lane.b32.xlu0 %v9240, 64
          %v9329 = vpop.permute.xlu0 %9328
          %9330 = vrot.lane.b32.xlu0 %v9241, 64
          %v9331 = vpop.permute.xlu0 %9330
          %9332 = vrot.lane.b32.xlu0 %v9242, 64
          %v9333 = vpop.permute.xlu0 %9332
          %9334 = vrot.lane.b32.xlu0 %v9243, 64
          %v9335 = vpop.permute.xlu0 %9334
          %9336 = vrot.lane.b32.xlu0 %v9244, 64
          %v9337 = vpop.permute.xlu0 %9336
          %9338 = vrot.lane.b32.xlu0 %v9245, 64
          %v9339 = vpop.permute.xlu0 %9338
          %9340 = vrot.lane.b32.xlu0 %v9246, 64
          %v9341 = vpop.permute.xlu0 %9340
          %9342 = vrot.lane.b32.xlu0 %v9247, 64
          %v9343 = vpop.permute.xlu0 %9342
          %v9346 = vsel %vm2481, %v9168, %v9265
          %v9349 = vsel %vm2481, %v9169, %v9267
          %v9352 = vsel %vm2481, %v9170, %v9269
          %v9355 = vsel %vm2481, %v9171, %v9271
          %v9358 = vsel %vm2481, %v9172, %v9273
          %v9361 = vsel %vm2481, %v9173, %v9275
          %v9364 = vsel %vm2481, %v9174, %v9277
          %v9367 = vsel %vm2481, %v9175, %v9279
          %v9370 = vsel %vm2481, %v9176, %v9281
          %v9373 = vsel %vm2481, %v9177, %v9283
          %v9376 = vsel %vm2481, %v9178, %v9285
          %v9379 = vsel %vm2481, %v9179, %v9287
          %v9382 = vsel %vm2481, %v9180, %v9289
          %v9385 = vsel %vm2481, %v9181, %v9291
          %v9388 = vsel %vm2481, %v9182, %v9293
          %v9391 = vsel %vm2481, %v9183, %v9295
          %v9393 = vsel %vm2786, %v9346, %v9313
          %v9395 = vsel %vm2786, %v9349, %v9315
          %v9397 = vsel %vm2786, %v9352, %v9317
          %v9399 = vsel %vm2786, %v9355, %v9319
          %v9401 = vsel %vm2786, %v9358, %v9321
          %v9403 = vsel %vm2786, %v9361, %v9323
          %v9405 = vsel %vm2786, %v9364, %v9325
          %v9407 = vsel %vm2786, %v9367, %v9327
          %v9409 = vsel %vm2786, %v9370, %v9329
          %v9411 = vsel %vm2786, %v9373, %v9331
          %v9413 = vsel %vm2786, %v9376, %v9333
          %v9415 = vsel %vm2786, %v9379, %v9335
          %v9417 = vsel %vm2786, %v9382, %v9337
          %v9419 = vsel %vm2786, %v9385, %v9339
          %v9421 = vsel %vm2786, %v9388, %v9341
          %v9423 = vsel %vm2786, %v9391, %v9343
          %v9440 = vunpack.c.l.b16 %v9393
          %v9441 = vunpack.c.h.b16 %v9393
          %v9442 = vunpack.c.l.b16 %v9395
          %v9443 = vunpack.c.h.b16 %v9395
          %v9444 = vunpack.c.l.b16 %v9397
          %v9445 = vunpack.c.h.b16 %v9397
          %v9446 = vunpack.c.l.b16 %v9399
          %v9447 = vunpack.c.h.b16 %v9399
          %v9448 = vunpack.c.l.b16 %v9401
          %v9449 = vunpack.c.h.b16 %v9401
          %v9450 = vunpack.c.l.b16 %v9403
          %v9451 = vunpack.c.h.b16 %v9403
          %v9452 = vunpack.c.l.b16 %v9405
          %v9453 = vunpack.c.h.b16 %v9405
          %v9454 = vunpack.c.l.b16 %v9407
          %v9455 = vunpack.c.h.b16 %v9407
          %v9456 = vunpack.c.l.b16 %v9409
          %v9457 = vunpack.c.h.b16 %v9409
          %v9458 = vunpack.c.l.b16 %v9411
          %v9459 = vunpack.c.h.b16 %v9411
          %v9460 = vunpack.c.l.b16 %v9413
          %v9461 = vunpack.c.h.b16 %v9413
          %v9462 = vunpack.c.l.b16 %v9415
          %v9463 = vunpack.c.h.b16 %v9415
          %v9464 = vunpack.c.l.b16 %v9417
          %v9465 = vunpack.c.h.b16 %v9417
          %v9466 = vunpack.c.l.b16 %v9419
          %v9467 = vunpack.c.h.b16 %v9419
          %v9468 = vunpack.c.l.b16 %v9421
          %v9469 = vunpack.c.h.b16 %v9421
          %v9470 = vunpack.c.l.b16 %v9423
          %v9471 = vunpack.c.h.b16 %v9423
          %v9472 = vpack.c.b16 %v9440, %v9440
          %v9473 = vpack.c.b16 %v9441, %v9441
          %v9474 = vpack.c.b16 %v9442, %v9442
          %v9475 = vpack.c.b16 %v9443, %v9443
          %v9476 = vpack.c.b16 %v9444, %v9444
          %v9477 = vpack.c.b16 %v9445, %v9445
          %v9478 = vpack.c.b16 %v9446, %v9446
          %v9479 = vpack.c.b16 %v9447, %v9447
          %v9480 = vpack.c.b16 %v9448, %v9448
          %v9481 = vpack.c.b16 %v9449, %v9449
          %v9482 = vpack.c.b16 %v9450, %v9450
          %v9483 = vpack.c.b16 %v9451, %v9451
          %v9484 = vpack.c.b16 %v9452, %v9452
          %v9485 = vpack.c.b16 %v9453, %v9453
          %v9486 = vpack.c.b16 %v9454, %v9454
          %v9487 = vpack.c.b16 %v9455, %v9455
          %v9488 = vpack.c.b16 %v9456, %v9456
          %v9489 = vpack.c.b16 %v9457, %v9457
          %v9490 = vpack.c.b16 %v9458, %v9458
          %v9491 = vpack.c.b16 %v9459, %v9459
          %v9492 = vpack.c.b16 %v9460, %v9460
          %v9493 = vpack.c.b16 %v9461, %v9461
          %v9494 = vpack.c.b16 %v9462, %v9462
          %v9495 = vpack.c.b16 %v9463, %v9463
          %v9496 = vpack.c.b16 %v9464, %v9464
          %v9497 = vpack.c.b16 %v9465, %v9465
          %v9498 = vpack.c.b16 %v9466, %v9466
          %v9499 = vpack.c.b16 %v9467, %v9467
          %v9500 = vpack.c.b16 %v9468, %v9468
          %v9501 = vpack.c.b16 %v9469, %v9469
          %v9502 = vpack.c.b16 %v9470, %v9470
          %v9503 = vpack.c.b16 %v9471, %v9471
          %vm9536 = vcmask 781312
          %9537 = vst.msk [vmem:[%s1205] sm:$0xf] %vm9536, %v9472
          %9538 = vst.msk [vmem:[%s1205 + $0x8] sm:$0xf] %vm9536, %v9473
          %9539 = vst.msk [vmem:[%s1205 + $0x10] sm:$0xf] %vm9536, %v9474
          %9540 = vst.msk [vmem:[%s1205 + $0x18] sm:$0xf] %vm9536, %v9475
          %9541 = vst.msk [vmem:[%s1205 + $0x20] sm:$0xf] %vm9536, %v9476
          %9542 = vst.msk [vmem:[%s1205 + $0x28] sm:$0xf] %vm9536, %v9477
          %9543 = vst.msk [vmem:[%s1205 + $0x30] sm:$0xf] %vm9536, %v9478
          %9544 = vst.msk [vmem:[%s1205 + $0x38] sm:$0xf] %vm9536, %v9479
          %9545 = vst.msk [vmem:[%s1205 + $0x40] sm:$0xf] %vm9536, %v9480
          %9546 = vst.msk [vmem:[%s1205 + $0x48] sm:$0xf] %vm9536, %v9481
          %9547 = vst.msk [vmem:[%s1205 + $0x50] sm:$0xf] %vm9536, %v9482
          %9548 = vst.msk [vmem:[%s1205 + $0x58] sm:$0xf] %vm9536, %v9483
          %9549 = vst.msk [vmem:[%s1205 + $0x60] sm:$0xf] %vm9536, %v9484
          %9550 = vst.msk [vmem:[%s1205 + $0x68] sm:$0xf] %vm9536, %v9485
          %9551 = vst.msk [vmem:[%s1205 + $0x70] sm:$0xf] %vm9536, %v9486
          %9552 = vst.msk [vmem:[%s1205 + $0x78] sm:$0xf] %vm9536, %v9487
          %9553 = vst.msk [vmem:[%s1205 + $0x80] sm:$0xf] %vm9536, %v9488
          %9554 = vst.msk [vmem:[%s1205 + $0x88] sm:$0xf] %vm9536, %v9489
          %9555 = vst.msk [vmem:[%s1205 + $0x90] sm:$0xf] %vm9536, %v9490
          %9556 = vst.msk [vmem:[%s1205 + $0x98] sm:$0xf] %vm9536, %v9491
          %9557 = vst.msk [vmem:[%s1205 + $0xa0] sm:$0xf] %vm9536, %v9492
          %9558 = vst.msk [vmem:[%s1205 + $0xa8] sm:$0xf] %vm9536, %v9493
          %9559 = vst.msk [vmem:[%s1205 + $0xb0] sm:$0xf] %vm9536, %v9494
          %9560 = vst.msk [vmem:[%s1205 + $0xb8] sm:$0xf] %vm9536, %v9495
          %9561 = vst.msk [vmem:[%s1205 + $0xc0] sm:$0xf] %vm9536, %v9496
          %9562 = vst.msk [vmem:[%s1205 + $0xc8] sm:$0xf] %vm9536, %v9497
          %9563 = vst.msk [vmem:[%s1205 + $0xd0] sm:$0xf] %vm9536, %v9498
          %9564 = vst.msk [vmem:[%s1205 + $0xd8] sm:$0xf] %vm9536, %v9499
          %9565 = vst.msk [vmem:[%s1205 + $0xe0] sm:$0xf] %vm9536, %v9500
          %9566 = vst.msk [vmem:[%s1205 + $0xe8] sm:$0xf] %vm9536, %v9501
          %9567 = vst.msk [vmem:[%s1205 + $0xf0] sm:$0xf] %vm9536, %v9502
          %9568 = vst.msk [vmem:[%s1205 + $0xf8] sm:$0xf] %vm9536, %v9503
          %v9569 = vld [vmem:[%s9] sm:$0xf]
          %v9570 = vld [vmem:[%s9 + $0x4] sm:$0xf]
          %v9571 = vld [vmem:[%s9 + $0x8] sm:$0xf]
          %v9572 = vld [vmem:[%s9 + $0xc] sm:$0xf]
          %v9573 = vld [vmem:[%s9 + $0x10] sm:$0xf]
          %v9574 = vld [vmem:[%s9 + $0x14] sm:$0xf]
          %v9575 = vld [vmem:[%s9 + $0x18] sm:$0xf]
          %v9576 = vld [vmem:[%s9 + $0x1c] sm:$0xf]
          %v9577 = vld [vmem:[%s9 + $0x20] sm:$0xf]
          %v9578 = vld [vmem:[%s9 + $0x24] sm:$0xf]
          %v9579 = vld [vmem:[%s9 + $0x28] sm:$0xf]
          %v9580 = vld [vmem:[%s9 + $0x2c] sm:$0xf]
          %v9581 = vld [vmem:[%s9 + $0x30] sm:$0xf]
          %v9582 = vld [vmem:[%s9 + $0x34] sm:$0xf]
          %v9583 = vld [vmem:[%s9 + $0x38] sm:$0xf]
          %v9584 = vld [vmem:[%s9 + $0x3c] sm:$0xf]
          %v9585 = vld [vmem:[%s9 + $0x40] sm:$0xf]
          %v9586 = vld [vmem:[%s9 + $0x44] sm:$0xf]
          %v9587 = vld [vmem:[%s9 + $0x48] sm:$0xf]
          %v9588 = vld [vmem:[%s9 + $0x4c] sm:$0xf]
          %v9589 = vld [vmem:[%s9 + $0x50] sm:$0xf]
          %v9590 = vld [vmem:[%s9 + $0x54] sm:$0xf]
          %v9591 = vld [vmem:[%s9 + $0x58] sm:$0xf]
          %v9592 = vld [vmem:[%s9 + $0x5c] sm:$0xf]
          %v9593 = vld [vmem:[%s9 + $0x60] sm:$0xf]
          %v9594 = vld [vmem:[%s9 + $0x64] sm:$0xf]
          %v9595 = vld [vmem:[%s9 + $0x68] sm:$0xf]
          %v9596 = vld [vmem:[%s9 + $0x6c] sm:$0xf]
          %v9597 = vld [vmem:[%s9 + $0x70] sm:$0xf]
          %v9598 = vld [vmem:[%s9 + $0x74] sm:$0xf]
          %v9599 = vld [vmem:[%s9 + $0x78] sm:$0xf]
          %v9600 = vld [vmem:[%s9 + $0x7c] sm:$0xf]
          %v9601 = vld [vmem:[%s9 + $0x80] sm:$0xf]
          %v9602 = vld [vmem:[%s9 + $0x84] sm:$0xf]
          %v9603 = vld [vmem:[%s9 + $0x88] sm:$0xf]
          %v9604 = vld [vmem:[%s9 + $0x8c] sm:$0xf]
          %v9605 = vld [vmem:[%s10] sm:$0x1]
          %v9606 = vld [vmem:[#allocation2] sm:$0xf]
          %v9607 = vld [vmem:[#allocation2 + $0x8] sm:$0xf]
          %v9608 = vld [vmem:[#allocation2 + $0x10] sm:$0xf]
          %v9609 = vld [vmem:[#allocation2 + $0x18] sm:$0xf]
          %v9610 = vld [vmem:[#allocation2 + $0x20] sm:$0xf]
          %v9611 = vld [vmem:[#allocation2 + $0x28] sm:$0xf]
          %v9612 = vld [vmem:[#allocation2 + $0x30] sm:$0xf]
          %v9613 = vld [vmem:[#allocation2 + $0x38] sm:$0xf]
          %v9614 = vld [vmem:[#allocation2 + $0x40] sm:$0xf]
          %v9615 = vld [vmem:[#allocation2 + $0x48] sm:$0xf]
          %v9616 = vld [vmem:[#allocation2 + $0x50] sm:$0xf]
          %v9617 = vld [vmem:[#allocation2 + $0x58] sm:$0xf]
          %v9618 = vld [vmem:[#allocation2 + $0x60] sm:$0xf]
          %v9619 = vld [vmem:[#allocation2 + $0x68] sm:$0xf]
          %v9620 = vld [vmem:[#allocation2 + $0x70] sm:$0xf]
          %v9621 = vld [vmem:[#allocation2 + $0x78] sm:$0xf]
          %v9622 = vld [vmem:[#allocation2 + $0x80] sm:$0xf]
          %v9623 = vld [vmem:[#allocation2 + $0x88] sm:$0xf]
          %v9624 = vld [vmem:[#allocation2 + $0x90] sm:$0xf]
          %v9625 = vld [vmem:[#allocation2 + $0x98] sm:$0xf]
          %v9626 = vld [vmem:[#allocation2 + $0xa0] sm:$0xf]
          %v9627 = vld [vmem:[#allocation2 + $0xa8] sm:$0xf]
          %v9628 = vld [vmem:[#allocation2 + $0xb0] sm:$0xf]
          %v9629 = vld [vmem:[#allocation2 + $0xb8] sm:$0xf]
          %v9630 = vld [vmem:[#allocation2 + $0xc0] sm:$0xf]
          %v9631 = vld [vmem:[#allocation2 + $0xc8] sm:$0xf]
          %v9632 = vld [vmem:[#allocation2 + $0xd0] sm:$0xf]
          %v9633 = vld [vmem:[#allocation2 + $0xd8] sm:$0xf]
          %v9634 = vld [vmem:[#allocation2 + $0xe0] sm:$0xf]
          %v9635 = vld [vmem:[#allocation2 + $0xe8] sm:$0xf]
          %v9636 = vld [vmem:[#allocation2 + $0xf0] sm:$0xf]
          %v9637 = vld [vmem:[#allocation2 + $0xf8] sm:$0xf]
          %v9638 = vld [vmem:[%s1205] sm:$0xf]
          %v9639 = vld [vmem:[%s1205 + $0x8] sm:$0xf]
          %v9640 = vld [vmem:[%s1205 + $0x10] sm:$0xf]
          %v9641 = vld [vmem:[%s1205 + $0x18] sm:$0xf]
          %v9642 = vld [vmem:[%s1205 + $0x20] sm:$0xf]
          %v9643 = vld [vmem:[%s1205 + $0x28] sm:$0xf]
          %v9644 = vld [vmem:[%s1205 + $0x30] sm:$0xf]
          %v9645 = vld [vmem:[%s1205 + $0x38] sm:$0xf]
          %v9646 = vld [vmem:[%s1205 + $0x40] sm:$0xf]
          %v9647 = vld [vmem:[%s1205 + $0x48] sm:$0xf]
          %v9648 = vld [vmem:[%s1205 + $0x50] sm:$0xf]
          %v9649 = vld [vmem:[%s1205 + $0x58] sm:$0xf]
          %v9650 = vld [vmem:[%s1205 + $0x60] sm:$0xf]
          %v9651 = vld [vmem:[%s1205 + $0x68] sm:$0xf]
          %v9652 = vld [vmem:[%s1205 + $0x70] sm:$0xf]
          %v9653 = vld [vmem:[%s1205 + $0x78] sm:$0xf]
          %v9654 = vld [vmem:[%s1205 + $0x80] sm:$0xf]
          %v9655 = vld [vmem:[%s1205 + $0x88] sm:$0xf]
          %v9656 = vld [vmem:[%s1205 + $0x90] sm:$0xf]
          %v9657 = vld [vmem:[%s1205 + $0x98] sm:$0xf]
          %v9658 = vld [vmem:[%s1205 + $0xa0] sm:$0xf]
          %v9659 = vld [vmem:[%s1205 + $0xa8] sm:$0xf]
          %v9660 = vld [vmem:[%s1205 + $0xb0] sm:$0xf]
          %v9661 = vld [vmem:[%s1205 + $0xb8] sm:$0xf]
          %v9662 = vld [vmem:[%s1205 + $0xc0] sm:$0xf]
          %v9663 = vld [vmem:[%s1205 + $0xc8] sm:$0xf]
          %v9664 = vld [vmem:[%s1205 + $0xd0] sm:$0xf]
          %v9665 = vld [vmem:[%s1205 + $0xd8] sm:$0xf]
          %v9666 = vld [vmem:[%s1205 + $0xe0] sm:$0xf]
          %v9667 = vld [vmem:[%s1205 + $0xe8] sm:$0xf]
          %v9668 = vld [vmem:[%s1205 + $0xf0] sm:$0xf]
          %v9669 = vld [vmem:[%s1205 + $0xf8] sm:$0xf]
          %v9702 = vunpack.c.l.b16 %v9638
          %v9703 = vunpack.c.l.b16 %v9639
          %v9704 = vunpack.c.l.b16 %v9640
          %v9705 = vunpack.c.l.b16 %v9641
          %v9706 = vunpack.c.l.b16 %v9642
          %v9707 = vunpack.c.l.b16 %v9643
          %v9708 = vunpack.c.l.b16 %v9644
          %v9709 = vunpack.c.l.b16 %v9645
          %v9710 = vunpack.c.l.b16 %v9646
          %v9711 = vunpack.c.l.b16 %v9647
          %v9712 = vunpack.c.l.b16 %v9648
          %v9713 = vunpack.c.l.b16 %v9649
          %v9714 = vunpack.c.l.b16 %v9650
          %v9715 = vunpack.c.l.b16 %v9651
          %v9716 = vunpack.c.l.b16 %v9652
          %v9717 = vunpack.c.l.b16 %v9653
          %v9718 = vunpack.c.l.b16 %v9654
          %v9719 = vunpack.c.l.b16 %v9655
          %v9720 = vunpack.c.l.b16 %v9656
          %v9721 = vunpack.c.l.b16 %v9657
          %v9722 = vunpack.c.l.b16 %v9658
          %v9723 = vunpack.c.l.b16 %v9659
          %v9724 = vunpack.c.l.b16 %v9660
          %v9725 = vunpack.c.l.b16 %v9661
          %v9726 = vunpack.c.l.b16 %v9662
          %v9727 = vunpack.c.l.b16 %v9663
          %v9728 = vunpack.c.l.b16 %v9664
          %v9729 = vunpack.c.l.b16 %v9665
          %v9730 = vunpack.c.l.b16 %v9666
          %v9731 = vunpack.c.l.b16 %v9667
          %v9732 = vunpack.c.l.b16 %v9668
          %v9733 = vunpack.c.l.b16 %v9669
          %v9734 = vpack.c.b16 %v9703, %v9702
          %v9735 = vpack.c.b16 %v9705, %v9704
          %v9736 = vpack.c.b16 %v9707, %v9706
          %v9737 = vpack.c.b16 %v9709, %v9708
          %v9738 = vpack.c.b16 %v9711, %v9710
          %v9739 = vpack.c.b16 %v9713, %v9712
          %v9740 = vpack.c.b16 %v9715, %v9714
          %v9741 = vpack.c.b16 %v9717, %v9716
          %v9742 = vpack.c.b16 %v9719, %v9718
          %v9743 = vpack.c.b16 %v9721, %v9720
          %v9744 = vpack.c.b16 %v9723, %v9722
          %v9745 = vpack.c.b16 %v9725, %v9724
          %v9746 = vpack.c.b16 %v9727, %v9726
          %v9747 = vpack.c.b16 %v9729, %v9728
          %v9748 = vpack.c.b16 %v9731, %v9730
          %v9749 = vpack.c.b16 %v9733, %v9732
          %v9762 = vunpack.c.l.b16 %v9581
          %v9763 = vunpack.c.l.b16 %v9582
          %v9764 = vunpack.c.l.b16 %v9583
          %v9765 = vunpack.c.l.b16 %v9584
          %v9766 = vunpack.c.l.b16 %v9585
          %v9767 = vunpack.c.l.b16 %v9586
          %v9768 = vunpack.c.l.b16 %v9587
          %v9769 = vunpack.c.l.b16 %v9588
          %v9770 = vunpack.c.l.b16 %v9589
          %v9771 = vunpack.c.l.b16 %v9590
          %v9772 = vunpack.c.l.b16 %v9591
          %v9773 = vunpack.c.l.b16 %v9592
          %v9774 = vpack.c.b16 %v9763, %v9762
          %v9775 = vpack.c.b16 %v9765, %v9764
          %v9776 = vpack.c.b16 %v9767, %v9766
          %v9777 = vpack.c.b16 %v9769, %v9768
          %v9778 = vpack.c.b16 %v9771, %v9770
          %v9779 = vpack.c.b16 %v9773, %v9772
          %vm9786 = vcmask 785408
          %v9788 = vsel %vm9786, %v9734, 0
          %v9791 = vsel %vm9786, %v9735, 0
          %v9794 = vsel %vm9786, %v9736, 0
          %v9797 = vsel %vm9786, %v9737, 0
          %v9800 = vsel %vm9786, %v9738, 0
          %v9803 = vsel %vm9786, %v9739, 0
          %v9806 = vsel %vm9786, %v9740, 0
          %v9809 = vsel %vm9786, %v9741, 0
          %v9812 = vsel %vm9786, %v9742, 0
          %v9815 = vsel %vm9786, %v9743, 0
          %v9818 = vsel %vm9786, %v9744, 0
          %v9821 = vsel %vm9786, %v9745, 0
          %v9824 = vsel %vm9786, %v9746, 0
          %v9827 = vsel %vm9786, %v9747, 0
          %v9830 = vsel %vm9786, %v9748, 0
          %v9833 = vsel %vm9786, %v9749, 0
          %9835 = vmatprep.subr.bf16.mxu0 0
          %9836 = vmatpush1.bf16.msra.mxu0 0
          %9837 = vmatprep.subr.bf16.mxu0 0
          %9838 = vmatpush1.bf16.msra.mxu0 0
          %9839 = vmatprep.subr.bf16.mxu0 0
          %9840 = vmatpush1.bf16.msra.mxu0 %v9779
          %9841 = vmatprep.subr.bf16.mxu0 0
          %9842 = vmatpush1.bf16.msra.mxu0 %v9778
          %9843 = vmatprep.subr.bf16.mxu0 0
          %9844 = vmatpush1.bf16.msra.mxu0 %v9777
          %9845 = vmatprep.subr.bf16.mxu0 0
          %9846 = vmatpush1.bf16.msra.mxu0 %v9776
          %9847 = vmatprep.subr.bf16.mxu0 0
          %9848 = vmatpush1.bf16.msra.mxu0 %v9775
          %9849 = vmatprep.subr.bf16.mxu0 0
          %9850 = vmatpush1.bf16.msra.mxu0 %v9774
          %9851 = vmatprep.subr.bf16.mxu0 0
          %9852 = vmatpush2.bf16.msra.mxu0 0
          %9853 = vmatprep.subr.bf16.mxu0 0
          %9854 = vmatpush2.bf16.msra.mxu0 0
          %9855 = vmatprep.subr.bf16.mxu0 0
          %9856 = vmatpush2.bf16.msra.mxu0 0
          %9857 = vmatprep.subr.bf16.mxu0 0
          %9858 = vmatpush2.bf16.msra.mxu0 0
          %9859 = vmatprep.subr.bf16.mxu0 0
          %9860 = vmatpush2.bf16.msra.mxu0 0
          %9861 = vmatprep.subr.bf16.mxu0 0
          %9862 = vmatpush2.bf16.msra.mxu0 0
          %9863 = vmatprep.subr.bf16.mxu0 0
          %9864 = vmatpush2.bf16.msra.mxu0 0
          %9865 = vmatprep.subr.bf16.mxu0 0
          %9866 = vmatpush2.bf16.msra.mxu0 0
          %9867 = vmatprep.mubr.bf16.mxu0 0
          %9868 = vmatmul.mubr.bf16.gmra.mxu0 %v9788
          %v9869 = vpop.f32.mrf.mxu0
          %v9870 = vadd.f32 0.0, %v9869
          %v9871 = vpop.f32.mrf.mxu0
          %v9872 = vpop.f32.mrf.mxu0
          %v9873 = vadd.f32 0.0, %v9872
          %v9874 = vpop.f32.mrf.mxu0
          %9875 = vmatprep.mubr.bf16.mxu0 0
          %9876 = vmatmul.mubr.bf16.gmra.mxu0 %v9791
          %v9877 = vpop.f32.mrf.mxu0
          %v9878 = vadd.f32 0.0, %v9877
          %v9879 = vpop.f32.mrf.mxu0
          %v9880 = vpop.f32.mrf.mxu0
          %v9881 = vadd.f32 0.0, %v9880
          %v9882 = vpop.f32.mrf.mxu0
          %9883 = vmatprep.mubr.bf16.mxu0 0
          %9884 = vmatmul.mubr.bf16.gmra.mxu0 %v9794
          %v9885 = vpop.f32.mrf.mxu0
          %v9886 = vadd.f32 0.0, %v9885
          %v9887 = vpop.f32.mrf.mxu0
          %v9888 = vpop.f32.mrf.mxu0
          %v9889 = vadd.f32 0.0, %v9888
          %v9890 = vpop.f32.mrf.mxu0
          %9891 = vmatprep.mubr.bf16.mxu0 0
          %9892 = vmatmul.mubr.bf16.gmra.mxu0 %v9797
          %v9893 = vpop.f32.mrf.mxu0
          %v9894 = vadd.f32 0.0, %v9893
          %v9895 = vpop.f32.mrf.mxu0
          %v9896 = vpop.f32.mrf.mxu0
          %v9897 = vadd.f32 0.0, %v9896
          %v9898 = vpop.f32.mrf.mxu0
          %9899 = vmatprep.mubr.bf16.mxu0 0
          %9900 = vmatmul.mubr.bf16.gmra.mxu0 %v9800
          %v9901 = vpop.f32.mrf.mxu0
          %v9902 = vadd.f32 0.0, %v9901
          %v9903 = vpop.f32.mrf.mxu0
          %v9904 = vpop.f32.mrf.mxu0
          %v9905 = vadd.f32 0.0, %v9904
          %v9906 = vpop.f32.mrf.mxu0
          %9907 = vmatprep.mubr.bf16.mxu0 0
          %9908 = vmatmul.mubr.bf16.gmra.mxu0 %v9803
          %v9909 = vpop.f32.mrf.mxu0
          %v9910 = vadd.f32 0.0, %v9909
          %v9911 = vpop.f32.mrf.mxu0
          %v9912 = vpop.f32.mrf.mxu0
          %v9913 = vadd.f32 0.0, %v9912
          %v9914 = vpop.f32.mrf.mxu0
          %9915 = vmatprep.mubr.bf16.mxu0 0
          %9916 = vmatmul.mubr.bf16.gmra.mxu0 %v9806
          %v9917 = vpop.f32.mrf.mxu0
          %v9918 = vadd.f32 0.0, %v9917
          %v9919 = vpop.f32.mrf.mxu0
          %v9920 = vpop.f32.mrf.mxu0
          %v9921 = vadd.f32 0.0, %v9920
          %v9922 = vpop.f32.mrf.mxu0
          %9923 = vmatprep.mubr.bf16.mxu0 0
          %9924 = vmatmul.mubr.bf16.gmra.mxu0 %v9809
          %v9925 = vpop.f32.mrf.mxu0
          %v9926 = vadd.f32 0.0, %v9925
          %v9927 = vpop.f32.mrf.mxu0
          %v9928 = vpop.f32.mrf.mxu0
          %v9929 = vadd.f32 0.0, %v9928
          %v9930 = vpop.f32.mrf.mxu0
          %9931 = vmatprep.mubr.bf16.mxu0 0
          %9932 = vmatmul.mubr.bf16.gmra.mxu0 %v9812
          %v9933 = vpop.f32.mrf.mxu0
          %v9934 = vadd.f32 0.0, %v9933
          %v9935 = vpop.f32.mrf.mxu0
          %v9936 = vpop.f32.mrf.mxu0
          %v9937 = vadd.f32 0.0, %v9936
          %v9938 = vpop.f32.mrf.mxu0
          %9939 = vmatprep.mubr.bf16.mxu0 0
          %9940 = vmatmul.mubr.bf16.gmra.mxu0 %v9815
          %v9941 = vpop.f32.mrf.mxu0
          %v9942 = vadd.f32 0.0, %v9941
          %v9943 = vpop.f32.mrf.mxu0
          %v9944 = vpop.f32.mrf.mxu0
          %v9945 = vadd.f32 0.0, %v9944
          %v9946 = vpop.f32.mrf.mxu0
          %9947 = vmatprep.mubr.bf16.mxu0 0
          %9948 = vmatmul.mubr.bf16.gmra.mxu0 %v9818
          %v9949 = vpop.f32.mrf.mxu0
          %v9950 = vadd.f32 0.0, %v9949
          %v9951 = vpop.f32.mrf.mxu0
          %v9952 = vpop.f32.mrf.mxu0
          %v9953 = vadd.f32 0.0, %v9952
          %v9954 = vpop.f32.mrf.mxu0
          %9955 = vmatprep.mubr.bf16.mxu0 0
          %9956 = vmatmul.mubr.bf16.gmra.mxu0 %v9821
          %v9957 = vpop.f32.mrf.mxu0
          %v9958 = vadd.f32 0.0, %v9957
          %v9959 = vpop.f32.mrf.mxu0
          %v9960 = vpop.f32.mrf.mxu0
          %v9961 = vadd.f32 0.0, %v9960
          %v9962 = vpop.f32.mrf.mxu0
          %9963 = vmatprep.mubr.bf16.mxu0 0
          %9964 = vmatmul.mubr.bf16.gmra.mxu0 %v9824
          %v9965 = vpop.f32.mrf.mxu0
          %v9966 = vadd.f32 0.0, %v9965
          %v9967 = vpop.f32.mrf.mxu0
          %v9968 = vpop.f32.mrf.mxu0
          %v9969 = vadd.f32 0.0, %v9968
          %v9970 = vpop.f32.mrf.mxu0
          %9971 = vmatprep.mubr.bf16.mxu0 0
          %9972 = vmatmul.mubr.bf16.gmra.mxu0 %v9827
          %v9973 = vpop.f32.mrf.mxu0
          %v9974 = vadd.f32 0.0, %v9973
          %v9975 = vpop.f32.mrf.mxu0
          %v9976 = vpop.f32.mrf.mxu0
          %v9977 = vadd.f32 0.0, %v9976
          %v9978 = vpop.f32.mrf.mxu0
          %9979 = vmatprep.mubr.bf16.mxu0 0
          %9980 = vmatmul.mubr.bf16.gmra.mxu0 %v9830
          %v9981 = vpop.f32.mrf.mxu0
          %v9982 = vadd.f32 0.0, %v9981
          %v9983 = vpop.f32.mrf.mxu0
          %v9984 = vpop.f32.mrf.mxu0
          %v9985 = vadd.f32 0.0, %v9984
          %v9986 = vpop.f32.mrf.mxu0
          %9987 = vmatprep.mubr.bf16.mxu0 0
          %9988 = vmatmul.mubr.bf16.gmra.mxu0 %v9833
          %v9989 = vpop.f32.mrf.mxu0
          %v9990 = vadd.f32 0.0, %v9989
          %v9991 = vpop.f32.mrf.mxu0
          %v9992 = vpop.f32.mrf.mxu0
          %v9993 = vadd.f32 0.0, %v9992
          %v9994 = vpop.f32.mrf.mxu0
          %9995 = vdwg.mxu0
          %v10028 = vunpack.c.l.b16 %v9606
          %v10029 = vunpack.c.l.b16 %v9607
          %v10030 = vunpack.c.l.b16 %v9608
          %v10031 = vunpack.c.l.b16 %v9609
          %v10032 = vunpack.c.l.b16 %v9610
          %v10033 = vunpack.c.l.b16 %v9611
          %v10034 = vunpack.c.l.b16 %v9612
          %v10035 = vunpack.c.l.b16 %v9613
          %v10036 = vunpack.c.l.b16 %v9614
          %v10037 = vunpack.c.l.b16 %v9615
          %v10038 = vunpack.c.l.b16 %v9616
          %v10039 = vunpack.c.l.b16 %v9617
          %v10040 = vunpack.c.l.b16 %v9618
          %v10041 = vunpack.c.l.b16 %v9619
          %v10042 = vunpack.c.l.b16 %v9620
          %v10043 = vunpack.c.l.b16 %v9621
          %v10044 = vunpack.c.l.b16 %v9622
          %v10045 = vunpack.c.l.b16 %v9623
          %v10046 = vunpack.c.l.b16 %v9624
          %v10047 = vunpack.c.l.b16 %v9625
          %v10048 = vunpack.c.l.b16 %v9626
          %v10049 = vunpack.c.l.b16 %v9627
          %v10050 = vunpack.c.l.b16 %v9628
          %v10051 = vunpack.c.l.b16 %v9629
          %v10052 = vunpack.c.l.b16 %v9630
          %v10053 = vunpack.c.l.b16 %v9631
          %v10054 = vunpack.c.l.b16 %v9632
          %v10055 = vunpack.c.l.b16 %v9633
          %v10056 = vunpack.c.l.b16 %v9634
          %v10057 = vunpack.c.l.b16 %v9635
          %v10058 = vunpack.c.l.b16 %v9636
          %v10059 = vunpack.c.l.b16 %v9637
          %v10060 = vpack.c.b16 %v10029, %v10028
          %v10061 = vpack.c.b16 %v10031, %v10030
          %v10062 = vpack.c.b16 %v10033, %v10032
          %v10063 = vpack.c.b16 %v10035, %v10034
          %v10064 = vpack.c.b16 %v10037, %v10036
          %v10065 = vpack.c.b16 %v10039, %v10038
          %v10066 = vpack.c.b16 %v10041, %v10040
          %v10067 = vpack.c.b16 %v10043, %v10042
          %v10068 = vpack.c.b16 %v10045, %v10044
          %v10069 = vpack.c.b16 %v10047, %v10046
          %v10070 = vpack.c.b16 %v10049, %v10048
          %v10071 = vpack.c.b16 %v10051, %v10050
          %v10072 = vpack.c.b16 %v10053, %v10052
          %v10073 = vpack.c.b16 %v10055, %v10054
          %v10074 = vpack.c.b16 %v10057, %v10056
          %v10075 = vpack.c.b16 %v10059, %v10058
          %v10088 = vunpack.c.l.b16 %v9569
          %v10089 = vunpack.c.l.b16 %v9570
          %v10090 = vunpack.c.l.b16 %v9571
          %v10091 = vunpack.c.l.b16 %v9572
          %v10092 = vunpack.c.l.b16 %v9573
          %v10093 = vunpack.c.l.b16 %v9574
          %v10094 = vunpack.c.l.b16 %v9575
          %v10095 = vunpack.c.l.b16 %v9576
          %v10096 = vunpack.c.l.b16 %v9577
          %v10097 = vunpack.c.l.b16 %v9578
          %v10098 = vunpack.c.l.b16 %v9579
          %v10099 = vunpack.c.l.b16 %v9580
          %v10100 = vpack.c.b16 %v10089, %v10088
          %v10101 = vpack.c.b16 %v10091, %v10090
          %v10102 = vpack.c.b16 %v10093, %v10092
          %v10103 = vpack.c.b16 %v10095, %v10094
          %v10104 = vpack.c.b16 %v10097, %v10096
          %v10105 = vpack.c.b16 %v10099, %v10098
          %v10113 = vsel %vm9786, %v10060, 0
          %v10116 = vsel %vm9786, %v10061, 0
          %v10119 = vsel %vm9786, %v10062, 0
          %v10122 = vsel %vm9786, %v10063, 0
          %v10125 = vsel %vm9786, %v10064, 0
          %v10128 = vsel %vm9786, %v10065, 0
          %v10131 = vsel %vm9786, %v10066, 0
          %v10134 = vsel %vm9786, %v10067, 0
          %v10137 = vsel %vm9786, %v10068, 0
          %v10140 = vsel %vm9786, %v10069, 0
          %v10143 = vsel %vm9786, %v10070, 0
          %v10146 = vsel %vm9786, %v10071, 0
          %v10149 = vsel %vm9786, %v10072, 0
          %v10152 = vsel %vm9786, %v10073, 0
          %v10155 = vsel %vm9786, %v10074, 0
          %v10158 = vsel %vm9786, %v10075, 0
          %10160 = vmatprep.subr.bf16.mxu0 0
          %10161 = vmatpush1.bf16.msra.mxu0 0
          %10162 = vmatprep.subr.bf16.mxu0 0
          %10163 = vmatpush1.bf16.msra.mxu0 0
          %10164 = vmatprep.subr.bf16.mxu0 0
          %10165 = vmatpush1.bf16.msra.mxu0 %v10105
          %10166 = vmatprep.subr.bf16.mxu0 0
          %10167 = vmatpush1.bf16.msra.mxu0 %v10104
          %10168 = vmatprep.subr.bf16.mxu0 0
          %10169 = vmatpush1.bf16.msra.mxu0 %v10103
          %10170 = vmatprep.subr.bf16.mxu0 0
          %10171 = vmatpush1.bf16.msra.mxu0 %v10102
          %10172 = vmatprep.subr.bf16.mxu0 0
          %10173 = vmatpush1.bf16.msra.mxu0 %v10101
          %10174 = vmatprep.subr.bf16.mxu0 0
          %10175 = vmatpush1.bf16.msra.mxu0 %v10100
          %10176 = vmatprep.subr.bf16.mxu0 0
          %10177 = vmatpush2.bf16.msra.mxu0 0
          %10178 = vmatprep.subr.bf16.mxu0 0
          %10179 = vmatpush2.bf16.msra.mxu0 0
          %10180 = vmatprep.subr.bf16.mxu0 0
          %10181 = vmatpush2.bf16.msra.mxu0 0
          %10182 = vmatprep.subr.bf16.mxu0 0
          %10183 = vmatpush2.bf16.msra.mxu0 0
          %10184 = vmatprep.subr.bf16.mxu0 0
          %10185 = vmatpush2.bf16.msra.mxu0 0
          %10186 = vmatprep.subr.bf16.mxu0 0
          %10187 = vmatpush2.bf16.msra.mxu0 0
          %10188 = vmatprep.subr.bf16.mxu0 0
          %10189 = vmatpush2.bf16.msra.mxu0 0
          %10190 = vmatprep.subr.bf16.mxu0 0
          %10191 = vmatpush2.bf16.msra.mxu0 0
          %10192 = vmatprep.mubr.bf16.mxu0 0
          %10193 = vmatmul.mubr.bf16.gmra.mxu0 %v10113
          %v10194 = vpop.f32.mrf.mxu0
          %v10195 = vadd.f32 %v9870, %v10194
          %v10196 = vpop.f32.mrf.mxu0
          %v10197 = vpop.f32.mrf.mxu0
          %v10198 = vadd.f32 %v9873, %v10197
          %v10199 = vpop.f32.mrf.mxu0
          %10200 = vmatprep.mubr.bf16.mxu0 0
          %10201 = vmatmul.mubr.bf16.gmra.mxu0 %v10116
          %v10202 = vpop.f32.mrf.mxu0
          %v10203 = vadd.f32 %v9878, %v10202
          %v10204 = vpop.f32.mrf.mxu0
          %v10205 = vpop.f32.mrf.mxu0
          %v10206 = vadd.f32 %v9881, %v10205
          %v10207 = vpop.f32.mrf.mxu0
          %10208 = vmatprep.mubr.bf16.mxu0 0
          %10209 = vmatmul.mubr.bf16.gmra.mxu0 %v10119
          %v10210 = vpop.f32.mrf.mxu0
          %v10211 = vadd.f32 %v9886, %v10210
          %v10212 = vpop.f32.mrf.mxu0
          %v10213 = vpop.f32.mrf.mxu0
          %v10214 = vadd.f32 %v9889, %v10213
          %v10215 = vpop.f32.mrf.mxu0
          %10216 = vmatprep.mubr.bf16.mxu0 0
          %10217 = vmatmul.mubr.bf16.gmra.mxu0 %v10122
          %v10218 = vpop.f32.mrf.mxu0
          %v10219 = vadd.f32 %v9894, %v10218
          %v10220 = vpop.f32.mrf.mxu0
          %v10221 = vpop.f32.mrf.mxu0
          %v10222 = vadd.f32 %v9897, %v10221
          %v10223 = vpop.f32.mrf.mxu0
          %10224 = vmatprep.mubr.bf16.mxu0 0
          %10225 = vmatmul.mubr.bf16.gmra.mxu0 %v10125
          %v10226 = vpop.f32.mrf.mxu0
          %v10227 = vadd.f32 %v9902, %v10226
          %v10228 = vpop.f32.mrf.mxu0
          %v10229 = vpop.f32.mrf.mxu0
          %v10230 = vadd.f32 %v9905, %v10229
          %v10231 = vpop.f32.mrf.mxu0
          %10232 = vmatprep.mubr.bf16.mxu0 0
          %10233 = vmatmul.mubr.bf16.gmra.mxu0 %v10128
          %v10234 = vpop.f32.mrf.mxu0
          %v10235 = vadd.f32 %v9910, %v10234
          %v10236 = vpop.f32.mrf.mxu0
          %v10237 = vpop.f32.mrf.mxu0
          %v10238 = vadd.f32 %v9913, %v10237
          %v10239 = vpop.f32.mrf.mxu0
          %10240 = vmatprep.mubr.bf16.mxu0 0
          %10241 = vmatmul.mubr.bf16.gmra.mxu0 %v10131
          %v10242 = vpop.f32.mrf.mxu0
          %v10243 = vadd.f32 %v9918, %v10242
          %v10244 = vpop.f32.mrf.mxu0
          %v10245 = vpop.f32.mrf.mxu0
          %v10246 = vadd.f32 %v9921, %v10245
          %v10247 = vpop.f32.mrf.mxu0
          %10248 = vmatprep.mubr.bf16.mxu0 0
          %10249 = vmatmul.mubr.bf16.gmra.mxu0 %v10134
          %v10250 = vpop.f32.mrf.mxu0
          %v10251 = vadd.f32 %v9926, %v10250
          %v10252 = vpop.f32.mrf.mxu0
          %v10253 = vpop.f32.mrf.mxu0
          %v10254 = vadd.f32 %v9929, %v10253
          %v10255 = vpop.f32.mrf.mxu0
          %10256 = vmatprep.mubr.bf16.mxu0 0
          %10257 = vmatmul.mubr.bf16.gmra.mxu0 %v10137
          %v10258 = vpop.f32.mrf.mxu0
          %v10259 = vadd.f32 %v9934, %v10258
          %v10260 = vpop.f32.mrf.mxu0
          %v10261 = vpop.f32.mrf.mxu0
          %v10262 = vadd.f32 %v9937, %v10261
          %v10263 = vpop.f32.mrf.mxu0
          %10264 = vmatprep.mubr.bf16.mxu0 0
          %10265 = vmatmul.mubr.bf16.gmra.mxu0 %v10140
          %v10266 = vpop.f32.mrf.mxu0
          %v10267 = vadd.f32 %v9942, %v10266
          %v10268 = vpop.f32.mrf.mxu0
          %v10269 = vpop.f32.mrf.mxu0
          %v10270 = vadd.f32 %v9945, %v10269
          %v10271 = vpop.f32.mrf.mxu0
          %10272 = vmatprep.mubr.bf16.mxu0 0
          %10273 = vmatmul.mubr.bf16.gmra.mxu0 %v10143
          %v10274 = vpop.f32.mrf.mxu0
          %v10275 = vadd.f32 %v9950, %v10274
          %v10276 = vpop.f32.mrf.mxu0
          %v10277 = vpop.f32.mrf.mxu0
          %v10278 = vadd.f32 %v9953, %v10277
          %v10279 = vpop.f32.mrf.mxu0
          %10280 = vmatprep.mubr.bf16.mxu0 0
          %10281 = vmatmul.mubr.bf16.gmra.mxu0 %v10146
          %v10282 = vpop.f32.mrf.mxu0
          %v10283 = vadd.f32 %v9958, %v10282
          %v10284 = vpop.f32.mrf.mxu0
          %v10285 = vpop.f32.mrf.mxu0
          %v10286 = vadd.f32 %v9961, %v10285
          %v10287 = vpop.f32.mrf.mxu0
          %10288 = vmatprep.mubr.bf16.mxu0 0
          %10289 = vmatmul.mubr.bf16.gmra.mxu0 %v10149
          %v10290 = vpop.f32.mrf.mxu0
          %v10291 = vadd.f32 %v9966, %v10290
          %v10292 = vpop.f32.mrf.mxu0
          %v10293 = vpop.f32.mrf.mxu0
          %v10294 = vadd.f32 %v9969, %v10293
          %v10295 = vpop.f32.mrf.mxu0
          %10296 = vmatprep.mubr.bf16.mxu0 0
          %10297 = vmatmul.mubr.bf16.gmra.mxu0 %v10152
          %v10298 = vpop.f32.mrf.mxu0
          %v10299 = vadd.f32 %v9974, %v10298
          %v10300 = vpop.f32.mrf.mxu0
          %v10301 = vpop.f32.mrf.mxu0
          %v10302 = vadd.f32 %v9977, %v10301
          %v10303 = vpop.f32.mrf.mxu0
          %10304 = vmatprep.mubr.bf16.mxu0 0
          %10305 = vmatmul.mubr.bf16.gmra.mxu0 %v10155
          %v10306 = vpop.f32.mrf.mxu0
          %v10307 = vadd.f32 %v9982, %v10306
          %v10308 = vpop.f32.mrf.mxu0
          %v10309 = vpop.f32.mrf.mxu0
          %v10310 = vadd.f32 %v9985, %v10309
          %v10311 = vpop.f32.mrf.mxu0
          %10312 = vmatprep.mubr.bf16.mxu0 0
          %10313 = vmatmul.mubr.bf16.gmra.mxu0 %v10158
          %v10314 = vpop.f32.mrf.mxu0
          %v10315 = vadd.f32 %v9990, %v10314
          %v10316 = vpop.f32.mrf.mxu0
          %v10317 = vpop.f32.mrf.mxu0
          %v10318 = vadd.f32 %v9993, %v10317
          %v10319 = vpop.f32.mrf.mxu0
          %10320 = vdwg.mxu0
          %v10321 = vld [vmem:[%s1917] sm:$0xf]
          %v10322 = vld [vmem:[%s1917 + $0x8] sm:$0xf]
          %v10323 = vld [vmem:[%s1917 + $0x10] sm:$0xf]
          %v10324 = vld [vmem:[%s1917 + $0x18] sm:$0xf]
          %v10325 = vld [vmem:[%s1917 + $0x20] sm:$0xf]
          %v10326 = vld [vmem:[%s1917 + $0x28] sm:$0xf]
          %v10327 = vld [vmem:[%s1917 + $0x30] sm:$0xf]
          %v10328 = vld [vmem:[%s1917 + $0x38] sm:$0xf]
          %v10329 = vld [vmem:[%s1917 + $0x40] sm:$0xf]
          %v10330 = vld [vmem:[%s1917 + $0x48] sm:$0xf]
          %v10331 = vld [vmem:[%s1917 + $0x50] sm:$0xf]
          %v10332 = vld [vmem:[%s1917 + $0x58] sm:$0xf]
          %v10333 = vld [vmem:[%s1917 + $0x60] sm:$0xf]
          %v10334 = vld [vmem:[%s1917 + $0x68] sm:$0xf]
          %v10335 = vld [vmem:[%s1917 + $0x70] sm:$0xf]
          %v10336 = vld [vmem:[%s1917 + $0x78] sm:$0xf]
          %v10337 = vld [vmem:[%s1917 + $0x80] sm:$0xf]
          %v10338 = vld [vmem:[%s1917 + $0x88] sm:$0xf]
          %v10339 = vld [vmem:[%s1917 + $0x90] sm:$0xf]
          %v10340 = vld [vmem:[%s1917 + $0x98] sm:$0xf]
          %v10341 = vld [vmem:[%s1917 + $0xa0] sm:$0xf]
          %v10342 = vld [vmem:[%s1917 + $0xa8] sm:$0xf]
          %v10343 = vld [vmem:[%s1917 + $0xb0] sm:$0xf]
          %v10344 = vld [vmem:[%s1917 + $0xb8] sm:$0xf]
          %v10345 = vld [vmem:[%s1917 + $0xc0] sm:$0xf]
          %v10346 = vld [vmem:[%s1917 + $0xc8] sm:$0xf]
          %v10347 = vld [vmem:[%s1917 + $0xd0] sm:$0xf]
          %v10348 = vld [vmem:[%s1917 + $0xd8] sm:$0xf]
          %v10349 = vld [vmem:[%s1917 + $0xe0] sm:$0xf]
          %v10350 = vld [vmem:[%s1917 + $0xe8] sm:$0xf]
          %v10351 = vld [vmem:[%s1917 + $0xf0] sm:$0xf]
          %v10352 = vld [vmem:[%s1917 + $0xf8] sm:$0xf]
          %v10385 = vunpack.c.l.b16 %v10321
          %v10386 = vunpack.c.l.b16 %v10322
          %v10387 = vunpack.c.l.b16 %v10323
          %v10388 = vunpack.c.l.b16 %v10324
          %v10389 = vunpack.c.l.b16 %v10325
          %v10390 = vunpack.c.l.b16 %v10326
          %v10391 = vunpack.c.l.b16 %v10327
          %v10392 = vunpack.c.l.b16 %v10328
          %v10393 = vunpack.c.l.b16 %v10329
          %v10394 = vunpack.c.l.b16 %v10330
          %v10395 = vunpack.c.l.b16 %v10331
          %v10396 = vunpack.c.l.b16 %v10332
          %v10397 = vunpack.c.l.b16 %v10333
          %v10398 = vunpack.c.l.b16 %v10334
          %v10399 = vunpack.c.l.b16 %v10335
          %v10400 = vunpack.c.l.b16 %v10336
          %v10401 = vunpack.c.l.b16 %v10337
          %v10402 = vunpack.c.l.b16 %v10338
          %v10403 = vunpack.c.l.b16 %v10339
          %v10404 = vunpack.c.l.b16 %v10340
          %v10405 = vunpack.c.l.b16 %v10341
          %v10406 = vunpack.c.l.b16 %v10342
          %v10407 = vunpack.c.l.b16 %v10343
          %v10408 = vunpack.c.l.b16 %v10344
          %v10409 = vunpack.c.l.b16 %v10345
          %v10410 = vunpack.c.l.b16 %v10346
          %v10411 = vunpack.c.l.b16 %v10347
          %v10412 = vunpack.c.l.b16 %v10348
          %v10413 = vunpack.c.l.b16 %v10349
          %v10414 = vunpack.c.l.b16 %v10350
          %v10415 = vunpack.c.l.b16 %v10351
          %v10416 = vunpack.c.l.b16 %v10352
          %v10417 = vpack.c.b16 %v10386, %v10385
          %v10418 = vpack.c.b16 %v10388, %v10387
          %v10419 = vpack.c.b16 %v10390, %v10389
          %v10420 = vpack.c.b16 %v10392, %v10391
          %v10421 = vpack.c.b16 %v10394, %v10393
          %v10422 = vpack.c.b16 %v10396, %v10395
          %v10423 = vpack.c.b16 %v10398, %v10397
          %v10424 = vpack.c.b16 %v10400, %v10399
          %v10425 = vpack.c.b16 %v10402, %v10401
          %v10426 = vpack.c.b16 %v10404, %v10403
          %v10427 = vpack.c.b16 %v10406, %v10405
          %v10428 = vpack.c.b16 %v10408, %v10407
          %v10429 = vpack.c.b16 %v10410, %v10409
          %v10430 = vpack.c.b16 %v10412, %v10411
          %v10431 = vpack.c.b16 %v10414, %v10413
          %v10432 = vpack.c.b16 %v10416, %v10415
          %v10445 = vunpack.c.l.b16 %v9593
          %v10446 = vunpack.c.l.b16 %v9594
          %v10447 = vunpack.c.l.b16 %v9595
          %v10448 = vunpack.c.l.b16 %v9596
          %v10449 = vunpack.c.l.b16 %v9597
          %v10450 = vunpack.c.l.b16 %v9598
          %v10451 = vunpack.c.l.b16 %v9599
          %v10452 = vunpack.c.l.b16 %v9600
          %v10453 = vunpack.c.l.b16 %v9601
          %v10454 = vunpack.c.l.b16 %v9602
          %v10455 = vunpack.c.l.b16 %v9603
          %v10456 = vunpack.c.l.b16 %v9604
          %v10457 = vpack.c.b16 %v10446, %v10445
          %v10458 = vpack.c.b16 %v10448, %v10447
          %v10459 = vpack.c.b16 %v10450, %v10449
          %v10460 = vpack.c.b16 %v10452, %v10451
          %v10461 = vpack.c.b16 %v10454, %v10453
          %v10462 = vpack.c.b16 %v10456, %v10455
          %v10470 = vsel %vm9786, %v10417, 0
          %v10473 = vsel %vm9786, %v10418, 0
          %v10476 = vsel %vm9786, %v10419, 0
          %v10479 = vsel %vm9786, %v10420, 0
          %v10482 = vsel %vm9786, %v10421, 0
          %v10485 = vsel %vm9786, %v10422, 0
          %v10488 = vsel %vm9786, %v10423, 0
          %v10491 = vsel %vm9786, %v10424, 0
          %v10494 = vsel %vm9786, %v10425, 0
          %v10497 = vsel %vm9786, %v10426, 0
          %v10500 = vsel %vm9786, %v10427, 0
          %v10503 = vsel %vm9786, %v10428, 0
          %v10506 = vsel %vm9786, %v10429, 0
          %v10509 = vsel %vm9786, %v10430, 0
          %v10512 = vsel %vm9786, %v10431, 0
          %v10515 = vsel %vm9786, %v10432, 0
          %10517 = vmatprep.subr.bf16.mxu0 0
          %10518 = vmatpush1.bf16.msra.mxu0 0
          %10519 = vmatprep.subr.bf16.mxu0 0
          %10520 = vmatpush1.bf16.msra.mxu0 0
          %10521 = vmatprep.subr.bf16.mxu0 0
          %10522 = vmatpush1.bf16.msra.mxu0 %v10462
          %10523 = vmatprep.subr.bf16.mxu0 0
          %10524 = vmatpush1.bf16.msra.mxu0 %v10461
          %10525 = vmatprep.subr.bf16.mxu0 0
          %10526 = vmatpush1.bf16.msra.mxu0 %v10460
          %10527 = vmatprep.subr.bf16.mxu0 0
          %10528 = vmatpush1.bf16.msra.mxu0 %v10459
          %10529 = vmatprep.subr.bf16.mxu0 0
          %10530 = vmatpush1.bf16.msra.mxu0 %v10458
          %10531 = vmatprep.subr.bf16.mxu0 0
          %10532 = vmatpush1.bf16.msra.mxu0 %v10457
          %10533 = vmatprep.subr.bf16.mxu0 0
          %10534 = vmatpush2.bf16.msra.mxu0 0
          %10535 = vmatprep.subr.bf16.mxu0 0
          %10536 = vmatpush2.bf16.msra.mxu0 0
          %10537 = vmatprep.subr.bf16.mxu0 0
          %10538 = vmatpush2.bf16.msra.mxu0 0
          %10539 = vmatprep.subr.bf16.mxu0 0
          %10540 = vmatpush2.bf16.msra.mxu0 0
          %10541 = vmatprep.subr.bf16.mxu0 0
          %10542 = vmatpush2.bf16.msra.mxu0 0
          %10543 = vmatprep.subr.bf16.mxu0 0
          %10544 = vmatpush2.bf16.msra.mxu0 0
          %10545 = vmatprep.subr.bf16.mxu0 0
          %10546 = vmatpush2.bf16.msra.mxu0 0
          %10547 = vmatprep.subr.bf16.mxu0 0
          %10548 = vmatpush2.bf16.msra.mxu0 0
          %10549 = vmatprep.mubr.bf16.mxu0 0
          %10550 = vmatmul.mubr.bf16.gmra.mxu0 %v10470
          %v10551 = vpop.f32.mrf.mxu0
          %v10552 = vadd.f32 0.0, %v10551
          %v10553 = vpop.f32.mrf.mxu0
          %v10554 = vpop.f32.mrf.mxu0
          %v10555 = vadd.f32 0.0, %v10554
          %v10556 = vpop.f32.mrf.mxu0
          %10557 = vmatprep.mubr.bf16.mxu0 0
          %10558 = vmatmul.mubr.bf16.gmra.mxu0 %v10473
          %v10559 = vpop.f32.mrf.mxu0
          %v10560 = vadd.f32 0.0, %v10559
          %v10561 = vpop.f32.mrf.mxu0
          %v10562 = vpop.f32.mrf.mxu0
          %v10563 = vadd.f32 0.0, %v10562
          %v10564 = vpop.f32.mrf.mxu0
          %10565 = vmatprep.mubr.bf16.mxu0 0
          %10566 = vmatmul.mubr.bf16.gmra.mxu0 %v10476
          %v10567 = vpop.f32.mrf.mxu0
          %v10568 = vadd.f32 0.0, %v10567
          %v10569 = vpop.f32.mrf.mxu0
          %v10570 = vpop.f32.mrf.mxu0
          %v10571 = vadd.f32 0.0, %v10570
          %v10572 = vpop.f32.mrf.mxu0
          %10573 = vmatprep.mubr.bf16.mxu0 0
          %10574 = vmatmul.mubr.bf16.gmra.mxu0 %v10479
          %v10575 = vpop.f32.mrf.mxu0
          %v10576 = vadd.f32 0.0, %v10575
          %v10577 = vpop.f32.mrf.mxu0
          %v10578 = vpop.f32.mrf.mxu0
          %v10579 = vadd.f32 0.0, %v10578
          %v10580 = vpop.f32.mrf.mxu0
          %10581 = vmatprep.mubr.bf16.mxu0 0
          %10582 = vmatmul.mubr.bf16.gmra.mxu0 %v10482
          %v10583 = vpop.f32.mrf.mxu0
          %v10584 = vadd.f32 0.0, %v10583
          %v10585 = vpop.f32.mrf.mxu0
          %v10586 = vpop.f32.mrf.mxu0
          %v10587 = vadd.f32 0.0, %v10586
          %v10588 = vpop.f32.mrf.mxu0
          %10589 = vmatprep.mubr.bf16.mxu0 0
          %10590 = vmatmul.mubr.bf16.gmra.mxu0 %v10485
          %v10591 = vpop.f32.mrf.mxu0
          %v10592 = vadd.f32 0.0, %v10591
          %v10593 = vpop.f32.mrf.mxu0
          %v10594 = vpop.f32.mrf.mxu0
          %v10595 = vadd.f32 0.0, %v10594
          %v10596 = vpop.f32.mrf.mxu0
          %10597 = vmatprep.mubr.bf16.mxu0 0
          %10598 = vmatmul.mubr.bf16.gmra.mxu0 %v10488
          %v10599 = vpop.f32.mrf.mxu0
          %v10600 = vadd.f32 0.0, %v10599
          %v10601 = vpop.f32.mrf.mxu0
          %v10602 = vpop.f32.mrf.mxu0
          %v10603 = vadd.f32 0.0, %v10602
          %v10604 = vpop.f32.mrf.mxu0
          %10605 = vmatprep.mubr.bf16.mxu0 0
          %10606 = vmatmul.mubr.bf16.gmra.mxu0 %v10491
          %v10607 = vpop.f32.mrf.mxu0
          %v10608 = vadd.f32 0.0, %v10607
          %v10609 = vpop.f32.mrf.mxu0
          %v10610 = vpop.f32.mrf.mxu0
          %v10611 = vadd.f32 0.0, %v10610
          %v10612 = vpop.f32.mrf.mxu0
          %10613 = vmatprep.mubr.bf16.mxu0 0
          %10614 = vmatmul.mubr.bf16.gmra.mxu0 %v10494
          %v10615 = vpop.f32.mrf.mxu0
          %v10616 = vadd.f32 0.0, %v10615
          %v10617 = vpop.f32.mrf.mxu0
          %v10618 = vpop.f32.mrf.mxu0
          %v10619 = vadd.f32 0.0, %v10618
          %v10620 = vpop.f32.mrf.mxu0
          %10621 = vmatprep.mubr.bf16.mxu0 0
          %10622 = vmatmul.mubr.bf16.gmra.mxu0 %v10497
          %v10623 = vpop.f32.mrf.mxu0
          %v10624 = vadd.f32 0.0, %v10623
          %v10625 = vpop.f32.mrf.mxu0
          %v10626 = vpop.f32.mrf.mxu0
          %v10627 = vadd.f32 0.0, %v10626
          %v10628 = vpop.f32.mrf.mxu0
          %10629 = vmatprep.mubr.bf16.mxu0 0
          %10630 = vmatmul.mubr.bf16.gmra.mxu0 %v10500
          %v10631 = vpop.f32.mrf.mxu0
          %v10632 = vadd.f32 0.0, %v10631
          %v10633 = vpop.f32.mrf.mxu0
          %v10634 = vpop.f32.mrf.mxu0
          %v10635 = vadd.f32 0.0, %v10634
          %v10636 = vpop.f32.mrf.mxu0
          %10637 = vmatprep.mubr.bf16.mxu0 0
          %10638 = vmatmul.mubr.bf16.gmra.mxu0 %v10503
          %v10639 = vpop.f32.mrf.mxu0
          %v10640 = vadd.f32 0.0, %v10639
          %v10641 = vpop.f32.mrf.mxu0
          %v10642 = vpop.f32.mrf.mxu0
          %v10643 = vadd.f32 0.0, %v10642
          %v10644 = vpop.f32.mrf.mxu0
          %10645 = vmatprep.mubr.bf16.mxu0 0
          %10646 = vmatmul.mubr.bf16.gmra.mxu0 %v10506
          %v10647 = vpop.f32.mrf.mxu0
          %v10648 = vadd.f32 0.0, %v10647
          %v10649 = vpop.f32.mrf.mxu0
          %v10650 = vpop.f32.mrf.mxu0
          %v10651 = vadd.f32 0.0, %v10650
          %v10652 = vpop.f32.mrf.mxu0
          %10653 = vmatprep.mubr.bf16.mxu0 0
          %10654 = vmatmul.mubr.bf16.gmra.mxu0 %v10509
          %v10655 = vpop.f32.mrf.mxu0
          %v10656 = vadd.f32 0.0, %v10655
          %v10657 = vpop.f32.mrf.mxu0
          %v10658 = vpop.f32.mrf.mxu0
          %v10659 = vadd.f32 0.0, %v10658
          %v10660 = vpop.f32.mrf.mxu0
          %10661 = vmatprep.mubr.bf16.mxu0 0
          %10662 = vmatmul.mubr.bf16.gmra.mxu0 %v10512
          %v10663 = vpop.f32.mrf.mxu0
          %v10664 = vadd.f32 0.0, %v10663
          %v10665 = vpop.f32.mrf.mxu0
          %v10666 = vpop.f32.mrf.mxu0
          %v10667 = vadd.f32 0.0, %v10666
          %v10668 = vpop.f32.mrf.mxu0
          %10669 = vmatprep.mubr.bf16.mxu0 0
          %10670 = vmatmul.mubr.bf16.gmra.mxu0 %v10515
          %v10671 = vpop.f32.mrf.mxu0
          %v10672 = vadd.f32 0.0, %v10671
          %v10673 = vpop.f32.mrf.mxu0
          %v10674 = vpop.f32.mrf.mxu0
          %v10675 = vadd.f32 0.0, %v10674
          %v10676 = vpop.f32.mrf.mxu0
          %10677 = vdwg.mxu0
          %v10678 = vadd.f32 %v10195, %v10552
          %v10679 = vadd.f32 %v10198, %v10555
          %v10680 = vadd.f32 %v10203, %v10560
          %v10681 = vadd.f32 %v10206, %v10563
          %v10682 = vadd.f32 %v10211, %v10568
          %v10683 = vadd.f32 %v10214, %v10571
          %v10684 = vadd.f32 %v10219, %v10576
          %v10685 = vadd.f32 %v10222, %v10579
          %v10686 = vadd.f32 %v10227, %v10584
          %v10687 = vadd.f32 %v10230, %v10587
          %v10688 = vadd.f32 %v10235, %v10592
          %v10689 = vadd.f32 %v10238, %v10595
          %v10690 = vadd.f32 %v10243, %v10600
          %v10691 = vadd.f32 %v10246, %v10603
          %v10692 = vadd.f32 %v10251, %v10608
          %v10693 = vadd.f32 %v10254, %v10611
          %v10694 = vadd.f32 %v10259, %v10616
          %v10695 = vadd.f32 %v10262, %v10619
          %v10696 = vadd.f32 %v10267, %v10624
          %v10697 = vadd.f32 %v10270, %v10627
          %v10698 = vadd.f32 %v10275, %v10632
          %v10699 = vadd.f32 %v10278, %v10635
          %v10700 = vadd.f32 %v10283, %v10640
          %v10701 = vadd.f32 %v10286, %v10643
          %v10702 = vadd.f32 %v10291, %v10648
          %v10703 = vadd.f32 %v10294, %v10651
          %v10704 = vadd.f32 %v10299, %v10656
          %v10705 = vadd.f32 %v10302, %v10659
          %v10706 = vadd.f32 %v10307, %v10664
          %v10707 = vadd.f32 %v10310, %v10667
          %v10708 = vadd.f32 %v10315, %v10672
          %v10709 = vadd.f32 %v10318, %v10675
          %v10711 = vlaneseq
          %v10712 = vshrl.u32 %v10711, 7
          %v10713 = vsub.s32 0, %v10712
          %v10714 = vrot.slane %v9605, %v10713
          %v10716 = vadd.f32 %v10678, %v10714
          %v10717 = vadd.f32 %v10679, %v10714
          %v10718 = vadd.f32 %v10680, %v10714
          %v10719 = vadd.f32 %v10681, %v10714
          %v10720 = vadd.f32 %v10682, %v10714
          %v10721 = vadd.f32 %v10683, %v10714
          %v10722 = vadd.f32 %v10684, %v10714
          %v10723 = vadd.f32 %v10685, %v10714
          %v10724 = vadd.f32 %v10686, %v10714
          %v10725 = vadd.f32 %v10687, %v10714
          %v10726 = vadd.f32 %v10688, %v10714
          %v10727 = vadd.f32 %v10689, %v10714
          %v10728 = vadd.f32 %v10690, %v10714
          %v10729 = vadd.f32 %v10691, %v10714
          %v10730 = vadd.f32 %v10692, %v10714
          %v10731 = vadd.f32 %v10693, %v10714
          %v10732 = vadd.f32 %v10694, %v10714
          %v10733 = vadd.f32 %v10695, %v10714
          %v10734 = vadd.f32 %v10696, %v10714
          %v10735 = vadd.f32 %v10697, %v10714
          %v10736 = vadd.f32 %v10698, %v10714
          %v10737 = vadd.f32 %v10699, %v10714
          %v10738 = vadd.f32 %v10700, %v10714
          %v10739 = vadd.f32 %v10701, %v10714
          %v10740 = vadd.f32 %v10702, %v10714
          %v10741 = vadd.f32 %v10703, %v10714
          %v10742 = vadd.f32 %v10704, %v10714
          %v10743 = vadd.f32 %v10705, %v10714
          %v10744 = vadd.f32 %v10706, %v10714
          %v10745 = vadd.f32 %v10707, %v10714
          %v10746 = vadd.f32 %v10708, %v10714
          %v10747 = vadd.f32 %v10709, %v10714
          %s10748 = smul.u32 %s423, 256
          %s10749 = scalar_lea.vmem %s375, %s10748 [#allocation3]
          %10750 = vst.msk [vmem:[%s10749] sm:$0xff] %vm652, %v10716
          %10751 = vst.msk [vmem:[%s10749 + $0x8] sm:$0xff] %vm652, %v10717
          %10752 = vst.msk [vmem:[%s10749 + $0x10] sm:$0xff] %vm652, %v10718
          %10753 = vst.msk [vmem:[%s10749 + $0x18] sm:$0xff] %vm652, %v10719
          %10754 = vst.msk [vmem:[%s10749 + $0x20] sm:$0xff] %vm652, %v10720
          %10755 = vst.msk [vmem:[%s10749 + $0x28] sm:$0xff] %vm652, %v10721
          %10756 = vst.msk [vmem:[%s10749 + $0x30] sm:$0xff] %vm652, %v10722
          %10757 = vst.msk [vmem:[%s10749 + $0x38] sm:$0xff] %vm652, %v10723
          %10758 = vst.msk [vmem:[%s10749 + $0x40] sm:$0xff] %vm652, %v10724
          %10759 = vst.msk [vmem:[%s10749 + $0x48] sm:$0xff] %vm652, %v10725
          %10760 = vst.msk [vmem:[%s10749 + $0x50] sm:$0xff] %vm652, %v10726
          %10761 = vst.msk [vmem:[%s10749 + $0x58] sm:$0xff] %vm652, %v10727
          %10762 = vst.msk [vmem:[%s10749 + $0x60] sm:$0xff] %vm652, %v10728
          %10763 = vst.msk [vmem:[%s10749 + $0x68] sm:$0xff] %vm652, %v10729
          %10764 = vst.msk [vmem:[%s10749 + $0x70] sm:$0xff] %vm652, %v10730
          %10765 = vst.msk [vmem:[%s10749 + $0x78] sm:$0xff] %vm652, %v10731
          %10766 = vst.msk [vmem:[%s10749 + $0x80] sm:$0xff] %vm652, %v10732
          %10767 = vst.msk [vmem:[%s10749 + $0x88] sm:$0xff] %vm652, %v10733
          %10768 = vst.msk [vmem:[%s10749 + $0x90] sm:$0xff] %vm652, %v10734
          %10769 = vst.msk [vmem:[%s10749 + $0x98] sm:$0xff] %vm652, %v10735
          %10770 = vst.msk [vmem:[%s10749 + $0xa0] sm:$0xff] %vm652, %v10736
          %10771 = vst.msk [vmem:[%s10749 + $0xa8] sm:$0xff] %vm652, %v10737
          %10772 = vst.msk [vmem:[%s10749 + $0xb0] sm:$0xff] %vm652, %v10738
          %10773 = vst.msk [vmem:[%s10749 + $0xb8] sm:$0xff] %vm652, %v10739
          %10774 = vst.msk [vmem:[%s10749 + $0xc0] sm:$0xff] %vm652, %v10740
          %10775 = vst.msk [vmem:[%s10749 + $0xc8] sm:$0xff] %vm652, %v10741
          %10776 = vst.msk [vmem:[%s10749 + $0xd0] sm:$0xff] %vm652, %v10742
          %10777 = vst.msk [vmem:[%s10749 + $0xd8] sm:$0xff] %vm652, %v10743
          %10778 = vst.msk [vmem:[%s10749 + $0xe0] sm:$0xff] %vm652, %v10744
          %10779 = vst.msk [vmem:[%s10749 + $0xe8] sm:$0xff] %vm652, %v10745
          %10780 = vst.msk [vmem:[%s10749 + $0xf0] sm:$0xff] %vm652, %v10746
          %10781 = vst.msk [vmem:[%s10749 + $0xf8] sm:$0xff] %vm652, %v10747
        $region69: #{prenet_lstm_forward.1} parent=63 // loop_footer
          %s427 = sadd.s32 1, %s423
        $region70: #{prenet_lstm_forward.1} parent=63 // loop_footer_branch
          %422 = sbr.rel target = $region66
        $region71: #{prenet_lstm_forward.1} parent=63 // loop_exit
          _
        %s10782 = sand.u32 %s266, 1
        %s10783 = sand.u32 %s266, 1
        %s10784 = smul.addr %s10783, 1536
        %s10785 = scalar_lea.vmem [#allocation3], %s10784
        // Predicated region
        $region79: #{prenet_lstm_forward.1} parent=63 // pred_check
          %p10786 = pneg %p276
        $region80: #{prenet_lstm_forward.1} parent=63 // pred_check_branch
          %10788 = sbr.rel (%p10786) target = $region82
        $region81: #{prenet_lstm_forward.1} parent=63 // pred_region
          %s10789 = smul.addr %s22, 32
          %s10790 = smul.addr %s10789, 8
          %s10791 = scalar_lea.vmem %s11, %s10790
          // Predicated region
          $region83: #{prenet_lstm_forward.1} parent=81 // pred_check
            _
          $region84: #{prenet_lstm_forward.1} parent=81 // pred_check_branch
            %10793 = sbr.rel (0) target = $region86
          $region85: #{prenet_lstm_forward.1} parent=81 // pred_region
            // Predicated region
            $region87: #{prenet_lstm_forward.1} parent=85 // pred_check
              _
            $region88: #{prenet_lstm_forward.1} parent=85 // pred_check_branch
              %10795 = sbr.rel (0) target = $region90
            $region89: #{prenet_lstm_forward.1} parent=85 // pred_region
              // Predicated region
              $region102: #{prenet_lstm_forward.1} parent=89 // pred_check
                _
              $region103: #{prenet_lstm_forward.1} parent=89 // pred_check_branch
                %11193 = sbr.rel (0) target = $region105
              $region104: #{prenet_lstm_forward.1} parent=89 // pred_region
                loop: start=0, step=1, limit=1
                $region106: #{prenet_lstm_forward.1} parent=104 // loop_pre_header
                  _
                $region107: #{prenet_lstm_forward.1} parent=104 // loop_header
                  %s11195 = sphi 0, %s11199
                  %p11196 = scmp.ge.s32.totalorder %s11195, 1
                  %s11200 = sphi %s10785, %s10785
                  %s11201 = sphi %s10791, %s10791
                $region108: #{prenet_lstm_forward.1} parent=104 // loop_header_branch
                  %11198 = sbr.rel (%p11196) target = $region112
                $region109: #{prenet_lstm_forward.1} parent=104 // loop_body
                  %v11202 = vld [vmem:[%s11200] sm:$0xff]
                  %11203 = vst [vmem:[%s11201] sm:$0xff] %v11202
                  %v11204 = vld [vmem:[%s11200 + $0x8] sm:$0xff]
                  %11205 = vst [vmem:[%s11201 + $0x8] sm:$0xff] %v11204
                  %v11206 = vld [vmem:[%s11200 + $0x10] sm:$0xff]
                  %11207 = vst [vmem:[%s11201 + $0x10] sm:$0xff] %v11206
                  %v11208 = vld [vmem:[%s11200 + $0x18] sm:$0xff]
                  %11209 = vst [vmem:[%s11201 + $0x18] sm:$0xff] %v11208
                  %v11210 = vld [vmem:[%s11200 + $0x20] sm:$0xff]
                  %11211 = vst [vmem:[%s11201 + $0x20] sm:$0xff] %v11210
                  %v11212 = vld [vmem:[%s11200 + $0x28] sm:$0xff]
                  %11213 = vst [vmem:[%s11201 + $0x28] sm:$0xff] %v11212
                  %v11214 = vld [vmem:[%s11200 + $0x30] sm:$0xff]
                  %11215 = vst [vmem:[%s11201 + $0x30] sm:$0xff] %v11214
                  %v11216 = vld [vmem:[%s11200 + $0x38] sm:$0xff]
                  %11217 = vst [vmem:[%s11201 + $0x38] sm:$0xff] %v11216
                  %v11218 = vld [vmem:[%s11200 + $0x40] sm:$0xff]
                  %11219 = vst [vmem:[%s11201 + $0x40] sm:$0xff] %v11218
                  %v11220 = vld [vmem:[%s11200 + $0x48] sm:$0xff]
                  %11221 = vst [vmem:[%s11201 + $0x48] sm:$0xff] %v11220
                  %v11222 = vld [vmem:[%s11200 + $0x50] sm:$0xff]
                  %11223 = vst [vmem:[%s11201 + $0x50] sm:$0xff] %v11222
                  %v11224 = vld [vmem:[%s11200 + $0x58] sm:$0xff]
                  %11225 = vst [vmem:[%s11201 + $0x58] sm:$0xff] %v11224
                  %v11226 = vld [vmem:[%s11200 + $0x60] sm:$0xff]
                  %11227 = vst [vmem:[%s11201 + $0x60] sm:$0xff] %v11226
                  %v11228 = vld [vmem:[%s11200 + $0x68] sm:$0xff]
                  %11229 = vst [vmem:[%s11201 + $0x68] sm:$0xff] %v11228
                  %v11230 = vld [vmem:[%s11200 + $0x70] sm:$0xff]
                  %11231 = vst [vmem:[%s11201 + $0x70] sm:$0xff] %v11230
                  %v11232 = vld [vmem:[%s11200 + $0x78] sm:$0xff]
                  %11233 = vst [vmem:[%s11201 + $0x78] sm:$0xff] %v11232
                  %v11234 = vld [vmem:[%s11200 + $0x80] sm:$0xff]
                  %11235 = vst [vmem:[%s11201 + $0x80] sm:$0xff] %v11234
                  %v11236 = vld [vmem:[%s11200 + $0x88] sm:$0xff]
                  %11237 = vst [vmem:[%s11201 + $0x88] sm:$0xff] %v11236
                  %v11238 = vld [vmem:[%s11200 + $0x90] sm:$0xff]
                  %11239 = vst [vmem:[%s11201 + $0x90] sm:$0xff] %v11238
                  %v11240 = vld [vmem:[%s11200 + $0x98] sm:$0xff]
                  %11241 = vst [vmem:[%s11201 + $0x98] sm:$0xff] %v11240
                  %v11242 = vld [vmem:[%s11200 + $0xa0] sm:$0xff]
                  %11243 = vst [vmem:[%s11201 + $0xa0] sm:$0xff] %v11242
                  %v11244 = vld [vmem:[%s11200 + $0xa8] sm:$0xff]
                  %11245 = vst [vmem:[%s11201 + $0xa8] sm:$0xff] %v11244
                  %v11246 = vld [vmem:[%s11200 + $0xb0] sm:$0xff]
                  %11247 = vst [vmem:[%s11201 + $0xb0] sm:$0xff] %v11246
                  %v11248 = vld [vmem:[%s11200 + $0xb8] sm:$0xff]
                  %11249 = vst [vmem:[%s11201 + $0xb8] sm:$0xff] %v11248
                  %v11250 = vld [vmem:[%s11200 + $0xc0] sm:$0xff]
                  %11251 = vst [vmem:[%s11201 + $0xc0] sm:$0xff] %v11250
                  %v11252 = vld [vmem:[%s11200 + $0xc8] sm:$0xff]
                  %11253 = vst [vmem:[%s11201 + $0xc8] sm:$0xff] %v11252
                  %v11254 = vld [vmem:[%s11200 + $0xd0] sm:$0xff]
                  %11255 = vst [vmem:[%s11201 + $0xd0] sm:$0xff] %v11254
                  %v11256 = vld [vmem:[%s11200 + $0xd8] sm:$0xff]
                  %11257 = vst [vmem:[%s11201 + $0xd8] sm:$0xff] %v11256
                  %v11258 = vld [vmem:[%s11200 + $0xe0] sm:$0xff]
                  %11259 = vst [vmem:[%s11201 + $0xe0] sm:$0xff] %v11258
                  %v11260 = vld [vmem:[%s11200 + $0xe8] sm:$0xff]
                  %11261 = vst [vmem:[%s11201 + $0xe8] sm:$0xff] %v11260
                  %v11262 = vld [vmem:[%s11200 + $0xf0] sm:$0xff]
                  %11263 = vst [vmem:[%s11201 + $0xf0] sm:$0xff] %v11262
                  %v11264 = vld [vmem:[%s11200 + $0xf8] sm:$0xff]
                  %11265 = vst [vmem:[%s11201 + $0xf8] sm:$0xff] %v11264
                  %v11266 = vld [vmem:[%s11200 + $0x100] sm:$0xff]
                  %11267 = vst [vmem:[%s11201 + $0x200] sm:$0xff] %v11266
                  %v11268 = vld [vmem:[%s11200 + $0x108] sm:$0xff]
                  %11269 = vst [vmem:[%s11201 + $0x208] sm:$0xff] %v11268
                  %v11270 = vld [vmem:[%s11200 + $0x110] sm:$0xff]
                  %11271 = vst [vmem:[%s11201 + $0x210] sm:$0xff] %v11270
                  %v11272 = vld [vmem:[%s11200 + $0x118] sm:$0xff]
                  %11273 = vst [vmem:[%s11201 + $0x218] sm:$0xff] %v11272
                  %v11274 = vld [vmem:[%s11200 + $0x120] sm:$0xff]
                  %11275 = vst [vmem:[%s11201 + $0x220] sm:$0xff] %v11274
                  %v11276 = vld [vmem:[%s11200 + $0x128] sm:$0xff]
                  %11277 = vst [vmem:[%s11201 + $0x228] sm:$0xff] %v11276
                  %v11278 = vld [vmem:[%s11200 + $0x130] sm:$0xff]
                  %11279 = vst [vmem:[%s11201 + $0x230] sm:$0xff] %v11278
                  %v11280 = vld [vmem:[%s11200 + $0x138] sm:$0xff]
                  %11281 = vst [vmem:[%s11201 + $0x238] sm:$0xff] %v11280
                  %v11282 = vld [vmem:[%s11200 + $0x140] sm:$0xff]
                  %11283 = vst [vmem:[%s11201 + $0x240] sm:$0xff] %v11282
                  %v11284 = vld [vmem:[%s11200 + $0x148] sm:$0xff]
                  %11285 = vst [vmem:[%s11201 + $0x248] sm:$0xff] %v11284
                  %v11286 = vld [vmem:[%s11200 + $0x150] sm:$0xff]
                  %11287 = vst [vmem:[%s11201 + $0x250] sm:$0xff] %v11286
                  %v11288 = vld [vmem:[%s11200 + $0x158] sm:$0xff]
                  %11289 = vst [vmem:[%s11201 + $0x258] sm:$0xff] %v11288
                  %v11290 = vld [vmem:[%s11200 + $0x160] sm:$0xff]
                  %11291 = vst [vmem:[%s11201 + $0x260] sm:$0xff] %v11290
                  %v11292 = vld [vmem:[%s11200 + $0x168] sm:$0xff]
                  %11293 = vst [vmem:[%s11201 + $0x268] sm:$0xff] %v11292
                  %v11294 = vld [vmem:[%s11200 + $0x170] sm:$0xff]
                  %11295 = vst [vmem:[%s11201 + $0x270] sm:$0xff] %v11294
                  %v11296 = vld [vmem:[%s11200 + $0x178] sm:$0xff]
                  %11297 = vst [vmem:[%s11201 + $0x278] sm:$0xff] %v11296
                  %v11298 = vld [vmem:[%s11200 + $0x180] sm:$0xff]
                  %11299 = vst [vmem:[%s11201 + $0x280] sm:$0xff] %v11298
                  %v11300 = vld [vmem:[%s11200 + $0x188] sm:$0xff]
                  %11301 = vst [vmem:[%s11201 + $0x288] sm:$0xff] %v11300
                  %v11302 = vld [vmem:[%s11200 + $0x190] sm:$0xff]
                  %11303 = vst [vmem:[%s11201 + $0x290] sm:$0xff] %v11302
                  %v11304 = vld [vmem:[%s11200 + $0x198] sm:$0xff]
                  %11305 = vst [vmem:[%s11201 + $0x298] sm:$0xff] %v11304
                  %v11306 = vld [vmem:[%s11200 + $0x1a0] sm:$0xff]
                  %11307 = vst [vmem:[%s11201 + $0x2a0] sm:$0xff] %v11306
                  %v11308 = vld [vmem:[%s11200 + $0x1a8] sm:$0xff]
                  %11309 = vst [vmem:[%s11201 + $0x2a8] sm:$0xff] %v11308
                  %v11310 = vld [vmem:[%s11200 + $0x1b0] sm:$0xff]
                  %11311 = vst [vmem:[%s11201 + $0x2b0] sm:$0xff] %v11310
                  %v11312 = vld [vmem:[%s11200 + $0x1b8] sm:$0xff]
                  %11313 = vst [vmem:[%s11201 + $0x2b8] sm:$0xff] %v11312
                  %v11314 = vld [vmem:[%s11200 + $0x1c0] sm:$0xff]
                  %11315 = vst [vmem:[%s11201 + $0x2c0] sm:$0xff] %v11314
                  %v11316 = vld [vmem:[%s11200 + $0x1c8] sm:$0xff]
                  %11317 = vst [vmem:[%s11201 + $0x2c8] sm:$0xff] %v11316
                  %v11318 = vld [vmem:[%s11200 + $0x1d0] sm:$0xff]
                  %11319 = vst [vmem:[%s11201 + $0x2d0] sm:$0xff] %v11318
                  %v11320 = vld [vmem:[%s11200 + $0x1d8] sm:$0xff]
                  %11321 = vst [vmem:[%s11201 + $0x2d8] sm:$0xff] %v11320
                  %v11322 = vld [vmem:[%s11200 + $0x1e0] sm:$0xff]
                  %11323 = vst [vmem:[%s11201 + $0x2e0] sm:$0xff] %v11322
                  %v11324 = vld [vmem:[%s11200 + $0x1e8] sm:$0xff]
                  %11325 = vst [vmem:[%s11201 + $0x2e8] sm:$0xff] %v11324
                  %v11326 = vld [vmem:[%s11200 + $0x1f0] sm:$0xff]
                  %11327 = vst [vmem:[%s11201 + $0x2f0] sm:$0xff] %v11326
                  %v11328 = vld [vmem:[%s11200 + $0x1f8] sm:$0xff]
                  %11329 = vst [vmem:[%s11201 + $0x2f8] sm:$0xff] %v11328
                  %v11330 = vld [vmem:[%s11200 + $0x200] sm:$0xff]
                  %11331 = vst [vmem:[%s11201 + $0x400] sm:$0xff] %v11330
                  %v11332 = vld [vmem:[%s11200 + $0x208] sm:$0xff]
                  %11333 = vst [vmem:[%s11201 + $0x408] sm:$0xff] %v11332
                  %v11334 = vld [vmem:[%s11200 + $0x210] sm:$0xff]
                  %11335 = vst [vmem:[%s11201 + $0x410] sm:$0xff] %v11334
                  %v11336 = vld [vmem:[%s11200 + $0x218] sm:$0xff]
                  %11337 = vst [vmem:[%s11201 + $0x418] sm:$0xff] %v11336
                  %v11338 = vld [vmem:[%s11200 + $0x220] sm:$0xff]
                  %11339 = vst [vmem:[%s11201 + $0x420] sm:$0xff] %v11338
                  %v11340 = vld [vmem:[%s11200 + $0x228] sm:$0xff]
                  %11341 = vst [vmem:[%s11201 + $0x428] sm:$0xff] %v11340
                  %v11342 = vld [vmem:[%s11200 + $0x230] sm:$0xff]
                  %11343 = vst [vmem:[%s11201 + $0x430] sm:$0xff] %v11342
                  %v11344 = vld [vmem:[%s11200 + $0x238] sm:$0xff]
                  %11345 = vst [vmem:[%s11201 + $0x438] sm:$0xff] %v11344
                  %v11346 = vld [vmem:[%s11200 + $0x240] sm:$0xff]
                  %11347 = vst [vmem:[%s11201 + $0x440] sm:$0xff] %v11346
                  %v11348 = vld [vmem:[%s11200 + $0x248] sm:$0xff]
                  %11349 = vst [vmem:[%s11201 + $0x448] sm:$0xff] %v11348
                  %v11350 = vld [vmem:[%s11200 + $0x250] sm:$0xff]
                  %11351 = vst [vmem:[%s11201 + $0x450] sm:$0xff] %v11350
                  %v11352 = vld [vmem:[%s11200 + $0x258] sm:$0xff]
                  %11353 = vst [vmem:[%s11201 + $0x458] sm:$0xff] %v11352
                  %v11354 = vld [vmem:[%s11200 + $0x260] sm:$0xff]
                  %11355 = vst [vmem:[%s11201 + $0x460] sm:$0xff] %v11354
                  %v11356 = vld [vmem:[%s11200 + $0x268] sm:$0xff]
                  %11357 = vst [vmem:[%s11201 + $0x468] sm:$0xff] %v11356
                  %v11358 = vld [vmem:[%s11200 + $0x270] sm:$0xff]
                  %11359 = vst [vmem:[%s11201 + $0x470] sm:$0xff] %v11358
                  %v11360 = vld [vmem:[%s11200 + $0x278] sm:$0xff]
                  %11361 = vst [vmem:[%s11201 + $0x478] sm:$0xff] %v11360
                  %v11362 = vld [vmem:[%s11200 + $0x280] sm:$0xff]
                  %11363 = vst [vmem:[%s11201 + $0x480] sm:$0xff] %v11362
                  %v11364 = vld [vmem:[%s11200 + $0x288] sm:$0xff]
                  %11365 = vst [vmem:[%s11201 + $0x488] sm:$0xff] %v11364
                  %v11366 = vld [vmem:[%s11200 + $0x290] sm:$0xff]
                  %11367 = vst [vmem:[%s11201 + $0x490] sm:$0xff] %v11366
                  %v11368 = vld [vmem:[%s11200 + $0x298] sm:$0xff]
                  %11369 = vst [vmem:[%s11201 + $0x498] sm:$0xff] %v11368
                  %v11370 = vld [vmem:[%s11200 + $0x2a0] sm:$0xff]
                  %11371 = vst [vmem:[%s11201 + $0x4a0] sm:$0xff] %v11370
                  %v11372 = vld [vmem:[%s11200 + $0x2a8] sm:$0xff]
                  %11373 = vst [vmem:[%s11201 + $0x4a8] sm:$0xff] %v11372
                  %v11374 = vld [vmem:[%s11200 + $0x2b0] sm:$0xff]
                  %11375 = vst [vmem:[%s11201 + $0x4b0] sm:$0xff] %v11374
                  %v11376 = vld [vmem:[%s11200 + $0x2b8] sm:$0xff]
                  %11377 = vst [vmem:[%s11201 + $0x4b8] sm:$0xff] %v11376
                  %v11378 = vld [vmem:[%s11200 + $0x2c0] sm:$0xff]
                  %11379 = vst [vmem:[%s11201 + $0x4c0] sm:$0xff] %v11378
                  %v11380 = vld [vmem:[%s11200 + $0x2c8] sm:$0xff]
                  %11381 = vst [vmem:[%s11201 + $0x4c8] sm:$0xff] %v11380
                  %v11382 = vld [vmem:[%s11200 + $0x2d0] sm:$0xff]
                  %11383 = vst [vmem:[%s11201 + $0x4d0] sm:$0xff] %v11382
                  %v11384 = vld [vmem:[%s11200 + $0x2d8] sm:$0xff]
                  %11385 = vst [vmem:[%s11201 + $0x4d8] sm:$0xff] %v11384
                  %v11386 = vld [vmem:[%s11200 + $0x2e0] sm:$0xff]
                  %11387 = vst [vmem:[%s11201 + $0x4e0] sm:$0xff] %v11386
                  %v11388 = vld [vmem:[%s11200 + $0x2e8] sm:$0xff]
                  %11389 = vst [vmem:[%s11201 + $0x4e8] sm:$0xff] %v11388
                  %v11390 = vld [vmem:[%s11200 + $0x2f0] sm:$0xff]
                  %11391 = vst [vmem:[%s11201 + $0x4f0] sm:$0xff] %v11390
                  %v11392 = vld [vmem:[%s11200 + $0x2f8] sm:$0xff]
                  %11393 = vst [vmem:[%s11201 + $0x4f8] sm:$0xff] %v11392
                  %v11394 = vld [vmem:[%s11200 + $0x300] sm:$0xff]
                  %11395 = vst [vmem:[%s11201 + $0x600] sm:$0xff] %v11394
                  %v11396 = vld [vmem:[%s11200 + $0x308] sm:$0xff]
                  %11397 = vst [vmem:[%s11201 + $0x608] sm:$0xff] %v11396
                  %v11398 = vld [vmem:[%s11200 + $0x310] sm:$0xff]
                  %11399 = vst [vmem:[%s11201 + $0x610] sm:$0xff] %v11398
                  %v11400 = vld [vmem:[%s11200 + $0x318] sm:$0xff]
                  %11401 = vst [vmem:[%s11201 + $0x618] sm:$0xff] %v11400
                  %v11402 = vld [vmem:[%s11200 + $0x320] sm:$0xff]
                  %11403 = vst [vmem:[%s11201 + $0x620] sm:$0xff] %v11402
                  %v11404 = vld [vmem:[%s11200 + $0x328] sm:$0xff]
                  %11405 = vst [vmem:[%s11201 + $0x628] sm:$0xff] %v11404
                  %v11406 = vld [vmem:[%s11200 + $0x330] sm:$0xff]
                  %11407 = vst [vmem:[%s11201 + $0x630] sm:$0xff] %v11406
                  %v11408 = vld [vmem:[%s11200 + $0x338] sm:$0xff]
                  %11409 = vst [vmem:[%s11201 + $0x638] sm:$0xff] %v11408
                  %v11410 = vld [vmem:[%s11200 + $0x340] sm:$0xff]
                  %11411 = vst [vmem:[%s11201 + $0x640] sm:$0xff] %v11410
                  %v11412 = vld [vmem:[%s11200 + $0x348] sm:$0xff]
                  %11413 = vst [vmem:[%s11201 + $0x648] sm:$0xff] %v11412
                  %v11414 = vld [vmem:[%s11200 + $0x350] sm:$0xff]
                  %11415 = vst [vmem:[%s11201 + $0x650] sm:$0xff] %v11414
                  %v11416 = vld [vmem:[%s11200 + $0x358] sm:$0xff]
                  %11417 = vst [vmem:[%s11201 + $0x658] sm:$0xff] %v11416
                  %v11418 = vld [vmem:[%s11200 + $0x360] sm:$0xff]
                  %11419 = vst [vmem:[%s11201 + $0x660] sm:$0xff] %v11418
                  %v11420 = vld [vmem:[%s11200 + $0x368] sm:$0xff]
                  %11421 = vst [vmem:[%s11201 + $0x668] sm:$0xff] %v11420
                  %v11422 = vld [vmem:[%s11200 + $0x370] sm:$0xff]
                  %11423 = vst [vmem:[%s11201 + $0x670] sm:$0xff] %v11422
                  %v11424 = vld [vmem:[%s11200 + $0x378] sm:$0xff]
                  %11425 = vst [vmem:[%s11201 + $0x678] sm:$0xff] %v11424
                  %v11426 = vld [vmem:[%s11200 + $0x380] sm:$0xff]
                  %11427 = vst [vmem:[%s11201 + $0x680] sm:$0xff] %v11426
                  %v11428 = vld [vmem:[%s11200 + $0x388] sm:$0xff]
                  %11429 = vst [vmem:[%s11201 + $0x688] sm:$0xff] %v11428
                  %v11430 = vld [vmem:[%s11200 + $0x390] sm:$0xff]
                  %11431 = vst [vmem:[%s11201 + $0x690] sm:$0xff] %v11430
                  %v11432 = vld [vmem:[%s11200 + $0x398] sm:$0xff]
                  %11433 = vst [vmem:[%s11201 + $0x698] sm:$0xff] %v11432
                  %v11434 = vld [vmem:[%s11200 + $0x3a0] sm:$0xff]
                  %11435 = vst [vmem:[%s11201 + $0x6a0] sm:$0xff] %v11434
                  %v11436 = vld [vmem:[%s11200 + $0x3a8] sm:$0xff]
                  %11437 = vst [vmem:[%s11201 + $0x6a8] sm:$0xff] %v11436
                  %v11438 = vld [vmem:[%s11200 + $0x3b0] sm:$0xff]
                  %11439 = vst [vmem:[%s11201 + $0x6b0] sm:$0xff] %v11438
                  %v11440 = vld [vmem:[%s11200 + $0x3b8] sm:$0xff]
                  %11441 = vst [vmem:[%s11201 + $0x6b8] sm:$0xff] %v11440
                  %v11442 = vld [vmem:[%s11200 + $0x3c0] sm:$0xff]
                  %11443 = vst [vmem:[%s11201 + $0x6c0] sm:$0xff] %v11442
                  %v11444 = vld [vmem:[%s11200 + $0x3c8] sm:$0xff]
                  %11445 = vst [vmem:[%s11201 + $0x6c8] sm:$0xff] %v11444
                  %v11446 = vld [vmem:[%s11200 + $0x3d0] sm:$0xff]
                  %11447 = vst [vmem:[%s11201 + $0x6d0] sm:$0xff] %v11446
                  %v11448 = vld [vmem:[%s11200 + $0x3d8] sm:$0xff]
                  %11449 = vst [vmem:[%s11201 + $0x6d8] sm:$0xff] %v11448
                  %v11450 = vld [vmem:[%s11200 + $0x3e0] sm:$0xff]
                  %11451 = vst [vmem:[%s11201 + $0x6e0] sm:$0xff] %v11450
                  %v11452 = vld [vmem:[%s11200 + $0x3e8] sm:$0xff]
                  %11453 = vst [vmem:[%s11201 + $0x6e8] sm:$0xff] %v11452
                  %v11454 = vld [vmem:[%s11200 + $0x3f0] sm:$0xff]
                  %11455 = vst [vmem:[%s11201 + $0x6f0] sm:$0xff] %v11454
                  %v11456 = vld [vmem:[%s11200 + $0x3f8] sm:$0xff]
                  %11457 = vst [vmem:[%s11201 + $0x6f8] sm:$0xff] %v11456
                  %v11458 = vld [vmem:[%s11200 + $0x400] sm:$0xff]
                  %11459 = vst [vmem:[%s11201 + $0x800] sm:$0xff] %v11458
                  %v11460 = vld [vmem:[%s11200 + $0x408] sm:$0xff]
                  %11461 = vst [vmem:[%s11201 + $0x808] sm:$0xff] %v11460
                  %v11462 = vld [vmem:[%s11200 + $0x410] sm:$0xff]
                  %11463 = vst [vmem:[%s11201 + $0x810] sm:$0xff] %v11462
                  %v11464 = vld [vmem:[%s11200 + $0x418] sm:$0xff]
                  %11465 = vst [vmem:[%s11201 + $0x818] sm:$0xff] %v11464
                  %v11466 = vld [vmem:[%s11200 + $0x420] sm:$0xff]
                  %11467 = vst [vmem:[%s11201 + $0x820] sm:$0xff] %v11466
                  %v11468 = vld [vmem:[%s11200 + $0x428] sm:$0xff]
                  %11469 = vst [vmem:[%s11201 + $0x828] sm:$0xff] %v11468
                  %v11470 = vld [vmem:[%s11200 + $0x430] sm:$0xff]
                  %11471 = vst [vmem:[%s11201 + $0x830] sm:$0xff] %v11470
                  %v11472 = vld [vmem:[%s11200 + $0x438] sm:$0xff]
                  %11473 = vst [vmem:[%s11201 + $0x838] sm:$0xff] %v11472
                  %v11474 = vld [vmem:[%s11200 + $0x440] sm:$0xff]
                  %11475 = vst [vmem:[%s11201 + $0x840] sm:$0xff] %v11474
                  %v11476 = vld [vmem:[%s11200 + $0x448] sm:$0xff]
                  %11477 = vst [vmem:[%s11201 + $0x848] sm:$0xff] %v11476
                  %v11478 = vld [vmem:[%s11200 + $0x450] sm:$0xff]
                  %11479 = vst [vmem:[%s11201 + $0x850] sm:$0xff] %v11478
                  %v11480 = vld [vmem:[%s11200 + $0x458] sm:$0xff]
                  %11481 = vst [vmem:[%s11201 + $0x858] sm:$0xff] %v11480
                  %v11482 = vld [vmem:[%s11200 + $0x460] sm:$0xff]
                  %11483 = vst [vmem:[%s11201 + $0x860] sm:$0xff] %v11482
                  %v11484 = vld [vmem:[%s11200 + $0x468] sm:$0xff]
                  %11485 = vst [vmem:[%s11201 + $0x868] sm:$0xff] %v11484
                  %v11486 = vld [vmem:[%s11200 + $0x470] sm:$0xff]
                  %11487 = vst [vmem:[%s11201 + $0x870] sm:$0xff] %v11486
                  %v11488 = vld [vmem:[%s11200 + $0x478] sm:$0xff]
                  %11489 = vst [vmem:[%s11201 + $0x878] sm:$0xff] %v11488
                  %v11490 = vld [vmem:[%s11200 + $0x480] sm:$0xff]
                  %11491 = vst [vmem:[%s11201 + $0x880] sm:$0xff] %v11490
                  %v11492 = vld [vmem:[%s11200 + $0x488] sm:$0xff]
                  %11493 = vst [vmem:[%s11201 + $0x888] sm:$0xff] %v11492
                  %v11494 = vld [vmem:[%s11200 + $0x490] sm:$0xff]
                  %11495 = vst [vmem:[%s11201 + $0x890] sm:$0xff] %v11494
                  %v11496 = vld [vmem:[%s11200 + $0x498] sm:$0xff]
                  %11497 = vst [vmem:[%s11201 + $0x898] sm:$0xff] %v11496
                  %v11498 = vld [vmem:[%s11200 + $0x4a0] sm:$0xff]
                  %11499 = vst [vmem:[%s11201 + $0x8a0] sm:$0xff] %v11498
                  %v11500 = vld [vmem:[%s11200 + $0x4a8] sm:$0xff]
                  %11501 = vst [vmem:[%s11201 + $0x8a8] sm:$0xff] %v11500
                  %v11502 = vld [vmem:[%s11200 + $0x4b0] sm:$0xff]
                  %11503 = vst [vmem:[%s11201 + $0x8b0] sm:$0xff] %v11502
                  %v11504 = vld [vmem:[%s11200 + $0x4b8] sm:$0xff]
                  %11505 = vst [vmem:[%s11201 + $0x8b8] sm:$0xff] %v11504
                  %v11506 = vld [vmem:[%s11200 + $0x4c0] sm:$0xff]
                  %11507 = vst [vmem:[%s11201 + $0x8c0] sm:$0xff] %v11506
                  %v11508 = vld [vmem:[%s11200 + $0x4c8] sm:$0xff]
                  %11509 = vst [vmem:[%s11201 + $0x8c8] sm:$0xff] %v11508
                  %v11510 = vld [vmem:[%s11200 + $0x4d0] sm:$0xff]
                  %11511 = vst [vmem:[%s11201 + $0x8d0] sm:$0xff] %v11510
                  %v11512 = vld [vmem:[%s11200 + $0x4d8] sm:$0xff]
                  %11513 = vst [vmem:[%s11201 + $0x8d8] sm:$0xff] %v11512
                  %v11514 = vld [vmem:[%s11200 + $0x4e0] sm:$0xff]
                  %11515 = vst [vmem:[%s11201 + $0x8e0] sm:$0xff] %v11514
                  %v11516 = vld [vmem:[%s11200 + $0x4e8] sm:$0xff]
                  %11517 = vst [vmem:[%s11201 + $0x8e8] sm:$0xff] %v11516
                  %v11518 = vld [vmem:[%s11200 + $0x4f0] sm:$0xff]
                  %11519 = vst [vmem:[%s11201 + $0x8f0] sm:$0xff] %v11518
                  %v11520 = vld [vmem:[%s11200 + $0x4f8] sm:$0xff]
                  %11521 = vst [vmem:[%s11201 + $0x8f8] sm:$0xff] %v11520
                  %v11522 = vld [vmem:[%s11200 + $0x500] sm:$0xff]
                  %11523 = vst [vmem:[%s11201 + $0xa00] sm:$0xff] %v11522
                  %v11524 = vld [vmem:[%s11200 + $0x508] sm:$0xff]
                  %11525 = vst [vmem:[%s11201 + $0xa08] sm:$0xff] %v11524
                  %v11526 = vld [vmem:[%s11200 + $0x510] sm:$0xff]
                  %11527 = vst [vmem:[%s11201 + $0xa10] sm:$0xff] %v11526
                  %v11528 = vld [vmem:[%s11200 + $0x518] sm:$0xff]
                  %11529 = vst [vmem:[%s11201 + $0xa18] sm:$0xff] %v11528
                  %v11530 = vld [vmem:[%s11200 + $0x520] sm:$0xff]
                  %11531 = vst [vmem:[%s11201 + $0xa20] sm:$0xff] %v11530
                  %v11532 = vld [vmem:[%s11200 + $0x528] sm:$0xff]
                  %11533 = vst [vmem:[%s11201 + $0xa28] sm:$0xff] %v11532
                  %v11534 = vld [vmem:[%s11200 + $0x530] sm:$0xff]
                  %11535 = vst [vmem:[%s11201 + $0xa30] sm:$0xff] %v11534
                  %v11536 = vld [vmem:[%s11200 + $0x538] sm:$0xff]
                  %11537 = vst [vmem:[%s11201 + $0xa38] sm:$0xff] %v11536
                  %v11538 = vld [vmem:[%s11200 + $0x540] sm:$0xff]
                  %11539 = vst [vmem:[%s11201 + $0xa40] sm:$0xff] %v11538
                  %v11540 = vld [vmem:[%s11200 + $0x548] sm:$0xff]
                  %11541 = vst [vmem:[%s11201 + $0xa48] sm:$0xff] %v11540
                  %v11542 = vld [vmem:[%s11200 + $0x550] sm:$0xff]
                  %11543 = vst [vmem:[%s11201 + $0xa50] sm:$0xff] %v11542
                  %v11544 = vld [vmem:[%s11200 + $0x558] sm:$0xff]
                  %11545 = vst [vmem:[%s11201 + $0xa58] sm:$0xff] %v11544
                  %v11546 = vld [vmem:[%s11200 + $0x560] sm:$0xff]
                  %11547 = vst [vmem:[%s11201 + $0xa60] sm:$0xff] %v11546
                  %v11548 = vld [vmem:[%s11200 + $0x568] sm:$0xff]
                  %11549 = vst [vmem:[%s11201 + $0xa68] sm:$0xff] %v11548
                  %v11550 = vld [vmem:[%s11200 + $0x570] sm:$0xff]
                  %11551 = vst [vmem:[%s11201 + $0xa70] sm:$0xff] %v11550
                  %v11552 = vld [vmem:[%s11200 + $0x578] sm:$0xff]
                  %11553 = vst [vmem:[%s11201 + $0xa78] sm:$0xff] %v11552
                  %v11554 = vld [vmem:[%s11200 + $0x580] sm:$0xff]
                  %11555 = vst [vmem:[%s11201 + $0xa80] sm:$0xff] %v11554
                  %v11556 = vld [vmem:[%s11200 + $0x588] sm:$0xff]
                  %11557 = vst [vmem:[%s11201 + $0xa88] sm:$0xff] %v11556
                  %v11558 = vld [vmem:[%s11200 + $0x590] sm:$0xff]
                  %11559 = vst [vmem:[%s11201 + $0xa90] sm:$0xff] %v11558
                  %v11560 = vld [vmem:[%s11200 + $0x598] sm:$0xff]
                  %11561 = vst [vmem:[%s11201 + $0xa98] sm:$0xff] %v11560
                  %v11562 = vld [vmem:[%s11200 + $0x5a0] sm:$0xff]
                  %11563 = vst [vmem:[%s11201 + $0xaa0] sm:$0xff] %v11562
                  %v11564 = vld [vmem:[%s11200 + $0x5a8] sm:$0xff]
                  %11565 = vst [vmem:[%s11201 + $0xaa8] sm:$0xff] %v11564
                  %v11566 = vld [vmem:[%s11200 + $0x5b0] sm:$0xff]
                  %11567 = vst [vmem:[%s11201 + $0xab0] sm:$0xff] %v11566
                  %v11568 = vld [vmem:[%s11200 + $0x5b8] sm:$0xff]
                  %11569 = vst [vmem:[%s11201 + $0xab8] sm:$0xff] %v11568
                  %v11570 = vld [vmem:[%s11200 + $0x5c0] sm:$0xff]
                  %11571 = vst [vmem:[%s11201 + $0xac0] sm:$0xff] %v11570
                  %v11572 = vld [vmem:[%s11200 + $0x5c8] sm:$0xff]
                  %11573 = vst [vmem:[%s11201 + $0xac8] sm:$0xff] %v11572
                  %v11574 = vld [vmem:[%s11200 + $0x5d0] sm:$0xff]
                  %11575 = vst [vmem:[%s11201 + $0xad0] sm:$0xff] %v11574
                  %v11576 = vld [vmem:[%s11200 + $0x5d8] sm:$0xff]
                  %11577 = vst [vmem:[%s11201 + $0xad8] sm:$0xff] %v11576
                  %v11578 = vld [vmem:[%s11200 + $0x5e0] sm:$0xff]
                  %11579 = vst [vmem:[%s11201 + $0xae0] sm:$0xff] %v11578
                  %v11580 = vld [vmem:[%s11200 + $0x5e8] sm:$0xff]
                  %11581 = vst [vmem:[%s11201 + $0xae8] sm:$0xff] %v11580
                  %v11582 = vld [vmem:[%s11200 + $0x5f0] sm:$0xff]
                  %11583 = vst [vmem:[%s11201 + $0xaf0] sm:$0xff] %v11582
                  %v11584 = vld [vmem:[%s11200 + $0x5f8] sm:$0xff]
                  %11585 = vst [vmem:[%s11201 + $0xaf8] sm:$0xff] %v11584
                $region110: #{prenet_lstm_forward.1} parent=104 // loop_footer
                  %s11199 = sadd.s32 1, %s11195
                $region111: #{prenet_lstm_forward.1} parent=104 // loop_footer_branch
                  %11194 = sbr.rel target = $region107
                $region112: #{prenet_lstm_forward.1} parent=104 // loop_exit
                  _
              $region105: #{prenet_lstm_forward.1} parent=89 // pred_fallthru
                _
              // Predicated region
              $region113: #{prenet_lstm_forward.1} parent=89 // pred_check
                _
              $region114: #{prenet_lstm_forward.1} parent=89 // pred_check_branch
                %11587 = sbr.rel target = $region116
              $region115: #{prenet_lstm_forward.1} parent=89 // pred_region
                _
              $region116: #{prenet_lstm_forward.1} parent=89 // pred_fallthru
                _
            $region90: #{prenet_lstm_forward.1} parent=85 // pred_fallthru
              _
            // Predicated region
            $region91: #{prenet_lstm_forward.1} parent=85 // pred_check
              _
            $region92: #{prenet_lstm_forward.1} parent=85 // pred_check_branch
              %10797 = sbr.rel target = $region94
            $region93: #{prenet_lstm_forward.1} parent=85 // pred_region
              %s10799 = ssub.s32 256, 1
              loop: start=0, step=1, limit=1
              $region95: #{prenet_lstm_forward.1} parent=93 // loop_pre_header
                _
              $region96: #{prenet_lstm_forward.1} parent=93 // loop_header
                %s10801 = sphi 0, %s10805
                %p10802 = scmp.ge.s32.totalorder %s10801, 1
                %s10806 = sphi %s10785, %s10785
                %s10807 = sphi %s10791, %s10791
              $region97: #{prenet_lstm_forward.1} parent=93 // loop_header_branch
                %10804 = sbr.rel (%p10802) target = $region101
              $region98: #{prenet_lstm_forward.1} parent=93 // loop_body
                %v10808 = vld [vmem:[%s10806] sm:%s10799]
                %10809 = vst [vmem:[%s10807] sm:%s10799] %v10808
                %v10810 = vld [vmem:[%s10806 + $0x8] sm:%s10799]
                %10811 = vst [vmem:[%s10807 + $0x8] sm:%s10799] %v10810
                %v10812 = vld [vmem:[%s10806 + $0x10] sm:%s10799]
                %10813 = vst [vmem:[%s10807 + $0x10] sm:%s10799] %v10812
                %v10814 = vld [vmem:[%s10806 + $0x18] sm:%s10799]
                %10815 = vst [vmem:[%s10807 + $0x18] sm:%s10799] %v10814
                %v10816 = vld [vmem:[%s10806 + $0x20] sm:%s10799]
                %10817 = vst [vmem:[%s10807 + $0x20] sm:%s10799] %v10816
                %v10818 = vld [vmem:[%s10806 + $0x28] sm:%s10799]
                %10819 = vst [vmem:[%s10807 + $0x28] sm:%s10799] %v10818
                %v10820 = vld [vmem:[%s10806 + $0x30] sm:%s10799]
                %10821 = vst [vmem:[%s10807 + $0x30] sm:%s10799] %v10820
                %v10822 = vld [vmem:[%s10806 + $0x38] sm:%s10799]
                %10823 = vst [vmem:[%s10807 + $0x38] sm:%s10799] %v10822
                %v10824 = vld [vmem:[%s10806 + $0x40] sm:%s10799]
                %10825 = vst [vmem:[%s10807 + $0x40] sm:%s10799] %v10824
                %v10826 = vld [vmem:[%s10806 + $0x48] sm:%s10799]
                %10827 = vst [vmem:[%s10807 + $0x48] sm:%s10799] %v10826
                %v10828 = vld [vmem:[%s10806 + $0x50] sm:%s10799]
                %10829 = vst [vmem:[%s10807 + $0x50] sm:%s10799] %v10828
                %v10830 = vld [vmem:[%s10806 + $0x58] sm:%s10799]
                %10831 = vst [vmem:[%s10807 + $0x58] sm:%s10799] %v10830
                %v10832 = vld [vmem:[%s10806 + $0x60] sm:%s10799]
                %10833 = vst [vmem:[%s10807 + $0x60] sm:%s10799] %v10832
                %v10834 = vld [vmem:[%s10806 + $0x68] sm:%s10799]
                %10835 = vst [vmem:[%s10807 + $0x68] sm:%s10799] %v10834
                %v10836 = vld [vmem:[%s10806 + $0x70] sm:%s10799]
                %10837 = vst [vmem:[%s10807 + $0x70] sm:%s10799] %v10836
                %v10838 = vld [vmem:[%s10806 + $0x78] sm:%s10799]
                %10839 = vst [vmem:[%s10807 + $0x78] sm:%s10799] %v10838
                %v10840 = vld [vmem:[%s10806 + $0x80] sm:%s10799]
                %10841 = vst [vmem:[%s10807 + $0x80] sm:%s10799] %v10840
                %v10842 = vld [vmem:[%s10806 + $0x88] sm:%s10799]
                %10843 = vst [vmem:[%s10807 + $0x88] sm:%s10799] %v10842
                %v10844 = vld [vmem:[%s10806 + $0x90] sm:%s10799]
                %10845 = vst [vmem:[%s10807 + $0x90] sm:%s10799] %v10844
                %v10846 = vld [vmem:[%s10806 + $0x98] sm:%s10799]
                %10847 = vst [vmem:[%s10807 + $0x98] sm:%s10799] %v10846
                %v10848 = vld [vmem:[%s10806 + $0xa0] sm:%s10799]
                %10849 = vst [vmem:[%s10807 + $0xa0] sm:%s10799] %v10848
                %v10850 = vld [vmem:[%s10806 + $0xa8] sm:%s10799]
                %10851 = vst [vmem:[%s10807 + $0xa8] sm:%s10799] %v10850
                %v10852 = vld [vmem:[%s10806 + $0xb0] sm:%s10799]
                %10853 = vst [vmem:[%s10807 + $0xb0] sm:%s10799] %v10852
                %v10854 = vld [vmem:[%s10806 + $0xb8] sm:%s10799]
                %10855 = vst [vmem:[%s10807 + $0xb8] sm:%s10799] %v10854
                %v10856 = vld [vmem:[%s10806 + $0xc0] sm:%s10799]
                %10857 = vst [vmem:[%s10807 + $0xc0] sm:%s10799] %v10856
                %v10858 = vld [vmem:[%s10806 + $0xc8] sm:%s10799]
                %10859 = vst [vmem:[%s10807 + $0xc8] sm:%s10799] %v10858
                %v10860 = vld [vmem:[%s10806 + $0xd0] sm:%s10799]
                %10861 = vst [vmem:[%s10807 + $0xd0] sm:%s10799] %v10860
                %v10862 = vld [vmem:[%s10806 + $0xd8] sm:%s10799]
                %10863 = vst [vmem:[%s10807 + $0xd8] sm:%s10799] %v10862
                %v10864 = vld [vmem:[%s10806 + $0xe0] sm:%s10799]
                %10865 = vst [vmem:[%s10807 + $0xe0] sm:%s10799] %v10864
                %v10866 = vld [vmem:[%s10806 + $0xe8] sm:%s10799]
                %10867 = vst [vmem:[%s10807 + $0xe8] sm:%s10799] %v10866
                %v10868 = vld [vmem:[%s10806 + $0xf0] sm:%s10799]
                %10869 = vst [vmem:[%s10807 + $0xf0] sm:%s10799] %v10868
                %v10870 = vld [vmem:[%s10806 + $0xf8] sm:%s10799]
                %10871 = vst [vmem:[%s10807 + $0xf8] sm:%s10799] %v10870
                %v10872 = vld [vmem:[%s10806 + $0x100] sm:%s10799]
                %10873 = vst [vmem:[%s10807 + $0x200] sm:%s10799] %v10872
                %v10874 = vld [vmem:[%s10806 + $0x108] sm:%s10799]
                %10875 = vst [vmem:[%s10807 + $0x208] sm:%s10799] %v10874
                %v10876 = vld [vmem:[%s10806 + $0x110] sm:%s10799]
                %10877 = vst [vmem:[%s10807 + $0x210] sm:%s10799] %v10876
                %v10878 = vld [vmem:[%s10806 + $0x118] sm:%s10799]
                %10879 = vst [vmem:[%s10807 + $0x218] sm:%s10799] %v10878
                %v10880 = vld [vmem:[%s10806 + $0x120] sm:%s10799]
                %10881 = vst [vmem:[%s10807 + $0x220] sm:%s10799] %v10880
                %v10882 = vld [vmem:[%s10806 + $0x128] sm:%s10799]
                %10883 = vst [vmem:[%s10807 + $0x228] sm:%s10799] %v10882
                %v10884 = vld [vmem:[%s10806 + $0x130] sm:%s10799]
                %10885 = vst [vmem:[%s10807 + $0x230] sm:%s10799] %v10884
                %v10886 = vld [vmem:[%s10806 + $0x138] sm:%s10799]
                %10887 = vst [vmem:[%s10807 + $0x238] sm:%s10799] %v10886
                %v10888 = vld [vmem:[%s10806 + $0x140] sm:%s10799]
                %10889 = vst [vmem:[%s10807 + $0x240] sm:%s10799] %v10888
                %v10890 = vld [vmem:[%s10806 + $0x148] sm:%s10799]
                %10891 = vst [vmem:[%s10807 + $0x248] sm:%s10799] %v10890
                %v10892 = vld [vmem:[%s10806 + $0x150] sm:%s10799]
                %10893 = vst [vmem:[%s10807 + $0x250] sm:%s10799] %v10892
                %v10894 = vld [vmem:[%s10806 + $0x158] sm:%s10799]
                %10895 = vst [vmem:[%s10807 + $0x258] sm:%s10799] %v10894
                %v10896 = vld [vmem:[%s10806 + $0x160] sm:%s10799]
                %10897 = vst [vmem:[%s10807 + $0x260] sm:%s10799] %v10896
                %v10898 = vld [vmem:[%s10806 + $0x168] sm:%s10799]
                %10899 = vst [vmem:[%s10807 + $0x268] sm:%s10799] %v10898
                %v10900 = vld [vmem:[%s10806 + $0x170] sm:%s10799]
                %10901 = vst [vmem:[%s10807 + $0x270] sm:%s10799] %v10900
                %v10902 = vld [vmem:[%s10806 + $0x178] sm:%s10799]
                %10903 = vst [vmem:[%s10807 + $0x278] sm:%s10799] %v10902
                %v10904 = vld [vmem:[%s10806 + $0x180] sm:%s10799]
                %10905 = vst [vmem:[%s10807 + $0x280] sm:%s10799] %v10904
                %v10906 = vld [vmem:[%s10806 + $0x188] sm:%s10799]
                %10907 = vst [vmem:[%s10807 + $0x288] sm:%s10799] %v10906
                %v10908 = vld [vmem:[%s10806 + $0x190] sm:%s10799]
                %10909 = vst [vmem:[%s10807 + $0x290] sm:%s10799] %v10908
                %v10910 = vld [vmem:[%s10806 + $0x198] sm:%s10799]
                %10911 = vst [vmem:[%s10807 + $0x298] sm:%s10799] %v10910
                %v10912 = vld [vmem:[%s10806 + $0x1a0] sm:%s10799]
                %10913 = vst [vmem:[%s10807 + $0x2a0] sm:%s10799] %v10912
                %v10914 = vld [vmem:[%s10806 + $0x1a8] sm:%s10799]
                %10915 = vst [vmem:[%s10807 + $0x2a8] sm:%s10799] %v10914
                %v10916 = vld [vmem:[%s10806 + $0x1b0] sm:%s10799]
                %10917 = vst [vmem:[%s10807 + $0x2b0] sm:%s10799] %v10916
                %v10918 = vld [vmem:[%s10806 + $0x1b8] sm:%s10799]
                %10919 = vst [vmem:[%s10807 + $0x2b8] sm:%s10799] %v10918
                %v10920 = vld [vmem:[%s10806 + $0x1c0] sm:%s10799]
                %10921 = vst [vmem:[%s10807 + $0x2c0] sm:%s10799] %v10920
                %v10922 = vld [vmem:[%s10806 + $0x1c8] sm:%s10799]
                %10923 = vst [vmem:[%s10807 + $0x2c8] sm:%s10799] %v10922
                %v10924 = vld [vmem:[%s10806 + $0x1d0] sm:%s10799]
                %10925 = vst [vmem:[%s10807 + $0x2d0] sm:%s10799] %v10924
                %v10926 = vld [vmem:[%s10806 + $0x1d8] sm:%s10799]
                %10927 = vst [vmem:[%s10807 + $0x2d8] sm:%s10799] %v10926
                %v10928 = vld [vmem:[%s10806 + $0x1e0] sm:%s10799]
                %10929 = vst [vmem:[%s10807 + $0x2e0] sm:%s10799] %v10928
                %v10930 = vld [vmem:[%s10806 + $0x1e8] sm:%s10799]
                %10931 = vst [vmem:[%s10807 + $0x2e8] sm:%s10799] %v10930
                %v10932 = vld [vmem:[%s10806 + $0x1f0] sm:%s10799]
                %10933 = vst [vmem:[%s10807 + $0x2f0] sm:%s10799] %v10932
                %v10934 = vld [vmem:[%s10806 + $0x1f8] sm:%s10799]
                %10935 = vst [vmem:[%s10807 + $0x2f8] sm:%s10799] %v10934
                %v10936 = vld [vmem:[%s10806 + $0x200] sm:%s10799]
                %10937 = vst [vmem:[%s10807 + $0x400] sm:%s10799] %v10936
                %v10938 = vld [vmem:[%s10806 + $0x208] sm:%s10799]
                %10939 = vst [vmem:[%s10807 + $0x408] sm:%s10799] %v10938
                %v10940 = vld [vmem:[%s10806 + $0x210] sm:%s10799]
                %10941 = vst [vmem:[%s10807 + $0x410] sm:%s10799] %v10940
                %v10942 = vld [vmem:[%s10806 + $0x218] sm:%s10799]
                %10943 = vst [vmem:[%s10807 + $0x418] sm:%s10799] %v10942
                %v10944 = vld [vmem:[%s10806 + $0x220] sm:%s10799]
                %10945 = vst [vmem:[%s10807 + $0x420] sm:%s10799] %v10944
                %v10946 = vld [vmem:[%s10806 + $0x228] sm:%s10799]
                %10947 = vst [vmem:[%s10807 + $0x428] sm:%s10799] %v10946
                %v10948 = vld [vmem:[%s10806 + $0x230] sm:%s10799]
                %10949 = vst [vmem:[%s10807 + $0x430] sm:%s10799] %v10948
                %v10950 = vld [vmem:[%s10806 + $0x238] sm:%s10799]
                %10951 = vst [vmem:[%s10807 + $0x438] sm:%s10799] %v10950
                %v10952 = vld [vmem:[%s10806 + $0x240] sm:%s10799]
                %10953 = vst [vmem:[%s10807 + $0x440] sm:%s10799] %v10952
                %v10954 = vld [vmem:[%s10806 + $0x248] sm:%s10799]
                %10955 = vst [vmem:[%s10807 + $0x448] sm:%s10799] %v10954
                %v10956 = vld [vmem:[%s10806 + $0x250] sm:%s10799]
                %10957 = vst [vmem:[%s10807 + $0x450] sm:%s10799] %v10956
                %v10958 = vld [vmem:[%s10806 + $0x258] sm:%s10799]
                %10959 = vst [vmem:[%s10807 + $0x458] sm:%s10799] %v10958
                %v10960 = vld [vmem:[%s10806 + $0x260] sm:%s10799]
                %10961 = vst [vmem:[%s10807 + $0x460] sm:%s10799] %v10960
                %v10962 = vld [vmem:[%s10806 + $0x268] sm:%s10799]
                %10963 = vst [vmem:[%s10807 + $0x468] sm:%s10799] %v10962
                %v10964 = vld [vmem:[%s10806 + $0x270] sm:%s10799]
                %10965 = vst [vmem:[%s10807 + $0x470] sm:%s10799] %v10964
                %v10966 = vld [vmem:[%s10806 + $0x278] sm:%s10799]
                %10967 = vst [vmem:[%s10807 + $0x478] sm:%s10799] %v10966
                %v10968 = vld [vmem:[%s10806 + $0x280] sm:%s10799]
                %10969 = vst [vmem:[%s10807 + $0x480] sm:%s10799] %v10968
                %v10970 = vld [vmem:[%s10806 + $0x288] sm:%s10799]
                %10971 = vst [vmem:[%s10807 + $0x488] sm:%s10799] %v10970
                %v10972 = vld [vmem:[%s10806 + $0x290] sm:%s10799]
                %10973 = vst [vmem:[%s10807 + $0x490] sm:%s10799] %v10972
                %v10974 = vld [vmem:[%s10806 + $0x298] sm:%s10799]
                %10975 = vst [vmem:[%s10807 + $0x498] sm:%s10799] %v10974
                %v10976 = vld [vmem:[%s10806 + $0x2a0] sm:%s10799]
                %10977 = vst [vmem:[%s10807 + $0x4a0] sm:%s10799] %v10976
                %v10978 = vld [vmem:[%s10806 + $0x2a8] sm:%s10799]
                %10979 = vst [vmem:[%s10807 + $0x4a8] sm:%s10799] %v10978
                %v10980 = vld [vmem:[%s10806 + $0x2b0] sm:%s10799]
                %10981 = vst [vmem:[%s10807 + $0x4b0] sm:%s10799] %v10980
                %v10982 = vld [vmem:[%s10806 + $0x2b8] sm:%s10799]
                %10983 = vst [vmem:[%s10807 + $0x4b8] sm:%s10799] %v10982
                %v10984 = vld [vmem:[%s10806 + $0x2c0] sm:%s10799]
                %10985 = vst [vmem:[%s10807 + $0x4c0] sm:%s10799] %v10984
                %v10986 = vld [vmem:[%s10806 + $0x2c8] sm:%s10799]
                %10987 = vst [vmem:[%s10807 + $0x4c8] sm:%s10799] %v10986
                %v10988 = vld [vmem:[%s10806 + $0x2d0] sm:%s10799]
                %10989 = vst [vmem:[%s10807 + $0x4d0] sm:%s10799] %v10988
                %v10990 = vld [vmem:[%s10806 + $0x2d8] sm:%s10799]
                %10991 = vst [vmem:[%s10807 + $0x4d8] sm:%s10799] %v10990
                %v10992 = vld [vmem:[%s10806 + $0x2e0] sm:%s10799]
                %10993 = vst [vmem:[%s10807 + $0x4e0] sm:%s10799] %v10992
                %v10994 = vld [vmem:[%s10806 + $0x2e8] sm:%s10799]
                %10995 = vst [vmem:[%s10807 + $0x4e8] sm:%s10799] %v10994
                %v10996 = vld [vmem:[%s10806 + $0x2f0] sm:%s10799]
                %10997 = vst [vmem:[%s10807 + $0x4f0] sm:%s10799] %v10996
                %v10998 = vld [vmem:[%s10806 + $0x2f8] sm:%s10799]
                %10999 = vst [vmem:[%s10807 + $0x4f8] sm:%s10799] %v10998
                %v11000 = vld [vmem:[%s10806 + $0x300] sm:%s10799]
                %11001 = vst [vmem:[%s10807 + $0x600] sm:%s10799] %v11000
                %v11002 = vld [vmem:[%s10806 + $0x308] sm:%s10799]
                %11003 = vst [vmem:[%s10807 + $0x608] sm:%s10799] %v11002
                %v11004 = vld [vmem:[%s10806 + $0x310] sm:%s10799]
                %11005 = vst [vmem:[%s10807 + $0x610] sm:%s10799] %v11004
                %v11006 = vld [vmem:[%s10806 + $0x318] sm:%s10799]
                %11007 = vst [vmem:[%s10807 + $0x618] sm:%s10799] %v11006
                %v11008 = vld [vmem:[%s10806 + $0x320] sm:%s10799]
                %11009 = vst [vmem:[%s10807 + $0x620] sm:%s10799] %v11008
                %v11010 = vld [vmem:[%s10806 + $0x328] sm:%s10799]
                %11011 = vst [vmem:[%s10807 + $0x628] sm:%s10799] %v11010
                %v11012 = vld [vmem:[%s10806 + $0x330] sm:%s10799]
                %11013 = vst [vmem:[%s10807 + $0x630] sm:%s10799] %v11012
                %v11014 = vld [vmem:[%s10806 + $0x338] sm:%s10799]
                %11015 = vst [vmem:[%s10807 + $0x638] sm:%s10799] %v11014
                %v11016 = vld [vmem:[%s10806 + $0x340] sm:%s10799]
                %11017 = vst [vmem:[%s10807 + $0x640] sm:%s10799] %v11016
                %v11018 = vld [vmem:[%s10806 + $0x348] sm:%s10799]
                %11019 = vst [vmem:[%s10807 + $0x648] sm:%s10799] %v11018
                %v11020 = vld [vmem:[%s10806 + $0x350] sm:%s10799]
                %11021 = vst [vmem:[%s10807 + $0x650] sm:%s10799] %v11020
                %v11022 = vld [vmem:[%s10806 + $0x358] sm:%s10799]
                %11023 = vst [vmem:[%s10807 + $0x658] sm:%s10799] %v11022
                %v11024 = vld [vmem:[%s10806 + $0x360] sm:%s10799]
                %11025 = vst [vmem:[%s10807 + $0x660] sm:%s10799] %v11024
                %v11026 = vld [vmem:[%s10806 + $0x368] sm:%s10799]
                %11027 = vst [vmem:[%s10807 + $0x668] sm:%s10799] %v11026
                %v11028 = vld [vmem:[%s10806 + $0x370] sm:%s10799]
                %11029 = vst [vmem:[%s10807 + $0x670] sm:%s10799] %v11028
                %v11030 = vld [vmem:[%s10806 + $0x378] sm:%s10799]
                %11031 = vst [vmem:[%s10807 + $0x678] sm:%s10799] %v11030
                %v11032 = vld [vmem:[%s10806 + $0x380] sm:%s10799]
                %11033 = vst [vmem:[%s10807 + $0x680] sm:%s10799] %v11032
                %v11034 = vld [vmem:[%s10806 + $0x388] sm:%s10799]
                %11035 = vst [vmem:[%s10807 + $0x688] sm:%s10799] %v11034
                %v11036 = vld [vmem:[%s10806 + $0x390] sm:%s10799]
                %11037 = vst [vmem:[%s10807 + $0x690] sm:%s10799] %v11036
                %v11038 = vld [vmem:[%s10806 + $0x398] sm:%s10799]
                %11039 = vst [vmem:[%s10807 + $0x698] sm:%s10799] %v11038
                %v11040 = vld [vmem:[%s10806 + $0x3a0] sm:%s10799]
                %11041 = vst [vmem:[%s10807 + $0x6a0] sm:%s10799] %v11040
                %v11042 = vld [vmem:[%s10806 + $0x3a8] sm:%s10799]
                %11043 = vst [vmem:[%s10807 + $0x6a8] sm:%s10799] %v11042
                %v11044 = vld [vmem:[%s10806 + $0x3b0] sm:%s10799]
                %11045 = vst [vmem:[%s10807 + $0x6b0] sm:%s10799] %v11044
                %v11046 = vld [vmem:[%s10806 + $0x3b8] sm:%s10799]
                %11047 = vst [vmem:[%s10807 + $0x6b8] sm:%s10799] %v11046
                %v11048 = vld [vmem:[%s10806 + $0x3c0] sm:%s10799]
                %11049 = vst [vmem:[%s10807 + $0x6c0] sm:%s10799] %v11048
                %v11050 = vld [vmem:[%s10806 + $0x3c8] sm:%s10799]
                %11051 = vst [vmem:[%s10807 + $0x6c8] sm:%s10799] %v11050
                %v11052 = vld [vmem:[%s10806 + $0x3d0] sm:%s10799]
                %11053 = vst [vmem:[%s10807 + $0x6d0] sm:%s10799] %v11052
                %v11054 = vld [vmem:[%s10806 + $0x3d8] sm:%s10799]
                %11055 = vst [vmem:[%s10807 + $0x6d8] sm:%s10799] %v11054
                %v11056 = vld [vmem:[%s10806 + $0x3e0] sm:%s10799]
                %11057 = vst [vmem:[%s10807 + $0x6e0] sm:%s10799] %v11056
                %v11058 = vld [vmem:[%s10806 + $0x3e8] sm:%s10799]
                %11059 = vst [vmem:[%s10807 + $0x6e8] sm:%s10799] %v11058
                %v11060 = vld [vmem:[%s10806 + $0x3f0] sm:%s10799]
                %11061 = vst [vmem:[%s10807 + $0x6f0] sm:%s10799] %v11060
                %v11062 = vld [vmem:[%s10806 + $0x3f8] sm:%s10799]
                %11063 = vst [vmem:[%s10807 + $0x6f8] sm:%s10799] %v11062
                %v11064 = vld [vmem:[%s10806 + $0x400] sm:%s10799]
                %11065 = vst [vmem:[%s10807 + $0x800] sm:%s10799] %v11064
                %v11066 = vld [vmem:[%s10806 + $0x408] sm:%s10799]
                %11067 = vst [vmem:[%s10807 + $0x808] sm:%s10799] %v11066
                %v11068 = vld [vmem:[%s10806 + $0x410] sm:%s10799]
                %11069 = vst [vmem:[%s10807 + $0x810] sm:%s10799] %v11068
                %v11070 = vld [vmem:[%s10806 + $0x418] sm:%s10799]
                %11071 = vst [vmem:[%s10807 + $0x818] sm:%s10799] %v11070
                %v11072 = vld [vmem:[%s10806 + $0x420] sm:%s10799]
                %11073 = vst [vmem:[%s10807 + $0x820] sm:%s10799] %v11072
                %v11074 = vld [vmem:[%s10806 + $0x428] sm:%s10799]
                %11075 = vst [vmem:[%s10807 + $0x828] sm:%s10799] %v11074
                %v11076 = vld [vmem:[%s10806 + $0x430] sm:%s10799]
                %11077 = vst [vmem:[%s10807 + $0x830] sm:%s10799] %v11076
                %v11078 = vld [vmem:[%s10806 + $0x438] sm:%s10799]
                %11079 = vst [vmem:[%s10807 + $0x838] sm:%s10799] %v11078
                %v11080 = vld [vmem:[%s10806 + $0x440] sm:%s10799]
                %11081 = vst [vmem:[%s10807 + $0x840] sm:%s10799] %v11080
                %v11082 = vld [vmem:[%s10806 + $0x448] sm:%s10799]
                %11083 = vst [vmem:[%s10807 + $0x848] sm:%s10799] %v11082
                %v11084 = vld [vmem:[%s10806 + $0x450] sm:%s10799]
                %11085 = vst [vmem:[%s10807 + $0x850] sm:%s10799] %v11084
                %v11086 = vld [vmem:[%s10806 + $0x458] sm:%s10799]
                %11087 = vst [vmem:[%s10807 + $0x858] sm:%s10799] %v11086
                %v11088 = vld [vmem:[%s10806 + $0x460] sm:%s10799]
                %11089 = vst [vmem:[%s10807 + $0x860] sm:%s10799] %v11088
                %v11090 = vld [vmem:[%s10806 + $0x468] sm:%s10799]
                %11091 = vst [vmem:[%s10807 + $0x868] sm:%s10799] %v11090
                %v11092 = vld [vmem:[%s10806 + $0x470] sm:%s10799]
                %11093 = vst [vmem:[%s10807 + $0x870] sm:%s10799] %v11092
                %v11094 = vld [vmem:[%s10806 + $0x478] sm:%s10799]
                %11095 = vst [vmem:[%s10807 + $0x878] sm:%s10799] %v11094
                %v11096 = vld [vmem:[%s10806 + $0x480] sm:%s10799]
                %11097 = vst [vmem:[%s10807 + $0x880] sm:%s10799] %v11096
                %v11098 = vld [vmem:[%s10806 + $0x488] sm:%s10799]
                %11099 = vst [vmem:[%s10807 + $0x888] sm:%s10799] %v11098
                %v11100 = vld [vmem:[%s10806 + $0x490] sm:%s10799]
                %11101 = vst [vmem:[%s10807 + $0x890] sm:%s10799] %v11100
                %v11102 = vld [vmem:[%s10806 + $0x498] sm:%s10799]
                %11103 = vst [vmem:[%s10807 + $0x898] sm:%s10799] %v11102
                %v11104 = vld [vmem:[%s10806 + $0x4a0] sm:%s10799]
                %11105 = vst [vmem:[%s10807 + $0x8a0] sm:%s10799] %v11104
                %v11106 = vld [vmem:[%s10806 + $0x4a8] sm:%s10799]
                %11107 = vst [vmem:[%s10807 + $0x8a8] sm:%s10799] %v11106
                %v11108 = vld [vmem:[%s10806 + $0x4b0] sm:%s10799]
                %11109 = vst [vmem:[%s10807 + $0x8b0] sm:%s10799] %v11108
                %v11110 = vld [vmem:[%s10806 + $0x4b8] sm:%s10799]
                %11111 = vst [vmem:[%s10807 + $0x8b8] sm:%s10799] %v11110
                %v11112 = vld [vmem:[%s10806 + $0x4c0] sm:%s10799]
                %11113 = vst [vmem:[%s10807 + $0x8c0] sm:%s10799] %v11112
                %v11114 = vld [vmem:[%s10806 + $0x4c8] sm:%s10799]
                %11115 = vst [vmem:[%s10807 + $0x8c8] sm:%s10799] %v11114
                %v11116 = vld [vmem:[%s10806 + $0x4d0] sm:%s10799]
                %11117 = vst [vmem:[%s10807 + $0x8d0] sm:%s10799] %v11116
                %v11118 = vld [vmem:[%s10806 + $0x4d8] sm:%s10799]
                %11119 = vst [vmem:[%s10807 + $0x8d8] sm:%s10799] %v11118
                %v11120 = vld [vmem:[%s10806 + $0x4e0] sm:%s10799]
                %11121 = vst [vmem:[%s10807 + $0x8e0] sm:%s10799] %v11120
                %v11122 = vld [vmem:[%s10806 + $0x4e8] sm:%s10799]
                %11123 = vst [vmem:[%s10807 + $0x8e8] sm:%s10799] %v11122
                %v11124 = vld [vmem:[%s10806 + $0x4f0] sm:%s10799]
                %11125 = vst [vmem:[%s10807 + $0x8f0] sm:%s10799] %v11124
                %v11126 = vld [vmem:[%s10806 + $0x4f8] sm:%s10799]
                %11127 = vst [vmem:[%s10807 + $0x8f8] sm:%s10799] %v11126
                %v11128 = vld [vmem:[%s10806 + $0x500] sm:%s10799]
                %11129 = vst [vmem:[%s10807 + $0xa00] sm:%s10799] %v11128
                %v11130 = vld [vmem:[%s10806 + $0x508] sm:%s10799]
                %11131 = vst [vmem:[%s10807 + $0xa08] sm:%s10799] %v11130
                %v11132 = vld [vmem:[%s10806 + $0x510] sm:%s10799]
                %11133 = vst [vmem:[%s10807 + $0xa10] sm:%s10799] %v11132
                %v11134 = vld [vmem:[%s10806 + $0x518] sm:%s10799]
                %11135 = vst [vmem:[%s10807 + $0xa18] sm:%s10799] %v11134
                %v11136 = vld [vmem:[%s10806 + $0x520] sm:%s10799]
                %11137 = vst [vmem:[%s10807 + $0xa20] sm:%s10799] %v11136
                %v11138 = vld [vmem:[%s10806 + $0x528] sm:%s10799]
                %11139 = vst [vmem:[%s10807 + $0xa28] sm:%s10799] %v11138
                %v11140 = vld [vmem:[%s10806 + $0x530] sm:%s10799]
                %11141 = vst [vmem:[%s10807 + $0xa30] sm:%s10799] %v11140
                %v11142 = vld [vmem:[%s10806 + $0x538] sm:%s10799]
                %11143 = vst [vmem:[%s10807 + $0xa38] sm:%s10799] %v11142
                %v11144 = vld [vmem:[%s10806 + $0x540] sm:%s10799]
                %11145 = vst [vmem:[%s10807 + $0xa40] sm:%s10799] %v11144
                %v11146 = vld [vmem:[%s10806 + $0x548] sm:%s10799]
                %11147 = vst [vmem:[%s10807 + $0xa48] sm:%s10799] %v11146
                %v11148 = vld [vmem:[%s10806 + $0x550] sm:%s10799]
                %11149 = vst [vmem:[%s10807 + $0xa50] sm:%s10799] %v11148
                %v11150 = vld [vmem:[%s10806 + $0x558] sm:%s10799]
                %11151 = vst [vmem:[%s10807 + $0xa58] sm:%s10799] %v11150
                %v11152 = vld [vmem:[%s10806 + $0x560] sm:%s10799]
                %11153 = vst [vmem:[%s10807 + $0xa60] sm:%s10799] %v11152
                %v11154 = vld [vmem:[%s10806 + $0x568] sm:%s10799]
                %11155 = vst [vmem:[%s10807 + $0xa68] sm:%s10799] %v11154
                %v11156 = vld [vmem:[%s10806 + $0x570] sm:%s10799]
                %11157 = vst [vmem:[%s10807 + $0xa70] sm:%s10799] %v11156
                %v11158 = vld [vmem:[%s10806 + $0x578] sm:%s10799]
                %11159 = vst [vmem:[%s10807 + $0xa78] sm:%s10799] %v11158
                %v11160 = vld [vmem:[%s10806 + $0x580] sm:%s10799]
                %11161 = vst [vmem:[%s10807 + $0xa80] sm:%s10799] %v11160
                %v11162 = vld [vmem:[%s10806 + $0x588] sm:%s10799]
                %11163 = vst [vmem:[%s10807 + $0xa88] sm:%s10799] %v11162
                %v11164 = vld [vmem:[%s10806 + $0x590] sm:%s10799]
                %11165 = vst [vmem:[%s10807 + $0xa90] sm:%s10799] %v11164
                %v11166 = vld [vmem:[%s10806 + $0x598] sm:%s10799]
                %11167 = vst [vmem:[%s10807 + $0xa98] sm:%s10799] %v11166
                %v11168 = vld [vmem:[%s10806 + $0x5a0] sm:%s10799]
                %11169 = vst [vmem:[%s10807 + $0xaa0] sm:%s10799] %v11168
                %v11170 = vld [vmem:[%s10806 + $0x5a8] sm:%s10799]
                %11171 = vst [vmem:[%s10807 + $0xaa8] sm:%s10799] %v11170
                %v11172 = vld [vmem:[%s10806 + $0x5b0] sm:%s10799]
                %11173 = vst [vmem:[%s10807 + $0xab0] sm:%s10799] %v11172
                %v11174 = vld [vmem:[%s10806 + $0x5b8] sm:%s10799]
                %11175 = vst [vmem:[%s10807 + $0xab8] sm:%s10799] %v11174
                %v11176 = vld [vmem:[%s10806 + $0x5c0] sm:%s10799]
                %11177 = vst [vmem:[%s10807 + $0xac0] sm:%s10799] %v11176
                %v11178 = vld [vmem:[%s10806 + $0x5c8] sm:%s10799]
                %11179 = vst [vmem:[%s10807 + $0xac8] sm:%s10799] %v11178
                %v11180 = vld [vmem:[%s10806 + $0x5d0] sm:%s10799]
                %11181 = vst [vmem:[%s10807 + $0xad0] sm:%s10799] %v11180
                %v11182 = vld [vmem:[%s10806 + $0x5d8] sm:%s10799]
                %11183 = vst [vmem:[%s10807 + $0xad8] sm:%s10799] %v11182
                %v11184 = vld [vmem:[%s10806 + $0x5e0] sm:%s10799]
                %11185 = vst [vmem:[%s10807 + $0xae0] sm:%s10799] %v11184
                %v11186 = vld [vmem:[%s10806 + $0x5e8] sm:%s10799]
                %11187 = vst [vmem:[%s10807 + $0xae8] sm:%s10799] %v11186
                %v11188 = vld [vmem:[%s10806 + $0x5f0] sm:%s10799]
                %11189 = vst [vmem:[%s10807 + $0xaf0] sm:%s10799] %v11188
                %v11190 = vld [vmem:[%s10806 + $0x5f8] sm:%s10799]
                %11191 = vst [vmem:[%s10807 + $0xaf8] sm:%s10799] %v11190
              $region99: #{prenet_lstm_forward.1} parent=93 // loop_footer
                %s10805 = sadd.s32 1, %s10801
              $region100: #{prenet_lstm_forward.1} parent=93 // loop_footer_branch
                %10800 = sbr.rel target = $region96
              $region101: #{prenet_lstm_forward.1} parent=93 // loop_exit
                _
            $region94: #{prenet_lstm_forward.1} parent=85 // pred_fallthru
              _
          $region86: #{prenet_lstm_forward.1} parent=81 // pred_fallthru
            _
          %11588 = vnop
        $region82: #{prenet_lstm_forward.1} parent=63 // pred_fallthru
          _
      $region64: #{prenet_lstm_forward.1} parent=5 // pred_fallthru
        _
      %p11589 = scmp.le.s32.totalorder 2, %s17
      // Predicated region
      $region117: #{prenet_lstm_forward.1} parent=5 // pred_check
        %p11590 = pneg %p11589
      $region118: #{prenet_lstm_forward.1} parent=5 // pred_check_branch
        %11592 = sbr.rel (%p11590) target = $region120
      $region119: #{prenet_lstm_forward.1} parent=5 // pred_region
        %s11593 = ssub.s32 %s17, 2
        // Predicated region
        $region121: #{prenet_lstm_forward.1} parent=119 // pred_check
          %p11594 = pneg %p282
        $region122: #{prenet_lstm_forward.1} parent=119 // pred_check_branch
          %11596 = sbr.rel (%p11594) target = $region124
        $region123: #{prenet_lstm_forward.1} parent=119 // pred_region
          %s11597 = sand.u32 %s267, 1
          %s11598 = sand.u32 %s267, 1
          %s11599 = smul.addr %s11598, 1536
          %s11600 = scalar_lea.vmem [#allocation3], %s11599
        $region124: #{prenet_lstm_forward.1} parent=119 // pred_fallthru
          _
      $region120: #{prenet_lstm_forward.1} parent=5 // pred_fallthru
        _
    $region6: #{prenet_lstm_forward.1} parent=1 // loop_footer
      %s21 = sadd.s32 1, %s17
    $region7: #{prenet_lstm_forward.1} parent=1 // loop_footer_branch
      %16 = sbr.rel target = $region3
    $region8: #{prenet_lstm_forward.1} parent=1 // loop_exit
      _

</llo_original>
